<compile_context>
chip_gen: v7x
topology: tpu7x:2x2x1
jax: 0.10.0
libtpu: 0.0.40
codegen_flags: <defaults>
</compile_context>

<pallas_src>
import functools

import jax
import jax.numpy as jnp
from jax import lax
from jax.experimental import pallas as pl
from jax.experimental.pallas import tpu as pltpu


def _round_up(x, m):
    return (x + m - 1) // m * m


# -----------------------------------------------------------------------------
# Fused kernel: input projection + bidirectional recurrence + output linears.
# -----------------------------------------------------------------------------
def _encoder_kernel(emb_ref,        # (S*Bp, Ep)   bf16
                    wih_ref,        # (Ep, 8*Hp)   bf16  [fwd 4*Hp | bwd 4*Hp]
                    bih_ref,        # (1, 8*Hp)    f32   (b_ih + b_hh, both dirs)
                    whh_f_ref,      # (Hp, 4*Hp)   bf16
                    whh_b_ref,      # (Hp, 4*Hp)   bf16
                    fch_w_ref,      # (2*Hp, Hp)   bf16
                    fch_b_ref,      # (1, Hp)      f32
                    fcc_w_ref,      # (2*Hp, Hp)   bf16
                    fcc_b_ref,      # (1, Hp)      f32
                    y_ref,          # out (S*Bp, 2*Hp) f32
                    hid_ref,        # out (Bp, Hp)     f32
                    cell_ref,       # out (Bp, Hp)     f32
                    pre_ref,        # scratch (S*Bp, 8*Hp) f32
                    *, S, Bp, Hp):
    G4 = 4 * Hp

    # ---- Phase 1: hoisted input projection (one large MXU call, bias added once). ----
    pre_ref[...] = (
        jnp.dot(emb_ref[...], wih_ref[...], preferred_element_type=jnp.float32)
        + bih_ref[...])

    # ---- Phase 2: serial recurrence; only h @ W_hh remains inside the loop. ----
    def cell_step(g_pre, h, c, whh):
        gates = g_pre + jnp.dot(h.astype(jnp.bfloat16), whh,
                                preferred_element_type=jnp.float32)
        i_g = jax.nn.sigmoid(gates[:, 0 * Hp:1 * Hp])   # lane-aligned vreg slices
        f_g = jax.nn.sigmoid(gates[:, 1 * Hp:2 * Hp])
        g_g = jnp.tanh(gates[:, 2 * Hp:3 * Hp])
        o_g = jax.nn.sigmoid(gates[:, 3 * Hp:4 * Hp])
        c_new = f_g * c + i_g * g_g
        h_new = o_g * jnp.tanh(c_new)
        return h_new, c_new

    def body(t, carry):
        h_f, c_f, h_b, c_b = carry
        row_f = pl.multiple_of(t * Bp, Bp)
        row_b = pl.multiple_of((S - 1 - t) * Bp, Bp)
        # forward direction, time t
        h_f, c_f = cell_step(pre_ref[pl.ds(row_f, Bp), pl.ds(0, G4)],
                             h_f, c_f, whh_f_ref[...])
        y_ref[pl.ds(row_f, Bp), pl.ds(0, Hp)] = h_f
        # backward direction, time S - 1 - t
        h_b, c_b = cell_step(pre_ref[pl.ds(row_b, Bp), pl.ds(G4, G4)],
                             h_b, c_b, whh_b_ref[...])
        y_ref[pl.ds(row_b, Bp), pl.ds(Hp, Hp)] = h_b
        return h_f, c_f, h_b, c_b

    z = jnp.zeros((Bp, Hp), jnp.float32)
    h_f, c_f, h_b, c_b = lax.fori_loop(0, S, body, (z, z, z, z), unroll=(S <= 16))

    # ---- Phase 3: fc_hidden / fc_cell fused into the finalize phase. ----
    h_cat = jnp.concatenate([h_f, h_b], axis=-1).astype(jnp.bfloat16)   # (Bp, 2*Hp)
    c_cat = jnp.concatenate([c_f, c_b], axis=-1).astype(jnp.bfloat16)
    hid_ref[...] = (jnp.dot(h_cat, fch_w_ref[...],
                            preferred_element_type=jnp.float32) + fch_b_ref[...])
    cell_ref[...] = (jnp.dot(c_cat, fcc_w_ref[...],
                             preferred_element_type=jnp.float32) + fcc_b_ref[...])


def _pallas_encoder(emb2, packed, S, Bp, Hp):
    kernel = functools.partial(_encoder_kernel, S=S, Bp=Bp, Hp=Hp)
    return pl.pallas_call(
        kernel,
        out_shape=(
            jax.ShapeDtypeStruct((S * Bp, 2 * Hp), jnp.float32),   # encoder states
            jax.ShapeDtypeStruct((Bp, Hp), jnp.float32),           # fc_hidden output
            jax.ShapeDtypeStruct((Bp, Hp), jnp.float32),           # fc_cell output
        ),
        scratch_shapes=[pltpu.VMEM((S * Bp, 8 * Hp), jnp.float32)],  # precomputed gates
        compiler_params=pltpu.CompilerParams(vmem_limit_bytes=32 * 1024 * 1024),
    )(emb2,
      packed["wih"], packed["bih"],
      packed["whh_f"], packed["whh_b"],
      packed["fch_w"], packed["fch_b"],
      packed["fcc_w"], packed["fcc_b"])


# -----------------------------------------------------------------------------
# Parameter packing (pad + transpose + lane-align gate blocks, cast bf16 for MXU).
# -----------------------------------------------------------------------------
def _pack_gate_w(w, din_p, Hp):
    """PyTorch (4H, Din) -> padded transposed (din_p, 4*Hp); gate g at lanes [g*Hp, g*Hp+H)."""
    four_h, din = w.shape
    H = four_h // 4
    wt = w.T
    out = jnp.zeros((din_p, 4 * Hp), jnp.float32)
    for g in range(4):
        out = out.at[:din, g * Hp:g * Hp + H].set(wt[:, g * H:(g + 1) * H])
    return out


def _pack_gate_b(b, Hp):
    H = b.shape[0] // 4
    out = jnp.zeros((1, 4 * Hp), jnp.float32)
    for g in range(4):
        out = out.at[0, g * Hp:g * Hp + H].set(b[g * H:(g + 1) * H])
    return out


def _pack_fc(w, b, H, Hp):
    """w: (H, 2H), b: (H,) -> (2*Hp, Hp) bf16 weight, (1, Hp) f32 bias."""
    wt = w.T                                      # (2H, H)
    wp = jnp.zeros((2 * Hp, Hp), jnp.float32)
    wp = wp.at[:H, :H].set(wt[:H])                # rows multiplying forward h/c
    wp = wp.at[Hp:Hp + H, :H].set(wt[H:])         # rows multiplying backward h/c
    bp = jnp.zeros((1, Hp), jnp.float32).at[0, :H].set(b)
    return wp.astype(jnp.bfloat16), bp


def pack_params(raw, E, H):
    Ep, Hp = _round_up(E, 128), _round_up(H, 128)
    wih = jnp.concatenate(
        [_pack_gate_w(raw["w_ih_f"], Ep, Hp),
         _pack_gate_w(raw["w_ih_b"], Ep, Hp)], axis=-1).astype(jnp.bfloat16)
    bih = jnp.concatenate(
        [_pack_gate_b(raw["b_ih_f"] + raw["b_hh_f"], Hp),
         _pack_gate_b(raw["b_ih_b"] + raw["b_hh_b"], Hp)], axis=-1)
    return dict(
        wih=wih, bih=bih,
        whh_f=_pack_gate_w(raw["w_hh_f"], Hp, Hp).astype(jnp.bfloat16),
        whh_b=_pack_gate_w(raw["w_hh_b"], Hp, Hp).astype(jnp.bfloat16),
        fch_w=_pack_fc(raw["fc_h_w"], raw["fc_h_b"], H, Hp)[0],
        fch_b=_pack_fc(raw["fc_h_w"], raw["fc_h_b"], H, Hp)[1],
        fcc_w=_pack_fc(raw["fc_c_w"], raw["fc_c_b"], H, Hp)[0],
        fcc_b=_pack_fc(raw["fc_c_w"], raw["fc_c_b"], H, Hp)[1],
    )


# -----------------------------------------------------------------------------
# Full Encoder_Attention forward.
# -----------------------------------------------------------------------------
def encoder_attention_forward(tokens, raw, packed):
    """tokens: (S, B) int32 -> (encoder_states (S,B,2H), hidden (1,B,H), cell (1,B,H))."""
    S, B = tokens.shape
    E = raw["embedding"].shape[1]
    H = raw["fc_h_w"].shape[0]
    Bp, Ep, Hp = _round_up(B, 8), _round_up(E, 128), _round_up(H, 128)

    # Embedding lookup (+ dropout in eval mode = identity). Pad B/E, flatten time into
    # the sublane axis -> one lane-dense (S*Bp, Ep) slab for the kernel.
    # TODO(synk): at realistic S/E, gather rows in-kernel via scalar-prefetched token ids
    #             instead of materializing the embedded sequence in HBM.
    emb = jnp.take(raw["embedding"], tokens, axis=0)                  # (S, B, E) f32
    emb = jnp.pad(emb, ((0, 0), (0, Bp - B), (0, Ep - E)))
    emb2 = emb.reshape(S * Bp, Ep).astype(jnp.bfloat16)

    y, hid, cel = _pallas_encoder(emb2, packed, S, Bp, Hp)

    y = y.reshape(S, Bp, 2 * Hp)
    encoder_states = jnp.concatenate(
        [y[:, :B, :H], y[:, :B, Hp:Hp + H]], axis=-1)                 # (S, B, 2H)
    hidden = hid[:B, :H][None]                                        # (1, B, H)
    cell = cel[:B, :H][None]                                          # (1, B, H)
    return encoder_states, hidden, cell


# -----------------------------------------------------------------------------
# Raw (PyTorch-layout) parameters and a pure-JAX reference for validation.
# -----------------------------------------------------------------------------
def init_raw_params(key, input_size, E, H):
    k = 1.0 / jnp.sqrt(jnp.float32(H))
    keys = jax.random.split(key, 16)

    def u(kk, shape):
        return jax.random.uniform(kk, shape, jnp.float32, -k, k)

    return {
        "embedding": jax.random.normal(keys[0], (input_size, E), jnp.float32),
        "w_ih_f": u(keys[1], (4 * H, E)), "w_hh_f": u(keys[2], (4 * H, H)),
        "b_ih_f": u(keys[3], (4 * H,)), "b_hh_f": u(keys[4], (4 * H,)),
        "w_ih_b": u(keys[5], (4 * H, E)), "w_hh_b": u(keys[6], (4 * H, H)),
        "b_ih_b": u(keys[7], (4 * H,)), "b_hh_b": u(keys[8], (4 * H,)),
        "fc_h_w": u(keys[9], (H, 2 * H)), "fc_h_b": u(keys[10], (H,)),
        "fc_c_w": u(keys[11], (H, 2 * H)), "fc_c_b": u(keys[12], (H,)),
    }


def reference_forward(tokens, raw):
    emb = jnp.take(raw["embedding"], tokens, axis=0)

    def lstm_dir(xs, w_ih, w_hh, b_ih, b_hh):
        H = w_hh.shape[1]
        B = xs.shape[1]

        def step(carry, x_t):
            h, c = carry
            gates = x_t @ w_ih.T + h @ w_hh.T + b_ih + b_hh
            i_g = jax.nn.sigmoid(gates[:, 0 * H:1 * H])
            f_g = jax.nn.sigmoid(gates[:, 1 * H:2 * H])
            g_g = jnp.tanh(gates[:, 2 * H:3 * H])
            o_g = jax.nn.sigmoid(gates[:, 3 * H:4 * H])
            c = f_g * c + i_g * g_g
            h = o_g * jnp.tanh(c)
            return (h, c), h

        z = jnp.zeros((B, H), jnp.float32)
        (h, c), ys = lax.scan(step, (z, z), xs)
        return ys, h, c

    y_f, h_f, c_f = lstm_dir(emb, raw["w_ih_f"], raw["w_hh_f"], raw["b_ih_f"], raw["b_hh_f"])
    y_br, h_b, c_b = lstm_dir(emb[::-1], raw["w_ih_b"], raw["w_hh_b"], raw["b_ih_b"], raw["b_hh_b"])
    enc = jnp.concatenate([y_f, y_br[::-1]], axis=-1)
    hid = jnp.concatenate([h_f, h_b], axis=-1) @ raw["fc_h_w"].T + raw["fc_h_b"]
    cel = jnp.concatenate([c_f, c_b], axis=-1) @ raw["fc_c_w"].T + raw["fc_c_b"]
    return enc, hid[None], cel[None]


if __name__ == "__main__":
    input_size = 32       # vocab
    embedding_size = 16
    hidden_size = 32
    num_layers = 1        # forward only uses layer-0 fwd/bwd states
    p = 0.0               # dropout -> identity in eval mode
    seq_len, batch = 8, 2

    key = jax.random.PRNGKey(0)
    k_tok, k_par = jax.random.split(key)
    tokens = jax.random.randint(k_tok, (seq_len, batch), 0, input_size, jnp.int32)

    raw = init_raw_params(k_par, input_size, embedding_size, hidden_size)
    packed = pack_params(raw, embedding_size, hidden_size)

    enc, hid, cel = encoder_attention_forward(tokens, raw, packed)
    jax.block_until_ready((enc, hid, cel))

    assert enc.shape == (seq_len, batch, 2 * hidden_size)
    assert hid.shape == (1, batch, hidden_size)
    assert cel.shape == (1, batch, hidden_size)

    # Validate against a pure-JAX (f32) reference; kernel uses bf16 MXU operands.
    enc_r, hid_r, cel_r = reference_forward(tokens, raw)
    max_err = max(float(jnp.max(jnp.abs(enc - enc_r))),
                  float(jnp.max(jnp.abs(hid - hid_r))),
                  float(jnp.max(jnp.abs(cel - cel_r))))
    assert max_err < 3e-2, f"numerical mismatch vs reference: {max_err}"

    print("KERNEL_OK")
</pallas_src>

<mosaic_0001>
module attributes {stable_mosaic.version = 11 : i64} {
  func.func @_encoder_kernel(%arg0: memref<64x128xbf16, #tpu.memory_space<vmem>>, %arg1: memref<128x1024xbf16, #tpu.memory_space<vmem>>, %arg2: memref<1x1024xf32, #tpu.memory_space<vmem>>, %arg3: memref<128x512xbf16, #tpu.memory_space<vmem>>, %arg4: memref<128x512xbf16, #tpu.memory_space<vmem>>, %arg5: memref<256x128xbf16, #tpu.memory_space<vmem>>, %arg6: memref<1x128xf32, #tpu.memory_space<vmem>>, %arg7: memref<256x128xbf16, #tpu.memory_space<vmem>>, %arg8: memref<1x128xf32, #tpu.memory_space<vmem>>, %arg9: memref<64x256xf32, #tpu.memory_space<vmem>>, %arg10: memref<8x128xf32, #tpu.memory_space<vmem>>, %arg11: memref<8x128xf32, #tpu.memory_space<vmem>>, %arg12: memref<64x1024xf32, #tpu.memory_space<vmem>>) attributes {dimension_semantics = [], scalar_prefetch = 0 : i64, scratch_operands = 1 : i64, tpu.core_type = #tpu.core_type<tc>} {
    %c0 = arith.constant 0 : index
    %c0_0 = arith.constant 0 : index
    %0 = vector.load %arg0[%c0, %c0_0] : memref<64x128xbf16, #tpu.memory_space<vmem>>, vector<64x128xbf16>
    %c0_1 = arith.constant 0 : index
    %c0_2 = arith.constant 0 : index
    %1 = vector.load %arg1[%c0_1, %c0_2] : memref<128x1024xbf16, #tpu.memory_space<vmem>>, vector<128x1024xbf16>
    %cst = arith.constant dense<0.000000e+00> : vector<64x1024xf32>
    %2 = tpu.matmul %0, %1, %cst {dimension_numbers = #tpu.dot_dimension_numbers<[1], [0], [0], [1], [0, 0, 1, 1], [], []>} : vector<64x128xbf16>, vector<128x1024xbf16>, vector<64x1024xf32> -> vector<64x1024xf32>
    %c0_3 = arith.constant 0 : index
    %c0_4 = arith.constant 0 : index
    %3 = vector.load %arg2[%c0_3, %c0_4] : memref<1x1024xf32, #tpu.memory_space<vmem>>, vector<1x1024xf32>
    %4 = vector.broadcast %3 : vector<1x1024xf32> to vector<64x1024xf32>
    %5 = arith.addf %2, %4 : vector<64x1024xf32>
    %c0_5 = arith.constant 0 : index
    %c0_6 = arith.constant 0 : index
    %6 = vector.load %arg12[%c0_5, %c0_6] : memref<64x1024xf32, #tpu.memory_space<vmem>>, vector<64x1024xf32>
    tpu.vector_store %arg12[%c0_5, %c0_6], %5 {strides = array<i32>} : memref<64x1024xf32, #tpu.memory_space<vmem>>, vector<64x1024xf32>,
    %cst_7 = arith.constant 0.000000e+00 : f32
    %7 = vector.broadcast %cst_7 : f32 to vector<8x128xf32>
    %c0_i32 = arith.constant 0 : i32
    %c8_i32 = arith.constant 8 : i32
    %8 = arith.muli %c0_i32, %c8_i32 : i32
    %9 = tpu.assume_multiple %8, 8 : i32
    %c7_i32 = arith.constant 7 : i32
    %10 = arith.subi %c7_i32, %c0_i32 : i32
    %c8_i32_8 = arith.constant 8 : i32
    %11 = arith.muli %10, %c8_i32_8 : i32
    %12 = tpu.assume_multiple %11, 8 : i32
    %13 = arith.index_cast %9 : i32 to index
    %c0_9 = arith.constant 0 : index
    %14 = vector.load %arg12[%13, %c0_9] : memref<64x1024xf32, #tpu.memory_space<vmem>>, vector<8x512xf32>
    %c0_10 = arith.constant 0 : index
    %c0_11 = arith.constant 0 : index
    %15 = vector.load %arg3[%c0_10, %c0_11] : memref<128x512xbf16, #tpu.memory_space<vmem>>, vector<128x512xbf16>
    %16 = arith.truncf %7 : vector<8x128xf32> to vector<8x128xbf16>
    %cst_12 = arith.constant dense<0.000000e+00> : vector<8x512xf32>
    %17 = tpu.matmul %16, %15, %cst_12 {dimension_numbers = #tpu.dot_dimension_numbers<[1], [0], [0], [1], [0, 0, 1, 1], [], []>} : vector<8x128xbf16>, vector<128x512xbf16>, vector<8x512xf32> -> vector<8x512xf32>
    %18 = arith.addf %14, %17 : vector<8x512xf32>
    %19 = vector.extract_strided_slice %18 {offsets = [0, 0], sizes = [8, 128], strides = [1, 1]} : vector<8x512xf32> to vector<8x128xf32>
    %20 = arith.negf %19 : vector<8x128xf32>
    %21 = math.exp %20 : vector<8x128xf32>
    %cst_13 = arith.constant 1.000000e+00 : f32
    %22 = vector.broadcast %cst_13 : f32 to vector<8x128xf32>
    %23 = arith.addf %22, %21 : vector<8x128xf32>
    %24 = arith.divf %22, %23 : vector<8x128xf32>
    %25 = vector.extract_strided_slice %18 {offsets = [0, 128], sizes = [8, 128], strides = [1, 1]} : vector<8x512xf32> to vector<8x128xf32>
    %26 = arith.negf %25 : vector<8x128xf32>
    %27 = math.exp %26 : vector<8x128xf32>
    %cst_14 = arith.constant 1.000000e+00 : f32
    %28 = vector.broadcast %cst_14 : f32 to vector<8x128xf32>
    %29 = arith.addf %28, %27 : vector<8x128xf32>
    %30 = arith.divf %28, %29 : vector<8x128xf32>
    %31 = vector.extract_strided_slice %18 {offsets = [0, 256], sizes = [8, 128], strides = [1, 1]} : vector<8x512xf32> to vector<8x128xf32>
    %32 = math.tanh %31 : vector<8x128xf32>
    %33 = vector.extract_strided_slice %18 {offsets = [0, 384], sizes = [8, 128], strides = [1, 1]} : vector<8x512xf32> to vector<8x128xf32>
    %34 = arith.negf %33 : vector<8x128xf32>
    %35 = math.exp %34 : vector<8x128xf32>
    %cst_15 = arith.constant 1.000000e+00 : f32
    %36 = vector.broadcast %cst_15 : f32 to vector<8x128xf32>
    %37 = arith.addf %36, %35 : vector<8x128xf32>
    %38 = arith.divf %36, %37 : vector<8x128xf32>
    %39 = arith.mulf %30, %7 : vector<8x128xf32>
    %40 = arith.mulf %24, %32 : vector<8x128xf32>
    %41 = arith.addf %39, %40 : vector<8x128xf32>
    %42 = math.tanh %41 : vector<8x128xf32>
    %43 = arith.mulf %38, %42 : vector<8x128xf32>
    %44 = arith.index_cast %9 : i32 to index
    %c0_16 = arith.constant 0 : index
    %45 = vector.load %arg9[%44, %c0_16] : memref<64x256xf32, #tpu.memory_space<vmem>>, vector<8x128xf32>
    tpu.vector_store %arg9[%44, %c0_16], %43 {strides = array<i32>} : memref<64x256xf32, #tpu.memory_space<vmem>>, vector<8x128xf32>,
    %46 = arith.index_cast %12 : i32 to index
    %c512 = arith.constant 512 : index
    %47 = vector.load %arg12[%46, %c512] : memref<64x1024xf32, #tpu.memory_space<vmem>>, vector<8x512xf32>
    %c0_17 = arith.constant 0 : index
    %c0_18 = arith.constant 0 : index
    %48 = vector.load %arg4[%c0_17, %c0_18] : memref<128x512xbf16, #tpu.memory_space<vmem>>, vector<128x512xbf16>
    %49 = arith.truncf %7 : vector<8x128xf32> to vector<8x128xbf16>
    %cst_19 = arith.constant dense<0.000000e+00> : vector<8x512xf32>
    %50 = tpu.matmul %49, %48, %cst_19 {dimension_numbers = #tpu.dot_dimension_numbers<[1], [0], [0], [1], [0, 0, 1, 1], [], []>} : vector<8x128xbf16>, vector<128x512xbf16>, vector<8x512xf32> -> vector<8x512xf32>
    %51 = arith.addf %47, %50 : vector<8x512xf32>
    %52 = vector.extract_strided_slice %51 {offsets = [0, 0], sizes = [8, 128], strides = [1, 1]} : vector<8x512xf32> to vector<8x128xf32>
    %53 = arith.negf %52 : vector<8x128xf32>
    %54 = math.exp %53 : vector<8x128xf32>
    %cst_20 = arith.constant 1.000000e+00 : f32
    %55 = vector.broadcast %cst_20 : f32 to vector<8x128xf32>
    %56 = arith.addf %55, %54 : vector<8x128xf32>
    %57 = arith.divf %55, %56 : vector<8x128xf32>
    %58 = vector.extract_strided_slice %51 {offsets = [0, 128], sizes = [8, 128], strides = [1, 1]} : vector<8x512xf32> to vector<8x128xf32>
    %59 = arith.negf %58 : vector<8x128xf32>
    %60 = math.exp %59 : vector<8x128xf32>
    %cst_21 = arith.constant 1.000000e+00 : f32
    %61 = vector.broadcast %cst_21 : f32 to vector<8x128xf32>
    %62 = arith.addf %61, %60 : vector<8x128xf32>
    %63 = arith.divf %61, %62 : vector<8x128xf32>
    %64 = vector.extract_strided_slice %51 {offsets = [0, 256], sizes = [8, 128], strides = [1, 1]} : vector<8x512xf32> to vector<8x128xf32>
    %65 = math.tanh %64 : vector<8x128xf32>
    %66 = vector.extract_strided_slice %51 {offsets = [0, 384], sizes = [8, 128], strides = [1, 1]} : vector<8x512xf32> to vector<8x128xf32>
    %67 = arith.negf %66 : vector<8x128xf32>
    %68 = math.exp %67 : vector<8x128xf32>
    %cst_22 = arith.constant 1.000000e+00 : f32
    %69 = vector.broadcast %cst_22 : f32 to vector<8x128xf32>
    %70 = arith.addf %69, %68 : vector<8x128xf32>
    %71 = arith.divf %69, %70 : vector<8x128xf32>
    %72 = arith.mulf %63, %7 : vector<8x128xf32>
    %73 = arith.mulf %57, %65 : vector<8x128xf32>
    %74 = arith.addf %72, %73 : vector<8x128xf32>
    %75 = math.tanh %74 : vector<8x128xf32>
    %76 = arith.mulf %71, %75 : vector<8x128xf32>
    %77 = arith.index_cast %12 : i32 to index
    %c128 = arith.constant 128 : index
    %78 = vector.load %arg9[%77, %c128] : memref<64x256xf32, #tpu.memory_space<vmem>>, vector<8x128xf32>
    tpu.vector_store %arg9[%77, %c128], %76 {strides = array<i32>} : memref<64x256xf32, #tpu.memory_space<vmem>>, vector<8x128xf32>,
    %c1_i32 = arith.constant 1 : i32
    %c8_i32_23 = arith.constant 8 : i32
    %79 = arith.muli %c1_i32, %c8_i32_23 : i32
    %80 = tpu.assume_multiple %79, 8 : i32
    %c7_i32_24 = arith.constant 7 : i32
    %81 = arith.subi %c7_i32_24, %c1_i32 : i32
    %c8_i32_25 = arith.constant 8 : i32
    %82 = arith.muli %81, %c8_i32_25 : i32
    %83 = tpu.assume_multiple %82, 8 : i32
    %84 = arith.index_cast %80 : i32 to index
    %c0_26 = arith.constant 0 : index
    %85 = vector.load %arg12[%84, %c0_26] : memref<64x1024xf32, #tpu.memory_space<vmem>>, vector<8x512xf32>
    %c0_27 = arith.constant 0 : index
    %c0_28 = arith.constant 0 : index
    %86 = vector.load %arg3[%c0_27, %c0_28] : memref<128x512xbf16, #tpu.memory_space<vmem>>, vector<128x512xbf16>
    %87 = arith.truncf %43 : vector<8x128xf32> to vector<8x128xbf16>
    %cst_29 = arith.constant dense<0.000000e+00> : vector<8x512xf32>
    %88 = tpu.matmul %87, %86, %cst_29 {dimension_numbers = #tpu.dot_dimension_numbers<[1], [0], [0], [1], [0, 0, 1, 1], [], []>} : vector<8x128xbf16>, vector<128x512xbf16>, vector<8x512xf32> -> vector<8x512xf32>
    %89 = arith.addf %85, %88 : vector<8x512xf32>
    %90 = vector.extract_strided_slice %89 {offsets = [0, 0], sizes = [8, 128], strides = [1, 1]} : vector<8x512xf32> to vector<8x128xf32>
    %91 = arith.negf %90 : vector<8x128xf32>
    %92 = math.exp %91 : vector<8x128xf32>
    %cst_30 = arith.constant 1.000000e+00 : f32
    %93 = vector.broadcast %cst_30 : f32 to vector<8x128xf32>
    %94 = arith.addf %93, %92 : vector<8x128xf32>
    %95 = arith.divf %93, %94 : vector<8x128xf32>
    %96 = vector.extract_strided_slice %89 {offsets = [0, 128], sizes = [8, 128], strides = [1, 1]} : vector<8x512xf32> to vector<8x128xf32>
    %97 = arith.negf %96 : vector<8x128xf32>
    %98 = math.exp %97 : vector<8x128xf32>
    %cst_31 = arith.constant 1.000000e+00 : f32
    %99 = vector.broadcast %cst_31 : f32 to vector<8x128xf32>
    %100 = arith.addf %99, %98 : vector<8x128xf32>
    %101 = arith.divf %99, %100 : vector<8x128xf32>
    %102 = vector.extract_strided_slice %89 {offsets = [0, 256], sizes = [8, 128], strides = [1, 1]} : vector<8x512xf32> to vector<8x128xf32>
    %103 = math.tanh %102 : vector<8x128xf32>
    %104 = vector.extract_strided_slice %89 {offsets = [0, 384], sizes = [8, 128], strides = [1, 1]} : vector<8x512xf32> to vector<8x128xf32>
    %105 = arith.negf %104 : vector<8x128xf32>
    %106 = math.exp %105 : vector<8x128xf32>
    %cst_32 = arith.constant 1.000000e+00 : f32
    %107 = vector.broadcast %cst_32 : f32 to vector<8x128xf32>
    %108 = arith.addf %107, %106 : vector<8x128xf32>
    %109 = arith.divf %107, %108 : vector<8x128xf32>
    %110 = arith.mulf %101, %41 : vector<8x128xf32>
    %111 = arith.mulf %95, %103 : vector<8x128xf32>
    %112 = arith.addf %110, %111 : vector<8x128xf32>
    %113 = math.tanh %112 : vector<8x128xf32>
    %114 = arith.mulf %109, %113 : vector<8x128xf32>
    %115 = arith.index_cast %80 : i32 to index
    %c0_33 = arith.constant 0 : index
    %116 = vector.load %arg9[%115, %c0_33] : memref<64x256xf32, #tpu.memory_space<vmem>>, vector<8x128xf32>
    tpu.vector_store %arg9[%115, %c0_33], %114 {strides = array<i32>} : memref<64x256xf32, #tpu.memory_space<vmem>>, vector<8x128xf32>,
    %117 = arith.index_cast %83 : i32 to index
    %c512_34 = arith.constant 512 : index
    %118 = vector.load %arg12[%117, %c512_34] : memref<64x1024xf32, #tpu.memory_space<vmem>>, vector<8x512xf32>
    %c0_35 = arith.constant 0 : index
    %c0_36 = arith.constant 0 : index
    %119 = vector.load %arg4[%c0_35, %c0_36] : memref<128x512xbf16, #tpu.memory_space<vmem>>, vector<128x512xbf16>
    %120 = arith.truncf %76 : vector<8x128xf32> to vector<8x128xbf16>
    %cst_37 = arith.constant dense<0.000000e+00> : vector<8x512xf32>
    %121 = tpu.matmul %120, %119, %cst_37 {dimension_numbers = #tpu.dot_dimension_numbers<[1], [0], [0], [1], [0, 0, 1, 1], [], []>} : vector<8x128xbf16>, vector<128x512xbf16>, vector<8x512xf32> -> vector<8x512xf32>
    %122 = arith.addf %118, %121 : vector<8x512xf32>
    %123 = vector.extract_strided_slice %122 {offsets = [0, 0], sizes = [8, 128], strides = [1, 1]} : vector<8x512xf32> to vector<8x128xf32>
    %124 = arith.negf %123 : vector<8x128xf32>
    %125 = math.exp %124 : vector<8x128xf32>
    %cst_38 = arith.constant 1.000000e+00 : f32
    %126 = vector.broadcast %cst_38 : f32 to vector<8x128xf32>
    %127 = arith.addf %126, %125 : vector<8x128xf32>
    %128 = arith.divf %126, %127 : vector<8x128xf32>
    %129 = vector.extract_strided_slice %122 {offsets = [0, 128], sizes = [8, 128], strides = [1, 1]} : vector<8x512xf32> to vector<8x128xf32>
    %130 = arith.negf %129 : vector<8x128xf32>
    %131 = math.exp %130 : vector<8x128xf32>
    %cst_39 = arith.constant 1.000000e+00 : f32
    %132 = vector.broadcast %cst_39 : f32 to vector<8x128xf32>
    %133 = arith.addf %132, %131 : vector<8x128xf32>
    %134 = arith.divf %132, %133 : vector<8x128xf32>
    %135 = vector.extract_strided_slice %122 {offsets = [0, 256], sizes = [8, 128], strides = [1, 1]} : vector<8x512xf32> to vector<8x128xf32>
    %136 = math.tanh %135 : vector<8x128xf32>
    %137 = vector.extract_strided_slice %122 {offsets = [0, 384], sizes = [8, 128], strides = [1, 1]} : vector<8x512xf32> to vector<8x128xf32>
    %138 = arith.negf %137 : vector<8x128xf32>
    %139 = math.exp %138 : vector<8x128xf32>
    %cst_40 = arith.constant 1.000000e+00 : f32
    %140 = vector.broadcast %cst_40 : f32 to vector<8x128xf32>
    %141 = arith.addf %140, %139 : vector<8x128xf32>
    %142 = arith.divf %140, %141 : vector<8x128xf32>
    %143 = arith.mulf %134, %74 : vector<8x128xf32>
    %144 = arith.mulf %128, %136 : vector<8x128xf32>
    %145 = arith.addf %143, %144 : vector<8x128xf32>
    %146 = math.tanh %145 : vector<8x128xf32>
    %147 = arith.mulf %142, %146 : vector<8x128xf32>
    %148 = arith.index_cast %83 : i32 to index
    %c128_41 = arith.constant 128 : index
    %149 = vector.load %arg9[%148, %c128_41] : memref<64x256xf32, #tpu.memory_space<vmem>>, vector<8x128xf32>
    tpu.vector_store %arg9[%148, %c128_41], %147 {strides = array<i32>} : memref<64x256xf32, #tpu.memory_space<vmem>>, vector<8x128xf32>,
    %c2_i32 = arith.constant 2 : i32
    %c8_i32_42 = arith.constant 8 : i32
    %150 = arith.muli %c2_i32, %c8_i32_42 : i32
    %151 = tpu.assume_multiple %150, 8 : i32
    %c7_i32_43 = arith.constant 7 : i32
    %152 = arith.subi %c7_i32_43, %c2_i32 : i32
    %c8_i32_44 = arith.constant 8 : i32
    %153 = arith.muli %152, %c8_i32_44 : i32
    %154 = tpu.assume_multiple %153, 8 : i32
    %155 = arith.index_cast %151 : i32 to index
    %c0_45 = arith.constant 0 : index
    %156 = vector.load %arg12[%155, %c0_45] : memref<64x1024xf32, #tpu.memory_space<vmem>>, vector<8x512xf32>
    %c0_46 = arith.constant 0 : index
    %c0_47 = arith.constant 0 : index
    %157 = vector.load %arg3[%c0_46, %c0_47] : memref<128x512xbf16, #tpu.memory_space<vmem>>, vector<128x512xbf16>
    %158 = arith.truncf %114 : vector<8x128xf32> to vector<8x128xbf16>
    %cst_48 = arith.constant dense<0.000000e+00> : vector<8x512xf32>
    %159 = tpu.matmul %158, %157, %cst_48 {dimension_numbers = #tpu.dot_dimension_numbers<[1], [0], [0], [1], [0, 0, 1, 1], [], []>} : vector<8x128xbf16>, vector<128x512xbf16>, vector<8x512xf32> -> vector<8x512xf32>
    %160 = arith.addf %156, %159 : vector<8x512xf32>
    %161 = vector.extract_strided_slice %160 {offsets = [0, 0], sizes = [8, 128], strides = [1, 1]} : vector<8x512xf32> to vector<8x128xf32>
    %162 = arith.negf %161 : vector<8x128xf32>
    %163 = math.exp %162 : vector<8x128xf32>
    %cst_49 = arith.constant 1.000000e+00 : f32
    %164 = vector.broadcast %cst_49 : f32 to vector<8x128xf32>
    %165 = arith.addf %164, %163 : vector<8x128xf32>
    %166 = arith.divf %164, %165 : vector<8x128xf32>
    %167 = vector.extract_strided_slice %160 {offsets = [0, 128], sizes = [8, 128], strides = [1, 1]} : vector<8x512xf32> to vector<8x128xf32>
    %168 = arith.negf %167 : vector<8x128xf32>
    %169 = math.exp %168 : vector<8x128xf32>
    %cst_50 = arith.constant 1.000000e+00 : f32
    %170 = vector.broadcast %cst_50 : f32 to vector<8x128xf32>
    %171 = arith.addf %170, %169 : vector<8x128xf32>
    %172 = arith.divf %170, %171 : vector<8x128xf32>
    %173 = vector.extract_strided_slice %160 {offsets = [0, 256], sizes = [8, 128], strides = [1, 1]} : vector<8x512xf32> to vector<8x128xf32>
    %174 = math.tanh %173 : vector<8x128xf32>
    %175 = vector.extract_strided_slice %160 {offsets = [0, 384], sizes = [8, 128], strides = [1, 1]} : vector<8x512xf32> to vector<8x128xf32>
    %176 = arith.negf %175 : vector<8x128xf32>
    %177 = math.exp %176 : vector<8x128xf32>
    %cst_51 = arith.constant 1.000000e+00 : f32
    %178 = vector.broadcast %cst_51 : f32 to vector<8x128xf32>
    %179 = arith.addf %178, %177 : vector<8x128xf32>
    %180 = arith.divf %178, %179 : vector<8x128xf32>
    %181 = arith.mulf %172, %112 : vector<8x128xf32>
    %182 = arith.mulf %166, %174 : vector<8x128xf32>
    %183 = arith.addf %181, %182 : vector<8x128xf32>
    %184 = math.tanh %183 : vector<8x128xf32>
    %185 = arith.mulf %180, %184 : vector<8x128xf32>
    %186 = arith.index_cast %151 : i32 to index
    %c0_52 = arith.constant 0 : index
    %187 = vector.load %arg9[%186, %c0_52] : memref<64x256xf32, #tpu.memory_space<vmem>>, vector<8x128xf32>
    tpu.vector_store %arg9[%186, %c0_52], %185 {strides = array<i32>} : memref<64x256xf32, #tpu.memory_space<vmem>>, vector<8x128xf32>,
    %188 = arith.index_cast %154 : i32 to index
    %c512_53 = arith.constant 512 : index
    %189 = vector.load %arg12[%188, %c512_53] : memref<64x1024xf32, #tpu.memory_space<vmem>>, vector<8x512xf32>
    %c0_54 = arith.constant 0 : index
    %c0_55 = arith.constant 0 : index
    %190 = vector.load %arg4[%c0_54, %c0_55] : memref<128x512xbf16, #tpu.memory_space<vmem>>, vector<128x512xbf16>
    %191 = arith.truncf %147 : vector<8x128xf32> to vector<8x128xbf16>
    %cst_56 = arith.constant dense<0.000000e+00> : vector<8x512xf32>
    %192 = tpu.matmul %191, %190, %cst_56 {dimension_numbers = #tpu.dot_dimension_numbers<[1], [0], [0], [1], [0, 0, 1, 1], [], []>} : vector<8x128xbf16>, vector<128x512xbf16>, vector<8x512xf32> -> vector<8x512xf32>
    %193 = arith.addf %189, %192 : vector<8x512xf32>
    %194 = vector.extract_strided_slice %193 {offsets = [0, 0], sizes = [8, 128], strides = [1, 1]} : vector<8x512xf32> to vector<8x128xf32>
    %195 = arith.negf %194 : vector<8x128xf32>
    %196 = math.exp %195 : vector<8x128xf32>
    %cst_57 = arith.constant 1.000000e+00 : f32
    %197 = vector.broadcast %cst_57 : f32 to vector<8x128xf32>
    %198 = arith.addf %197, %196 : vector<8x128xf32>
    %199 = arith.divf %197, %198 : vector<8x128xf32>
    %200 = vector.extract_strided_slice %193 {offsets = [0, 128], sizes = [8, 128], strides = [1, 1]} : vector<8x512xf32> to vector<8x128xf32>
    %201 = arith.negf %200 : vector<8x128xf32>
    %202 = math.exp %201 : vector<8x128xf32>
    %cst_58 = arith.constant 1.000000e+00 : f32
    %203 = vector.broadcast %cst_58 : f32 to vector<8x128xf32>
    %204 = arith.addf %203, %202 : vector<8x128xf32>
    %205 = arith.divf %203, %204 : vector<8x128xf32>
    %206 = vector.extract_strided_slice %193 {offsets = [0, 256], sizes = [8, 128], strides = [1, 1]} : vector<8x512xf32> to vector<8x128xf32>
    %207 = math.tanh %206 : vector<8x128xf32>
    %208 = vector.extract_strided_slice %193 {offsets = [0, 384], sizes = [8, 128], strides = [1, 1]} : vector<8x512xf32> to vector<8x128xf32>
    %209 = arith.negf %208 : vector<8x128xf32>
    %210 = math.exp %209 : vector<8x128xf32>
    %cst_59 = arith.constant 1.000000e+00 : f32
    %211 = vector.broadcast %cst_59 : f32 to vector<8x128xf32>
    %212 = arith.addf %211, %210 : vector<8x128xf32>
    %213 = arith.divf %211, %212 : vector<8x128xf32>
    %214 = arith.mulf %205, %145 : vector<8x128xf32>
    %215 = arith.mulf %199, %207 : vector<8x128xf32>
    %216 = arith.addf %214, %215 : vector<8x128xf32>
    %217 = math.tanh %216 : vector<8x128xf32>
    %218 = arith.mulf %213, %217 : vector<8x128xf32>
    %219 = arith.index_cast %154 : i32 to index
    %c128_60 = arith.constant 128 : index
    %220 = vector.load %arg9[%219, %c128_60] : memref<64x256xf32, #tpu.memory_space<vmem>>, vector<8x128xf32>
    tpu.vector_store %arg9[%219, %c128_60], %218 {strides = array<i32>} : memref<64x256xf32, #tpu.memory_space<vmem>>, vector<8x128xf32>,
    %c3_i32 = arith.constant 3 : i32
    %c8_i32_61 = arith.constant 8 : i32
    %221 = arith.muli %c3_i32, %c8_i32_61 : i32
    %222 = tpu.assume_multiple %221, 8 : i32
    %c7_i32_62 = arith.constant 7 : i32
    %223 = arith.subi %c7_i32_62, %c3_i32 : i32
    %c8_i32_63 = arith.constant 8 : i32
    %224 = arith.muli %223, %c8_i32_63 : i32
    %225 = tpu.assume_multiple %224, 8 : i32
    %226 = arith.index_cast %222 : i32 to index
    %c0_64 = arith.constant 0 : index
    %227 = vector.load %arg12[%226, %c0_64] : memref<64x1024xf32, #tpu.memory_space<vmem>>, vector<8x512xf32>
    %c0_65 = arith.constant 0 : index
    %c0_66 = arith.constant 0 : index
    %228 = vector.load %arg3[%c0_65, %c0_66] : memref<128x512xbf16, #tpu.memory_space<vmem>>, vector<128x512xbf16>
    %229 = arith.truncf %185 : vector<8x128xf32> to vector<8x128xbf16>
    %cst_67 = arith.constant dense<0.000000e+00> : vector<8x512xf32>
    %230 = tpu.matmul %229, %228, %cst_67 {dimension_numbers = #tpu.dot_dimension_numbers<[1], [0], [0], [1], [0, 0, 1, 1], [], []>} : vector<8x128xbf16>, vector<128x512xbf16>, vector<8x512xf32> -> vector<8x512xf32>
    %231 = arith.addf %227, %230 : vector<8x512xf32>
    %232 = vector.extract_strided_slice %231 {offsets = [0, 0], sizes = [8, 128], strides = [1, 1]} : vector<8x512xf32> to vector<8x128xf32>
    %233 = arith.negf %232 : vector<8x128xf32>
    %234 = math.exp %233 : vector<8x128xf32>
    %cst_68 = arith.constant 1.000000e+00 : f32
    %235 = vector.broadcast %cst_68 : f32 to vector<8x128xf32>
    %236 = arith.addf %235, %234 : vector<8x128xf32>
    %237 = arith.divf %235, %236 : vector<8x128xf32>
    %238 = vector.extract_strided_slice %231 {offsets = [0, 128], sizes = [8, 128], strides = [1, 1]} : vector<8x512xf32> to vector<8x128xf32>
    %239 = arith.negf %238 : vector<8x128xf32>
    %240 = math.exp %239 : vector<8x128xf32>
    %cst_69 = arith.constant 1.000000e+00 : f32
    %241 = vector.broadcast %cst_69 : f32 to vector<8x128xf32>
    %242 = arith.addf %241, %240 : vector<8x128xf32>
    %243 = arith.divf %241, %242 : vector<8x128xf32>
    %244 = vector.extract_strided_slice %231 {offsets = [0, 256], sizes = [8, 128], strides = [1, 1]} : vector<8x512xf32> to vector<8x128xf32>
    %245 = math.tanh %244 : vector<8x128xf32>
    %246 = vector.extract_strided_slice %231 {offsets = [0, 384], sizes = [8, 128], strides = [1, 1]} : vector<8x512xf32> to vector<8x128xf32>
    %247 = arith.negf %246 : vector<8x128xf32>
    %248 = math.exp %247 : vector<8x128xf32>
    %cst_70 = arith.constant 1.000000e+00 : f32
    %249 = vector.broadcast %cst_70 : f32 to vector<8x128xf32>
    %250 = arith.addf %249, %248 : vector<8x128xf32>
    %251 = arith.divf %249, %250 : vector<8x128xf32>
    %252 = arith.mulf %243, %183 : vector<8x128xf32>
    %253 = arith.mulf %237, %245 : vector<8x128xf32>
    %254 = arith.addf %252, %253 : vector<8x128xf32>
    %255 = math.tanh %254 : vector<8x128xf32>
    %256 = arith.mulf %251, %255 : vector<8x128xf32>
    %257 = arith.index_cast %222 : i32 to index
    %c0_71 = arith.constant 0 : index
    %258 = vector.load %arg9[%257, %c0_71] : memref<64x256xf32, #tpu.memory_space<vmem>>, vector<8x128xf32>
    tpu.vector_store %arg9[%257, %c0_71], %256 {strides = array<i32>} : memref<64x256xf32, #tpu.memory_space<vmem>>, vector<8x128xf32>,
    %259 = arith.index_cast %225 : i32 to index
    %c512_72 = arith.constant 512 : index
    %260 = vector.load %arg12[%259, %c512_72] : memref<64x1024xf32, #tpu.memory_space<vmem>>, vector<8x512xf32>
    %c0_73 = arith.constant 0 : index
    %c0_74 = arith.constant 0 : index
    %261 = vector.load %arg4[%c0_73, %c0_74] : memref<128x512xbf16, #tpu.memory_space<vmem>>, vector<128x512xbf16>
    %262 = arith.truncf %218 : vector<8x128xf32> to vector<8x128xbf16>
    %cst_75 = arith.constant dense<0.000000e+00> : vector<8x512xf32>
    %263 = tpu.matmul %262, %261, %cst_75 {dimension_numbers = #tpu.dot_dimension_numbers<[1], [0], [0], [1], [0, 0, 1, 1], [], []>} : vector<8x128xbf16>, vector<128x512xbf16>, vector<8x512xf32> -> vector<8x512xf32>
    %264 = arith.addf %260, %263 : vector<8x512xf32>
    %265 = vector.extract_strided_slice %264 {offsets = [0, 0], sizes = [8, 128], strides = [1, 1]} : vector<8x512xf32> to vector<8x128xf32>
    %266 = arith.negf %265 : vector<8x128xf32>
    %267 = math.exp %266 : vector<8x128xf32>
    %cst_76 = arith.constant 1.000000e+00 : f32
    %268 = vector.broadcast %cst_76 : f32 to vector<8x128xf32>
    %269 = arith.addf %268, %267 : vector<8x128xf32>
    %270 = arith.divf %268, %269 : vector<8x128xf32>
    %271 = vector.extract_strided_slice %264 {offsets = [0, 128], sizes = [8, 128], strides = [1, 1]} : vector<8x512xf32> to vector<8x128xf32>
    %272 = arith.negf %271 : vector<8x128xf32>
    %273 = math.exp %272 : vector<8x128xf32>
    %cst_77 = arith.constant 1.000000e+00 : f32
    %274 = vector.broadcast %cst_77 : f32 to vector<8x128xf32>
    %275 = arith.addf %274, %273 : vector<8x128xf32>
    %276 = arith.divf %274, %275 : vector<8x128xf32>
    %277 = vector.extract_strided_slice %264 {offsets = [0, 256], sizes = [8, 128], strides = [1, 1]} : vector<8x512xf32> to vector<8x128xf32>
    %278 = math.tanh %277 : vector<8x128xf32>
    %279 = vector.extract_strided_slice %264 {offsets = [0, 384], sizes = [8, 128], strides = [1, 1]} : vector<8x512xf32> to vector<8x128xf32>
    %280 = arith.negf %279 : vector<8x128xf32>
    %281 = math.exp %280 : vector<8x128xf32>
    %cst_78 = arith.constant 1.000000e+00 : f32
    %282 = vector.broadcast %cst_78 : f32 to vector<8x128xf32>
    %283 = arith.addf %282, %281 : vector<8x128xf32>
    %284 = arith.divf %282, %283 : vector<8x128xf32>
    %285 = arith.mulf %276, %216 : vector<8x128xf32>
    %286 = arith.mulf %270, %278 : vector<8x128xf32>
    %287 = arith.addf %285, %286 : vector<8x128xf32>
    %288 = math.tanh %287 : vector<8x128xf32>
    %289 = arith.mulf %284, %288 : vector<8x128xf32>
    %290 = arith.index_cast %225 : i32 to index
    %c128_79 = arith.constant 128 : index
    %291 = vector.load %arg9[%290, %c128_79] : memref<64x256xf32, #tpu.memory_space<vmem>>, vector<8x128xf32>
    tpu.vector_store %arg9[%290, %c128_79], %289 {strides = array<i32>} : memref<64x256xf32, #tpu.memory_space<vmem>>, vector<8x128xf32>,
    %c4_i32 = arith.constant 4 : i32
    %c8_i32_80 = arith.constant 8 : i32
    %292 = arith.muli %c4_i32, %c8_i32_80 : i32
    %293 = tpu.assume_multiple %292, 8 : i32
    %c7_i32_81 = arith.constant 7 : i32
    %294 = arith.subi %c7_i32_81, %c4_i32 : i32
    %c8_i32_82 = arith.constant 8 : i32
    %295 = arith.muli %294, %c8_i32_82 : i32
    %296 = tpu.assume_multiple %295, 8 : i32
    %297 = arith.index_cast %293 : i32 to index
    %c0_83 = arith.constant 0 : index
    %298 = vector.load %arg12[%297, %c0_83] : memref<64x1024xf32, #tpu.memory_space<vmem>>, vector<8x512xf32>
    %c0_84 = arith.constant 0 : index
    %c0_85 = arith.constant 0 : index
    %299 = vector.load %arg3[%c0_84, %c0_85] : memref<128x512xbf16, #tpu.memory_space<vmem>>, vector<128x512xbf16>
    %300 = arith.truncf %256 : vector<8x128xf32> to vector<8x128xbf16>
    %cst_86 = arith.constant dense<0.000000e+00> : vector<8x512xf32>
    %301 = tpu.matmul %300, %299, %cst_86 {dimension_numbers = #tpu.dot_dimension_numbers<[1], [0], [0], [1], [0, 0, 1, 1], [], []>} : vector<8x128xbf16>, vector<128x512xbf16>, vector<8x512xf32> -> vector<8x512xf32>
    %302 = arith.addf %298, %301 : vector<8x512xf32>
    %303 = vector.extract_strided_slice %302 {offsets = [0, 0], sizes = [8, 128], strides = [1, 1]} : vector<8x512xf32> to vector<8x128xf32>
    %304 = arith.negf %303 : vector<8x128xf32>
    %305 = math.exp %304 : vector<8x128xf32>
    %cst_87 = arith.constant 1.000000e+00 : f32
    %306 = vector.broadcast %cst_87 : f32 to vector<8x128xf32>
    %307 = arith.addf %306, %305 : vector<8x128xf32>
    %308 = arith.divf %306, %307 : vector<8x128xf32>
    %309 = vector.extract_strided_slice %302 {offsets = [0, 128], sizes = [8, 128], strides = [1, 1]} : vector<8x512xf32> to vector<8x128xf32>
    %310 = arith.negf %309 : vector<8x128xf32>
    %311 = math.exp %310 : vector<8x128xf32>
    %cst_88 = arith.constant 1.000000e+00 : f32
    %312 = vector.broadcast %cst_88 : f32 to vector<8x128xf32>
    %313 = arith.addf %312, %311 : vector<8x128xf32>
    %314 = arith.divf %312, %313 : vector<8x128xf32>
    %315 = vector.extract_strided_slice %302 {offsets = [0, 256], sizes = [8, 128], strides = [1, 1]} : vector<8x512xf32> to vector<8x128xf32>
    %316 = math.tanh %315 : vector<8x128xf32>
    %317 = vector.extract_strided_slice %302 {offsets = [0, 384], sizes = [8, 128], strides = [1, 1]} : vector<8x512xf32> to vector<8x128xf32>
    %318 = arith.negf %317 : vector<8x128xf32>
    %319 = math.exp %318 : vector<8x128xf32>
    %cst_89 = arith.constant 1.000000e+00 : f32
    %320 = vector.broadcast %cst_89 : f32 to vector<8x128xf32>
    %321 = arith.addf %320, %319 : vector<8x128xf32>
    %322 = arith.divf %320, %321 : vector<8x128xf32>
    %323 = arith.mulf %314, %254 : vector<8x128xf32>
    %324 = arith.mulf %308, %316 : vector<8x128xf32>
    %325 = arith.addf %323, %324 : vector<8x128xf32>
    %326 = math.tanh %325 : vector<8x128xf32>
    %327 = arith.mulf %322, %326 : vector<8x128xf32>
    %328 = arith.index_cast %293 : i32 to index
    %c0_90 = arith.constant 0 : index
    %329 = vector.load %arg9[%328, %c0_90] : memref<64x256xf32, #tpu.memory_space<vmem>>, vector<8x128xf32>
    tpu.vector_store %arg9[%328, %c0_90], %327 {strides = array<i32>} : memref<64x256xf32, #tpu.memory_space<vmem>>, vector<8x128xf32>,
    %330 = arith.index_cast %296 : i32 to index
    %c512_91 = arith.constant 512 : index
    %331 = vector.load %arg12[%330, %c512_91] : memref<64x1024xf32, #tpu.memory_space<vmem>>, vector<8x512xf32>
    %c0_92 = arith.constant 0 : index
    %c0_93 = arith.constant 0 : index
    %332 = vector.load %arg4[%c0_92, %c0_93] : memref<128x512xbf16, #tpu.memory_space<vmem>>, vector<128x512xbf16>
    %333 = arith.truncf %289 : vector<8x128xf32> to vector<8x128xbf16>
    %cst_94 = arith.constant dense<0.000000e+00> : vector<8x512xf32>
    %334 = tpu.matmul %333, %332, %cst_94 {dimension_numbers = #tpu.dot_dimension_numbers<[1], [0], [0], [1], [0, 0, 1, 1], [], []>} : vector<8x128xbf16>, vector<128x512xbf16>, vector<8x512xf32> -> vector<8x512xf32>
    %335 = arith.addf %331, %334 : vector<8x512xf32>
    %336 = vector.extract_strided_slice %335 {offsets = [0, 0], sizes = [8, 128], strides = [1, 1]} : vector<8x512xf32> to vector<8x128xf32>
    %337 = arith.negf %336 : vector<8x128xf32>
    %338 = math.exp %337 : vector<8x128xf32>
    %cst_95 = arith.constant 1.000000e+00 : f32
    %339 = vector.broadcast %cst_95 : f32 to vector<8x128xf32>
    %340 = arith.addf %339, %338 : vector<8x128xf32>
    %341 = arith.divf %339, %340 : vector<8x128xf32>
    %342 = vector.extract_strided_slice %335 {offsets = [0, 128], sizes = [8, 128], strides = [1, 1]} : vector<8x512xf32> to vector<8x128xf32>
    %343 = arith.negf %342 : vector<8x128xf32>
    %344 = math.exp %343 : vector<8x128xf32>
    %cst_96 = arith.constant 1.000000e+00 : f32
    %345 = vector.broadcast %cst_96 : f32 to vector<8x128xf32>
    %346 = arith.addf %345, %344 : vector<8x128xf32>
    %347 = arith.divf %345, %346 : vector<8x128xf32>
    %348 = vector.extract_strided_slice %335 {offsets = [0, 256], sizes = [8, 128], strides = [1, 1]} : vector<8x512xf32> to vector<8x128xf32>
    %349 = math.tanh %348 : vector<8x128xf32>
    %350 = vector.extract_strided_slice %335 {offsets = [0, 384], sizes = [8, 128], strides = [1, 1]} : vector<8x512xf32> to vector<8x128xf32>
    %351 = arith.negf %350 : vector<8x128xf32>
    %352 = math.exp %351 : vector<8x128xf32>
    %cst_97 = arith.constant 1.000000e+00 : f32
    %353 = vector.broadcast %cst_97 : f32 to vector<8x128xf32>
    %354 = arith.addf %353, %352 : vector<8x128xf32>
    %355 = arith.divf %353, %354 : vector<8x128xf32>
    %356 = arith.mulf %347, %287 : vector<8x128xf32>
    %357 = arith.mulf %341, %349 : vector<8x128xf32>
    %358 = arith.addf %356, %357 : vector<8x128xf32>
    %359 = math.tanh %358 : vector<8x128xf32>
    %360 = arith.mulf %355, %359 : vector<8x128xf32>
    %361 = arith.index_cast %296 : i32 to index
    %c128_98 = arith.constant 128 : index
    %362 = vector.load %arg9[%361, %c128_98] : memref<64x256xf32, #tpu.memory_space<vmem>>, vector<8x128xf32>
    tpu.vector_store %arg9[%361, %c128_98], %360 {strides = array<i32>} : memref<64x256xf32, #tpu.memory_space<vmem>>, vector<8x128xf32>,
    %c5_i32 = arith.constant 5 : i32
    %c8_i32_99 = arith.constant 8 : i32
    %363 = arith.muli %c5_i32, %c8_i32_99 : i32
    %364 = tpu.assume_multiple %363, 8 : i32
    %c7_i32_100 = arith.constant 7 : i32
    %365 = arith.subi %c7_i32_100, %c5_i32 : i32
    %c8_i32_101 = arith.constant 8 : i32
    %366 = arith.muli %365, %c8_i32_101 : i32
    %367 = tpu.assume_multiple %366, 8 : i32
    %368 = arith.index_cast %364 : i32 to index
    %c0_102 = arith.constant 0 : index
    %369 = vector.load %arg12[%368, %c0_102] : memref<64x1024xf32, #tpu.memory_space<vmem>>, vector<8x512xf32>
    %c0_103 = arith.constant 0 : index
    %c0_104 = arith.constant 0 : index
    %370 = vector.load %arg3[%c0_103, %c0_104] : memref<128x512xbf16, #tpu.memory_space<vmem>>, vector<128x512xbf16>
    %371 = arith.truncf %327 : vector<8x128xf32> to vector<8x128xbf16>
    %cst_105 = arith.constant dense<0.000000e+00> : vector<8x512xf32>
    %372 = tpu.matmul %371, %370, %cst_105 {dimension_numbers = #tpu.dot_dimension_numbers<[1], [0], [0], [1], [0, 0, 1, 1], [], []>} : vector<8x128xbf16>, vector<128x512xbf16>, vector<8x512xf32> -> vector<8x512xf32>
    %373 = arith.addf %369, %372 : vector<8x512xf32>
    %374 = vector.extract_strided_slice %373 {offsets = [0, 0], sizes = [8, 128], strides = [1, 1]} : vector<8x512xf32> to vector<8x128xf32>
    %375 = arith.negf %374 : vector<8x128xf32>
    %376 = math.exp %375 : vector<8x128xf32>
    %cst_106 = arith.constant 1.000000e+00 : f32
    %377 = vector.broadcast %cst_106 : f32 to vector<8x128xf32>
    %378 = arith.addf %377, %376 : vector<8x128xf32>
    %379 = arith.divf %377, %378 : vector<8x128xf32>
    %380 = vector.extract_strided_slice %373 {offsets = [0, 128], sizes = [8, 128], strides = [1, 1]} : vector<8x512xf32> to vector<8x128xf32>
    %381 = arith.negf %380 : vector<8x128xf32>
    %382 = math.exp %381 : vector<8x128xf32>
    %cst_107 = arith.constant 1.000000e+00 : f32
    %383 = vector.broadcast %cst_107 : f32 to vector<8x128xf32>
    %384 = arith.addf %383, %382 : vector<8x128xf32>
    %385 = arith.divf %383, %384 : vector<8x128xf32>
    %386 = vector.extract_strided_slice %373 {offsets = [0, 256], sizes = [8, 128], strides = [1, 1]} : vector<8x512xf32> to vector<8x128xf32>
    %387 = math.tanh %386 : vector<8x128xf32>
    %388 = vector.extract_strided_slice %373 {offsets = [0, 384], sizes = [8, 128], strides = [1, 1]} : vector<8x512xf32> to vector<8x128xf32>
    %389 = arith.negf %388 : vector<8x128xf32>
    %390 = math.exp %389 : vector<8x128xf32>
    %cst_108 = arith.constant 1.000000e+00 : f32
    %391 = vector.broadcast %cst_108 : f32 to vector<8x128xf32>
    %392 = arith.addf %391, %390 : vector<8x128xf32>
    %393 = arith.divf %391, %392 : vector<8x128xf32>
    %394 = arith.mulf %385, %325 : vector<8x128xf32>
    %395 = arith.mulf %379, %387 : vector<8x128xf32>
    %396 = arith.addf %394, %395 : vector<8x128xf32>
    %397 = math.tanh %396 : vector<8x128xf32>
    %398 = arith.mulf %393, %397 : vector<8x128xf32>
    %399 = arith.index_cast %364 : i32 to index
    %c0_109 = arith.constant 0 : index
    %400 = vector.load %arg9[%399, %c0_109] : memref<64x256xf32, #tpu.memory_space<vmem>>, vector<8x128xf32>
    tpu.vector_store %arg9[%399, %c0_109], %398 {strides = array<i32>} : memref<64x256xf32, #tpu.memory_space<vmem>>, vector<8x128xf32>,
    %401 = arith.index_cast %367 : i32 to index
    %c512_110 = arith.constant 512 : index
    %402 = vector.load %arg12[%401, %c512_110] : memref<64x1024xf32, #tpu.memory_space<vmem>>, vector<8x512xf32>
    %c0_111 = arith.constant 0 : index
    %c0_112 = arith.constant 0 : index
    %403 = vector.load %arg4[%c0_111, %c0_112] : memref<128x512xbf16, #tpu.memory_space<vmem>>, vector<128x512xbf16>
    %404 = arith.truncf %360 : vector<8x128xf32> to vector<8x128xbf16>
    %cst_113 = arith.constant dense<0.000000e+00> : vector<8x512xf32>
    %405 = tpu.matmul %404, %403, %cst_113 {dimension_numbers = #tpu.dot_dimension_numbers<[1], [0], [0], [1], [0, 0, 1, 1], [], []>} : vector<8x128xbf16>, vector<128x512xbf16>, vector<8x512xf32> -> vector<8x512xf32>
    %406 = arith.addf %402, %405 : vector<8x512xf32>
    %407 = vector.extract_strided_slice %406 {offsets = [0, 0], sizes = [8, 128], strides = [1, 1]} : vector<8x512xf32> to vector<8x128xf32>
    %408 = arith.negf %407 : vector<8x128xf32>
    %409 = math.exp %408 : vector<8x128xf32>
    %cst_114 = arith.constant 1.000000e+00 : f32
    %410 = vector.broadcast %cst_114 : f32 to vector<8x128xf32>
    %411 = arith.addf %410, %409 : vector<8x128xf32>
    %412 = arith.divf %410, %411 : vector<8x128xf32>
    %413 = vector.extract_strided_slice %406 {offsets = [0, 128], sizes = [8, 128], strides = [1, 1]} : vector<8x512xf32> to vector<8x128xf32>
    %414 = arith.negf %413 : vector<8x128xf32>
    %415 = math.exp %414 : vector<8x128xf32>
    %cst_115 = arith.constant 1.000000e+00 : f32
    %416 = vector.broadcast %cst_115 : f32 to vector<8x128xf32>
    %417 = arith.addf %416, %415 : vector<8x128xf32>
    %418 = arith.divf %416, %417 : vector<8x128xf32>
    %419 = vector.extract_strided_slice %406 {offsets = [0, 256], sizes = [8, 128], strides = [1, 1]} : vector<8x512xf32> to vector<8x128xf32>
    %420 = math.tanh %419 : vector<8x128xf32>
    %421 = vector.extract_strided_slice %406 {offsets = [0, 384], sizes = [8, 128], strides = [1, 1]} : vector<8x512xf32> to vector<8x128xf32>
    %422 = arith.negf %421 : vector<8x128xf32>
    %423 = math.exp %422 : vector<8x128xf32>
    %cst_116 = arith.constant 1.000000e+00 : f32
    %424 = vector.broadcast %cst_116 : f32 to vector<8x128xf32>
    %425 = arith.addf %424, %423 : vector<8x128xf32>
    %426 = arith.divf %424, %425 : vector<8x128xf32>
    %427 = arith.mulf %418, %358 : vector<8x128xf32>
    %428 = arith.mulf %412, %420 : vector<8x128xf32>
    %429 = arith.addf %427, %428 : vector<8x128xf32>
    %430 = math.tanh %429 : vector<8x128xf32>
    %431 = arith.mulf %426, %430 : vector<8x128xf32>
    %432 = arith.index_cast %367 : i32 to index
    %c128_117 = arith.constant 128 : index
    %433 = vector.load %arg9[%432, %c128_117] : memref<64x256xf32, #tpu.memory_space<vmem>>, vector<8x128xf32>
    tpu.vector_store %arg9[%432, %c128_117], %431 {strides = array<i32>} : memref<64x256xf32, #tpu.memory_space<vmem>>, vector<8x128xf32>,
    %c6_i32 = arith.constant 6 : i32
    %c8_i32_118 = arith.constant 8 : i32
    %434 = arith.muli %c6_i32, %c8_i32_118 : i32
    %435 = tpu.assume_multiple %434, 8 : i32
    %c7_i32_119 = arith.constant 7 : i32
    %436 = arith.subi %c7_i32_119, %c6_i32 : i32
    %c8_i32_120 = arith.constant 8 : i32
    %437 = arith.muli %436, %c8_i32_120 : i32
    %438 = tpu.assume_multiple %437, 8 : i32
    %439 = arith.index_cast %435 : i32 to index
    %c0_121 = arith.constant 0 : index
    %440 = vector.load %arg12[%439, %c0_121] : memref<64x1024xf32, #tpu.memory_space<vmem>>, vector<8x512xf32>
    %c0_122 = arith.constant 0 : index
    %c0_123 = arith.constant 0 : index
    %441 = vector.load %arg3[%c0_122, %c0_123] : memref<128x512xbf16, #tpu.memory_space<vmem>>, vector<128x512xbf16>
    %442 = arith.truncf %398 : vector<8x128xf32> to vector<8x128xbf16>
    %cst_124 = arith.constant dense<0.000000e+00> : vector<8x512xf32>
    %443 = tpu.matmul %442, %441, %cst_124 {dimension_numbers = #tpu.dot_dimension_numbers<[1], [0], [0], [1], [0, 0, 1, 1], [], []>} : vector<8x128xbf16>, vector<128x512xbf16>, vector<8x512xf32> -> vector<8x512xf32>
    %444 = arith.addf %440, %443 : vector<8x512xf32>
    %445 = vector.extract_strided_slice %444 {offsets = [0, 0], sizes = [8, 128], strides = [1, 1]} : vector<8x512xf32> to vector<8x128xf32>
    %446 = arith.negf %445 : vector<8x128xf32>
    %447 = math.exp %446 : vector<8x128xf32>
    %cst_125 = arith.constant 1.000000e+00 : f32
    %448 = vector.broadcast %cst_125 : f32 to vector<8x128xf32>
    %449 = arith.addf %448, %447 : vector<8x128xf32>
    %450 = arith.divf %448, %449 : vector<8x128xf32>
    %451 = vector.extract_strided_slice %444 {offsets = [0, 128], sizes = [8, 128], strides = [1, 1]} : vector<8x512xf32> to vector<8x128xf32>
    %452 = arith.negf %451 : vector<8x128xf32>
    %453 = math.exp %452 : vector<8x128xf32>
    %cst_126 = arith.constant 1.000000e+00 : f32
    %454 = vector.broadcast %cst_126 : f32 to vector<8x128xf32>
    %455 = arith.addf %454, %453 : vector<8x128xf32>
    %456 = arith.divf %454, %455 : vector<8x128xf32>
    %457 = vector.extract_strided_slice %444 {offsets = [0, 256], sizes = [8, 128], strides = [1, 1]} : vector<8x512xf32> to vector<8x128xf32>
    %458 = math.tanh %457 : vector<8x128xf32>
    %459 = vector.extract_strided_slice %444 {offsets = [0, 384], sizes = [8, 128], strides = [1, 1]} : vector<8x512xf32> to vector<8x128xf32>
    %460 = arith.negf %459 : vector<8x128xf32>
    %461 = math.exp %460 : vector<8x128xf32>
    %cst_127 = arith.constant 1.000000e+00 : f32
    %462 = vector.broadcast %cst_127 : f32 to vector<8x128xf32>
    %463 = arith.addf %462, %461 : vector<8x128xf32>
    %464 = arith.divf %462, %463 : vector<8x128xf32>
    %465 = arith.mulf %456, %396 : vector<8x128xf32>
    %466 = arith.mulf %450, %458 : vector<8x128xf32>
    %467 = arith.addf %465, %466 : vector<8x128xf32>
    %468 = math.tanh %467 : vector<8x128xf32>
    %469 = arith.mulf %464, %468 : vector<8x128xf32>
    %470 = arith.index_cast %435 : i32 to index
    %c0_128 = arith.constant 0 : index
    %471 = vector.load %arg9[%470, %c0_128] : memref<64x256xf32, #tpu.memory_space<vmem>>, vector<8x128xf32>
    tpu.vector_store %arg9[%470, %c0_128], %469 {strides = array<i32>} : memref<64x256xf32, #tpu.memory_space<vmem>>, vector<8x128xf32>,
    %472 = arith.index_cast %438 : i32 to index
    %c512_129 = arith.constant 512 : index
    %473 = vector.load %arg12[%472, %c512_129] : memref<64x1024xf32, #tpu.memory_space<vmem>>, vector<8x512xf32>
    %c0_130 = arith.constant 0 : index
    %c0_131 = arith.constant 0 : index
    %474 = vector.load %arg4[%c0_130, %c0_131] : memref<128x512xbf16, #tpu.memory_space<vmem>>, vector<128x512xbf16>
    %475 = arith.truncf %431 : vector<8x128xf32> to vector<8x128xbf16>
    %cst_132 = arith.constant dense<0.000000e+00> : vector<8x512xf32>
    %476 = tpu.matmul %475, %474, %cst_132 {dimension_numbers = #tpu.dot_dimension_numbers<[1], [0], [0], [1], [0, 0, 1, 1], [], []>} : vector<8x128xbf16>, vector<128x512xbf16>, vector<8x512xf32> -> vector<8x512xf32>
    %477 = arith.addf %473, %476 : vector<8x512xf32>
    %478 = vector.extract_strided_slice %477 {offsets = [0, 0], sizes = [8, 128], strides = [1, 1]} : vector<8x512xf32> to vector<8x128xf32>
    %479 = arith.negf %478 : vector<8x128xf32>
    %480 = math.exp %479 : vector<8x128xf32>
    %cst_133 = arith.constant 1.000000e+00 : f32
    %481 = vector.broadcast %cst_133 : f32 to vector<8x128xf32>
    %482 = arith.addf %481, %480 : vector<8x128xf32>
    %483 = arith.divf %481, %482 : vector<8x128xf32>
    %484 = vector.extract_strided_slice %477 {offsets = [0, 128], sizes = [8, 128], strides = [1, 1]} : vector<8x512xf32> to vector<8x128xf32>
    %485 = arith.negf %484 : vector<8x128xf32>
    %486 = math.exp %485 : vector<8x128xf32>
    %cst_134 = arith.constant 1.000000e+00 : f32
    %487 = vector.broadcast %cst_134 : f32 to vector<8x128xf32>
    %488 = arith.addf %487, %486 : vector<8x128xf32>
    %489 = arith.divf %487, %488 : vector<8x128xf32>
    %490 = vector.extract_strided_slice %477 {offsets = [0, 256], sizes = [8, 128], strides = [1, 1]} : vector<8x512xf32> to vector<8x128xf32>
    %491 = math.tanh %490 : vector<8x128xf32>
    %492 = vector.extract_strided_slice %477 {offsets = [0, 384], sizes = [8, 128], strides = [1, 1]} : vector<8x512xf32> to vector<8x128xf32>
    %493 = arith.negf %492 : vector<8x128xf32>
    %494 = math.exp %493 : vector<8x128xf32>
    %cst_135 = arith.constant 1.000000e+00 : f32
    %495 = vector.broadcast %cst_135 : f32 to vector<8x128xf32>
    %496 = arith.addf %495, %494 : vector<8x128xf32>
    %497 = arith.divf %495, %496 : vector<8x128xf32>
    %498 = arith.mulf %489, %429 : vector<8x128xf32>
    %499 = arith.mulf %483, %491 : vector<8x128xf32>
    %500 = arith.addf %498, %499 : vector<8x128xf32>
    %501 = math.tanh %500 : vector<8x128xf32>
    %502 = arith.mulf %497, %501 : vector<8x128xf32>
    %503 = arith.index_cast %438 : i32 to index
    %c128_136 = arith.constant 128 : index
    %504 = vector.load %arg9[%503, %c128_136] : memref<64x256xf32, #tpu.memory_space<vmem>>, vector<8x128xf32>
    tpu.vector_store %arg9[%503, %c128_136], %502 {strides = array<i32>} : memref<64x256xf32, #tpu.memory_space<vmem>>, vector<8x128xf32>,
    %c7_i32_137 = arith.constant 7 : i32
    %c8_i32_138 = arith.constant 8 : i32
    %505 = arith.muli %c7_i32_137, %c8_i32_138 : i32
    %506 = tpu.assume_multiple %505, 8 : i32
    %c7_i32_139 = arith.constant 7 : i32
    %507 = arith.subi %c7_i32_139, %c7_i32_137 : i32
    %c8_i32_140 = arith.constant 8 : i32
    %508 = arith.muli %507, %c8_i32_140 : i32
    %509 = tpu.assume_multiple %508, 8 : i32
    %510 = arith.index_cast %506 : i32 to index
    %c0_141 = arith.constant 0 : index
    %511 = vector.load %arg12[%510, %c0_141] : memref<64x1024xf32, #tpu.memory_space<vmem>>, vector<8x512xf32>
    %c0_142 = arith.constant 0 : index
    %c0_143 = arith.constant 0 : index
    %512 = vector.load %arg3[%c0_142, %c0_143] : memref<128x512xbf16, #tpu.memory_space<vmem>>, vector<128x512xbf16>
    %513 = arith.truncf %469 : vector<8x128xf32> to vector<8x128xbf16>
    %cst_144 = arith.constant dense<0.000000e+00> : vector<8x512xf32>
    %514 = tpu.matmul %513, %512, %cst_144 {dimension_numbers = #tpu.dot_dimension_numbers<[1], [0], [0], [1], [0, 0, 1, 1], [], []>} : vector<8x128xbf16>, vector<128x512xbf16>, vector<8x512xf32> -> vector<8x512xf32>
    %515 = arith.addf %511, %514 : vector<8x512xf32>
    %516 = vector.extract_strided_slice %515 {offsets = [0, 0], sizes = [8, 128], strides = [1, 1]} : vector<8x512xf32> to vector<8x128xf32>
    %517 = arith.negf %516 : vector<8x128xf32>
    %518 = math.exp %517 : vector<8x128xf32>
    %cst_145 = arith.constant 1.000000e+00 : f32
    %519 = vector.broadcast %cst_145 : f32 to vector<8x128xf32>
    %520 = arith.addf %519, %518 : vector<8x128xf32>
    %521 = arith.divf %519, %520 : vector<8x128xf32>
    %522 = vector.extract_strided_slice %515 {offsets = [0, 128], sizes = [8, 128], strides = [1, 1]} : vector<8x512xf32> to vector<8x128xf32>
    %523 = arith.negf %522 : vector<8x128xf32>
    %524 = math.exp %523 : vector<8x128xf32>
    %cst_146 = arith.constant 1.000000e+00 : f32
    %525 = vector.broadcast %cst_146 : f32 to vector<8x128xf32>
    %526 = arith.addf %525, %524 : vector<8x128xf32>
    %527 = arith.divf %525, %526 : vector<8x128xf32>
    %528 = vector.extract_strided_slice %515 {offsets = [0, 256], sizes = [8, 128], strides = [1, 1]} : vector<8x512xf32> to vector<8x128xf32>
    %529 = math.tanh %528 : vector<8x128xf32>
    %530 = vector.extract_strided_slice %515 {offsets = [0, 384], sizes = [8, 128], strides = [1, 1]} : vector<8x512xf32> to vector<8x128xf32>
    %531 = arith.negf %530 : vector<8x128xf32>
    %532 = math.exp %531 : vector<8x128xf32>
    %cst_147 = arith.constant 1.000000e+00 : f32
    %533 = vector.broadcast %cst_147 : f32 to vector<8x128xf32>
    %534 = arith.addf %533, %532 : vector<8x128xf32>
    %535 = arith.divf %533, %534 : vector<8x128xf32>
    %536 = arith.mulf %527, %467 : vector<8x128xf32>
    %537 = arith.mulf %521, %529 : vector<8x128xf32>
    %538 = arith.addf %536, %537 : vector<8x128xf32>
    %539 = math.tanh %538 : vector<8x128xf32>
    %540 = arith.mulf %535, %539 : vector<8x128xf32>
    %541 = arith.index_cast %506 : i32 to index
    %c0_148 = arith.constant 0 : index
    %542 = vector.load %arg9[%541, %c0_148] : memref<64x256xf32, #tpu.memory_space<vmem>>, vector<8x128xf32>
    tpu.vector_store %arg9[%541, %c0_148], %540 {strides = array<i32>} : memref<64x256xf32, #tpu.memory_space<vmem>>, vector<8x128xf32>,
    %543 = arith.index_cast %509 : i32 to index
    %c512_149 = arith.constant 512 : index
    %544 = vector.load %arg12[%543, %c512_149] : memref<64x1024xf32, #tpu.memory_space<vmem>>, vector<8x512xf32>
    %c0_150 = arith.constant 0 : index
    %c0_151 = arith.constant 0 : index
    %545 = vector.load %arg4[%c0_150, %c0_151] : memref<128x512xbf16, #tpu.memory_space<vmem>>, vector<128x512xbf16>
    %546 = arith.truncf %502 : vector<8x128xf32> to vector<8x128xbf16>
    %cst_152 = arith.constant dense<0.000000e+00> : vector<8x512xf32>
    %547 = tpu.matmul %546, %545, %cst_152 {dimension_numbers = #tpu.dot_dimension_numbers<[1], [0], [0], [1], [0, 0, 1, 1], [], []>} : vector<8x128xbf16>, vector<128x512xbf16>, vector<8x512xf32> -> vector<8x512xf32>
    %548 = arith.addf %544, %547 : vector<8x512xf32>
    %549 = vector.extract_strided_slice %548 {offsets = [0, 0], sizes = [8, 128], strides = [1, 1]} : vector<8x512xf32> to vector<8x128xf32>
    %550 = arith.negf %549 : vector<8x128xf32>
    %551 = math.exp %550 : vector<8x128xf32>
    %cst_153 = arith.constant 1.000000e+00 : f32
    %552 = vector.broadcast %cst_153 : f32 to vector<8x128xf32>
    %553 = arith.addf %552, %551 : vector<8x128xf32>
    %554 = arith.divf %552, %553 : vector<8x128xf32>
    %555 = vector.extract_strided_slice %548 {offsets = [0, 128], sizes = [8, 128], strides = [1, 1]} : vector<8x512xf32> to vector<8x128xf32>
    %556 = arith.negf %555 : vector<8x128xf32>
    %557 = math.exp %556 : vector<8x128xf32>
    %cst_154 = arith.constant 1.000000e+00 : f32
    %558 = vector.broadcast %cst_154 : f32 to vector<8x128xf32>
    %559 = arith.addf %558, %557 : vector<8x128xf32>
    %560 = arith.divf %558, %559 : vector<8x128xf32>
    %561 = vector.extract_strided_slice %548 {offsets = [0, 256], sizes = [8, 128], strides = [1, 1]} : vector<8x512xf32> to vector<8x128xf32>
    %562 = math.tanh %561 : vector<8x128xf32>
    %563 = vector.extract_strided_slice %548 {offsets = [0, 384], sizes = [8, 128], strides = [1, 1]} : vector<8x512xf32> to vector<8x128xf32>
    %564 = arith.negf %563 : vector<8x128xf32>
    %565 = math.exp %564 : vector<8x128xf32>
    %cst_155 = arith.constant 1.000000e+00 : f32
    %566 = vector.broadcast %cst_155 : f32 to vector<8x128xf32>
    %567 = arith.addf %566, %565 : vector<8x128xf32>
    %568 = arith.divf %566, %567 : vector<8x128xf32>
    %569 = arith.mulf %560, %500 : vector<8x128xf32>
    %570 = arith.mulf %554, %562 : vector<8x128xf32>
    %571 = arith.addf %569, %570 : vector<8x128xf32>
    %572 = math.tanh %571 : vector<8x128xf32>
    %573 = arith.mulf %568, %572 : vector<8x128xf32>
    %574 = arith.index_cast %509 : i32 to index
    %c128_156 = arith.constant 128 : index
    %575 = vector.load %arg9[%574, %c128_156] : memref<64x256xf32, #tpu.memory_space<vmem>>, vector<8x128xf32>
    tpu.vector_store %arg9[%574, %c128_156], %573 {strides = array<i32>} : memref<64x256xf32, #tpu.memory_space<vmem>>, vector<8x128xf32>,
    %c8_i32_157 = arith.constant 8 : i32
    %576 = tpu.concatenate %540, %573 in 1 : vector<8x128xf32>, vector<8x128xf32> -> vector<8x256xf32>
    %577 = arith.truncf %576 : vector<8x256xf32> to vector<8x256xbf16>
    %578 = tpu.concatenate %538, %571 in 1 : vector<8x128xf32>, vector<8x128xf32> -> vector<8x256xf32>
    %579 = arith.truncf %578 : vector<8x256xf32> to vector<8x256xbf16>
    %c0_158 = arith.constant 0 : index
    %c0_159 = arith.constant 0 : index
    %580 = vector.load %arg5[%c0_158, %c0_159] : memref<256x128xbf16, #tpu.memory_space<vmem>>, vector<256x128xbf16>
    %cst_160 = arith.constant dense<0.000000e+00> : vector<8x128xf32>
    %581 = tpu.matmul %577, %580, %cst_160 {dimension_numbers = #tpu.dot_dimension_numbers<[1], [0], [0], [1], [0, 0, 1, 1], [], []>} : vector<8x256xbf16>, vector<256x128xbf16>, vector<8x128xf32> -> vector<8x128xf32>
    %c0_161 = arith.constant 0 : index
    %c0_162 = arith.constant 0 : index
    %582 = vector.load %arg6[%c0_161, %c0_162] : memref<1x128xf32, #tpu.memory_space<vmem>>, vector<1x128xf32>
    %583 = vector.broadcast %582 : vector<1x128xf32> to vector<8x128xf32>
    %584 = arith.addf %581, %583 : vector<8x128xf32>
    %c0_163 = arith.constant 0 : index
    %c0_164 = arith.constant 0 : index
    %585 = vector.load %arg10[%c0_163, %c0_164] : memref<8x128xf32, #tpu.memory_space<vmem>>, vector<8x128xf32>
    tpu.vector_store %arg10[%c0_163, %c0_164], %584 {strides = array<i32>} : memref<8x128xf32, #tpu.memory_space<vmem>>, vector<8x128xf32>,
    %c0_165 = arith.constant 0 : index
    %c0_166 = arith.constant 0 : index
    %586 = vector.load %arg7[%c0_165, %c0_166] : memref<256x128xbf16, #tpu.memory_space<vmem>>, vector<256x128xbf16>
    %cst_167 = arith.constant dense<0.000000e+00> : vector<8x128xf32>
    %587 = tpu.matmul %579, %586, %cst_167 {dimension_numbers = #tpu.dot_dimension_numbers<[1], [0], [0], [1], [0, 0, 1, 1], [], []>} : vector<8x256xbf16>, vector<256x128xbf16>, vector<8x128xf32> -> vector<8x128xf32>
    %c0_168 = arith.constant 0 : index
    %c0_169 = arith.constant 0 : index
    %588 = vector.load %arg8[%c0_168, %c0_169] : memref<1x128xf32, #tpu.memory_space<vmem>>, vector<1x128xf32>
    %589 = vector.broadcast %588 : vector<1x128xf32> to vector<8x128xf32>
    %590 = arith.addf %587, %589 : vector<8x128xf32>
    %c0_170 = arith.constant 0 : index
    %c0_171 = arith.constant 0 : index
    %591 = vector.load %arg11[%c0_170, %c0_171] : memref<8x128xf32, #tpu.memory_space<vmem>>, vector<8x128xf32>
    tpu.vector_store %arg11[%c0_170, %c0_171], %590 {strides = array<i32>} : memref<8x128xf32, #tpu.memory_space<vmem>>, vector<8x128xf32>,
    return
  }
}

</mosaic_0001>

<llo_original>
// kernel: tpu_custom_call.1
$region0: #{tpu_custom_call.1}
  #allocation0 [shape = 'u32[]', space=smem, size = 0x4, offset = 0x4, fixed_abs, tag = 'smem constant byte address 0x4 - core index']
  #allocation1 [shape = 'u32[144,128]{1,0:T(1,128)}', space=vmem, size = 0x12000, scoped, tag = 'internal scratch']
  #allocation2 [shape = 'f32[64,1024]{1,0:T(8,128)}', space=vmem, size = 0x40000, scoped, tag = 'scratch operand']
  %s0 = inlined_call_operand.hbm [shape: bf16[64,128], index: 0, kind: input, shape index: {}]
  %s1 = inlined_call_operand.hbm [shape: bf16[128,1024], index: 1, kind: input, shape index: {}]
  %s2 = inlined_call_operand.hbm [shape: f32[1,1024], index: 2, kind: input, shape index: {}]
  %s3 = inlined_call_operand.hbm [shape: bf16[128,512], index: 3, kind: input, shape index: {}]
  %s4 = inlined_call_operand.hbm [shape: bf16[128,512], index: 4, kind: input, shape index: {}]
  %s5 = inlined_call_operand.hbm [shape: bf16[256,128], index: 5, kind: input, shape index: {}]
  %s6 = inlined_call_operand.vmem [shape: f32[1,128], index: 6, kind: input, shape index: {}]
  %s7 = inlined_call_operand.hbm [shape: bf16[256,128], index: 7, kind: input, shape index: {}]
  %s8 = inlined_call_operand.vmem [shape: f32[1,128], index: 8, kind: input, shape index: {}]
  %s9 = inlined_call_operand.hbm [shape: f32[64,256], index: 9, kind: output, shape index: {0}]
  %s10 = inlined_call_operand.hbm [shape: f32[8,128], index: 10, kind: output, shape index: {1}]
  %s11 = inlined_call_operand.hbm [shape: f32[8,128], index: 11, kind: output, shape index: {2}]
  %12 = xla_tuple %s9, %s10, %s11
  %s13 = sld [smem:[#allocation0]]
  $region90: #{tpu_custom_call.1} parent=0
    _
  %s15 = ssub.s32 1, %s13
  %s16 = scalar_select 0, %s15, %s13
  $region1: #{tpu_custom_call.1} parent=0
    #allocation3 [shape = 'u8[16384]{0}', space=vmem, size = 0x4000, scoped, tag = 'input window, operand 0, single buffered']
    #allocation4 [shape = 's32[1]{0}', space=sflag, size = 0x4, scoped, tag = 'scoped memory for tpu_custom_call.1']
    #allocation5 [shape = 's32[1]{0}', space=sflag, size = 0x4, scoped, tag = 'scoped memory for tpu_custom_call.1']
    #allocation6 [shape = 'u8[262144]{0}', space=vmem, size = 0x40000, scoped, tag = 'input window, operand 1, single buffered']
    #allocation7 [shape = 's32[1]{0}', space=sflag, size = 0x4, scoped, tag = 'scoped memory for tpu_custom_call.1']
    #allocation8 [shape = 'u8[4096]{0}', space=vmem, size = 0x1000, scoped, tag = 'input window, operand 2, single buffered']
    #allocation9 [shape = 'u8[131072]{0}', space=vmem, size = 0x20000, scoped, tag = 'input window, operand 3, single buffered']
    #allocation10 [shape = 's32[1]{0}', space=sflag, size = 0x4, scoped, tag = 'scoped memory for tpu_custom_call.1']
    #allocation11 [shape = 'u8[131072]{0}', space=vmem, size = 0x20000, scoped, tag = 'input window, operand 4, single buffered']
    #allocation12 [shape = 'u8[65536]{0}', space=vmem, size = 0x10000, scoped, tag = 'input window, operand 5, single buffered']
    #allocation13 [shape = 's32[1]{0}', space=sflag, size = 0x4, scoped, tag = 'scoped memory for tpu_custom_call.1']
    #allocation14 [shape = 'u8[65536]{0}', space=vmem, size = 0x10000, scoped, tag = 'input window, operand 7, single buffered']
    #allocation15 [shape = 'u8[65536]{0}', space=vmem, size = 0x10000, scoped, tag = 'output window, operand 0, single buffered']
    #allocation16 [shape = 'u8[4096]{0}', space=vmem, size = 0x1000, scoped, tag = 'output window, operand 1, single buffered']
    #allocation17 [shape = 's32[1]{0}', space=sflag, size = 0x4, scoped, tag = 'scoped memory for tpu_custom_call.1']
    #allocation18 [shape = 'u8[4096]{0}', space=vmem, size = 0x1000, scoped, tag = 'output window, operand 2, single buffered']
    %17 = vsyncpa [#allocation4], 0
    %18 = vsyncpa [#allocation7], 0
    %19 = vsyncpa [#allocation10], 0
    %20 = vsyncpa [#allocation13], 0
    %21 = vsyncpa [#allocation5], 0
    %22 = vsyncpa [#allocation17], 0
    // Predicated region
    $region2: #{tpu_custom_call.1} parent=1 // pred_check
      _
    $region3: #{tpu_custom_call.1} parent=1 // pred_check_branch
      %24 = sbr.rel (0) target = $region5
    $region4: #{tpu_custom_call.1} parent=1 // pred_region
      %s26 = ssub.s32 512, 512
      %27 = vsyncadd [#allocation4], %s26
      %s28 = sshll.u32 [#allocation3], 4
      %s29 = int_to_ptr.vmem [resolvable:$true] %s28
      %34 = dma.hbm_to_vmem [thread:$0]  %s0, 512, %s29, [#allocation4], 64, 64, 4
    $region5: #{tpu_custom_call.1} parent=1 // pred_fallthru
      _
    // Predicated region
    $region6: #{tpu_custom_call.1} parent=1 // pred_check
      _
    $region7: #{tpu_custom_call.1} parent=1 // pred_check_branch
      %36 = sbr.rel (0) target = $region9
    $region8: #{tpu_custom_call.1} parent=1 // pred_region
      %s38 = ssub.s32 8192, 8192
      %39 = vsyncadd [#allocation7], %s38
      %s40 = sshll.u32 [#allocation6], 4
      %s41 = int_to_ptr.vmem [resolvable:$true] %s40
      %46 = dma.hbm_to_vmem [thread:$0]  %s1, 8192, %s41, [#allocation7], 512, 512, 32
    $region9: #{tpu_custom_call.1} parent=1 // pred_fallthru
      _
    // Predicated region
    $region10: #{tpu_custom_call.1} parent=1 // pred_check
      _
    $region11: #{tpu_custom_call.1} parent=1 // pred_check_branch
      %48 = sbr.rel (0) target = $region13
    $region12: #{tpu_custom_call.1} parent=1 // pred_region
      %s50 = ssub.s32 128, 128
      %51 = vsyncadd [#allocation7], %s50
      %s53 = sshll.u32 [#allocation8], 4
      %s54 = int_to_ptr.vmem [resolvable:$true] %s53
      %56 = dma.hbm_to_vmem [thread:$0]  %s2, 128, %s54, [#allocation7]
    $region13: #{tpu_custom_call.1} parent=1 // pred_fallthru
      _
    // Predicated region
    $region14: #{tpu_custom_call.1} parent=1 // pred_check
      _
    $region15: #{tpu_custom_call.1} parent=1 // pred_check_branch
      %58 = sbr.rel (0) target = $region17
    $region16: #{tpu_custom_call.1} parent=1 // pred_region
      %s60 = ssub.s32 4096, 4096
      %61 = vsyncadd [#allocation10], %s60
      %s62 = sshll.u32 [#allocation9], 4
      %s63 = int_to_ptr.vmem [resolvable:$true] %s62
      %68 = dma.hbm_to_vmem [thread:$0]  %s3, 4096, %s63, [#allocation10], 256, 256, 16
    $region17: #{tpu_custom_call.1} parent=1 // pred_fallthru
      _
    // Predicated region
    $region18: #{tpu_custom_call.1} parent=1 // pred_check
      _
    $region19: #{tpu_custom_call.1} parent=1 // pred_check_branch
      %70 = sbr.rel (0) target = $region21
    $region20: #{tpu_custom_call.1} parent=1 // pred_region
      %s72 = ssub.s32 4096, 4096
      %73 = vsyncadd [#allocation10], %s72
      %s74 = sshll.u32 [#allocation11], 4
      %s75 = int_to_ptr.vmem [resolvable:$true] %s74
      %80 = dma.hbm_to_vmem [thread:$0]  %s4, 4096, %s75, [#allocation10], 256, 256, 16
    $region21: #{tpu_custom_call.1} parent=1 // pred_fallthru
      _
    // Predicated region
    $region22: #{tpu_custom_call.1} parent=1 // pred_check
      _
    $region23: #{tpu_custom_call.1} parent=1 // pred_check_branch
      %82 = sbr.rel (0) target = $region25
    $region24: #{tpu_custom_call.1} parent=1 // pred_region
      %s84 = ssub.s32 2048, 2048
      %85 = vsyncadd [#allocation13], %s84
      %s86 = sshll.u32 [#allocation12], 4
      %s87 = int_to_ptr.vmem [resolvable:$true] %s86
      %92 = dma.hbm_to_vmem [thread:$0]  %s5, 2048, %s87, [#allocation13], 64, 64, 4
    $region25: #{tpu_custom_call.1} parent=1 // pred_fallthru
      _
    // Predicated region
    $region26: #{tpu_custom_call.1} parent=1 // pred_check
      _
    $region27: #{tpu_custom_call.1} parent=1 // pred_check_branch
      %94 = sbr.rel (0) target = $region29
    $region28: #{tpu_custom_call.1} parent=1 // pred_region
      _
    $region29: #{tpu_custom_call.1} parent=1 // pred_fallthru
      _
    // Predicated region
    $region30: #{tpu_custom_call.1} parent=1 // pred_check
      _
    $region31: #{tpu_custom_call.1} parent=1 // pred_check_branch
      %96 = sbr.rel (0) target = $region33
    $region32: #{tpu_custom_call.1} parent=1 // pred_region
      %s98 = ssub.s32 2048, 2048
      %99 = vsyncadd [#allocation13], %s98
      %s100 = sshll.u32 [#allocation14], 4
      %s101 = int_to_ptr.vmem [resolvable:$true] %s100
      %106 = dma.hbm_to_vmem [thread:$0]  %s7, 2048, %s101, [#allocation13], 64, 64, 4
    $region33: #{tpu_custom_call.1} parent=1 // pred_fallthru
      _
    // Predicated region
    $region34: #{tpu_custom_call.1} parent=1 // pred_check
      _
    $region35: #{tpu_custom_call.1} parent=1 // pred_check_branch
      %108 = sbr.rel (0) target = $region37
    $region36: #{tpu_custom_call.1} parent=1 // pred_region
      _
    $region37: #{tpu_custom_call.1} parent=1 // pred_fallthru
      _
    // Predicated region
    $region38: #{tpu_custom_call.1} parent=1 // pred_check
      _
    $region39: #{tpu_custom_call.1} parent=1 // pred_check_branch
      %110 = sbr.rel (0) target = $region41
    $region40: #{tpu_custom_call.1} parent=1 // pred_region
      %111 = dma.done [#allocation4], 512
    $region41: #{tpu_custom_call.1} parent=1 // pred_fallthru
      _
    // Predicated region
    $region42: #{tpu_custom_call.1} parent=1 // pred_check
      _
    $region43: #{tpu_custom_call.1} parent=1 // pred_check_branch
      %113 = sbr.rel (0) target = $region45
    $region44: #{tpu_custom_call.1} parent=1 // pred_region
      %114 = dma.done [#allocation7], 8192
    $region45: #{tpu_custom_call.1} parent=1 // pred_fallthru
      _
    // Predicated region
    $region46: #{tpu_custom_call.1} parent=1 // pred_check
      _
    $region47: #{tpu_custom_call.1} parent=1 // pred_check_branch
      %116 = sbr.rel (0) target = $region49
    $region48: #{tpu_custom_call.1} parent=1 // pred_region
      %117 = dma.done [#allocation7], 128
    $region49: #{tpu_custom_call.1} parent=1 // pred_fallthru
      _
    // Predicated region
    $region50: #{tpu_custom_call.1} parent=1 // pred_check
      _
    $region51: #{tpu_custom_call.1} parent=1 // pred_check_branch
      %119 = sbr.rel (0) target = $region53
    $region52: #{tpu_custom_call.1} parent=1 // pred_region
      %120 = dma.done [#allocation10], 4096
    $region53: #{tpu_custom_call.1} parent=1 // pred_fallthru
      _
    // Predicated region
    $region54: #{tpu_custom_call.1} parent=1 // pred_check
      _
    $region55: #{tpu_custom_call.1} parent=1 // pred_check_branch
      %122 = sbr.rel (0) target = $region57
    $region56: #{tpu_custom_call.1} parent=1 // pred_region
      %123 = dma.done [#allocation10], 4096
    $region57: #{tpu_custom_call.1} parent=1 // pred_fallthru
      _
    // Predicated region
    $region58: #{tpu_custom_call.1} parent=1 // pred_check
      _
    $region59: #{tpu_custom_call.1} parent=1 // pred_check_branch
      %125 = sbr.rel (0) target = $region61
    $region60: #{tpu_custom_call.1} parent=1 // pred_region
      %126 = dma.done [#allocation13], 2048
    $region61: #{tpu_custom_call.1} parent=1 // pred_fallthru
      _
    // Predicated region
    $region62: #{tpu_custom_call.1} parent=1 // pred_check
      _
    $region63: #{tpu_custom_call.1} parent=1 // pred_check_branch
      %128 = sbr.rel (0) target = $region65
    $region64: #{tpu_custom_call.1} parent=1 // pred_region
      %129 = dma.done [#allocation13], 2048
    $region65: #{tpu_custom_call.1} parent=1 // pred_fallthru
      _
    %v131 = vld [vmem:[#allocation3] sm:$0xf]
    %v132 = vld [vmem:[#allocation3 + $0x4] sm:$0xf]
    %v133 = vld [vmem:[#allocation3 + $0x8] sm:$0xf]
    %v134 = vld [vmem:[#allocation3 + $0xc] sm:$0xf]
    %v135 = vld [vmem:[#allocation3 + $0x10] sm:$0xf]
    %v136 = vld [vmem:[#allocation3 + $0x14] sm:$0xf]
    %v137 = vld [vmem:[#allocation3 + $0x18] sm:$0xf]
    %v138 = vld [vmem:[#allocation3 + $0x1c] sm:$0xf]
    %v139 = vld [vmem:[#allocation6] sm:$0xff]
    %v140 = vld [vmem:[#allocation6 + $0x8] sm:$0xff]
    %v141 = vld [vmem:[#allocation6 + $0x10] sm:$0xff]
    %v142 = vld [vmem:[#allocation6 + $0x18] sm:$0xff]
    %v143 = vld [vmem:[#allocation6 + $0x20] sm:$0xff]
    %v144 = vld [vmem:[#allocation6 + $0x28] sm:$0xff]
    %v145 = vld [vmem:[#allocation6 + $0x30] sm:$0xff]
    %v146 = vld [vmem:[#allocation6 + $0x38] sm:$0xff]
    %v147 = vld [vmem:[#allocation6 + $0x40] sm:$0xff]
    %v148 = vld [vmem:[#allocation6 + $0x48] sm:$0xff]
    %v149 = vld [vmem:[#allocation6 + $0x50] sm:$0xff]
    %v150 = vld [vmem:[#allocation6 + $0x58] sm:$0xff]
    %v151 = vld [vmem:[#allocation6 + $0x60] sm:$0xff]
    %v152 = vld [vmem:[#allocation6 + $0x68] sm:$0xff]
    %v153 = vld [vmem:[#allocation6 + $0x70] sm:$0xff]
    %v154 = vld [vmem:[#allocation6 + $0x78] sm:$0xff]
    %v155 = vld [vmem:[#allocation6 + $0x80] sm:$0xff]
    %v156 = vld [vmem:[#allocation6 + $0x88] sm:$0xff]
    %v157 = vld [vmem:[#allocation6 + $0x90] sm:$0xff]
    %v158 = vld [vmem:[#allocation6 + $0x98] sm:$0xff]
    %v159 = vld [vmem:[#allocation6 + $0xa0] sm:$0xff]
    %v160 = vld [vmem:[#allocation6 + $0xa8] sm:$0xff]
    %v161 = vld [vmem:[#allocation6 + $0xb0] sm:$0xff]
    %v162 = vld [vmem:[#allocation6 + $0xb8] sm:$0xff]
    %v163 = vld [vmem:[#allocation6 + $0xc0] sm:$0xff]
    %v164 = vld [vmem:[#allocation6 + $0xc8] sm:$0xff]
    %v165 = vld [vmem:[#allocation6 + $0xd0] sm:$0xff]
    %v166 = vld [vmem:[#allocation6 + $0xd8] sm:$0xff]
    %v167 = vld [vmem:[#allocation6 + $0xe0] sm:$0xff]
    %v168 = vld [vmem:[#allocation6 + $0xe8] sm:$0xff]
    %v169 = vld [vmem:[#allocation6 + $0xf0] sm:$0xff]
    %v170 = vld [vmem:[#allocation6 + $0xf8] sm:$0xff]
    %v171 = vld [vmem:[#allocation6 + $0x100] sm:$0xff]
    %v172 = vld [vmem:[#allocation6 + $0x108] sm:$0xff]
    %v173 = vld [vmem:[#allocation6 + $0x110] sm:$0xff]
    %v174 = vld [vmem:[#allocation6 + $0x118] sm:$0xff]
    %v175 = vld [vmem:[#allocation6 + $0x120] sm:$0xff]
    %v176 = vld [vmem:[#allocation6 + $0x128] sm:$0xff]
    %v177 = vld [vmem:[#allocation6 + $0x130] sm:$0xff]
    %v178 = vld [vmem:[#allocation6 + $0x138] sm:$0xff]
    %v179 = vld [vmem:[#allocation6 + $0x140] sm:$0xff]
    %v180 = vld [vmem:[#allocation6 + $0x148] sm:$0xff]
    %v181 = vld [vmem:[#allocation6 + $0x150] sm:$0xff]
    %v182 = vld [vmem:[#allocation6 + $0x158] sm:$0xff]
    %v183 = vld [vmem:[#allocation6 + $0x160] sm:$0xff]
    %v184 = vld [vmem:[#allocation6 + $0x168] sm:$0xff]
    %v185 = vld [vmem:[#allocation6 + $0x170] sm:$0xff]
    %v186 = vld [vmem:[#allocation6 + $0x178] sm:$0xff]
    %v187 = vld [vmem:[#allocation6 + $0x180] sm:$0xff]
    %v188 = vld [vmem:[#allocation6 + $0x188] sm:$0xff]
    %v189 = vld [vmem:[#allocation6 + $0x190] sm:$0xff]
    %v190 = vld [vmem:[#allocation6 + $0x198] sm:$0xff]
    %v191 = vld [vmem:[#allocation6 + $0x1a0] sm:$0xff]
    %v192 = vld [vmem:[#allocation6 + $0x1a8] sm:$0xff]
    %v193 = vld [vmem:[#allocation6 + $0x1b0] sm:$0xff]
    %v194 = vld [vmem:[#allocation6 + $0x1b8] sm:$0xff]
    %v195 = vld [vmem:[#allocation6 + $0x1c0] sm:$0xff]
    %v196 = vld [vmem:[#allocation6 + $0x1c8] sm:$0xff]
    %v197 = vld [vmem:[#allocation6 + $0x1d0] sm:$0xff]
    %v198 = vld [vmem:[#allocation6 + $0x1d8] sm:$0xff]
    %v199 = vld [vmem:[#allocation6 + $0x1e0] sm:$0xff]
    %v200 = vld [vmem:[#allocation6 + $0x1e8] sm:$0xff]
    %v201 = vld [vmem:[#allocation6 + $0x1f0] sm:$0xff]
    %v202 = vld [vmem:[#allocation6 + $0x1f8] sm:$0xff]
    %v203 = vld [vmem:[#allocation8] sm:$0xff]
    %v205 = vlaneseq
    %v206 = vshrl.u32 %v205, 7
    %v207 = vsub.s32 0, %v206
    %v208 = vrot.slane %v203, %v207
    %v209 = vlaneseq
    %v210 = vshrl.u32 %v209, 7
    %v211 = vsub.s32 1, %v210
    %v212 = vrot.slane %v203, %v211
    %v213 = vlaneseq
    %v214 = vshrl.u32 %v213, 7
    %v215 = vsub.s32 2, %v214
    %v216 = vrot.slane %v203, %v215
    %v217 = vlaneseq
    %v218 = vshrl.u32 %v217, 7
    %v219 = vsub.s32 3, %v218
    %v220 = vrot.slane %v203, %v219
    %v221 = vlaneseq
    %v222 = vshrl.u32 %v221, 7
    %v223 = vsub.s32 4, %v222
    %v224 = vrot.slane %v203, %v223
    %v225 = vlaneseq
    %v226 = vshrl.u32 %v225, 7
    %v227 = vsub.s32 5, %v226
    %v228 = vrot.slane %v203, %v227
    %v229 = vlaneseq
    %v230 = vshrl.u32 %v229, 7
    %v231 = vsub.s32 6, %v230
    %v232 = vrot.slane %v203, %v231
    %v233 = vlaneseq
    %v234 = vshrl.u32 %v233, 7
    %v235 = vsub.s32 7, %v234
    %v236 = vrot.slane %v203, %v235
    %v253 = vunpack.c.l.b16 %v131
    %v254 = vunpack.c.l.b16 %v132
    %v255 = vunpack.c.l.b16 %v133
    %v256 = vunpack.c.l.b16 %v134
    %v257 = vunpack.c.l.b16 %v135
    %v258 = vunpack.c.l.b16 %v136
    %v259 = vunpack.c.l.b16 %v137
    %v260 = vunpack.c.l.b16 %v138
    %v261 = vpack.c.b16 %v254, %v253
    %v262 = vpack.c.b16 %v256, %v255
    %v263 = vpack.c.b16 %v258, %v257
    %v264 = vpack.c.b16 %v260, %v259
    %v333 = vunpack.c.l.b16 %v139
    %v334 = vunpack.c.h.b16 %v139
    %v335 = vunpack.c.l.b16 %v140
    %v336 = vunpack.c.h.b16 %v140
    %v337 = vunpack.c.l.b16 %v141
    %v338 = vunpack.c.h.b16 %v141
    %v339 = vunpack.c.l.b16 %v142
    %v340 = vunpack.c.h.b16 %v142
    %v341 = vunpack.c.l.b16 %v143
    %v342 = vunpack.c.h.b16 %v143
    %v343 = vunpack.c.l.b16 %v144
    %v344 = vunpack.c.h.b16 %v144
    %v345 = vunpack.c.l.b16 %v145
    %v346 = vunpack.c.h.b16 %v145
    %v347 = vunpack.c.l.b16 %v146
    %v348 = vunpack.c.h.b16 %v146
    %v349 = vunpack.c.l.b16 %v147
    %v350 = vunpack.c.h.b16 %v147
    %v351 = vunpack.c.l.b16 %v148
    %v352 = vunpack.c.h.b16 %v148
    %v353 = vunpack.c.l.b16 %v149
    %v354 = vunpack.c.h.b16 %v149
    %v355 = vunpack.c.l.b16 %v150
    %v356 = vunpack.c.h.b16 %v150
    %v357 = vunpack.c.l.b16 %v151
    %v358 = vunpack.c.h.b16 %v151
    %v359 = vunpack.c.l.b16 %v152
    %v360 = vunpack.c.h.b16 %v152
    %v361 = vunpack.c.l.b16 %v153
    %v362 = vunpack.c.h.b16 %v153
    %v363 = vunpack.c.l.b16 %v154
    %v364 = vunpack.c.h.b16 %v154
    %v365 = vunpack.c.l.b16 %v155
    %v366 = vunpack.c.h.b16 %v155
    %v367 = vunpack.c.l.b16 %v156
    %v368 = vunpack.c.h.b16 %v156
    %v369 = vunpack.c.l.b16 %v157
    %v370 = vunpack.c.h.b16 %v157
    %v371 = vunpack.c.l.b16 %v158
    %v372 = vunpack.c.h.b16 %v158
    %v373 = vunpack.c.l.b16 %v159
    %v374 = vunpack.c.h.b16 %v159
    %v375 = vunpack.c.l.b16 %v160
    %v376 = vunpack.c.h.b16 %v160
    %v377 = vunpack.c.l.b16 %v161
    %v378 = vunpack.c.h.b16 %v161
    %v379 = vunpack.c.l.b16 %v162
    %v380 = vunpack.c.h.b16 %v162
    %v381 = vunpack.c.l.b16 %v163
    %v382 = vunpack.c.h.b16 %v163
    %v383 = vunpack.c.l.b16 %v164
    %v384 = vunpack.c.h.b16 %v164
    %v385 = vunpack.c.l.b16 %v165
    %v386 = vunpack.c.h.b16 %v165
    %v387 = vunpack.c.l.b16 %v166
    %v388 = vunpack.c.h.b16 %v166
    %v389 = vunpack.c.l.b16 %v167
    %v390 = vunpack.c.h.b16 %v167
    %v391 = vunpack.c.l.b16 %v168
    %v392 = vunpack.c.h.b16 %v168
    %v393 = vunpack.c.l.b16 %v169
    %v394 = vunpack.c.h.b16 %v169
    %v395 = vunpack.c.l.b16 %v170
    %v396 = vunpack.c.h.b16 %v170
    %v397 = vunpack.c.l.b16 %v171
    %v398 = vunpack.c.h.b16 %v171
    %v399 = vunpack.c.l.b16 %v172
    %v400 = vunpack.c.h.b16 %v172
    %v401 = vunpack.c.l.b16 %v173
    %v402 = vunpack.c.h.b16 %v173
    %v403 = vunpack.c.l.b16 %v174
    %v404 = vunpack.c.h.b16 %v174
    %v405 = vunpack.c.l.b16 %v175
    %v406 = vunpack.c.h.b16 %v175
    %v407 = vunpack.c.l.b16 %v176
    %v408 = vunpack.c.h.b16 %v176
    %v409 = vunpack.c.l.b16 %v177
    %v410 = vunpack.c.h.b16 %v177
    %v411 = vunpack.c.l.b16 %v178
    %v412 = vunpack.c.h.b16 %v178
    %v413 = vunpack.c.l.b16 %v179
    %v414 = vunpack.c.h.b16 %v179
    %v415 = vunpack.c.l.b16 %v180
    %v416 = vunpack.c.h.b16 %v180
    %v417 = vunpack.c.l.b16 %v181
    %v418 = vunpack.c.h.b16 %v181
    %v419 = vunpack.c.l.b16 %v182
    %v420 = vunpack.c.h.b16 %v182
    %v421 = vunpack.c.l.b16 %v183
    %v422 = vunpack.c.h.b16 %v183
    %v423 = vunpack.c.l.b16 %v184
    %v424 = vunpack.c.h.b16 %v184
    %v425 = vunpack.c.l.b16 %v185
    %v426 = vunpack.c.h.b16 %v185
    %v427 = vunpack.c.l.b16 %v186
    %v428 = vunpack.c.h.b16 %v186
    %v429 = vunpack.c.l.b16 %v187
    %v430 = vunpack.c.h.b16 %v187
    %v431 = vunpack.c.l.b16 %v188
    %v432 = vunpack.c.h.b16 %v188
    %v433 = vunpack.c.l.b16 %v189
    %v434 = vunpack.c.h.b16 %v189
    %v435 = vunpack.c.l.b16 %v190
    %v436 = vunpack.c.h.b16 %v190
    %v437 = vunpack.c.l.b16 %v191
    %v438 = vunpack.c.h.b16 %v191
    %v439 = vunpack.c.l.b16 %v192
    %v440 = vunpack.c.h.b16 %v192
    %v441 = vunpack.c.l.b16 %v193
    %v442 = vunpack.c.h.b16 %v193
    %v443 = vunpack.c.l.b16 %v194
    %v444 = vunpack.c.h.b16 %v194
    %v445 = vunpack.c.l.b16 %v195
    %v446 = vunpack.c.h.b16 %v195
    %v447 = vunpack.c.l.b16 %v196
    %v448 = vunpack.c.h.b16 %v196
    %v449 = vunpack.c.l.b16 %v197
    %v450 = vunpack.c.h.b16 %v197
    %v451 = vunpack.c.l.b16 %v198
    %v452 = vunpack.c.h.b16 %v198
    %v453 = vunpack.c.l.b16 %v199
    %v454 = vunpack.c.h.b16 %v199
    %v455 = vunpack.c.l.b16 %v200
    %v456 = vunpack.c.h.b16 %v200
    %v457 = vunpack.c.l.b16 %v201
    %v458 = vunpack.c.h.b16 %v201
    %v459 = vunpack.c.l.b16 %v202
    %v460 = vunpack.c.h.b16 %v202
    %v461 = vpack.c.b16 %v341, %v333
    %v462 = vpack.c.b16 %v342, %v334
    %v463 = vpack.c.b16 %v343, %v335
    %v464 = vpack.c.b16 %v344, %v336
    %v465 = vpack.c.b16 %v345, %v337
    %v466 = vpack.c.b16 %v346, %v338
    %v467 = vpack.c.b16 %v347, %v339
    %v468 = vpack.c.b16 %v348, %v340
    %v469 = vpack.c.b16 %v357, %v349
    %v470 = vpack.c.b16 %v358, %v350
    %v471 = vpack.c.b16 %v359, %v351
    %v472 = vpack.c.b16 %v360, %v352
    %v473 = vpack.c.b16 %v361, %v353
    %v474 = vpack.c.b16 %v362, %v354
    %v475 = vpack.c.b16 %v363, %v355
    %v476 = vpack.c.b16 %v364, %v356
    %v477 = vpack.c.b16 %v373, %v365
    %v478 = vpack.c.b16 %v374, %v366
    %v479 = vpack.c.b16 %v375, %v367
    %v480 = vpack.c.b16 %v376, %v368
    %v481 = vpack.c.b16 %v377, %v369
    %v482 = vpack.c.b16 %v378, %v370
    %v483 = vpack.c.b16 %v379, %v371
    %v484 = vpack.c.b16 %v380, %v372
    %v485 = vpack.c.b16 %v389, %v381
    %v486 = vpack.c.b16 %v390, %v382
    %v487 = vpack.c.b16 %v391, %v383
    %v488 = vpack.c.b16 %v392, %v384
    %v489 = vpack.c.b16 %v393, %v385
    %v490 = vpack.c.b16 %v394, %v386
    %v491 = vpack.c.b16 %v395, %v387
    %v492 = vpack.c.b16 %v396, %v388
    %v493 = vpack.c.b16 %v405, %v397
    %v494 = vpack.c.b16 %v406, %v398
    %v495 = vpack.c.b16 %v407, %v399
    %v496 = vpack.c.b16 %v408, %v400
    %v497 = vpack.c.b16 %v409, %v401
    %v498 = vpack.c.b16 %v410, %v402
    %v499 = vpack.c.b16 %v411, %v403
    %v500 = vpack.c.b16 %v412, %v404
    %v501 = vpack.c.b16 %v421, %v413
    %v502 = vpack.c.b16 %v422, %v414
    %v503 = vpack.c.b16 %v423, %v415
    %v504 = vpack.c.b16 %v424, %v416
    %v505 = vpack.c.b16 %v425, %v417
    %v506 = vpack.c.b16 %v426, %v418
    %v507 = vpack.c.b16 %v427, %v419
    %v508 = vpack.c.b16 %v428, %v420
    %v509 = vpack.c.b16 %v437, %v429
    %v510 = vpack.c.b16 %v438, %v430
    %v511 = vpack.c.b16 %v439, %v431
    %v512 = vpack.c.b16 %v440, %v432
    %v513 = vpack.c.b16 %v441, %v433
    %v514 = vpack.c.b16 %v442, %v434
    %v515 = vpack.c.b16 %v443, %v435
    %v516 = vpack.c.b16 %v444, %v436
    %v517 = vpack.c.b16 %v453, %v445
    %v518 = vpack.c.b16 %v454, %v446
    %v519 = vpack.c.b16 %v455, %v447
    %v520 = vpack.c.b16 %v456, %v448
    %v521 = vpack.c.b16 %v457, %v449
    %v522 = vpack.c.b16 %v458, %v450
    %v523 = vpack.c.b16 %v459, %v451
    %v524 = vpack.c.b16 %v460, %v452
    %589 = vmatprep.subr.bf16.mxu0 %v462
    %590 = vmatpush1.bf16.msra.mxu0 %v461
    %591 = vmatprep.subr.bf16.mxu0 %v470
    %592 = vmatpush1.bf16.msra.mxu0 %v469
    %593 = vmatprep.subr.bf16.mxu0 %v478
    %594 = vmatpush1.bf16.msra.mxu0 %v477
    %595 = vmatprep.subr.bf16.mxu0 %v486
    %596 = vmatpush1.bf16.msra.mxu0 %v485
    %597 = vmatprep.subr.bf16.mxu0 %v494
    %598 = vmatpush1.bf16.msra.mxu0 %v493
    %599 = vmatprep.subr.bf16.mxu0 %v502
    %600 = vmatpush1.bf16.msra.mxu0 %v501
    %601 = vmatprep.subr.bf16.mxu0 %v510
    %602 = vmatpush1.bf16.msra.mxu0 %v509
    %603 = vmatprep.subr.bf16.mxu0 %v518
    %604 = vmatpush1.bf16.msra.mxu0 %v517
    %605 = vmatprep.subr.bf16.mxu0 0
    %606 = vmatpush1.bf16.msra.mxu0 0
    %607 = vmatprep.subr.bf16.mxu0 0
    %608 = vmatpush1.bf16.msra.mxu0 0
    %609 = vmatprep.subr.bf16.mxu0 0
    %610 = vmatpush1.bf16.msra.mxu0 0
    %611 = vmatprep.subr.bf16.mxu0 0
    %612 = vmatpush1.bf16.msra.mxu0 0
    %613 = vmatprep.subr.bf16.mxu0 0
    %614 = vmatpush1.bf16.msra.mxu0 0
    %615 = vmatprep.subr.bf16.mxu0 0
    %616 = vmatpush1.bf16.msra.mxu0 0
    %617 = vmatprep.subr.bf16.mxu0 0
    %618 = vmatpush1.bf16.msra.mxu0 0
    %619 = vmatprep.subr.bf16.mxu0 0
    %620 = vmatpush1.bf16.msra.mxu0 0
    %621 = vmatprep.mubr.bf16.mxu0 0
    %622 = vmatmul.mubr.bf16.gmra.mrb[0].mxu0 %v261
    %v623 = vpop.f32.mrb[0].mxu0
    %v624 = vadd.f32 %v208, %v623
    %v625 = vpop.f32.mrb[0].mxu0
    %v626 = vadd.f32 %v212, %v625
    %v627 = vpop.f32.mrb[0].mxu0
    %v628 = vadd.f32 %v208, %v627
    %v629 = vpop.f32.mrb[0].mxu0
    %v630 = vadd.f32 %v212, %v629
    %631 = vmatprep.mubr.bf16.mxu0 0
    %632 = vmatmul.mubr.bf16.gmra.mrb[0].mxu0 %v262
    %v633 = vpop.f32.mrb[0].mxu0
    %v634 = vadd.f32 %v208, %v633
    %v635 = vpop.f32.mrb[0].mxu0
    %v636 = vadd.f32 %v212, %v635
    %v637 = vpop.f32.mrb[0].mxu0
    %v638 = vadd.f32 %v208, %v637
    %v639 = vpop.f32.mrb[0].mxu0
    %v640 = vadd.f32 %v212, %v639
    %641 = vmatprep.mubr.bf16.mxu0 0
    %642 = vmatmul.mubr.bf16.gmra.mrb[0].mxu0 %v263
    %v643 = vpop.f32.mrb[0].mxu0
    %v644 = vadd.f32 %v208, %v643
    %v645 = vpop.f32.mrb[0].mxu0
    %v646 = vadd.f32 %v212, %v645
    %v647 = vpop.f32.mrb[0].mxu0
    %v648 = vadd.f32 %v208, %v647
    %v649 = vpop.f32.mrb[0].mxu0
    %v650 = vadd.f32 %v212, %v649
    %651 = vmatprep.mubr.bf16.mxu0 0
    %652 = vmatmul.mubr.bf16.gmra.mrb[0].mxu0 %v264
    %v653 = vpop.f32.mrb[0].mxu0
    %v654 = vadd.f32 %v208, %v653
    %v655 = vpop.f32.mrb[0].mxu0
    %v656 = vadd.f32 %v212, %v655
    %v657 = vpop.f32.mrb[0].mxu0
    %v658 = vadd.f32 %v208, %v657
    %v659 = vpop.f32.mrb[0].mxu0
    %v660 = vadd.f32 %v212, %v659
    %661 = vdwg.mxu0
    %662 = vmatprep.subr.bf16.mxu0 %v464
    %663 = vmatpush1.bf16.msra.mxu0 %v463
    %664 = vmatprep.subr.bf16.mxu0 %v472
    %665 = vmatpush1.bf16.msra.mxu0 %v471
    %666 = vmatprep.subr.bf16.mxu0 %v480
    %667 = vmatpush1.bf16.msra.mxu0 %v479
    %668 = vmatprep.subr.bf16.mxu0 %v488
    %669 = vmatpush1.bf16.msra.mxu0 %v487
    %670 = vmatprep.subr.bf16.mxu0 %v496
    %671 = vmatpush1.bf16.msra.mxu0 %v495
    %672 = vmatprep.subr.bf16.mxu0 %v504
    %673 = vmatpush1.bf16.msra.mxu0 %v503
    %674 = vmatprep.subr.bf16.mxu0 %v512
    %675 = vmatpush1.bf16.msra.mxu0 %v511
    %676 = vmatprep.subr.bf16.mxu0 %v520
    %677 = vmatpush1.bf16.msra.mxu0 %v519
    %678 = vmatprep.subr.bf16.mxu0 0
    %679 = vmatpush1.bf16.msra.mxu0 0
    %680 = vmatprep.subr.bf16.mxu0 0
    %681 = vmatpush1.bf16.msra.mxu0 0
    %682 = vmatprep.subr.bf16.mxu0 0
    %683 = vmatpush1.bf16.msra.mxu0 0
    %684 = vmatprep.subr.bf16.mxu0 0
    %685 = vmatpush1.bf16.msra.mxu0 0
    %686 = vmatprep.subr.bf16.mxu0 0
    %687 = vmatpush1.bf16.msra.mxu0 0
    %688 = vmatprep.subr.bf16.mxu0 0
    %689 = vmatpush1.bf16.msra.mxu0 0
    %690 = vmatprep.subr.bf16.mxu0 0
    %691 = vmatpush1.bf16.msra.mxu0 0
    %692 = vmatprep.subr.bf16.mxu0 0
    %693 = vmatpush1.bf16.msra.mxu0 0
    %694 = vmatprep.mubr.bf16.mxu0 0
    %695 = vmatmul.mubr.bf16.gmra.mrb[0].mxu0 %v261
    %v696 = vpop.f32.mrb[0].mxu0
    %v697 = vadd.f32 %v216, %v696
    %v698 = vpop.f32.mrb[0].mxu0
    %v699 = vadd.f32 %v220, %v698
    %v700 = vpop.f32.mrb[0].mxu0
    %v701 = vadd.f32 %v216, %v700
    %v702 = vpop.f32.mrb[0].mxu0
    %v703 = vadd.f32 %v220, %v702
    %704 = vmatprep.mubr.bf16.mxu0 0
    %705 = vmatmul.mubr.bf16.gmra.mrb[0].mxu0 %v262
    %v706 = vpop.f32.mrb[0].mxu0
    %v707 = vadd.f32 %v216, %v706
    %v708 = vpop.f32.mrb[0].mxu0
    %v709 = vadd.f32 %v220, %v708
    %v710 = vpop.f32.mrb[0].mxu0
    %v711 = vadd.f32 %v216, %v710
    %v712 = vpop.f32.mrb[0].mxu0
    %v713 = vadd.f32 %v220, %v712
    %714 = vmatprep.mubr.bf16.mxu0 0
    %715 = vmatmul.mubr.bf16.gmra.mrb[0].mxu0 %v263
    %v716 = vpop.f32.mrb[0].mxu0
    %v717 = vadd.f32 %v216, %v716
    %v718 = vpop.f32.mrb[0].mxu0
    %v719 = vadd.f32 %v220, %v718
    %v720 = vpop.f32.mrb[0].mxu0
    %v721 = vadd.f32 %v216, %v720
    %v722 = vpop.f32.mrb[0].mxu0
    %v723 = vadd.f32 %v220, %v722
    %724 = vmatprep.mubr.bf16.mxu0 0
    %725 = vmatmul.mubr.bf16.gmra.mrb[0].mxu0 %v264
    %v726 = vpop.f32.mrb[0].mxu0
    %v727 = vadd.f32 %v216, %v726
    %v728 = vpop.f32.mrb[0].mxu0
    %v729 = vadd.f32 %v220, %v728
    %v730 = vpop.f32.mrb[0].mxu0
    %v731 = vadd.f32 %v216, %v730
    %v732 = vpop.f32.mrb[0].mxu0
    %v733 = vadd.f32 %v220, %v732
    %734 = vdwg.mxu0
    %735 = vmatprep.subr.bf16.mxu0 %v466
    %736 = vmatpush1.bf16.msra.mxu0 %v465
    %737 = vmatprep.subr.bf16.mxu0 %v474
    %738 = vmatpush1.bf16.msra.mxu0 %v473
    %739 = vmatprep.subr.bf16.mxu0 %v482
    %740 = vmatpush1.bf16.msra.mxu0 %v481
    %741 = vmatprep.subr.bf16.mxu0 %v490
    %742 = vmatpush1.bf16.msra.mxu0 %v489
    %743 = vmatprep.subr.bf16.mxu0 %v498
    %744 = vmatpush1.bf16.msra.mxu0 %v497
    %745 = vmatprep.subr.bf16.mxu0 %v506
    %746 = vmatpush1.bf16.msra.mxu0 %v505
    %747 = vmatprep.subr.bf16.mxu0 %v514
    %748 = vmatpush1.bf16.msra.mxu0 %v513
    %749 = vmatprep.subr.bf16.mxu0 %v522
    %750 = vmatpush1.bf16.msra.mxu0 %v521
    %751 = vmatprep.subr.bf16.mxu0 0
    %752 = vmatpush1.bf16.msra.mxu0 0
    %753 = vmatprep.subr.bf16.mxu0 0
    %754 = vmatpush1.bf16.msra.mxu0 0
    %755 = vmatprep.subr.bf16.mxu0 0
    %756 = vmatpush1.bf16.msra.mxu0 0
    %757 = vmatprep.subr.bf16.mxu0 0
    %758 = vmatpush1.bf16.msra.mxu0 0
    %759 = vmatprep.subr.bf16.mxu0 0
    %760 = vmatpush1.bf16.msra.mxu0 0
    %761 = vmatprep.subr.bf16.mxu0 0
    %762 = vmatpush1.bf16.msra.mxu0 0
    %763 = vmatprep.subr.bf16.mxu0 0
    %764 = vmatpush1.bf16.msra.mxu0 0
    %765 = vmatprep.subr.bf16.mxu0 0
    %766 = vmatpush1.bf16.msra.mxu0 0
    %767 = vmatprep.mubr.bf16.mxu0 0
    %768 = vmatmul.mubr.bf16.gmra.mrb[0].mxu0 %v261
    %v769 = vpop.f32.mrb[0].mxu0
    %v770 = vadd.f32 %v224, %v769
    %v771 = vpop.f32.mrb[0].mxu0
    %v772 = vadd.f32 %v228, %v771
    %v773 = vpop.f32.mrb[0].mxu0
    %v774 = vadd.f32 %v224, %v773
    %v775 = vpop.f32.mrb[0].mxu0
    %v776 = vadd.f32 %v228, %v775
    %777 = vmatprep.mubr.bf16.mxu0 0
    %778 = vmatmul.mubr.bf16.gmra.mrb[0].mxu0 %v262
    %v779 = vpop.f32.mrb[0].mxu0
    %v780 = vadd.f32 %v224, %v779
    %v781 = vpop.f32.mrb[0].mxu0
    %v782 = vadd.f32 %v228, %v781
    %v783 = vpop.f32.mrb[0].mxu0
    %v784 = vadd.f32 %v224, %v783
    %v785 = vpop.f32.mrb[0].mxu0
    %v786 = vadd.f32 %v228, %v785
    %787 = vmatprep.mubr.bf16.mxu0 0
    %788 = vmatmul.mubr.bf16.gmra.mrb[0].mxu0 %v263
    %v789 = vpop.f32.mrb[0].mxu0
    %v790 = vadd.f32 %v224, %v789
    %v791 = vpop.f32.mrb[0].mxu0
    %v792 = vadd.f32 %v228, %v791
    %v793 = vpop.f32.mrb[0].mxu0
    %v794 = vadd.f32 %v224, %v793
    %v795 = vpop.f32.mrb[0].mxu0
    %v796 = vadd.f32 %v228, %v795
    %797 = vmatprep.mubr.bf16.mxu0 0
    %798 = vmatmul.mubr.bf16.gmra.mrb[0].mxu0 %v264
    %v799 = vpop.f32.mrb[0].mxu0
    %v800 = vadd.f32 %v224, %v799
    %v801 = vpop.f32.mrb[0].mxu0
    %v802 = vadd.f32 %v228, %v801
    %v803 = vpop.f32.mrb[0].mxu0
    %v804 = vadd.f32 %v224, %v803
    %v805 = vpop.f32.mrb[0].mxu0
    %v806 = vadd.f32 %v228, %v805
    %807 = vdwg.mxu0
    %808 = vmatprep.subr.bf16.mxu0 %v468
    %809 = vmatpush1.bf16.msra.mxu0 %v467
    %810 = vmatprep.subr.bf16.mxu0 %v476
    %811 = vmatpush1.bf16.msra.mxu0 %v475
    %812 = vmatprep.subr.bf16.mxu0 %v484
    %813 = vmatpush1.bf16.msra.mxu0 %v483
    %814 = vmatprep.subr.bf16.mxu0 %v492
    %815 = vmatpush1.bf16.msra.mxu0 %v491
    %816 = vmatprep.subr.bf16.mxu0 %v500
    %817 = vmatpush1.bf16.msra.mxu0 %v499
    %818 = vmatprep.subr.bf16.mxu0 %v508
    %819 = vmatpush1.bf16.msra.mxu0 %v507
    %820 = vmatprep.subr.bf16.mxu0 %v516
    %821 = vmatpush1.bf16.msra.mxu0 %v515
    %822 = vmatprep.subr.bf16.mxu0 %v524
    %823 = vmatpush1.bf16.msra.mxu0 %v523
    %824 = vmatprep.subr.bf16.mxu0 0
    %825 = vmatpush1.bf16.msra.mxu0 0
    %826 = vmatprep.subr.bf16.mxu0 0
    %827 = vmatpush1.bf16.msra.mxu0 0
    %828 = vmatprep.subr.bf16.mxu0 0
    %829 = vmatpush1.bf16.msra.mxu0 0
    %830 = vmatprep.subr.bf16.mxu0 0
    %831 = vmatpush1.bf16.msra.mxu0 0
    %832 = vmatprep.subr.bf16.mxu0 0
    %833 = vmatpush1.bf16.msra.mxu0 0
    %834 = vmatprep.subr.bf16.mxu0 0
    %835 = vmatpush1.bf16.msra.mxu0 0
    %836 = vmatprep.subr.bf16.mxu0 0
    %837 = vmatpush1.bf16.msra.mxu0 0
    %838 = vmatprep.subr.bf16.mxu0 0
    %839 = vmatpush1.bf16.msra.mxu0 0
    %840 = vmatprep.mubr.bf16.mxu0 0
    %841 = vmatmul.mubr.bf16.gmra.mrb[0].mxu0 %v261
    %v842 = vpop.f32.mrb[0].mxu0
    %v843 = vadd.f32 %v232, %v842
    %v844 = vpop.f32.mrb[0].mxu0
    %v845 = vadd.f32 %v236, %v844
    %v846 = vpop.f32.mrb[0].mxu0
    %v847 = vadd.f32 %v232, %v846
    %v848 = vpop.f32.mrb[0].mxu0
    %v849 = vadd.f32 %v236, %v848
    %850 = vmatprep.mubr.bf16.mxu0 0
    %851 = vmatmul.mubr.bf16.gmra.mrb[0].mxu0 %v262
    %v852 = vpop.f32.mrb[0].mxu0
    %v853 = vadd.f32 %v232, %v852
    %v854 = vpop.f32.mrb[0].mxu0
    %v855 = vadd.f32 %v236, %v854
    %v856 = vpop.f32.mrb[0].mxu0
    %v857 = vadd.f32 %v232, %v856
    %v858 = vpop.f32.mrb[0].mxu0
    %v859 = vadd.f32 %v236, %v858
    %860 = vmatprep.mubr.bf16.mxu0 0
    %861 = vmatmul.mubr.bf16.gmra.mrb[0].mxu0 %v263
    %v862 = vpop.f32.mrb[0].mxu0
    %v863 = vadd.f32 %v232, %v862
    %v864 = vpop.f32.mrb[0].mxu0
    %v865 = vadd.f32 %v236, %v864
    %v866 = vpop.f32.mrb[0].mxu0
    %v867 = vadd.f32 %v232, %v866
    %v868 = vpop.f32.mrb[0].mxu0
    %v869 = vadd.f32 %v236, %v868
    %870 = vmatprep.mubr.bf16.mxu0 0
    %871 = vmatmul.mubr.bf16.gmra.mrb[0].mxu0 %v264
    %v872 = vpop.f32.mrb[0].mxu0
    %v873 = vadd.f32 %v232, %v872
    %v874 = vpop.f32.mrb[0].mxu0
    %v875 = vadd.f32 %v236, %v874
    %v876 = vpop.f32.mrb[0].mxu0
    %v877 = vadd.f32 %v232, %v876
    %v878 = vpop.f32.mrb[0].mxu0
    %v879 = vadd.f32 %v236, %v878
    %880 = vdwg.mxu0
    %881 = vst [vmem:[#allocation2] sm:$0xff] %v624
    %882 = vst [vmem:[#allocation2 + $0x8] sm:$0xff] %v626
    %883 = vst [vmem:[#allocation2 + $0x10] sm:$0xff] %v697
    %884 = vst [vmem:[#allocation2 + $0x18] sm:$0xff] %v699
    %885 = vst [vmem:[#allocation2 + $0x20] sm:$0xff] %v770
    %886 = vst [vmem:[#allocation2 + $0x28] sm:$0xff] %v772
    %887 = vst [vmem:[#allocation2 + $0x30] sm:$0xff] %v843
    %888 = vst [vmem:[#allocation2 + $0x38] sm:$0xff] %v845
    %889 = vst [vmem:[#allocation2 + $0x40] sm:$0xff] %v628
    %890 = vst [vmem:[#allocation2 + $0x48] sm:$0xff] %v630
    %891 = vst [vmem:[#allocation2 + $0x50] sm:$0xff] %v701
    %892 = vst [vmem:[#allocation2 + $0x58] sm:$0xff] %v703
    %893 = vst [vmem:[#allocation2 + $0x60] sm:$0xff] %v774
    %894 = vst [vmem:[#allocation2 + $0x68] sm:$0xff] %v776
    %895 = vst [vmem:[#allocation2 + $0x70] sm:$0xff] %v847
    %896 = vst [vmem:[#allocation2 + $0x78] sm:$0xff] %v849
    %897 = vst [vmem:[#allocation2 + $0x80] sm:$0xff] %v634
    %898 = vst [vmem:[#allocation2 + $0x88] sm:$0xff] %v636
    %899 = vst [vmem:[#allocation2 + $0x90] sm:$0xff] %v707
    %900 = vst [vmem:[#allocation2 + $0x98] sm:$0xff] %v709
    %901 = vst [vmem:[#allocation2 + $0xa0] sm:$0xff] %v780
    %902 = vst [vmem:[#allocation2 + $0xa8] sm:$0xff] %v782
    %903 = vst [vmem:[#allocation2 + $0xb0] sm:$0xff] %v853
    %904 = vst [vmem:[#allocation2 + $0xb8] sm:$0xff] %v855
    %905 = vst [vmem:[#allocation2 + $0xc0] sm:$0xff] %v638
    %906 = vst [vmem:[#allocation2 + $0xc8] sm:$0xff] %v640
    %907 = vst [vmem:[#allocation2 + $0xd0] sm:$0xff] %v711
    %908 = vst [vmem:[#allocation2 + $0xd8] sm:$0xff] %v713
    %909 = vst [vmem:[#allocation2 + $0xe0] sm:$0xff] %v784
    %910 = vst [vmem:[#allocation2 + $0xe8] sm:$0xff] %v786
    %911 = vst [vmem:[#allocation2 + $0xf0] sm:$0xff] %v857
    %912 = vst [vmem:[#allocation2 + $0xf8] sm:$0xff] %v859
    %913 = vst [vmem:[#allocation2 + $0x100] sm:$0xff] %v644
    %914 = vst [vmem:[#allocation2 + $0x108] sm:$0xff] %v646
    %915 = vst [vmem:[#allocation2 + $0x110] sm:$0xff] %v717
    %916 = vst [vmem:[#allocation2 + $0x118] sm:$0xff] %v719
    %917 = vst [vmem:[#allocation2 + $0x120] sm:$0xff] %v790
    %918 = vst [vmem:[#allocation2 + $0x128] sm:$0xff] %v792
    %919 = vst [vmem:[#allocation2 + $0x130] sm:$0xff] %v863
    %920 = vst [vmem:[#allocation2 + $0x138] sm:$0xff] %v865
    %921 = vst [vmem:[#allocation2 + $0x140] sm:$0xff] %v648
    %922 = vst [vmem:[#allocation2 + $0x148] sm:$0xff] %v650
    %923 = vst [vmem:[#allocation2 + $0x150] sm:$0xff] %v721
    %924 = vst [vmem:[#allocation2 + $0x158] sm:$0xff] %v723
    %925 = vst [vmem:[#allocation2 + $0x160] sm:$0xff] %v794
    %926 = vst [vmem:[#allocation2 + $0x168] sm:$0xff] %v796
    %927 = vst [vmem:[#allocation2 + $0x170] sm:$0xff] %v867
    %928 = vst [vmem:[#allocation2 + $0x178] sm:$0xff] %v869
    %929 = vst [vmem:[#allocation2 + $0x180] sm:$0xff] %v654
    %930 = vst [vmem:[#allocation2 + $0x188] sm:$0xff] %v656
    %931 = vst [vmem:[#allocation2 + $0x190] sm:$0xff] %v727
    %932 = vst [vmem:[#allocation2 + $0x198] sm:$0xff] %v729
    %933 = vst [vmem:[#allocation2 + $0x1a0] sm:$0xff] %v800
    %934 = vst [vmem:[#allocation2 + $0x1a8] sm:$0xff] %v802
    %935 = vst [vmem:[#allocation2 + $0x1b0] sm:$0xff] %v873
    %936 = vst [vmem:[#allocation2 + $0x1b8] sm:$0xff] %v875
    %937 = vst [vmem:[#allocation2 + $0x1c0] sm:$0xff] %v658
    %938 = vst [vmem:[#allocation2 + $0x1c8] sm:$0xff] %v660
    %939 = vst [vmem:[#allocation2 + $0x1d0] sm:$0xff] %v731
    %940 = vst [vmem:[#allocation2 + $0x1d8] sm:$0xff] %v733
    %941 = vst [vmem:[#allocation2 + $0x1e0] sm:$0xff] %v804
    %942 = vst [vmem:[#allocation2 + $0x1e8] sm:$0xff] %v806
    %943 = vst [vmem:[#allocation2 + $0x1f0] sm:$0xff] %v877
    %944 = vst [vmem:[#allocation2 + $0x1f8] sm:$0xff] %v879
    %s945 = smul.u32 0, 8
    %s946 = smul.addr %s945, 8
    %s947 = scalar_lea.vmem [#allocation2], %s946
    %v948 = vld [vmem:[%s947] sm:$0xff]
    %v949 = vld [vmem:[%s947 + $0x8] sm:$0xff]
    %v950 = vld [vmem:[%s947 + $0x10] sm:$0xff]
    %v951 = vld [vmem:[%s947 + $0x18] sm:$0xff]
    %v952 = vld [vmem:[#allocation9] sm:$0xff]
    %v953 = vld [vmem:[#allocation9 + $0x8] sm:$0xff]
    %v954 = vld [vmem:[#allocation9 + $0x10] sm:$0xff]
    %v955 = vld [vmem:[#allocation9 + $0x18] sm:$0xff]
    %v956 = vld [vmem:[#allocation9 + $0x20] sm:$0xff]
    %v957 = vld [vmem:[#allocation9 + $0x28] sm:$0xff]
    %v958 = vld [vmem:[#allocation9 + $0x30] sm:$0xff]
    %v959 = vld [vmem:[#allocation9 + $0x38] sm:$0xff]
    %v960 = vld [vmem:[#allocation9 + $0x40] sm:$0xff]
    %v961 = vld [vmem:[#allocation9 + $0x48] sm:$0xff]
    %v962 = vld [vmem:[#allocation9 + $0x50] sm:$0xff]
    %v963 = vld [vmem:[#allocation9 + $0x58] sm:$0xff]
    %v964 = vld [vmem:[#allocation9 + $0x60] sm:$0xff]
    %v965 = vld [vmem:[#allocation9 + $0x68] sm:$0xff]
    %v966 = vld [vmem:[#allocation9 + $0x70] sm:$0xff]
    %v967 = vld [vmem:[#allocation9 + $0x78] sm:$0xff]
    %v968 = vld [vmem:[#allocation9 + $0x80] sm:$0xff]
    %v969 = vld [vmem:[#allocation9 + $0x88] sm:$0xff]
    %v970 = vld [vmem:[#allocation9 + $0x90] sm:$0xff]
    %v971 = vld [vmem:[#allocation9 + $0x98] sm:$0xff]
    %v972 = vld [vmem:[#allocation9 + $0xa0] sm:$0xff]
    %v973 = vld [vmem:[#allocation9 + $0xa8] sm:$0xff]
    %v974 = vld [vmem:[#allocation9 + $0xb0] sm:$0xff]
    %v975 = vld [vmem:[#allocation9 + $0xb8] sm:$0xff]
    %v976 = vld [vmem:[#allocation9 + $0xc0] sm:$0xff]
    %v977 = vld [vmem:[#allocation9 + $0xc8] sm:$0xff]
    %v978 = vld [vmem:[#allocation9 + $0xd0] sm:$0xff]
    %v979 = vld [vmem:[#allocation9 + $0xd8] sm:$0xff]
    %v980 = vld [vmem:[#allocation9 + $0xe0] sm:$0xff]
    %v981 = vld [vmem:[#allocation9 + $0xe8] sm:$0xff]
    %v982 = vld [vmem:[#allocation9 + $0xf0] sm:$0xff]
    %v983 = vld [vmem:[#allocation9 + $0xf8] sm:$0xff]
    %v1016 = vunpack.c.l.b16 %v952
    %v1017 = vunpack.c.h.b16 %v952
    %v1018 = vunpack.c.l.b16 %v953
    %v1019 = vunpack.c.h.b16 %v953
    %v1020 = vunpack.c.l.b16 %v954
    %v1021 = vunpack.c.h.b16 %v954
    %v1022 = vunpack.c.l.b16 %v955
    %v1023 = vunpack.c.h.b16 %v955
    %v1024 = vunpack.c.l.b16 %v956
    %v1025 = vunpack.c.h.b16 %v956
    %v1026 = vunpack.c.l.b16 %v957
    %v1027 = vunpack.c.h.b16 %v957
    %v1028 = vunpack.c.l.b16 %v958
    %v1029 = vunpack.c.h.b16 %v958
    %v1030 = vunpack.c.l.b16 %v959
    %v1031 = vunpack.c.h.b16 %v959
    %v1032 = vunpack.c.l.b16 %v960
    %v1033 = vunpack.c.h.b16 %v960
    %v1034 = vunpack.c.l.b16 %v961
    %v1035 = vunpack.c.h.b16 %v961
    %v1036 = vunpack.c.l.b16 %v962
    %v1037 = vunpack.c.h.b16 %v962
    %v1038 = vunpack.c.l.b16 %v963
    %v1039 = vunpack.c.h.b16 %v963
    %v1040 = vunpack.c.l.b16 %v964
    %v1041 = vunpack.c.h.b16 %v964
    %v1042 = vunpack.c.l.b16 %v965
    %v1043 = vunpack.c.h.b16 %v965
    %v1044 = vunpack.c.l.b16 %v966
    %v1045 = vunpack.c.h.b16 %v966
    %v1046 = vunpack.c.l.b16 %v967
    %v1047 = vunpack.c.h.b16 %v967
    %v1048 = vunpack.c.l.b16 %v968
    %v1049 = vunpack.c.h.b16 %v968
    %v1050 = vunpack.c.l.b16 %v969
    %v1051 = vunpack.c.h.b16 %v969
    %v1052 = vunpack.c.l.b16 %v970
    %v1053 = vunpack.c.h.b16 %v970
    %v1054 = vunpack.c.l.b16 %v971
    %v1055 = vunpack.c.h.b16 %v971
    %v1056 = vunpack.c.l.b16 %v972
    %v1057 = vunpack.c.h.b16 %v972
    %v1058 = vunpack.c.l.b16 %v973
    %v1059 = vunpack.c.h.b16 %v973
    %v1060 = vunpack.c.l.b16 %v974
    %v1061 = vunpack.c.h.b16 %v974
    %v1062 = vunpack.c.l.b16 %v975
    %v1063 = vunpack.c.h.b16 %v975
    %v1064 = vunpack.c.l.b16 %v976
    %v1065 = vunpack.c.h.b16 %v976
    %v1066 = vunpack.c.l.b16 %v977
    %v1067 = vunpack.c.h.b16 %v977
    %v1068 = vunpack.c.l.b16 %v978
    %v1069 = vunpack.c.h.b16 %v978
    %v1070 = vunpack.c.l.b16 %v979
    %v1071 = vunpack.c.h.b16 %v979
    %v1072 = vunpack.c.l.b16 %v980
    %v1073 = vunpack.c.h.b16 %v980
    %v1074 = vunpack.c.l.b16 %v981
    %v1075 = vunpack.c.h.b16 %v981
    %v1076 = vunpack.c.l.b16 %v982
    %v1077 = vunpack.c.h.b16 %v982
    %v1078 = vunpack.c.l.b16 %v983
    %v1079 = vunpack.c.h.b16 %v983
    %v1080 = vpack.c.b16 %v1020, %v1016
    %v1081 = vpack.c.b16 %v1021, %v1017
    %v1082 = vpack.c.b16 %v1022, %v1018
    %v1083 = vpack.c.b16 %v1023, %v1019
    %v1084 = vpack.c.b16 %v1028, %v1024
    %v1085 = vpack.c.b16 %v1029, %v1025
    %v1086 = vpack.c.b16 %v1030, %v1026
    %v1087 = vpack.c.b16 %v1031, %v1027
    %v1088 = vpack.c.b16 %v1036, %v1032
    %v1089 = vpack.c.b16 %v1037, %v1033
    %v1090 = vpack.c.b16 %v1038, %v1034
    %v1091 = vpack.c.b16 %v1039, %v1035
    %v1092 = vpack.c.b16 %v1044, %v1040
    %v1093 = vpack.c.b16 %v1045, %v1041
    %v1094 = vpack.c.b16 %v1046, %v1042
    %v1095 = vpack.c.b16 %v1047, %v1043
    %v1096 = vpack.c.b16 %v1052, %v1048
    %v1097 = vpack.c.b16 %v1053, %v1049
    %v1098 = vpack.c.b16 %v1054, %v1050
    %v1099 = vpack.c.b16 %v1055, %v1051
    %v1100 = vpack.c.b16 %v1060, %v1056
    %v1101 = vpack.c.b16 %v1061, %v1057
    %v1102 = vpack.c.b16 %v1062, %v1058
    %v1103 = vpack.c.b16 %v1063, %v1059
    %v1104 = vpack.c.b16 %v1068, %v1064
    %v1105 = vpack.c.b16 %v1069, %v1065
    %v1106 = vpack.c.b16 %v1070, %v1066
    %v1107 = vpack.c.b16 %v1071, %v1067
    %v1108 = vpack.c.b16 %v1076, %v1072
    %v1109 = vpack.c.b16 %v1077, %v1073
    %v1110 = vpack.c.b16 %v1078, %v1074
    %v1111 = vpack.c.b16 %v1079, %v1075
    %1144 = vmatprep.subr.bf16.mxu0 %v1081
    %1145 = vmatpush1.bf16.msra.mxu0 %v1080
    %1146 = vmatprep.subr.bf16.mxu0 %v1085
    %1147 = vmatpush1.bf16.msra.mxu0 %v1084
    %1148 = vmatprep.subr.bf16.mxu0 %v1089
    %1149 = vmatpush1.bf16.msra.mxu0 %v1088
    %1150 = vmatprep.subr.bf16.mxu0 %v1093
    %1151 = vmatpush1.bf16.msra.mxu0 %v1092
    %1152 = vmatprep.subr.bf16.mxu0 %v1097
    %1153 = vmatpush1.bf16.msra.mxu0 %v1096
    %1154 = vmatprep.subr.bf16.mxu0 %v1101
    %1155 = vmatpush1.bf16.msra.mxu0 %v1100
    %1156 = vmatprep.subr.bf16.mxu0 %v1105
    %1157 = vmatpush1.bf16.msra.mxu0 %v1104
    %1158 = vmatprep.subr.bf16.mxu0 %v1109
    %1159 = vmatpush1.bf16.msra.mxu0 %v1108
    %1160 = vmatprep.subr.bf16.mxu0 0
    %1161 = vmatpush1.bf16.msra.mxu0 0
    %1162 = vmatprep.subr.bf16.mxu0 0
    %1163 = vmatpush1.bf16.msra.mxu0 0
    %1164 = vmatprep.subr.bf16.mxu0 0
    %1165 = vmatpush1.bf16.msra.mxu0 0
    %1166 = vmatprep.subr.bf16.mxu0 0
    %1167 = vmatpush1.bf16.msra.mxu0 0
    %1168 = vmatprep.subr.bf16.mxu0 0
    %1169 = vmatpush1.bf16.msra.mxu0 0
    %1170 = vmatprep.subr.bf16.mxu0 0
    %1171 = vmatpush1.bf16.msra.mxu0 0
    %1172 = vmatprep.subr.bf16.mxu0 0
    %1173 = vmatpush1.bf16.msra.mxu0 0
    %1174 = vmatprep.subr.bf16.mxu0 0
    %1175 = vmatpush1.bf16.msra.mxu0 0
    %1176 = vmatprep.mubr.bf16.mxu0 0
    %1177 = vmatmul.mubr.bf16.gmra.mrb[0].mxu0 0
    %v1178 = vpop.f32.mrb[0].mxu0
    %v1179 = vadd.f32 0.0, %v1178
    %v1180 = vpop.f32.mrb[0].mxu0
    %v1181 = vadd.f32 0.0, %v1180
    %v1182 = vpop.f32.mrb[0].mxu0
    %v1183 = vpop.f32.mrb[0].mxu0
    %1184 = vdwg.mxu0
    %1185 = vmatprep.subr.bf16.mxu0 %v1083
    %1186 = vmatpush1.bf16.msra.mxu0 %v1082
    %1187 = vmatprep.subr.bf16.mxu0 %v1087
    %1188 = vmatpush1.bf16.msra.mxu0 %v1086
    %1189 = vmatprep.subr.bf16.mxu0 %v1091
    %1190 = vmatpush1.bf16.msra.mxu0 %v1090
    %1191 = vmatprep.subr.bf16.mxu0 %v1095
    %1192 = vmatpush1.bf16.msra.mxu0 %v1094
    %1193 = vmatprep.subr.bf16.mxu0 %v1099
    %1194 = vmatpush1.bf16.msra.mxu0 %v1098
    %1195 = vmatprep.subr.bf16.mxu0 %v1103
    %1196 = vmatpush1.bf16.msra.mxu0 %v1102
    %1197 = vmatprep.subr.bf16.mxu0 %v1107
    %1198 = vmatpush1.bf16.msra.mxu0 %v1106
    %1199 = vmatprep.subr.bf16.mxu0 %v1111
    %1200 = vmatpush1.bf16.msra.mxu0 %v1110
    %1201 = vmatprep.subr.bf16.mxu0 0
    %1202 = vmatpush1.bf16.msra.mxu0 0
    %1203 = vmatprep.subr.bf16.mxu0 0
    %1204 = vmatpush1.bf16.msra.mxu0 0
    %1205 = vmatprep.subr.bf16.mxu0 0
    %1206 = vmatpush1.bf16.msra.mxu0 0
    %1207 = vmatprep.subr.bf16.mxu0 0
    %1208 = vmatpush1.bf16.msra.mxu0 0
    %1209 = vmatprep.subr.bf16.mxu0 0
    %1210 = vmatpush1.bf16.msra.mxu0 0
    %1211 = vmatprep.subr.bf16.mxu0 0
    %1212 = vmatpush1.bf16.msra.mxu0 0
    %1213 = vmatprep.subr.bf16.mxu0 0
    %1214 = vmatpush1.bf16.msra.mxu0 0
    %1215 = vmatprep.subr.bf16.mxu0 0
    %1216 = vmatpush1.bf16.msra.mxu0 0
    %1217 = vmatprep.mubr.bf16.mxu0 0
    %1218 = vmatmul.mubr.bf16.gmra.mrb[0].mxu0 0
    %v1219 = vpop.f32.mrb[0].mxu0
    %v1220 = vadd.f32 0.0, %v1219
    %v1221 = vpop.f32.mrb[0].mxu0
    %v1222 = vadd.f32 0.0, %v1221
    %v1223 = vpop.f32.mrb[0].mxu0
    %v1224 = vpop.f32.mrb[0].mxu0
    %1225 = vdwg.mxu0
    %v1226 = vadd.f32 %v948, %v1179
    %v1227 = vadd.f32 %v949, %v1181
    %v1228 = vadd.f32 %v950, %v1220
    %v1229 = vadd.f32 %v951, %v1222
    %v1230 = vxor.u32 %v1226, 2147483648
    %v1231 = vmul.f32 %v1230, 1.442695
    %v1232 = vpow.pop %v1231
    %v1233 = vadd.f32 %v1232, 1.0
    %v1234 = vrcp.pop %v1233
    %v1235 = vmul.f32 1.0, %v1234
    %v1236 = vxor.u32 %v1227, 2147483648
    %v1237 = vmul.f32 %v1236, 1.442695
    %v1238 = vpow.pop %v1237
    %v1239 = vadd.f32 %v1238, 1.0
    %v1240 = vrcp.pop %v1239
    %v1241 = vmul.f32 1.0, %v1240
    %v1242 = vtanh.pop %v1228
    %v1243 = vxor.u32 %v1229, 2147483648
    %v1244 = vmul.f32 %v1243, 1.442695
    %v1245 = vpow.pop %v1244
    %v1246 = vadd.f32 %v1245, 1.0
    %v1247 = vrcp.pop %v1246
    %v1248 = vmul.f32 1.0, %v1247
    %v1249 = vmul.f32 %v1241, 0.0
    %v1250 = vmul.f32 %v1235, %v1242
    %v1251 = vadd.f32 %v1249, %v1250
    %v1252 = vtanh.pop %v1251
    %v1253 = vmul.f32 %v1248, %v1252
    %s1254 = smul.u32 0, 2
    %s1255 = smul.addr %s1254, 8
    %s1256 = scalar_lea.vmem [#allocation15], %s1255
    %1257 = vst [vmem:[%s1256] sm:$0xff] %v1253
    %s1258 = smul.u32 7, 8
    %s1259 = smul.addr %s1258, 8
    %s1260 = scalar_lea.vmem [#allocation2], %s1259
    %v1261 = vld [vmem:[%s1260 + $0x20] sm:$0xff]
    %v1262 = vld [vmem:[%s1260 + $0x28] sm:$0xff]
    %v1263 = vld [vmem:[%s1260 + $0x30] sm:$0xff]
    %v1264 = vld [vmem:[%s1260 + $0x38] sm:$0xff]
    %v1265 = vld [vmem:[#allocation11] sm:$0xff]
    %v1266 = vld [vmem:[#allocation11 + $0x8] sm:$0xff]
    %v1267 = vld [vmem:[#allocation11 + $0x10] sm:$0xff]
    %v1268 = vld [vmem:[#allocation11 + $0x18] sm:$0xff]
    %v1269 = vld [vmem:[#allocation11 + $0x20] sm:$0xff]
    %v1270 = vld [vmem:[#allocation11 + $0x28] sm:$0xff]
    %v1271 = vld [vmem:[#allocation11 + $0x30] sm:$0xff]
    %v1272 = vld [vmem:[#allocation11 + $0x38] sm:$0xff]
    %v1273 = vld [vmem:[#allocation11 + $0x40] sm:$0xff]
    %v1274 = vld [vmem:[#allocation11 + $0x48] sm:$0xff]
    %v1275 = vld [vmem:[#allocation11 + $0x50] sm:$0xff]
    %v1276 = vld [vmem:[#allocation11 + $0x58] sm:$0xff]
    %v1277 = vld [vmem:[#allocation11 + $0x60] sm:$0xff]
    %v1278 = vld [vmem:[#allocation11 + $0x68] sm:$0xff]
    %v1279 = vld [vmem:[#allocation11 + $0x70] sm:$0xff]
    %v1280 = vld [vmem:[#allocation11 + $0x78] sm:$0xff]
    %v1281 = vld [vmem:[#allocation11 + $0x80] sm:$0xff]
    %v1282 = vld [vmem:[#allocation11 + $0x88] sm:$0xff]
    %v1283 = vld [vmem:[#allocation11 + $0x90] sm:$0xff]
    %v1284 = vld [vmem:[#allocation11 + $0x98] sm:$0xff]
    %v1285 = vld [vmem:[#allocation11 + $0xa0] sm:$0xff]
    %v1286 = vld [vmem:[#allocation11 + $0xa8] sm:$0xff]
    %v1287 = vld [vmem:[#allocation11 + $0xb0] sm:$0xff]
    %v1288 = vld [vmem:[#allocation11 + $0xb8] sm:$0xff]
    %v1289 = vld [vmem:[#allocation11 + $0xc0] sm:$0xff]
    %v1290 = vld [vmem:[#allocation11 + $0xc8] sm:$0xff]
    %v1291 = vld [vmem:[#allocation11 + $0xd0] sm:$0xff]
    %v1292 = vld [vmem:[#allocation11 + $0xd8] sm:$0xff]
    %v1293 = vld [vmem:[#allocation11 + $0xe0] sm:$0xff]
    %v1294 = vld [vmem:[#allocation11 + $0xe8] sm:$0xff]
    %v1295 = vld [vmem:[#allocation11 + $0xf0] sm:$0xff]
    %v1296 = vld [vmem:[#allocation11 + $0xf8] sm:$0xff]
    %v1329 = vunpack.c.l.b16 %v1265
    %v1330 = vunpack.c.h.b16 %v1265
    %v1331 = vunpack.c.l.b16 %v1266
    %v1332 = vunpack.c.h.b16 %v1266
    %v1333 = vunpack.c.l.b16 %v1267
    %v1334 = vunpack.c.h.b16 %v1267
    %v1335 = vunpack.c.l.b16 %v1268
    %v1336 = vunpack.c.h.b16 %v1268
    %v1337 = vunpack.c.l.b16 %v1269
    %v1338 = vunpack.c.h.b16 %v1269
    %v1339 = vunpack.c.l.b16 %v1270
    %v1340 = vunpack.c.h.b16 %v1270
    %v1341 = vunpack.c.l.b16 %v1271
    %v1342 = vunpack.c.h.b16 %v1271
    %v1343 = vunpack.c.l.b16 %v1272
    %v1344 = vunpack.c.h.b16 %v1272
    %v1345 = vunpack.c.l.b16 %v1273
    %v1346 = vunpack.c.h.b16 %v1273
    %v1347 = vunpack.c.l.b16 %v1274
    %v1348 = vunpack.c.h.b16 %v1274
    %v1349 = vunpack.c.l.b16 %v1275
    %v1350 = vunpack.c.h.b16 %v1275
    %v1351 = vunpack.c.l.b16 %v1276
    %v1352 = vunpack.c.h.b16 %v1276
    %v1353 = vunpack.c.l.b16 %v1277
    %v1354 = vunpack.c.h.b16 %v1277
    %v1355 = vunpack.c.l.b16 %v1278
    %v1356 = vunpack.c.h.b16 %v1278
    %v1357 = vunpack.c.l.b16 %v1279
    %v1358 = vunpack.c.h.b16 %v1279
    %v1359 = vunpack.c.l.b16 %v1280
    %v1360 = vunpack.c.h.b16 %v1280
    %v1361 = vunpack.c.l.b16 %v1281
    %v1362 = vunpack.c.h.b16 %v1281
    %v1363 = vunpack.c.l.b16 %v1282
    %v1364 = vunpack.c.h.b16 %v1282
    %v1365 = vunpack.c.l.b16 %v1283
    %v1366 = vunpack.c.h.b16 %v1283
    %v1367 = vunpack.c.l.b16 %v1284
    %v1368 = vunpack.c.h.b16 %v1284
    %v1369 = vunpack.c.l.b16 %v1285
    %v1370 = vunpack.c.h.b16 %v1285
    %v1371 = vunpack.c.l.b16 %v1286
    %v1372 = vunpack.c.h.b16 %v1286
    %v1373 = vunpack.c.l.b16 %v1287
    %v1374 = vunpack.c.h.b16 %v1287
    %v1375 = vunpack.c.l.b16 %v1288
    %v1376 = vunpack.c.h.b16 %v1288
    %v1377 = vunpack.c.l.b16 %v1289
    %v1378 = vunpack.c.h.b16 %v1289
    %v1379 = vunpack.c.l.b16 %v1290
    %v1380 = vunpack.c.h.b16 %v1290
    %v1381 = vunpack.c.l.b16 %v1291
    %v1382 = vunpack.c.h.b16 %v1291
    %v1383 = vunpack.c.l.b16 %v1292
    %v1384 = vunpack.c.h.b16 %v1292
    %v1385 = vunpack.c.l.b16 %v1293
    %v1386 = vunpack.c.h.b16 %v1293
    %v1387 = vunpack.c.l.b16 %v1294
    %v1388 = vunpack.c.h.b16 %v1294
    %v1389 = vunpack.c.l.b16 %v1295
    %v1390 = vunpack.c.h.b16 %v1295
    %v1391 = vunpack.c.l.b16 %v1296
    %v1392 = vunpack.c.h.b16 %v1296
    %v1393 = vpack.c.b16 %v1333, %v1329
    %v1394 = vpack.c.b16 %v1334, %v1330
    %v1395 = vpack.c.b16 %v1335, %v1331
    %v1396 = vpack.c.b16 %v1336, %v1332
    %v1397 = vpack.c.b16 %v1341, %v1337
    %v1398 = vpack.c.b16 %v1342, %v1338
    %v1399 = vpack.c.b16 %v1343, %v1339
    %v1400 = vpack.c.b16 %v1344, %v1340
    %v1401 = vpack.c.b16 %v1349, %v1345
    %v1402 = vpack.c.b16 %v1350, %v1346
    %v1403 = vpack.c.b16 %v1351, %v1347
    %v1404 = vpack.c.b16 %v1352, %v1348
    %v1405 = vpack.c.b16 %v1357, %v1353
    %v1406 = vpack.c.b16 %v1358, %v1354
    %v1407 = vpack.c.b16 %v1359, %v1355
    %v1408 = vpack.c.b16 %v1360, %v1356
    %v1409 = vpack.c.b16 %v1365, %v1361
    %v1410 = vpack.c.b16 %v1366, %v1362
    %v1411 = vpack.c.b16 %v1367, %v1363
    %v1412 = vpack.c.b16 %v1368, %v1364
    %v1413 = vpack.c.b16 %v1373, %v1369
    %v1414 = vpack.c.b16 %v1374, %v1370
    %v1415 = vpack.c.b16 %v1375, %v1371
    %v1416 = vpack.c.b16 %v1376, %v1372
    %v1417 = vpack.c.b16 %v1381, %v1377
    %v1418 = vpack.c.b16 %v1382, %v1378
    %v1419 = vpack.c.b16 %v1383, %v1379
    %v1420 = vpack.c.b16 %v1384, %v1380
    %v1421 = vpack.c.b16 %v1389, %v1385
    %v1422 = vpack.c.b16 %v1390, %v1386
    %v1423 = vpack.c.b16 %v1391, %v1387
    %v1424 = vpack.c.b16 %v1392, %v1388
    %1457 = vmatprep.subr.bf16.mxu0 %v1394
    %1458 = vmatpush1.bf16.msra.mxu0 %v1393
    %1459 = vmatprep.subr.bf16.mxu0 %v1398
    %1460 = vmatpush1.bf16.msra.mxu0 %v1397
    %1461 = vmatprep.subr.bf16.mxu0 %v1402
    %1462 = vmatpush1.bf16.msra.mxu0 %v1401
    %1463 = vmatprep.subr.bf16.mxu0 %v1406
    %1464 = vmatpush1.bf16.msra.mxu0 %v1405
    %1465 = vmatprep.subr.bf16.mxu0 %v1410
    %1466 = vmatpush1.bf16.msra.mxu0 %v1409
    %1467 = vmatprep.subr.bf16.mxu0 %v1414
    %1468 = vmatpush1.bf16.msra.mxu0 %v1413
    %1469 = vmatprep.subr.bf16.mxu0 %v1418
    %1470 = vmatpush1.bf16.msra.mxu0 %v1417
    %1471 = vmatprep.subr.bf16.mxu0 %v1422
    %1472 = vmatpush1.bf16.msra.mxu0 %v1421
    %1473 = vmatprep.subr.bf16.mxu0 0
    %1474 = vmatpush1.bf16.msra.mxu0 0
    %1475 = vmatprep.subr.bf16.mxu0 0
    %1476 = vmatpush1.bf16.msra.mxu0 0
    %1477 = vmatprep.subr.bf16.mxu0 0
    %1478 = vmatpush1.bf16.msra.mxu0 0
    %1479 = vmatprep.subr.bf16.mxu0 0
    %1480 = vmatpush1.bf16.msra.mxu0 0
    %1481 = vmatprep.subr.bf16.mxu0 0
    %1482 = vmatpush1.bf16.msra.mxu0 0
    %1483 = vmatprep.subr.bf16.mxu0 0
    %1484 = vmatpush1.bf16.msra.mxu0 0
    %1485 = vmatprep.subr.bf16.mxu0 0
    %1486 = vmatpush1.bf16.msra.mxu0 0
    %1487 = vmatprep.subr.bf16.mxu0 0
    %1488 = vmatpush1.bf16.msra.mxu0 0
    %1489 = vmatprep.mubr.bf16.mxu0 0
    %1490 = vmatmul.mubr.bf16.gmra.mrb[0].mxu0 0
    %v1491 = vpop.f32.mrb[0].mxu0
    %v1492 = vadd.f32 0.0, %v1491
    %v1493 = vpop.f32.mrb[0].mxu0
    %v1494 = vadd.f32 0.0, %v1493
    %v1495 = vpop.f32.mrb[0].mxu0
    %v1496 = vpop.f32.mrb[0].mxu0
    %1497 = vdwg.mxu0
    %1498 = vmatprep.subr.bf16.mxu0 %v1396
    %1499 = vmatpush1.bf16.msra.mxu0 %v1395
    %1500 = vmatprep.subr.bf16.mxu0 %v1400
    %1501 = vmatpush1.bf16.msra.mxu0 %v1399
    %1502 = vmatprep.subr.bf16.mxu0 %v1404
    %1503 = vmatpush1.bf16.msra.mxu0 %v1403
    %1504 = vmatprep.subr.bf16.mxu0 %v1408
    %1505 = vmatpush1.bf16.msra.mxu0 %v1407
    %1506 = vmatprep.subr.bf16.mxu0 %v1412
    %1507 = vmatpush1.bf16.msra.mxu0 %v1411
    %1508 = vmatprep.subr.bf16.mxu0 %v1416
    %1509 = vmatpush1.bf16.msra.mxu0 %v1415
    %1510 = vmatprep.subr.bf16.mxu0 %v1420
    %1511 = vmatpush1.bf16.msra.mxu0 %v1419
    %1512 = vmatprep.subr.bf16.mxu0 %v1424
    %1513 = vmatpush1.bf16.msra.mxu0 %v1423
    %1514 = vmatprep.subr.bf16.mxu0 0
    %1515 = vmatpush1.bf16.msra.mxu0 0
    %1516 = vmatprep.subr.bf16.mxu0 0
    %1517 = vmatpush1.bf16.msra.mxu0 0
    %1518 = vmatprep.subr.bf16.mxu0 0
    %1519 = vmatpush1.bf16.msra.mxu0 0
    %1520 = vmatprep.subr.bf16.mxu0 0
    %1521 = vmatpush1.bf16.msra.mxu0 0
    %1522 = vmatprep.subr.bf16.mxu0 0
    %1523 = vmatpush1.bf16.msra.mxu0 0
    %1524 = vmatprep.subr.bf16.mxu0 0
    %1525 = vmatpush1.bf16.msra.mxu0 0
    %1526 = vmatprep.subr.bf16.mxu0 0
    %1527 = vmatpush1.bf16.msra.mxu0 0
    %1528 = vmatprep.subr.bf16.mxu0 0
    %1529 = vmatpush1.bf16.msra.mxu0 0
    %1530 = vmatprep.mubr.bf16.mxu0 0
    %1531 = vmatmul.mubr.bf16.gmra.mrb[0].mxu0 0
    %v1532 = vpop.f32.mrb[0].mxu0
    %v1533 = vadd.f32 0.0, %v1532
    %v1534 = vpop.f32.mrb[0].mxu0
    %v1535 = vadd.f32 0.0, %v1534
    %v1536 = vpop.f32.mrb[0].mxu0
    %v1537 = vpop.f32.mrb[0].mxu0
    %1538 = vdwg.mxu0
    %v1539 = vadd.f32 %v1261, %v1492
    %v1540 = vadd.f32 %v1262, %v1494
    %v1541 = vadd.f32 %v1263, %v1533
    %v1542 = vadd.f32 %v1264, %v1535
    %v1543 = vxor.u32 %v1539, 2147483648
    %v1544 = vmul.f32 %v1543, 1.442695
    %v1545 = vpow.pop %v1544
    %v1546 = vadd.f32 %v1545, 1.0
    %v1547 = vrcp.pop %v1546
    %v1548 = vmul.f32 1.0, %v1547
    %v1549 = vxor.u32 %v1540, 2147483648
    %v1550 = vmul.f32 %v1549, 1.442695
    %v1551 = vpow.pop %v1550
    %v1552 = vadd.f32 %v1551, 1.0
    %v1553 = vrcp.pop %v1552
    %v1554 = vmul.f32 1.0, %v1553
    %v1555 = vtanh.pop %v1541
    %v1556 = vxor.u32 %v1542, 2147483648
    %v1557 = vmul.f32 %v1556, 1.442695
    %v1558 = vpow.pop %v1557
    %v1559 = vadd.f32 %v1558, 1.0
    %v1560 = vrcp.pop %v1559
    %v1561 = vmul.f32 1.0, %v1560
    %v1562 = vmul.f32 %v1554, 0.0
    %v1563 = vmul.f32 %v1548, %v1555
    %v1564 = vadd.f32 %v1562, %v1563
    %v1565 = vtanh.pop %v1564
    %v1566 = vmul.f32 %v1561, %v1565
    %s1567 = smul.u32 7, 2
    %s1568 = smul.addr %s1567, 8
    %s1569 = scalar_lea.vmem [#allocation15], %s1568
    %1570 = vst [vmem:[%s1569 + $0x8] sm:$0xff] %v1566
    %s1571 = smul.u32 1, 8
    %s1572 = smul.addr %s1571, 8
    %s1573 = scalar_lea.vmem [#allocation2], %s1572
    %v1574 = vld [vmem:[%s1573] sm:$0xff]
    %v1575 = vld [vmem:[%s1573 + $0x8] sm:$0xff]
    %v1576 = vld [vmem:[%s1573 + $0x10] sm:$0xff]
    %v1577 = vld [vmem:[%s1573 + $0x18] sm:$0xff]
    %v1578 = vld [vmem:[#allocation9] sm:$0xff]
    %v1579 = vld [vmem:[#allocation9 + $0x8] sm:$0xff]
    %v1580 = vld [vmem:[#allocation9 + $0x10] sm:$0xff]
    %v1581 = vld [vmem:[#allocation9 + $0x18] sm:$0xff]
    %v1582 = vld [vmem:[#allocation9 + $0x20] sm:$0xff]
    %v1583 = vld [vmem:[#allocation9 + $0x28] sm:$0xff]
    %v1584 = vld [vmem:[#allocation9 + $0x30] sm:$0xff]
    %v1585 = vld [vmem:[#allocation9 + $0x38] sm:$0xff]
    %v1586 = vld [vmem:[#allocation9 + $0x40] sm:$0xff]
    %v1587 = vld [vmem:[#allocation9 + $0x48] sm:$0xff]
    %v1588 = vld [vmem:[#allocation9 + $0x50] sm:$0xff]
    %v1589 = vld [vmem:[#allocation9 + $0x58] sm:$0xff]
    %v1590 = vld [vmem:[#allocation9 + $0x60] sm:$0xff]
    %v1591 = vld [vmem:[#allocation9 + $0x68] sm:$0xff]
    %v1592 = vld [vmem:[#allocation9 + $0x70] sm:$0xff]
    %v1593 = vld [vmem:[#allocation9 + $0x78] sm:$0xff]
    %v1594 = vld [vmem:[#allocation9 + $0x80] sm:$0xff]
    %v1595 = vld [vmem:[#allocation9 + $0x88] sm:$0xff]
    %v1596 = vld [vmem:[#allocation9 + $0x90] sm:$0xff]
    %v1597 = vld [vmem:[#allocation9 + $0x98] sm:$0xff]
    %v1598 = vld [vmem:[#allocation9 + $0xa0] sm:$0xff]
    %v1599 = vld [vmem:[#allocation9 + $0xa8] sm:$0xff]
    %v1600 = vld [vmem:[#allocation9 + $0xb0] sm:$0xff]
    %v1601 = vld [vmem:[#allocation9 + $0xb8] sm:$0xff]
    %v1602 = vld [vmem:[#allocation9 + $0xc0] sm:$0xff]
    %v1603 = vld [vmem:[#allocation9 + $0xc8] sm:$0xff]
    %v1604 = vld [vmem:[#allocation9 + $0xd0] sm:$0xff]
    %v1605 = vld [vmem:[#allocation9 + $0xd8] sm:$0xff]
    %v1606 = vld [vmem:[#allocation9 + $0xe0] sm:$0xff]
    %v1607 = vld [vmem:[#allocation9 + $0xe8] sm:$0xff]
    %v1608 = vld [vmem:[#allocation9 + $0xf0] sm:$0xff]
    %v1609 = vld [vmem:[#allocation9 + $0xf8] sm:$0xff]
    %v1610 = vpack.c.bf16 %v1253, %v1253
    %v1643 = vunpack.c.l.b16 %v1578
    %v1644 = vunpack.c.h.b16 %v1578
    %v1645 = vunpack.c.l.b16 %v1579
    %v1646 = vunpack.c.h.b16 %v1579
    %v1647 = vunpack.c.l.b16 %v1580
    %v1648 = vunpack.c.h.b16 %v1580
    %v1649 = vunpack.c.l.b16 %v1581
    %v1650 = vunpack.c.h.b16 %v1581
    %v1651 = vunpack.c.l.b16 %v1582
    %v1652 = vunpack.c.h.b16 %v1582
    %v1653 = vunpack.c.l.b16 %v1583
    %v1654 = vunpack.c.h.b16 %v1583
    %v1655 = vunpack.c.l.b16 %v1584
    %v1656 = vunpack.c.h.b16 %v1584
    %v1657 = vunpack.c.l.b16 %v1585
    %v1658 = vunpack.c.h.b16 %v1585
    %v1659 = vunpack.c.l.b16 %v1586
    %v1660 = vunpack.c.h.b16 %v1586
    %v1661 = vunpack.c.l.b16 %v1587
    %v1662 = vunpack.c.h.b16 %v1587
    %v1663 = vunpack.c.l.b16 %v1588
    %v1664 = vunpack.c.h.b16 %v1588
    %v1665 = vunpack.c.l.b16 %v1589
    %v1666 = vunpack.c.h.b16 %v1589
    %v1667 = vunpack.c.l.b16 %v1590
    %v1668 = vunpack.c.h.b16 %v1590
    %v1669 = vunpack.c.l.b16 %v1591
    %v1670 = vunpack.c.h.b16 %v1591
    %v1671 = vunpack.c.l.b16 %v1592
    %v1672 = vunpack.c.h.b16 %v1592
    %v1673 = vunpack.c.l.b16 %v1593
    %v1674 = vunpack.c.h.b16 %v1593
    %v1675 = vunpack.c.l.b16 %v1594
    %v1676 = vunpack.c.h.b16 %v1594
    %v1677 = vunpack.c.l.b16 %v1595
    %v1678 = vunpack.c.h.b16 %v1595
    %v1679 = vunpack.c.l.b16 %v1596
    %v1680 = vunpack.c.h.b16 %v1596
    %v1681 = vunpack.c.l.b16 %v1597
    %v1682 = vunpack.c.h.b16 %v1597
    %v1683 = vunpack.c.l.b16 %v1598
    %v1684 = vunpack.c.h.b16 %v1598
    %v1685 = vunpack.c.l.b16 %v1599
    %v1686 = vunpack.c.h.b16 %v1599
    %v1687 = vunpack.c.l.b16 %v1600
    %v1688 = vunpack.c.h.b16 %v1600
    %v1689 = vunpack.c.l.b16 %v1601
    %v1690 = vunpack.c.h.b16 %v1601
    %v1691 = vunpack.c.l.b16 %v1602
    %v1692 = vunpack.c.h.b16 %v1602
    %v1693 = vunpack.c.l.b16 %v1603
    %v1694 = vunpack.c.h.b16 %v1603
    %v1695 = vunpack.c.l.b16 %v1604
    %v1696 = vunpack.c.h.b16 %v1604
    %v1697 = vunpack.c.l.b16 %v1605
    %v1698 = vunpack.c.h.b16 %v1605
    %v1699 = vunpack.c.l.b16 %v1606
    %v1700 = vunpack.c.h.b16 %v1606
    %v1701 = vunpack.c.l.b16 %v1607
    %v1702 = vunpack.c.h.b16 %v1607
    %v1703 = vunpack.c.l.b16 %v1608
    %v1704 = vunpack.c.h.b16 %v1608
    %v1705 = vunpack.c.l.b16 %v1609
    %v1706 = vunpack.c.h.b16 %v1609
    %v1707 = vpack.c.b16 %v1647, %v1643
    %v1708 = vpack.c.b16 %v1648, %v1644
    %v1709 = vpack.c.b16 %v1649, %v1645
    %v1710 = vpack.c.b16 %v1650, %v1646
    %v1711 = vpack.c.b16 %v1655, %v1651
    %v1712 = vpack.c.b16 %v1656, %v1652
    %v1713 = vpack.c.b16 %v1657, %v1653
    %v1714 = vpack.c.b16 %v1658, %v1654
    %v1715 = vpack.c.b16 %v1663, %v1659
    %v1716 = vpack.c.b16 %v1664, %v1660
    %v1717 = vpack.c.b16 %v1665, %v1661
    %v1718 = vpack.c.b16 %v1666, %v1662
    %v1719 = vpack.c.b16 %v1671, %v1667
    %v1720 = vpack.c.b16 %v1672, %v1668
    %v1721 = vpack.c.b16 %v1673, %v1669
    %v1722 = vpack.c.b16 %v1674, %v1670
    %v1723 = vpack.c.b16 %v1679, %v1675
    %v1724 = vpack.c.b16 %v1680, %v1676
    %v1725 = vpack.c.b16 %v1681, %v1677
    %v1726 = vpack.c.b16 %v1682, %v1678
    %v1727 = vpack.c.b16 %v1687, %v1683
    %v1728 = vpack.c.b16 %v1688, %v1684
    %v1729 = vpack.c.b16 %v1689, %v1685
    %v1730 = vpack.c.b16 %v1690, %v1686
    %v1731 = vpack.c.b16 %v1695, %v1691
    %v1732 = vpack.c.b16 %v1696, %v1692
    %v1733 = vpack.c.b16 %v1697, %v1693
    %v1734 = vpack.c.b16 %v1698, %v1694
    %v1735 = vpack.c.b16 %v1703, %v1699
    %v1736 = vpack.c.b16 %v1704, %v1700
    %v1737 = vpack.c.b16 %v1705, %v1701
    %v1738 = vpack.c.b16 %v1706, %v1702
    %1771 = vmatprep.subr.bf16.mxu0 %v1708
    %1772 = vmatpush1.bf16.msra.mxu0 %v1707
    %1773 = vmatprep.subr.bf16.mxu0 %v1712
    %1774 = vmatpush1.bf16.msra.mxu0 %v1711
    %1775 = vmatprep.subr.bf16.mxu0 %v1716
    %1776 = vmatpush1.bf16.msra.mxu0 %v1715
    %1777 = vmatprep.subr.bf16.mxu0 %v1720
    %1778 = vmatpush1.bf16.msra.mxu0 %v1719
    %1779 = vmatprep.subr.bf16.mxu0 %v1724
    %1780 = vmatpush1.bf16.msra.mxu0 %v1723
    %1781 = vmatprep.subr.bf16.mxu0 %v1728
    %1782 = vmatpush1.bf16.msra.mxu0 %v1727
    %1783 = vmatprep.subr.bf16.mxu0 %v1732
    %1784 = vmatpush1.bf16.msra.mxu0 %v1731
    %1785 = vmatprep.subr.bf16.mxu0 %v1736
    %1786 = vmatpush1.bf16.msra.mxu0 %v1735
    %1787 = vmatprep.subr.bf16.mxu0 0
    %1788 = vmatpush1.bf16.msra.mxu0 0
    %1789 = vmatprep.subr.bf16.mxu0 0
    %1790 = vmatpush1.bf16.msra.mxu0 0
    %1791 = vmatprep.subr.bf16.mxu0 0
    %1792 = vmatpush1.bf16.msra.mxu0 0
    %1793 = vmatprep.subr.bf16.mxu0 0
    %1794 = vmatpush1.bf16.msra.mxu0 0
    %1795 = vmatprep.subr.bf16.mxu0 0
    %1796 = vmatpush1.bf16.msra.mxu0 0
    %1797 = vmatprep.subr.bf16.mxu0 0
    %1798 = vmatpush1.bf16.msra.mxu0 0
    %1799 = vmatprep.subr.bf16.mxu0 0
    %1800 = vmatpush1.bf16.msra.mxu0 0
    %1801 = vmatprep.subr.bf16.mxu0 0
    %1802 = vmatpush1.bf16.msra.mxu0 0
    %1803 = vmatprep.mubr.bf16.mxu0 0
    %1804 = vmatmul.mubr.bf16.gmra.mrb[0].mxu0 %v1610
    %v1805 = vpop.f32.mrb[0].mxu0
    %v1806 = vadd.f32 0.0, %v1805
    %v1807 = vpop.f32.mrb[0].mxu0
    %v1808 = vadd.f32 0.0, %v1807
    %v1809 = vpop.f32.mrb[0].mxu0
    %v1810 = vpop.f32.mrb[0].mxu0
    %1811 = vdwg.mxu0
    %1812 = vmatprep.subr.bf16.mxu0 %v1710
    %1813 = vmatpush1.bf16.msra.mxu0 %v1709
    %1814 = vmatprep.subr.bf16.mxu0 %v1714
    %1815 = vmatpush1.bf16.msra.mxu0 %v1713
    %1816 = vmatprep.subr.bf16.mxu0 %v1718
    %1817 = vmatpush1.bf16.msra.mxu0 %v1717
    %1818 = vmatprep.subr.bf16.mxu0 %v1722
    %1819 = vmatpush1.bf16.msra.mxu0 %v1721
    %1820 = vmatprep.subr.bf16.mxu0 %v1726
    %1821 = vmatpush1.bf16.msra.mxu0 %v1725
    %1822 = vmatprep.subr.bf16.mxu0 %v1730
    %1823 = vmatpush1.bf16.msra.mxu0 %v1729
    %1824 = vmatprep.subr.bf16.mxu0 %v1734
    %1825 = vmatpush1.bf16.msra.mxu0 %v1733
    %1826 = vmatprep.subr.bf16.mxu0 %v1738
    %1827 = vmatpush1.bf16.msra.mxu0 %v1737
    %1828 = vmatprep.subr.bf16.mxu0 0
    %1829 = vmatpush1.bf16.msra.mxu0 0
    %1830 = vmatprep.subr.bf16.mxu0 0
    %1831 = vmatpush1.bf16.msra.mxu0 0
    %1832 = vmatprep.subr.bf16.mxu0 0
    %1833 = vmatpush1.bf16.msra.mxu0 0
    %1834 = vmatprep.subr.bf16.mxu0 0
    %1835 = vmatpush1.bf16.msra.mxu0 0
    %1836 = vmatprep.subr.bf16.mxu0 0
    %1837 = vmatpush1.bf16.msra.mxu0 0
    %1838 = vmatprep.subr.bf16.mxu0 0
    %1839 = vmatpush1.bf16.msra.mxu0 0
    %1840 = vmatprep.subr.bf16.mxu0 0
    %1841 = vmatpush1.bf16.msra.mxu0 0
    %1842 = vmatprep.subr.bf16.mxu0 0
    %1843 = vmatpush1.bf16.msra.mxu0 0
    %1844 = vmatprep.mubr.bf16.mxu0 0
    %1845 = vmatmul.mubr.bf16.gmra.mrb[0].mxu0 %v1610
    %v1846 = vpop.f32.mrb[0].mxu0
    %v1847 = vadd.f32 0.0, %v1846
    %v1848 = vpop.f32.mrb[0].mxu0
    %v1849 = vadd.f32 0.0, %v1848
    %v1850 = vpop.f32.mrb[0].mxu0
    %v1851 = vpop.f32.mrb[0].mxu0
    %1852 = vdwg.mxu0
    %v1853 = vadd.f32 %v1574, %v1806
    %v1854 = vadd.f32 %v1575, %v1808
    %v1855 = vadd.f32 %v1576, %v1847
    %v1856 = vadd.f32 %v1577, %v1849
    %v1857 = vxor.u32 %v1853, 2147483648
    %v1858 = vmul.f32 %v1857, 1.442695
    %v1859 = vpow.pop %v1858
    %v1860 = vadd.f32 %v1859, 1.0
    %v1861 = vrcp.pop %v1860
    %v1862 = vmul.f32 1.0, %v1861
    %v1863 = vxor.u32 %v1854, 2147483648
    %v1864 = vmul.f32 %v1863, 1.442695
    %v1865 = vpow.pop %v1864
    %v1866 = vadd.f32 %v1865, 1.0
    %v1867 = vrcp.pop %v1866
    %v1868 = vmul.f32 1.0, %v1867
    %v1869 = vtanh.pop %v1855
    %v1870 = vxor.u32 %v1856, 2147483648
    %v1871 = vmul.f32 %v1870, 1.442695
    %v1872 = vpow.pop %v1871
    %v1873 = vadd.f32 %v1872, 1.0
    %v1874 = vrcp.pop %v1873
    %v1875 = vmul.f32 1.0, %v1874
    %v1876 = vmul.f32 %v1868, %v1251
    %v1877 = vmul.f32 %v1862, %v1869
    %v1878 = vadd.f32 %v1876, %v1877
    %v1879 = vtanh.pop %v1878
    %v1880 = vmul.f32 %v1875, %v1879
    %s1881 = smul.u32 1, 2
    %s1882 = smul.addr %s1881, 8
    %s1883 = scalar_lea.vmem [#allocation15], %s1882
    %1884 = vst [vmem:[%s1883] sm:$0xff] %v1880
    %s1885 = smul.u32 6, 8
    %s1886 = smul.addr %s1885, 8
    %s1887 = scalar_lea.vmem [#allocation2], %s1886
    %v1888 = vld [vmem:[%s1887 + $0x20] sm:$0xff]
    %v1889 = vld [vmem:[%s1887 + $0x28] sm:$0xff]
    %v1890 = vld [vmem:[%s1887 + $0x30] sm:$0xff]
    %v1891 = vld [vmem:[%s1887 + $0x38] sm:$0xff]
    %v1892 = vld [vmem:[#allocation11] sm:$0xff]
    %v1893 = vld [vmem:[#allocation11 + $0x8] sm:$0xff]
    %v1894 = vld [vmem:[#allocation11 + $0x10] sm:$0xff]
    %v1895 = vld [vmem:[#allocation11 + $0x18] sm:$0xff]
    %v1896 = vld [vmem:[#allocation11 + $0x20] sm:$0xff]
    %v1897 = vld [vmem:[#allocation11 + $0x28] sm:$0xff]
    %v1898 = vld [vmem:[#allocation11 + $0x30] sm:$0xff]
    %v1899 = vld [vmem:[#allocation11 + $0x38] sm:$0xff]
    %v1900 = vld [vmem:[#allocation11 + $0x40] sm:$0xff]
    %v1901 = vld [vmem:[#allocation11 + $0x48] sm:$0xff]
    %v1902 = vld [vmem:[#allocation11 + $0x50] sm:$0xff]
    %v1903 = vld [vmem:[#allocation11 + $0x58] sm:$0xff]
    %v1904 = vld [vmem:[#allocation11 + $0x60] sm:$0xff]
    %v1905 = vld [vmem:[#allocation11 + $0x68] sm:$0xff]
    %v1906 = vld [vmem:[#allocation11 + $0x70] sm:$0xff]
    %v1907 = vld [vmem:[#allocation11 + $0x78] sm:$0xff]
    %v1908 = vld [vmem:[#allocation11 + $0x80] sm:$0xff]
    %v1909 = vld [vmem:[#allocation11 + $0x88] sm:$0xff]
    %v1910 = vld [vmem:[#allocation11 + $0x90] sm:$0xff]
    %v1911 = vld [vmem:[#allocation11 + $0x98] sm:$0xff]
    %v1912 = vld [vmem:[#allocation11 + $0xa0] sm:$0xff]
    %v1913 = vld [vmem:[#allocation11 + $0xa8] sm:$0xff]
    %v1914 = vld [vmem:[#allocation11 + $0xb0] sm:$0xff]
    %v1915 = vld [vmem:[#allocation11 + $0xb8] sm:$0xff]
    %v1916 = vld [vmem:[#allocation11 + $0xc0] sm:$0xff]
    %v1917 = vld [vmem:[#allocation11 + $0xc8] sm:$0xff]
    %v1918 = vld [vmem:[#allocation11 + $0xd0] sm:$0xff]
    %v1919 = vld [vmem:[#allocation11 + $0xd8] sm:$0xff]
    %v1920 = vld [vmem:[#allocation11 + $0xe0] sm:$0xff]
    %v1921 = vld [vmem:[#allocation11 + $0xe8] sm:$0xff]
    %v1922 = vld [vmem:[#allocation11 + $0xf0] sm:$0xff]
    %v1923 = vld [vmem:[#allocation11 + $0xf8] sm:$0xff]
    %v1924 = vpack.c.bf16 %v1566, %v1566
    %v1957 = vunpack.c.l.b16 %v1892
    %v1958 = vunpack.c.h.b16 %v1892
    %v1959 = vunpack.c.l.b16 %v1893
    %v1960 = vunpack.c.h.b16 %v1893
    %v1961 = vunpack.c.l.b16 %v1894
    %v1962 = vunpack.c.h.b16 %v1894
    %v1963 = vunpack.c.l.b16 %v1895
    %v1964 = vunpack.c.h.b16 %v1895
    %v1965 = vunpack.c.l.b16 %v1896
    %v1966 = vunpack.c.h.b16 %v1896
    %v1967 = vunpack.c.l.b16 %v1897
    %v1968 = vunpack.c.h.b16 %v1897
    %v1969 = vunpack.c.l.b16 %v1898
    %v1970 = vunpack.c.h.b16 %v1898
    %v1971 = vunpack.c.l.b16 %v1899
    %v1972 = vunpack.c.h.b16 %v1899
    %v1973 = vunpack.c.l.b16 %v1900
    %v1974 = vunpack.c.h.b16 %v1900
    %v1975 = vunpack.c.l.b16 %v1901
    %v1976 = vunpack.c.h.b16 %v1901
    %v1977 = vunpack.c.l.b16 %v1902
    %v1978 = vunpack.c.h.b16 %v1902
    %v1979 = vunpack.c.l.b16 %v1903
    %v1980 = vunpack.c.h.b16 %v1903
    %v1981 = vunpack.c.l.b16 %v1904
    %v1982 = vunpack.c.h.b16 %v1904
    %v1983 = vunpack.c.l.b16 %v1905
    %v1984 = vunpack.c.h.b16 %v1905
    %v1985 = vunpack.c.l.b16 %v1906
    %v1986 = vunpack.c.h.b16 %v1906
    %v1987 = vunpack.c.l.b16 %v1907
    %v1988 = vunpack.c.h.b16 %v1907
    %v1989 = vunpack.c.l.b16 %v1908
    %v1990 = vunpack.c.h.b16 %v1908
    %v1991 = vunpack.c.l.b16 %v1909
    %v1992 = vunpack.c.h.b16 %v1909
    %v1993 = vunpack.c.l.b16 %v1910
    %v1994 = vunpack.c.h.b16 %v1910
    %v1995 = vunpack.c.l.b16 %v1911
    %v1996 = vunpack.c.h.b16 %v1911
    %v1997 = vunpack.c.l.b16 %v1912
    %v1998 = vunpack.c.h.b16 %v1912
    %v1999 = vunpack.c.l.b16 %v1913
    %v2000 = vunpack.c.h.b16 %v1913
    %v2001 = vunpack.c.l.b16 %v1914
    %v2002 = vunpack.c.h.b16 %v1914
    %v2003 = vunpack.c.l.b16 %v1915
    %v2004 = vunpack.c.h.b16 %v1915
    %v2005 = vunpack.c.l.b16 %v1916
    %v2006 = vunpack.c.h.b16 %v1916
    %v2007 = vunpack.c.l.b16 %v1917
    %v2008 = vunpack.c.h.b16 %v1917
    %v2009 = vunpack.c.l.b16 %v1918
    %v2010 = vunpack.c.h.b16 %v1918
    %v2011 = vunpack.c.l.b16 %v1919
    %v2012 = vunpack.c.h.b16 %v1919
    %v2013 = vunpack.c.l.b16 %v1920
    %v2014 = vunpack.c.h.b16 %v1920
    %v2015 = vunpack.c.l.b16 %v1921
    %v2016 = vunpack.c.h.b16 %v1921
    %v2017 = vunpack.c.l.b16 %v1922
    %v2018 = vunpack.c.h.b16 %v1922
    %v2019 = vunpack.c.l.b16 %v1923
    %v2020 = vunpack.c.h.b16 %v1923
    %v2021 = vpack.c.b16 %v1961, %v1957
    %v2022 = vpack.c.b16 %v1962, %v1958
    %v2023 = vpack.c.b16 %v1963, %v1959
    %v2024 = vpack.c.b16 %v1964, %v1960
    %v2025 = vpack.c.b16 %v1969, %v1965
    %v2026 = vpack.c.b16 %v1970, %v1966
    %v2027 = vpack.c.b16 %v1971, %v1967
    %v2028 = vpack.c.b16 %v1972, %v1968
    %v2029 = vpack.c.b16 %v1977, %v1973
    %v2030 = vpack.c.b16 %v1978, %v1974
    %v2031 = vpack.c.b16 %v1979, %v1975
    %v2032 = vpack.c.b16 %v1980, %v1976
    %v2033 = vpack.c.b16 %v1985, %v1981
    %v2034 = vpack.c.b16 %v1986, %v1982
    %v2035 = vpack.c.b16 %v1987, %v1983
    %v2036 = vpack.c.b16 %v1988, %v1984
    %v2037 = vpack.c.b16 %v1993, %v1989
    %v2038 = vpack.c.b16 %v1994, %v1990
    %v2039 = vpack.c.b16 %v1995, %v1991
    %v2040 = vpack.c.b16 %v1996, %v1992
    %v2041 = vpack.c.b16 %v2001, %v1997
    %v2042 = vpack.c.b16 %v2002, %v1998
    %v2043 = vpack.c.b16 %v2003, %v1999
    %v2044 = vpack.c.b16 %v2004, %v2000
    %v2045 = vpack.c.b16 %v2009, %v2005
    %v2046 = vpack.c.b16 %v2010, %v2006
    %v2047 = vpack.c.b16 %v2011, %v2007
    %v2048 = vpack.c.b16 %v2012, %v2008
    %v2049 = vpack.c.b16 %v2017, %v2013
    %v2050 = vpack.c.b16 %v2018, %v2014
    %v2051 = vpack.c.b16 %v2019, %v2015
    %v2052 = vpack.c.b16 %v2020, %v2016
    %2085 = vmatprep.subr.bf16.mxu0 %v2022
    %2086 = vmatpush1.bf16.msra.mxu0 %v2021
    %2087 = vmatprep.subr.bf16.mxu0 %v2026
    %2088 = vmatpush1.bf16.msra.mxu0 %v2025
    %2089 = vmatprep.subr.bf16.mxu0 %v2030
    %2090 = vmatpush1.bf16.msra.mxu0 %v2029
    %2091 = vmatprep.subr.bf16.mxu0 %v2034
    %2092 = vmatpush1.bf16.msra.mxu0 %v2033
    %2093 = vmatprep.subr.bf16.mxu0 %v2038
    %2094 = vmatpush1.bf16.msra.mxu0 %v2037
    %2095 = vmatprep.subr.bf16.mxu0 %v2042
    %2096 = vmatpush1.bf16.msra.mxu0 %v2041
    %2097 = vmatprep.subr.bf16.mxu0 %v2046
    %2098 = vmatpush1.bf16.msra.mxu0 %v2045
    %2099 = vmatprep.subr.bf16.mxu0 %v2050
    %2100 = vmatpush1.bf16.msra.mxu0 %v2049
    %2101 = vmatprep.subr.bf16.mxu0 0
    %2102 = vmatpush1.bf16.msra.mxu0 0
    %2103 = vmatprep.subr.bf16.mxu0 0
    %2104 = vmatpush1.bf16.msra.mxu0 0
    %2105 = vmatprep.subr.bf16.mxu0 0
    %2106 = vmatpush1.bf16.msra.mxu0 0
    %2107 = vmatprep.subr.bf16.mxu0 0
    %2108 = vmatpush1.bf16.msra.mxu0 0
    %2109 = vmatprep.subr.bf16.mxu0 0
    %2110 = vmatpush1.bf16.msra.mxu0 0
    %2111 = vmatprep.subr.bf16.mxu0 0
    %2112 = vmatpush1.bf16.msra.mxu0 0
    %2113 = vmatprep.subr.bf16.mxu0 0
    %2114 = vmatpush1.bf16.msra.mxu0 0
    %2115 = vmatprep.subr.bf16.mxu0 0
    %2116 = vmatpush1.bf16.msra.mxu0 0
    %2117 = vmatprep.mubr.bf16.mxu0 0
    %2118 = vmatmul.mubr.bf16.gmra.mrb[0].mxu0 %v1924
    %v2119 = vpop.f32.mrb[0].mxu0
    %v2120 = vadd.f32 0.0, %v2119
    %v2121 = vpop.f32.mrb[0].mxu0
    %v2122 = vadd.f32 0.0, %v2121
    %v2123 = vpop.f32.mrb[0].mxu0
    %v2124 = vpop.f32.mrb[0].mxu0
    %2125 = vdwg.mxu0
    %2126 = vmatprep.subr.bf16.mxu0 %v2024
    %2127 = vmatpush1.bf16.msra.mxu0 %v2023
    %2128 = vmatprep.subr.bf16.mxu0 %v2028
    %2129 = vmatpush1.bf16.msra.mxu0 %v2027
    %2130 = vmatprep.subr.bf16.mxu0 %v2032
    %2131 = vmatpush1.bf16.msra.mxu0 %v2031
    %2132 = vmatprep.subr.bf16.mxu0 %v2036
    %2133 = vmatpush1.bf16.msra.mxu0 %v2035
    %2134 = vmatprep.subr.bf16.mxu0 %v2040
    %2135 = vmatpush1.bf16.msra.mxu0 %v2039
    %2136 = vmatprep.subr.bf16.mxu0 %v2044
    %2137 = vmatpush1.bf16.msra.mxu0 %v2043
    %2138 = vmatprep.subr.bf16.mxu0 %v2048
    %2139 = vmatpush1.bf16.msra.mxu0 %v2047
    %2140 = vmatprep.subr.bf16.mxu0 %v2052
    %2141 = vmatpush1.bf16.msra.mxu0 %v2051
    %2142 = vmatprep.subr.bf16.mxu0 0
    %2143 = vmatpush1.bf16.msra.mxu0 0
    %2144 = vmatprep.subr.bf16.mxu0 0
    %2145 = vmatpush1.bf16.msra.mxu0 0
    %2146 = vmatprep.subr.bf16.mxu0 0
    %2147 = vmatpush1.bf16.msra.mxu0 0
    %2148 = vmatprep.subr.bf16.mxu0 0
    %2149 = vmatpush1.bf16.msra.mxu0 0
    %2150 = vmatprep.subr.bf16.mxu0 0
    %2151 = vmatpush1.bf16.msra.mxu0 0
    %2152 = vmatprep.subr.bf16.mxu0 0
    %2153 = vmatpush1.bf16.msra.mxu0 0
    %2154 = vmatprep.subr.bf16.mxu0 0
    %2155 = vmatpush1.bf16.msra.mxu0 0
    %2156 = vmatprep.subr.bf16.mxu0 0
    %2157 = vmatpush1.bf16.msra.mxu0 0
    %2158 = vmatprep.mubr.bf16.mxu0 0
    %2159 = vmatmul.mubr.bf16.gmra.mrb[0].mxu0 %v1924
    %v2160 = vpop.f32.mrb[0].mxu0
    %v2161 = vadd.f32 0.0, %v2160
    %v2162 = vpop.f32.mrb[0].mxu0
    %v2163 = vadd.f32 0.0, %v2162
    %v2164 = vpop.f32.mrb[0].mxu0
    %v2165 = vpop.f32.mrb[0].mxu0
    %2166 = vdwg.mxu0
    %v2167 = vadd.f32 %v1888, %v2120
    %v2168 = vadd.f32 %v1889, %v2122
    %v2169 = vadd.f32 %v1890, %v2161
    %v2170 = vadd.f32 %v1891, %v2163
    %v2171 = vxor.u32 %v2167, 2147483648
    %v2172 = vmul.f32 %v2171, 1.442695
    %v2173 = vpow.pop %v2172
    %v2174 = vadd.f32 %v2173, 1.0
    %v2175 = vrcp.pop %v2174
    %v2176 = vmul.f32 1.0, %v2175
    %v2177 = vxor.u32 %v2168, 2147483648
    %v2178 = vmul.f32 %v2177, 1.442695
    %v2179 = vpow.pop %v2178
    %v2180 = vadd.f32 %v2179, 1.0
    %v2181 = vrcp.pop %v2180
    %v2182 = vmul.f32 1.0, %v2181
    %v2183 = vtanh.pop %v2169
    %v2184 = vxor.u32 %v2170, 2147483648
    %v2185 = vmul.f32 %v2184, 1.442695
    %v2186 = vpow.pop %v2185
    %v2187 = vadd.f32 %v2186, 1.0
    %v2188 = vrcp.pop %v2187
    %v2189 = vmul.f32 1.0, %v2188
    %v2190 = vmul.f32 %v2182, %v1564
    %v2191 = vmul.f32 %v2176, %v2183
    %v2192 = vadd.f32 %v2190, %v2191
    %v2193 = vtanh.pop %v2192
    %v2194 = vmul.f32 %v2189, %v2193
    %s2195 = smul.u32 6, 2
    %s2196 = smul.addr %s2195, 8
    %s2197 = scalar_lea.vmem [#allocation15], %s2196
    %2198 = vst [vmem:[%s2197 + $0x8] sm:$0xff] %v2194
    %s2199 = smul.u32 2, 8
    %s2200 = smul.addr %s2199, 8
    %s2201 = scalar_lea.vmem [#allocation2], %s2200
    %v2202 = vld [vmem:[%s2201] sm:$0xff]
    %v2203 = vld [vmem:[%s2201 + $0x8] sm:$0xff]
    %v2204 = vld [vmem:[%s2201 + $0x10] sm:$0xff]
    %v2205 = vld [vmem:[%s2201 + $0x18] sm:$0xff]
    %v2206 = vld [vmem:[#allocation9] sm:$0xff]
    %v2207 = vld [vmem:[#allocation9 + $0x8] sm:$0xff]
    %v2208 = vld [vmem:[#allocation9 + $0x10] sm:$0xff]
    %v2209 = vld [vmem:[#allocation9 + $0x18] sm:$0xff]
    %v2210 = vld [vmem:[#allocation9 + $0x20] sm:$0xff]
    %v2211 = vld [vmem:[#allocation9 + $0x28] sm:$0xff]
    %v2212 = vld [vmem:[#allocation9 + $0x30] sm:$0xff]
    %v2213 = vld [vmem:[#allocation9 + $0x38] sm:$0xff]
    %v2214 = vld [vmem:[#allocation9 + $0x40] sm:$0xff]
    %v2215 = vld [vmem:[#allocation9 + $0x48] sm:$0xff]
    %v2216 = vld [vmem:[#allocation9 + $0x50] sm:$0xff]
    %v2217 = vld [vmem:[#allocation9 + $0x58] sm:$0xff]
    %v2218 = vld [vmem:[#allocation9 + $0x60] sm:$0xff]
    %v2219 = vld [vmem:[#allocation9 + $0x68] sm:$0xff]
    %v2220 = vld [vmem:[#allocation9 + $0x70] sm:$0xff]
    %v2221 = vld [vmem:[#allocation9 + $0x78] sm:$0xff]
    %v2222 = vld [vmem:[#allocation9 + $0x80] sm:$0xff]
    %v2223 = vld [vmem:[#allocation9 + $0x88] sm:$0xff]
    %v2224 = vld [vmem:[#allocation9 + $0x90] sm:$0xff]
    %v2225 = vld [vmem:[#allocation9 + $0x98] sm:$0xff]
    %v2226 = vld [vmem:[#allocation9 + $0xa0] sm:$0xff]
    %v2227 = vld [vmem:[#allocation9 + $0xa8] sm:$0xff]
    %v2228 = vld [vmem:[#allocation9 + $0xb0] sm:$0xff]
    %v2229 = vld [vmem:[#allocation9 + $0xb8] sm:$0xff]
    %v2230 = vld [vmem:[#allocation9 + $0xc0] sm:$0xff]
    %v2231 = vld [vmem:[#allocation9 + $0xc8] sm:$0xff]
    %v2232 = vld [vmem:[#allocation9 + $0xd0] sm:$0xff]
    %v2233 = vld [vmem:[#allocation9 + $0xd8] sm:$0xff]
    %v2234 = vld [vmem:[#allocation9 + $0xe0] sm:$0xff]
    %v2235 = vld [vmem:[#allocation9 + $0xe8] sm:$0xff]
    %v2236 = vld [vmem:[#allocation9 + $0xf0] sm:$0xff]
    %v2237 = vld [vmem:[#allocation9 + $0xf8] sm:$0xff]
    %v2238 = vpack.c.bf16 %v1880, %v1880
    %v2271 = vunpack.c.l.b16 %v2206
    %v2272 = vunpack.c.h.b16 %v2206
    %v2273 = vunpack.c.l.b16 %v2207
    %v2274 = vunpack.c.h.b16 %v2207
    %v2275 = vunpack.c.l.b16 %v2208
    %v2276 = vunpack.c.h.b16 %v2208
    %v2277 = vunpack.c.l.b16 %v2209
    %v2278 = vunpack.c.h.b16 %v2209
    %v2279 = vunpack.c.l.b16 %v2210
    %v2280 = vunpack.c.h.b16 %v2210
    %v2281 = vunpack.c.l.b16 %v2211
    %v2282 = vunpack.c.h.b16 %v2211
    %v2283 = vunpack.c.l.b16 %v2212
    %v2284 = vunpack.c.h.b16 %v2212
    %v2285 = vunpack.c.l.b16 %v2213
    %v2286 = vunpack.c.h.b16 %v2213
    %v2287 = vunpack.c.l.b16 %v2214
    %v2288 = vunpack.c.h.b16 %v2214
    %v2289 = vunpack.c.l.b16 %v2215
    %v2290 = vunpack.c.h.b16 %v2215
    %v2291 = vunpack.c.l.b16 %v2216
    %v2292 = vunpack.c.h.b16 %v2216
    %v2293 = vunpack.c.l.b16 %v2217
    %v2294 = vunpack.c.h.b16 %v2217
    %v2295 = vunpack.c.l.b16 %v2218
    %v2296 = vunpack.c.h.b16 %v2218
    %v2297 = vunpack.c.l.b16 %v2219
    %v2298 = vunpack.c.h.b16 %v2219
    %v2299 = vunpack.c.l.b16 %v2220
    %v2300 = vunpack.c.h.b16 %v2220
    %v2301 = vunpack.c.l.b16 %v2221
    %v2302 = vunpack.c.h.b16 %v2221
    %v2303 = vunpack.c.l.b16 %v2222
    %v2304 = vunpack.c.h.b16 %v2222
    %v2305 = vunpack.c.l.b16 %v2223
    %v2306 = vunpack.c.h.b16 %v2223
    %v2307 = vunpack.c.l.b16 %v2224
    %v2308 = vunpack.c.h.b16 %v2224
    %v2309 = vunpack.c.l.b16 %v2225
    %v2310 = vunpack.c.h.b16 %v2225
    %v2311 = vunpack.c.l.b16 %v2226
    %v2312 = vunpack.c.h.b16 %v2226
    %v2313 = vunpack.c.l.b16 %v2227
    %v2314 = vunpack.c.h.b16 %v2227
    %v2315 = vunpack.c.l.b16 %v2228
    %v2316 = vunpack.c.h.b16 %v2228
    %v2317 = vunpack.c.l.b16 %v2229
    %v2318 = vunpack.c.h.b16 %v2229
    %v2319 = vunpack.c.l.b16 %v2230
    %v2320 = vunpack.c.h.b16 %v2230
    %v2321 = vunpack.c.l.b16 %v2231
    %v2322 = vunpack.c.h.b16 %v2231
    %v2323 = vunpack.c.l.b16 %v2232
    %v2324 = vunpack.c.h.b16 %v2232
    %v2325 = vunpack.c.l.b16 %v2233
    %v2326 = vunpack.c.h.b16 %v2233
    %v2327 = vunpack.c.l.b16 %v2234
    %v2328 = vunpack.c.h.b16 %v2234
    %v2329 = vunpack.c.l.b16 %v2235
    %v2330 = vunpack.c.h.b16 %v2235
    %v2331 = vunpack.c.l.b16 %v2236
    %v2332 = vunpack.c.h.b16 %v2236
    %v2333 = vunpack.c.l.b16 %v2237
    %v2334 = vunpack.c.h.b16 %v2237
    %v2335 = vpack.c.b16 %v2275, %v2271
    %v2336 = vpack.c.b16 %v2276, %v2272
    %v2337 = vpack.c.b16 %v2277, %v2273
    %v2338 = vpack.c.b16 %v2278, %v2274
    %v2339 = vpack.c.b16 %v2283, %v2279
    %v2340 = vpack.c.b16 %v2284, %v2280
    %v2341 = vpack.c.b16 %v2285, %v2281
    %v2342 = vpack.c.b16 %v2286, %v2282
    %v2343 = vpack.c.b16 %v2291, %v2287
    %v2344 = vpack.c.b16 %v2292, %v2288
    %v2345 = vpack.c.b16 %v2293, %v2289
    %v2346 = vpack.c.b16 %v2294, %v2290
    %v2347 = vpack.c.b16 %v2299, %v2295
    %v2348 = vpack.c.b16 %v2300, %v2296
    %v2349 = vpack.c.b16 %v2301, %v2297
    %v2350 = vpack.c.b16 %v2302, %v2298
    %v2351 = vpack.c.b16 %v2307, %v2303
    %v2352 = vpack.c.b16 %v2308, %v2304
    %v2353 = vpack.c.b16 %v2309, %v2305
    %v2354 = vpack.c.b16 %v2310, %v2306
    %v2355 = vpack.c.b16 %v2315, %v2311
    %v2356 = vpack.c.b16 %v2316, %v2312
    %v2357 = vpack.c.b16 %v2317, %v2313
    %v2358 = vpack.c.b16 %v2318, %v2314
    %v2359 = vpack.c.b16 %v2323, %v2319
    %v2360 = vpack.c.b16 %v2324, %v2320
    %v2361 = vpack.c.b16 %v2325, %v2321
    %v2362 = vpack.c.b16 %v2326, %v2322
    %v2363 = vpack.c.b16 %v2331, %v2327
    %v2364 = vpack.c.b16 %v2332, %v2328
    %v2365 = vpack.c.b16 %v2333, %v2329
    %v2366 = vpack.c.b16 %v2334, %v2330
    %2399 = vmatprep.subr.bf16.mxu0 %v2336
    %2400 = vmatpush1.bf16.msra.mxu0 %v2335
    %2401 = vmatprep.subr.bf16.mxu0 %v2340
    %2402 = vmatpush1.bf16.msra.mxu0 %v2339
    %2403 = vmatprep.subr.bf16.mxu0 %v2344
    %2404 = vmatpush1.bf16.msra.mxu0 %v2343
    %2405 = vmatprep.subr.bf16.mxu0 %v2348
    %2406 = vmatpush1.bf16.msra.mxu0 %v2347
    %2407 = vmatprep.subr.bf16.mxu0 %v2352
    %2408 = vmatpush1.bf16.msra.mxu0 %v2351
    %2409 = vmatprep.subr.bf16.mxu0 %v2356
    %2410 = vmatpush1.bf16.msra.mxu0 %v2355
    %2411 = vmatprep.subr.bf16.mxu0 %v2360
    %2412 = vmatpush1.bf16.msra.mxu0 %v2359
    %2413 = vmatprep.subr.bf16.mxu0 %v2364
    %2414 = vmatpush1.bf16.msra.mxu0 %v2363
    %2415 = vmatprep.subr.bf16.mxu0 0
    %2416 = vmatpush1.bf16.msra.mxu0 0
    %2417 = vmatprep.subr.bf16.mxu0 0
    %2418 = vmatpush1.bf16.msra.mxu0 0
    %2419 = vmatprep.subr.bf16.mxu0 0
    %2420 = vmatpush1.bf16.msra.mxu0 0
    %2421 = vmatprep.subr.bf16.mxu0 0
    %2422 = vmatpush1.bf16.msra.mxu0 0
    %2423 = vmatprep.subr.bf16.mxu0 0
    %2424 = vmatpush1.bf16.msra.mxu0 0
    %2425 = vmatprep.subr.bf16.mxu0 0
    %2426 = vmatpush1.bf16.msra.mxu0 0
    %2427 = vmatprep.subr.bf16.mxu0 0
    %2428 = vmatpush1.bf16.msra.mxu0 0
    %2429 = vmatprep.subr.bf16.mxu0 0
    %2430 = vmatpush1.bf16.msra.mxu0 0
    %2431 = vmatprep.mubr.bf16.mxu0 0
    %2432 = vmatmul.mubr.bf16.gmra.mrb[0].mxu0 %v2238
    %v2433 = vpop.f32.mrb[0].mxu0
    %v2434 = vadd.f32 0.0, %v2433
    %v2435 = vpop.f32.mrb[0].mxu0
    %v2436 = vadd.f32 0.0, %v2435
    %v2437 = vpop.f32.mrb[0].mxu0
    %v2438 = vpop.f32.mrb[0].mxu0
    %2439 = vdwg.mxu0
    %2440 = vmatprep.subr.bf16.mxu0 %v2338
    %2441 = vmatpush1.bf16.msra.mxu0 %v2337
    %2442 = vmatprep.subr.bf16.mxu0 %v2342
    %2443 = vmatpush1.bf16.msra.mxu0 %v2341
    %2444 = vmatprep.subr.bf16.mxu0 %v2346
    %2445 = vmatpush1.bf16.msra.mxu0 %v2345
    %2446 = vmatprep.subr.bf16.mxu0 %v2350
    %2447 = vmatpush1.bf16.msra.mxu0 %v2349
    %2448 = vmatprep.subr.bf16.mxu0 %v2354
    %2449 = vmatpush1.bf16.msra.mxu0 %v2353
    %2450 = vmatprep.subr.bf16.mxu0 %v2358
    %2451 = vmatpush1.bf16.msra.mxu0 %v2357
    %2452 = vmatprep.subr.bf16.mxu0 %v2362
    %2453 = vmatpush1.bf16.msra.mxu0 %v2361
    %2454 = vmatprep.subr.bf16.mxu0 %v2366
    %2455 = vmatpush1.bf16.msra.mxu0 %v2365
    %2456 = vmatprep.subr.bf16.mxu0 0
    %2457 = vmatpush1.bf16.msra.mxu0 0
    %2458 = vmatprep.subr.bf16.mxu0 0
    %2459 = vmatpush1.bf16.msra.mxu0 0
    %2460 = vmatprep.subr.bf16.mxu0 0
    %2461 = vmatpush1.bf16.msra.mxu0 0
    %2462 = vmatprep.subr.bf16.mxu0 0
    %2463 = vmatpush1.bf16.msra.mxu0 0
    %2464 = vmatprep.subr.bf16.mxu0 0
    %2465 = vmatpush1.bf16.msra.mxu0 0
    %2466 = vmatprep.subr.bf16.mxu0 0
    %2467 = vmatpush1.bf16.msra.mxu0 0
    %2468 = vmatprep.subr.bf16.mxu0 0
    %2469 = vmatpush1.bf16.msra.mxu0 0
    %2470 = vmatprep.subr.bf16.mxu0 0
    %2471 = vmatpush1.bf16.msra.mxu0 0
    %2472 = vmatprep.mubr.bf16.mxu0 0
    %2473 = vmatmul.mubr.bf16.gmra.mrb[0].mxu0 %v2238
    %v2474 = vpop.f32.mrb[0].mxu0
    %v2475 = vadd.f32 0.0, %v2474
    %v2476 = vpop.f32.mrb[0].mxu0
    %v2477 = vadd.f32 0.0, %v2476
    %v2478 = vpop.f32.mrb[0].mxu0
    %v2479 = vpop.f32.mrb[0].mxu0
    %2480 = vdwg.mxu0
    %v2481 = vadd.f32 %v2202, %v2434
    %v2482 = vadd.f32 %v2203, %v2436
    %v2483 = vadd.f32 %v2204, %v2475
    %v2484 = vadd.f32 %v2205, %v2477
    %v2485 = vxor.u32 %v2481, 2147483648
    %v2486 = vmul.f32 %v2485, 1.442695
    %v2487 = vpow.pop %v2486
    %v2488 = vadd.f32 %v2487, 1.0
    %v2489 = vrcp.pop %v2488
    %v2490 = vmul.f32 1.0, %v2489
    %v2491 = vxor.u32 %v2482, 2147483648
    %v2492 = vmul.f32 %v2491, 1.442695
    %v2493 = vpow.pop %v2492
    %v2494 = vadd.f32 %v2493, 1.0
    %v2495 = vrcp.pop %v2494
    %v2496 = vmul.f32 1.0, %v2495
    %v2497 = vtanh.pop %v2483
    %v2498 = vxor.u32 %v2484, 2147483648
    %v2499 = vmul.f32 %v2498, 1.442695
    %v2500 = vpow.pop %v2499
    %v2501 = vadd.f32 %v2500, 1.0
    %v2502 = vrcp.pop %v2501
    %v2503 = vmul.f32 1.0, %v2502
    %v2504 = vmul.f32 %v2496, %v1878
    %v2505 = vmul.f32 %v2490, %v2497
    %v2506 = vadd.f32 %v2504, %v2505
    %v2507 = vtanh.pop %v2506
    %v2508 = vmul.f32 %v2503, %v2507
    %s2509 = smul.u32 2, 2
    %s2510 = smul.addr %s2509, 8
    %s2511 = scalar_lea.vmem [#allocation15], %s2510
    %2512 = vst [vmem:[%s2511] sm:$0xff] %v2508
    %s2513 = smul.u32 5, 8
    %s2514 = smul.addr %s2513, 8
    %s2515 = scalar_lea.vmem [#allocation2], %s2514
    %v2516 = vld [vmem:[%s2515 + $0x20] sm:$0xff]
    %v2517 = vld [vmem:[%s2515 + $0x28] sm:$0xff]
    %v2518 = vld [vmem:[%s2515 + $0x30] sm:$0xff]
    %v2519 = vld [vmem:[%s2515 + $0x38] sm:$0xff]
    %v2520 = vld [vmem:[#allocation11] sm:$0xff]
    %v2521 = vld [vmem:[#allocation11 + $0x8] sm:$0xff]
    %v2522 = vld [vmem:[#allocation11 + $0x10] sm:$0xff]
    %v2523 = vld [vmem:[#allocation11 + $0x18] sm:$0xff]
    %v2524 = vld [vmem:[#allocation11 + $0x20] sm:$0xff]
    %v2525 = vld [vmem:[#allocation11 + $0x28] sm:$0xff]
    %v2526 = vld [vmem:[#allocation11 + $0x30] sm:$0xff]
    %v2527 = vld [vmem:[#allocation11 + $0x38] sm:$0xff]
    %v2528 = vld [vmem:[#allocation11 + $0x40] sm:$0xff]
    %v2529 = vld [vmem:[#allocation11 + $0x48] sm:$0xff]
    %v2530 = vld [vmem:[#allocation11 + $0x50] sm:$0xff]
    %v2531 = vld [vmem:[#allocation11 + $0x58] sm:$0xff]
    %v2532 = vld [vmem:[#allocation11 + $0x60] sm:$0xff]
    %v2533 = vld [vmem:[#allocation11 + $0x68] sm:$0xff]
    %v2534 = vld [vmem:[#allocation11 + $0x70] sm:$0xff]
    %v2535 = vld [vmem:[#allocation11 + $0x78] sm:$0xff]
    %v2536 = vld [vmem:[#allocation11 + $0x80] sm:$0xff]
    %v2537 = vld [vmem:[#allocation11 + $0x88] sm:$0xff]
    %v2538 = vld [vmem:[#allocation11 + $0x90] sm:$0xff]
    %v2539 = vld [vmem:[#allocation11 + $0x98] sm:$0xff]
    %v2540 = vld [vmem:[#allocation11 + $0xa0] sm:$0xff]
    %v2541 = vld [vmem:[#allocation11 + $0xa8] sm:$0xff]
    %v2542 = vld [vmem:[#allocation11 + $0xb0] sm:$0xff]
    %v2543 = vld [vmem:[#allocation11 + $0xb8] sm:$0xff]
    %v2544 = vld [vmem:[#allocation11 + $0xc0] sm:$0xff]
    %v2545 = vld [vmem:[#allocation11 + $0xc8] sm:$0xff]
    %v2546 = vld [vmem:[#allocation11 + $0xd0] sm:$0xff]
    %v2547 = vld [vmem:[#allocation11 + $0xd8] sm:$0xff]
    %v2548 = vld [vmem:[#allocation11 + $0xe0] sm:$0xff]
    %v2549 = vld [vmem:[#allocation11 + $0xe8] sm:$0xff]
    %v2550 = vld [vmem:[#allocation11 + $0xf0] sm:$0xff]
    %v2551 = vld [vmem:[#allocation11 + $0xf8] sm:$0xff]
    %v2552 = vpack.c.bf16 %v2194, %v2194
    %v2585 = vunpack.c.l.b16 %v2520
    %v2586 = vunpack.c.h.b16 %v2520
    %v2587 = vunpack.c.l.b16 %v2521
    %v2588 = vunpack.c.h.b16 %v2521
    %v2589 = vunpack.c.l.b16 %v2522
    %v2590 = vunpack.c.h.b16 %v2522
    %v2591 = vunpack.c.l.b16 %v2523
    %v2592 = vunpack.c.h.b16 %v2523
    %v2593 = vunpack.c.l.b16 %v2524
    %v2594 = vunpack.c.h.b16 %v2524
    %v2595 = vunpack.c.l.b16 %v2525
    %v2596 = vunpack.c.h.b16 %v2525
    %v2597 = vunpack.c.l.b16 %v2526
    %v2598 = vunpack.c.h.b16 %v2526
    %v2599 = vunpack.c.l.b16 %v2527
    %v2600 = vunpack.c.h.b16 %v2527
    %v2601 = vunpack.c.l.b16 %v2528
    %v2602 = vunpack.c.h.b16 %v2528
    %v2603 = vunpack.c.l.b16 %v2529
    %v2604 = vunpack.c.h.b16 %v2529
    %v2605 = vunpack.c.l.b16 %v2530
    %v2606 = vunpack.c.h.b16 %v2530
    %v2607 = vunpack.c.l.b16 %v2531
    %v2608 = vunpack.c.h.b16 %v2531
    %v2609 = vunpack.c.l.b16 %v2532
    %v2610 = vunpack.c.h.b16 %v2532
    %v2611 = vunpack.c.l.b16 %v2533
    %v2612 = vunpack.c.h.b16 %v2533
    %v2613 = vunpack.c.l.b16 %v2534
    %v2614 = vunpack.c.h.b16 %v2534
    %v2615 = vunpack.c.l.b16 %v2535
    %v2616 = vunpack.c.h.b16 %v2535
    %v2617 = vunpack.c.l.b16 %v2536
    %v2618 = vunpack.c.h.b16 %v2536
    %v2619 = vunpack.c.l.b16 %v2537
    %v2620 = vunpack.c.h.b16 %v2537
    %v2621 = vunpack.c.l.b16 %v2538
    %v2622 = vunpack.c.h.b16 %v2538
    %v2623 = vunpack.c.l.b16 %v2539
    %v2624 = vunpack.c.h.b16 %v2539
    %v2625 = vunpack.c.l.b16 %v2540
    %v2626 = vunpack.c.h.b16 %v2540
    %v2627 = vunpack.c.l.b16 %v2541
    %v2628 = vunpack.c.h.b16 %v2541
    %v2629 = vunpack.c.l.b16 %v2542
    %v2630 = vunpack.c.h.b16 %v2542
    %v2631 = vunpack.c.l.b16 %v2543
    %v2632 = vunpack.c.h.b16 %v2543
    %v2633 = vunpack.c.l.b16 %v2544
    %v2634 = vunpack.c.h.b16 %v2544
    %v2635 = vunpack.c.l.b16 %v2545
    %v2636 = vunpack.c.h.b16 %v2545
    %v2637 = vunpack.c.l.b16 %v2546
    %v2638 = vunpack.c.h.b16 %v2546
    %v2639 = vunpack.c.l.b16 %v2547
    %v2640 = vunpack.c.h.b16 %v2547
    %v2641 = vunpack.c.l.b16 %v2548
    %v2642 = vunpack.c.h.b16 %v2548
    %v2643 = vunpack.c.l.b16 %v2549
    %v2644 = vunpack.c.h.b16 %v2549
    %v2645 = vunpack.c.l.b16 %v2550
    %v2646 = vunpack.c.h.b16 %v2550
    %v2647 = vunpack.c.l.b16 %v2551
    %v2648 = vunpack.c.h.b16 %v2551
    %v2649 = vpack.c.b16 %v2589, %v2585
    %v2650 = vpack.c.b16 %v2590, %v2586
    %v2651 = vpack.c.b16 %v2591, %v2587
    %v2652 = vpack.c.b16 %v2592, %v2588
    %v2653 = vpack.c.b16 %v2597, %v2593
    %v2654 = vpack.c.b16 %v2598, %v2594
    %v2655 = vpack.c.b16 %v2599, %v2595
    %v2656 = vpack.c.b16 %v2600, %v2596
    %v2657 = vpack.c.b16 %v2605, %v2601
    %v2658 = vpack.c.b16 %v2606, %v2602
    %v2659 = vpack.c.b16 %v2607, %v2603
    %v2660 = vpack.c.b16 %v2608, %v2604
    %v2661 = vpack.c.b16 %v2613, %v2609
    %v2662 = vpack.c.b16 %v2614, %v2610
    %v2663 = vpack.c.b16 %v2615, %v2611
    %v2664 = vpack.c.b16 %v2616, %v2612
    %v2665 = vpack.c.b16 %v2621, %v2617
    %v2666 = vpack.c.b16 %v2622, %v2618
    %v2667 = vpack.c.b16 %v2623, %v2619
    %v2668 = vpack.c.b16 %v2624, %v2620
    %v2669 = vpack.c.b16 %v2629, %v2625
    %v2670 = vpack.c.b16 %v2630, %v2626
    %v2671 = vpack.c.b16 %v2631, %v2627
    %v2672 = vpack.c.b16 %v2632, %v2628
    %v2673 = vpack.c.b16 %v2637, %v2633
    %v2674 = vpack.c.b16 %v2638, %v2634
    %v2675 = vpack.c.b16 %v2639, %v2635
    %v2676 = vpack.c.b16 %v2640, %v2636
    %v2677 = vpack.c.b16 %v2645, %v2641
    %v2678 = vpack.c.b16 %v2646, %v2642
    %v2679 = vpack.c.b16 %v2647, %v2643
    %v2680 = vpack.c.b16 %v2648, %v2644
    %2713 = vmatprep.subr.bf16.mxu0 %v2650
    %2714 = vmatpush1.bf16.msra.mxu0 %v2649
    %2715 = vmatprep.subr.bf16.mxu0 %v2654
    %2716 = vmatpush1.bf16.msra.mxu0 %v2653
    %2717 = vmatprep.subr.bf16.mxu0 %v2658
    %2718 = vmatpush1.bf16.msra.mxu0 %v2657
    %2719 = vmatprep.subr.bf16.mxu0 %v2662
    %2720 = vmatpush1.bf16.msra.mxu0 %v2661
    %2721 = vmatprep.subr.bf16.mxu0 %v2666
    %2722 = vmatpush1.bf16.msra.mxu0 %v2665
    %2723 = vmatprep.subr.bf16.mxu0 %v2670
    %2724 = vmatpush1.bf16.msra.mxu0 %v2669
    %2725 = vmatprep.subr.bf16.mxu0 %v2674
    %2726 = vmatpush1.bf16.msra.mxu0 %v2673
    %2727 = vmatprep.subr.bf16.mxu0 %v2678
    %2728 = vmatpush1.bf16.msra.mxu0 %v2677
    %2729 = vmatprep.subr.bf16.mxu0 0
    %2730 = vmatpush1.bf16.msra.mxu0 0
    %2731 = vmatprep.subr.bf16.mxu0 0
    %2732 = vmatpush1.bf16.msra.mxu0 0
    %2733 = vmatprep.subr.bf16.mxu0 0
    %2734 = vmatpush1.bf16.msra.mxu0 0
    %2735 = vmatprep.subr.bf16.mxu0 0
    %2736 = vmatpush1.bf16.msra.mxu0 0
    %2737 = vmatprep.subr.bf16.mxu0 0
    %2738 = vmatpush1.bf16.msra.mxu0 0
    %2739 = vmatprep.subr.bf16.mxu0 0
    %2740 = vmatpush1.bf16.msra.mxu0 0
    %2741 = vmatprep.subr.bf16.mxu0 0
    %2742 = vmatpush1.bf16.msra.mxu0 0
    %2743 = vmatprep.subr.bf16.mxu0 0
    %2744 = vmatpush1.bf16.msra.mxu0 0
    %2745 = vmatprep.mubr.bf16.mxu0 0
    %2746 = vmatmul.mubr.bf16.gmra.mrb[0].mxu0 %v2552
    %v2747 = vpop.f32.mrb[0].mxu0
    %v2748 = vadd.f32 0.0, %v2747
    %v2749 = vpop.f32.mrb[0].mxu0
    %v2750 = vadd.f32 0.0, %v2749
    %v2751 = vpop.f32.mrb[0].mxu0
    %v2752 = vpop.f32.mrb[0].mxu0
    %2753 = vdwg.mxu0
    %2754 = vmatprep.subr.bf16.mxu0 %v2652
    %2755 = vmatpush1.bf16.msra.mxu0 %v2651
    %2756 = vmatprep.subr.bf16.mxu0 %v2656
    %2757 = vmatpush1.bf16.msra.mxu0 %v2655
    %2758 = vmatprep.subr.bf16.mxu0 %v2660
    %2759 = vmatpush1.bf16.msra.mxu0 %v2659
    %2760 = vmatprep.subr.bf16.mxu0 %v2664
    %2761 = vmatpush1.bf16.msra.mxu0 %v2663
    %2762 = vmatprep.subr.bf16.mxu0 %v2668
    %2763 = vmatpush1.bf16.msra.mxu0 %v2667
    %2764 = vmatprep.subr.bf16.mxu0 %v2672
    %2765 = vmatpush1.bf16.msra.mxu0 %v2671
    %2766 = vmatprep.subr.bf16.mxu0 %v2676
    %2767 = vmatpush1.bf16.msra.mxu0 %v2675
    %2768 = vmatprep.subr.bf16.mxu0 %v2680
    %2769 = vmatpush1.bf16.msra.mxu0 %v2679
    %2770 = vmatprep.subr.bf16.mxu0 0
    %2771 = vmatpush1.bf16.msra.mxu0 0
    %2772 = vmatprep.subr.bf16.mxu0 0
    %2773 = vmatpush1.bf16.msra.mxu0 0
    %2774 = vmatprep.subr.bf16.mxu0 0
    %2775 = vmatpush1.bf16.msra.mxu0 0
    %2776 = vmatprep.subr.bf16.mxu0 0
    %2777 = vmatpush1.bf16.msra.mxu0 0
    %2778 = vmatprep.subr.bf16.mxu0 0
    %2779 = vmatpush1.bf16.msra.mxu0 0
    %2780 = vmatprep.subr.bf16.mxu0 0
    %2781 = vmatpush1.bf16.msra.mxu0 0
    %2782 = vmatprep.subr.bf16.mxu0 0
    %2783 = vmatpush1.bf16.msra.mxu0 0
    %2784 = vmatprep.subr.bf16.mxu0 0
    %2785 = vmatpush1.bf16.msra.mxu0 0
    %2786 = vmatprep.mubr.bf16.mxu0 0
    %2787 = vmatmul.mubr.bf16.gmra.mrb[0].mxu0 %v2552
    %v2788 = vpop.f32.mrb[0].mxu0
    %v2789 = vadd.f32 0.0, %v2788
    %v2790 = vpop.f32.mrb[0].mxu0
    %v2791 = vadd.f32 0.0, %v2790
    %v2792 = vpop.f32.mrb[0].mxu0
    %v2793 = vpop.f32.mrb[0].mxu0
    %2794 = vdwg.mxu0
    %v2795 = vadd.f32 %v2516, %v2748
    %v2796 = vadd.f32 %v2517, %v2750
    %v2797 = vadd.f32 %v2518, %v2789
    %v2798 = vadd.f32 %v2519, %v2791
    %v2799 = vxor.u32 %v2795, 2147483648
    %v2800 = vmul.f32 %v2799, 1.442695
    %v2801 = vpow.pop %v2800
    %v2802 = vadd.f32 %v2801, 1.0
    %v2803 = vrcp.pop %v2802
    %v2804 = vmul.f32 1.0, %v2803
    %v2805 = vxor.u32 %v2796, 2147483648
    %v2806 = vmul.f32 %v2805, 1.442695
    %v2807 = vpow.pop %v2806
    %v2808 = vadd.f32 %v2807, 1.0
    %v2809 = vrcp.pop %v2808
    %v2810 = vmul.f32 1.0, %v2809
    %v2811 = vtanh.pop %v2797
    %v2812 = vxor.u32 %v2798, 2147483648
    %v2813 = vmul.f32 %v2812, 1.442695
    %v2814 = vpow.pop %v2813
    %v2815 = vadd.f32 %v2814, 1.0
    %v2816 = vrcp.pop %v2815
    %v2817 = vmul.f32 1.0, %v2816
    %v2818 = vmul.f32 %v2810, %v2192
    %v2819 = vmul.f32 %v2804, %v2811
    %v2820 = vadd.f32 %v2818, %v2819
    %v2821 = vtanh.pop %v2820
    %v2822 = vmul.f32 %v2817, %v2821
    %s2823 = smul.u32 5, 2
    %s2824 = smul.addr %s2823, 8
    %s2825 = scalar_lea.vmem [#allocation15], %s2824
    %2826 = vst [vmem:[%s2825 + $0x8] sm:$0xff] %v2822
    %s2827 = smul.u32 3, 8
    %s2828 = smul.addr %s2827, 8
    %s2829 = scalar_lea.vmem [#allocation2], %s2828
    %v2830 = vld [vmem:[%s2829] sm:$0xff]
    %v2831 = vld [vmem:[%s2829 + $0x8] sm:$0xff]
    %v2832 = vld [vmem:[%s2829 + $0x10] sm:$0xff]
    %v2833 = vld [vmem:[%s2829 + $0x18] sm:$0xff]
    %v2834 = vld [vmem:[#allocation9] sm:$0xff]
    %v2835 = vld [vmem:[#allocation9 + $0x8] sm:$0xff]
    %v2836 = vld [vmem:[#allocation9 + $0x10] sm:$0xff]
    %v2837 = vld [vmem:[#allocation9 + $0x18] sm:$0xff]
    %v2838 = vld [vmem:[#allocation9 + $0x20] sm:$0xff]
    %v2839 = vld [vmem:[#allocation9 + $0x28] sm:$0xff]
    %v2840 = vld [vmem:[#allocation9 + $0x30] sm:$0xff]
    %v2841 = vld [vmem:[#allocation9 + $0x38] sm:$0xff]
    %v2842 = vld [vmem:[#allocation9 + $0x40] sm:$0xff]
    %v2843 = vld [vmem:[#allocation9 + $0x48] sm:$0xff]
    %v2844 = vld [vmem:[#allocation9 + $0x50] sm:$0xff]
    %v2845 = vld [vmem:[#allocation9 + $0x58] sm:$0xff]
    %v2846 = vld [vmem:[#allocation9 + $0x60] sm:$0xff]
    %v2847 = vld [vmem:[#allocation9 + $0x68] sm:$0xff]
    %v2848 = vld [vmem:[#allocation9 + $0x70] sm:$0xff]
    %v2849 = vld [vmem:[#allocation9 + $0x78] sm:$0xff]
    %v2850 = vld [vmem:[#allocation9 + $0x80] sm:$0xff]
    %v2851 = vld [vmem:[#allocation9 + $0x88] sm:$0xff]
    %v2852 = vld [vmem:[#allocation9 + $0x90] sm:$0xff]
    %v2853 = vld [vmem:[#allocation9 + $0x98] sm:$0xff]
    %v2854 = vld [vmem:[#allocation9 + $0xa0] sm:$0xff]
    %v2855 = vld [vmem:[#allocation9 + $0xa8] sm:$0xff]
    %v2856 = vld [vmem:[#allocation9 + $0xb0] sm:$0xff]
    %v2857 = vld [vmem:[#allocation9 + $0xb8] sm:$0xff]
    %v2858 = vld [vmem:[#allocation9 + $0xc0] sm:$0xff]
    %v2859 = vld [vmem:[#allocation9 + $0xc8] sm:$0xff]
    %v2860 = vld [vmem:[#allocation9 + $0xd0] sm:$0xff]
    %v2861 = vld [vmem:[#allocation9 + $0xd8] sm:$0xff]
    %v2862 = vld [vmem:[#allocation9 + $0xe0] sm:$0xff]
    %v2863 = vld [vmem:[#allocation9 + $0xe8] sm:$0xff]
    %v2864 = vld [vmem:[#allocation9 + $0xf0] sm:$0xff]
    %v2865 = vld [vmem:[#allocation9 + $0xf8] sm:$0xff]
    %v2866 = vpack.c.bf16 %v2508, %v2508
    %v2899 = vunpack.c.l.b16 %v2834
    %v2900 = vunpack.c.h.b16 %v2834
    %v2901 = vunpack.c.l.b16 %v2835
    %v2902 = vunpack.c.h.b16 %v2835
    %v2903 = vunpack.c.l.b16 %v2836
    %v2904 = vunpack.c.h.b16 %v2836
    %v2905 = vunpack.c.l.b16 %v2837
    %v2906 = vunpack.c.h.b16 %v2837
    %v2907 = vunpack.c.l.b16 %v2838
    %v2908 = vunpack.c.h.b16 %v2838
    %v2909 = vunpack.c.l.b16 %v2839
    %v2910 = vunpack.c.h.b16 %v2839
    %v2911 = vunpack.c.l.b16 %v2840
    %v2912 = vunpack.c.h.b16 %v2840
    %v2913 = vunpack.c.l.b16 %v2841
    %v2914 = vunpack.c.h.b16 %v2841
    %v2915 = vunpack.c.l.b16 %v2842
    %v2916 = vunpack.c.h.b16 %v2842
    %v2917 = vunpack.c.l.b16 %v2843
    %v2918 = vunpack.c.h.b16 %v2843
    %v2919 = vunpack.c.l.b16 %v2844
    %v2920 = vunpack.c.h.b16 %v2844
    %v2921 = vunpack.c.l.b16 %v2845
    %v2922 = vunpack.c.h.b16 %v2845
    %v2923 = vunpack.c.l.b16 %v2846
    %v2924 = vunpack.c.h.b16 %v2846
    %v2925 = vunpack.c.l.b16 %v2847
    %v2926 = vunpack.c.h.b16 %v2847
    %v2927 = vunpack.c.l.b16 %v2848
    %v2928 = vunpack.c.h.b16 %v2848
    %v2929 = vunpack.c.l.b16 %v2849
    %v2930 = vunpack.c.h.b16 %v2849
    %v2931 = vunpack.c.l.b16 %v2850
    %v2932 = vunpack.c.h.b16 %v2850
    %v2933 = vunpack.c.l.b16 %v2851
    %v2934 = vunpack.c.h.b16 %v2851
    %v2935 = vunpack.c.l.b16 %v2852
    %v2936 = vunpack.c.h.b16 %v2852
    %v2937 = vunpack.c.l.b16 %v2853
    %v2938 = vunpack.c.h.b16 %v2853
    %v2939 = vunpack.c.l.b16 %v2854
    %v2940 = vunpack.c.h.b16 %v2854
    %v2941 = vunpack.c.l.b16 %v2855
    %v2942 = vunpack.c.h.b16 %v2855
    %v2943 = vunpack.c.l.b16 %v2856
    %v2944 = vunpack.c.h.b16 %v2856
    %v2945 = vunpack.c.l.b16 %v2857
    %v2946 = vunpack.c.h.b16 %v2857
    %v2947 = vunpack.c.l.b16 %v2858
    %v2948 = vunpack.c.h.b16 %v2858
    %v2949 = vunpack.c.l.b16 %v2859
    %v2950 = vunpack.c.h.b16 %v2859
    %v2951 = vunpack.c.l.b16 %v2860
    %v2952 = vunpack.c.h.b16 %v2860
    %v2953 = vunpack.c.l.b16 %v2861
    %v2954 = vunpack.c.h.b16 %v2861
    %v2955 = vunpack.c.l.b16 %v2862
    %v2956 = vunpack.c.h.b16 %v2862
    %v2957 = vunpack.c.l.b16 %v2863
    %v2958 = vunpack.c.h.b16 %v2863
    %v2959 = vunpack.c.l.b16 %v2864
    %v2960 = vunpack.c.h.b16 %v2864
    %v2961 = vunpack.c.l.b16 %v2865
    %v2962 = vunpack.c.h.b16 %v2865
    %v2963 = vpack.c.b16 %v2903, %v2899
    %v2964 = vpack.c.b16 %v2904, %v2900
    %v2965 = vpack.c.b16 %v2905, %v2901
    %v2966 = vpack.c.b16 %v2906, %v2902
    %v2967 = vpack.c.b16 %v2911, %v2907
    %v2968 = vpack.c.b16 %v2912, %v2908
    %v2969 = vpack.c.b16 %v2913, %v2909
    %v2970 = vpack.c.b16 %v2914, %v2910
    %v2971 = vpack.c.b16 %v2919, %v2915
    %v2972 = vpack.c.b16 %v2920, %v2916
    %v2973 = vpack.c.b16 %v2921, %v2917
    %v2974 = vpack.c.b16 %v2922, %v2918
    %v2975 = vpack.c.b16 %v2927, %v2923
    %v2976 = vpack.c.b16 %v2928, %v2924
    %v2977 = vpack.c.b16 %v2929, %v2925
    %v2978 = vpack.c.b16 %v2930, %v2926
    %v2979 = vpack.c.b16 %v2935, %v2931
    %v2980 = vpack.c.b16 %v2936, %v2932
    %v2981 = vpack.c.b16 %v2937, %v2933
    %v2982 = vpack.c.b16 %v2938, %v2934
    %v2983 = vpack.c.b16 %v2943, %v2939
    %v2984 = vpack.c.b16 %v2944, %v2940
    %v2985 = vpack.c.b16 %v2945, %v2941
    %v2986 = vpack.c.b16 %v2946, %v2942
    %v2987 = vpack.c.b16 %v2951, %v2947
    %v2988 = vpack.c.b16 %v2952, %v2948
    %v2989 = vpack.c.b16 %v2953, %v2949
    %v2990 = vpack.c.b16 %v2954, %v2950
    %v2991 = vpack.c.b16 %v2959, %v2955
    %v2992 = vpack.c.b16 %v2960, %v2956
    %v2993 = vpack.c.b16 %v2961, %v2957
    %v2994 = vpack.c.b16 %v2962, %v2958
    %3027 = vmatprep.subr.bf16.mxu0 %v2964
    %3028 = vmatpush1.bf16.msra.mxu0 %v2963
    %3029 = vmatprep.subr.bf16.mxu0 %v2968
    %3030 = vmatpush1.bf16.msra.mxu0 %v2967
    %3031 = vmatprep.subr.bf16.mxu0 %v2972
    %3032 = vmatpush1.bf16.msra.mxu0 %v2971
    %3033 = vmatprep.subr.bf16.mxu0 %v2976
    %3034 = vmatpush1.bf16.msra.mxu0 %v2975
    %3035 = vmatprep.subr.bf16.mxu0 %v2980
    %3036 = vmatpush1.bf16.msra.mxu0 %v2979
    %3037 = vmatprep.subr.bf16.mxu0 %v2984
    %3038 = vmatpush1.bf16.msra.mxu0 %v2983
    %3039 = vmatprep.subr.bf16.mxu0 %v2988
    %3040 = vmatpush1.bf16.msra.mxu0 %v2987
    %3041 = vmatprep.subr.bf16.mxu0 %v2992
    %3042 = vmatpush1.bf16.msra.mxu0 %v2991
    %3043 = vmatprep.subr.bf16.mxu0 0
    %3044 = vmatpush1.bf16.msra.mxu0 0
    %3045 = vmatprep.subr.bf16.mxu0 0
    %3046 = vmatpush1.bf16.msra.mxu0 0
    %3047 = vmatprep.subr.bf16.mxu0 0
    %3048 = vmatpush1.bf16.msra.mxu0 0
    %3049 = vmatprep.subr.bf16.mxu0 0
    %3050 = vmatpush1.bf16.msra.mxu0 0
    %3051 = vmatprep.subr.bf16.mxu0 0
    %3052 = vmatpush1.bf16.msra.mxu0 0
    %3053 = vmatprep.subr.bf16.mxu0 0
    %3054 = vmatpush1.bf16.msra.mxu0 0
    %3055 = vmatprep.subr.bf16.mxu0 0
    %3056 = vmatpush1.bf16.msra.mxu0 0
    %3057 = vmatprep.subr.bf16.mxu0 0
    %3058 = vmatpush1.bf16.msra.mxu0 0
    %3059 = vmatprep.mubr.bf16.mxu0 0
    %3060 = vmatmul.mubr.bf16.gmra.mrb[0].mxu0 %v2866
    %v3061 = vpop.f32.mrb[0].mxu0
    %v3062 = vadd.f32 0.0, %v3061
    %v3063 = vpop.f32.mrb[0].mxu0
    %v3064 = vadd.f32 0.0, %v3063
    %v3065 = vpop.f32.mrb[0].mxu0
    %v3066 = vpop.f32.mrb[0].mxu0
    %3067 = vdwg.mxu0
    %3068 = vmatprep.subr.bf16.mxu0 %v2966
    %3069 = vmatpush1.bf16.msra.mxu0 %v2965
    %3070 = vmatprep.subr.bf16.mxu0 %v2970
    %3071 = vmatpush1.bf16.msra.mxu0 %v2969
    %3072 = vmatprep.subr.bf16.mxu0 %v2974
    %3073 = vmatpush1.bf16.msra.mxu0 %v2973
    %3074 = vmatprep.subr.bf16.mxu0 %v2978
    %3075 = vmatpush1.bf16.msra.mxu0 %v2977
    %3076 = vmatprep.subr.bf16.mxu0 %v2982
    %3077 = vmatpush1.bf16.msra.mxu0 %v2981
    %3078 = vmatprep.subr.bf16.mxu0 %v2986
    %3079 = vmatpush1.bf16.msra.mxu0 %v2985
    %3080 = vmatprep.subr.bf16.mxu0 %v2990
    %3081 = vmatpush1.bf16.msra.mxu0 %v2989
    %3082 = vmatprep.subr.bf16.mxu0 %v2994
    %3083 = vmatpush1.bf16.msra.mxu0 %v2993
    %3084 = vmatprep.subr.bf16.mxu0 0
    %3085 = vmatpush1.bf16.msra.mxu0 0
    %3086 = vmatprep.subr.bf16.mxu0 0
    %3087 = vmatpush1.bf16.msra.mxu0 0
    %3088 = vmatprep.subr.bf16.mxu0 0
    %3089 = vmatpush1.bf16.msra.mxu0 0
    %3090 = vmatprep.subr.bf16.mxu0 0
    %3091 = vmatpush1.bf16.msra.mxu0 0
    %3092 = vmatprep.subr.bf16.mxu0 0
    %3093 = vmatpush1.bf16.msra.mxu0 0
    %3094 = vmatprep.subr.bf16.mxu0 0
    %3095 = vmatpush1.bf16.msra.mxu0 0
    %3096 = vmatprep.subr.bf16.mxu0 0
    %3097 = vmatpush1.bf16.msra.mxu0 0
    %3098 = vmatprep.subr.bf16.mxu0 0
    %3099 = vmatpush1.bf16.msra.mxu0 0
    %3100 = vmatprep.mubr.bf16.mxu0 0
    %3101 = vmatmul.mubr.bf16.gmra.mrb[0].mxu0 %v2866
    %v3102 = vpop.f32.mrb[0].mxu0
    %v3103 = vadd.f32 0.0, %v3102
    %v3104 = vpop.f32.mrb[0].mxu0
    %v3105 = vadd.f32 0.0, %v3104
    %v3106 = vpop.f32.mrb[0].mxu0
    %v3107 = vpop.f32.mrb[0].mxu0
    %3108 = vdwg.mxu0
    %v3109 = vadd.f32 %v2830, %v3062
    %v3110 = vadd.f32 %v2831, %v3064
    %v3111 = vadd.f32 %v2832, %v3103
    %v3112 = vadd.f32 %v2833, %v3105
    %v3113 = vxor.u32 %v3109, 2147483648
    %v3114 = vmul.f32 %v3113, 1.442695
    %v3115 = vpow.pop %v3114
    %v3116 = vadd.f32 %v3115, 1.0
    %v3117 = vrcp.pop %v3116
    %v3118 = vmul.f32 1.0, %v3117
    %v3119 = vxor.u32 %v3110, 2147483648
    %v3120 = vmul.f32 %v3119, 1.442695
    %v3121 = vpow.pop %v3120
    %v3122 = vadd.f32 %v3121, 1.0
    %v3123 = vrcp.pop %v3122
    %v3124 = vmul.f32 1.0, %v3123
    %v3125 = vtanh.pop %v3111
    %v3126 = vxor.u32 %v3112, 2147483648
    %v3127 = vmul.f32 %v3126, 1.442695
    %v3128 = vpow.pop %v3127
    %v3129 = vadd.f32 %v3128, 1.0
    %v3130 = vrcp.pop %v3129
    %v3131 = vmul.f32 1.0, %v3130
    %v3132 = vmul.f32 %v3124, %v2506
    %v3133 = vmul.f32 %v3118, %v3125
    %v3134 = vadd.f32 %v3132, %v3133
    %v3135 = vtanh.pop %v3134
    %v3136 = vmul.f32 %v3131, %v3135
    %s3137 = smul.u32 3, 2
    %s3138 = smul.addr %s3137, 8
    %s3139 = scalar_lea.vmem [#allocation15], %s3138
    %3140 = vst [vmem:[%s3139] sm:$0xff] %v3136
    %s3141 = smul.u32 4, 8
    %s3142 = smul.addr %s3141, 8
    %s3143 = scalar_lea.vmem [#allocation2], %s3142
    %v3144 = vld [vmem:[%s3143 + $0x20] sm:$0xff]
    %v3145 = vld [vmem:[%s3143 + $0x28] sm:$0xff]
    %v3146 = vld [vmem:[%s3143 + $0x30] sm:$0xff]
    %v3147 = vld [vmem:[%s3143 + $0x38] sm:$0xff]
    %v3148 = vld [vmem:[#allocation11] sm:$0xff]
    %v3149 = vld [vmem:[#allocation11 + $0x8] sm:$0xff]
    %v3150 = vld [vmem:[#allocation11 + $0x10] sm:$0xff]
    %v3151 = vld [vmem:[#allocation11 + $0x18] sm:$0xff]
    %v3152 = vld [vmem:[#allocation11 + $0x20] sm:$0xff]
    %v3153 = vld [vmem:[#allocation11 + $0x28] sm:$0xff]
    %v3154 = vld [vmem:[#allocation11 + $0x30] sm:$0xff]
    %v3155 = vld [vmem:[#allocation11 + $0x38] sm:$0xff]
    %v3156 = vld [vmem:[#allocation11 + $0x40] sm:$0xff]
    %v3157 = vld [vmem:[#allocation11 + $0x48] sm:$0xff]
    %v3158 = vld [vmem:[#allocation11 + $0x50] sm:$0xff]
    %v3159 = vld [vmem:[#allocation11 + $0x58] sm:$0xff]
    %v3160 = vld [vmem:[#allocation11 + $0x60] sm:$0xff]
    %v3161 = vld [vmem:[#allocation11 + $0x68] sm:$0xff]
    %v3162 = vld [vmem:[#allocation11 + $0x70] sm:$0xff]
    %v3163 = vld [vmem:[#allocation11 + $0x78] sm:$0xff]
    %v3164 = vld [vmem:[#allocation11 + $0x80] sm:$0xff]
    %v3165 = vld [vmem:[#allocation11 + $0x88] sm:$0xff]
    %v3166 = vld [vmem:[#allocation11 + $0x90] sm:$0xff]
    %v3167 = vld [vmem:[#allocation11 + $0x98] sm:$0xff]
    %v3168 = vld [vmem:[#allocation11 + $0xa0] sm:$0xff]
    %v3169 = vld [vmem:[#allocation11 + $0xa8] sm:$0xff]
    %v3170 = vld [vmem:[#allocation11 + $0xb0] sm:$0xff]
    %v3171 = vld [vmem:[#allocation11 + $0xb8] sm:$0xff]
    %v3172 = vld [vmem:[#allocation11 + $0xc0] sm:$0xff]
    %v3173 = vld [vmem:[#allocation11 + $0xc8] sm:$0xff]
    %v3174 = vld [vmem:[#allocation11 + $0xd0] sm:$0xff]
    %v3175 = vld [vmem:[#allocation11 + $0xd8] sm:$0xff]
    %v3176 = vld [vmem:[#allocation11 + $0xe0] sm:$0xff]
    %v3177 = vld [vmem:[#allocation11 + $0xe8] sm:$0xff]
    %v3178 = vld [vmem:[#allocation11 + $0xf0] sm:$0xff]
    %v3179 = vld [vmem:[#allocation11 + $0xf8] sm:$0xff]
    %v3180 = vpack.c.bf16 %v2822, %v2822
    %v3213 = vunpack.c.l.b16 %v3148
    %v3214 = vunpack.c.h.b16 %v3148
    %v3215 = vunpack.c.l.b16 %v3149
    %v3216 = vunpack.c.h.b16 %v3149
    %v3217 = vunpack.c.l.b16 %v3150
    %v3218 = vunpack.c.h.b16 %v3150
    %v3219 = vunpack.c.l.b16 %v3151
    %v3220 = vunpack.c.h.b16 %v3151
    %v3221 = vunpack.c.l.b16 %v3152
    %v3222 = vunpack.c.h.b16 %v3152
    %v3223 = vunpack.c.l.b16 %v3153
    %v3224 = vunpack.c.h.b16 %v3153
    %v3225 = vunpack.c.l.b16 %v3154
    %v3226 = vunpack.c.h.b16 %v3154
    %v3227 = vunpack.c.l.b16 %v3155
    %v3228 = vunpack.c.h.b16 %v3155
    %v3229 = vunpack.c.l.b16 %v3156
    %v3230 = vunpack.c.h.b16 %v3156
    %v3231 = vunpack.c.l.b16 %v3157
    %v3232 = vunpack.c.h.b16 %v3157
    %v3233 = vunpack.c.l.b16 %v3158
    %v3234 = vunpack.c.h.b16 %v3158
    %v3235 = vunpack.c.l.b16 %v3159
    %v3236 = vunpack.c.h.b16 %v3159
    %v3237 = vunpack.c.l.b16 %v3160
    %v3238 = vunpack.c.h.b16 %v3160
    %v3239 = vunpack.c.l.b16 %v3161
    %v3240 = vunpack.c.h.b16 %v3161
    %v3241 = vunpack.c.l.b16 %v3162
    %v3242 = vunpack.c.h.b16 %v3162
    %v3243 = vunpack.c.l.b16 %v3163
    %v3244 = vunpack.c.h.b16 %v3163
    %v3245 = vunpack.c.l.b16 %v3164
    %v3246 = vunpack.c.h.b16 %v3164
    %v3247 = vunpack.c.l.b16 %v3165
    %v3248 = vunpack.c.h.b16 %v3165
    %v3249 = vunpack.c.l.b16 %v3166
    %v3250 = vunpack.c.h.b16 %v3166
    %v3251 = vunpack.c.l.b16 %v3167
    %v3252 = vunpack.c.h.b16 %v3167
    %v3253 = vunpack.c.l.b16 %v3168
    %v3254 = vunpack.c.h.b16 %v3168
    %v3255 = vunpack.c.l.b16 %v3169
    %v3256 = vunpack.c.h.b16 %v3169
    %v3257 = vunpack.c.l.b16 %v3170
    %v3258 = vunpack.c.h.b16 %v3170
    %v3259 = vunpack.c.l.b16 %v3171
    %v3260 = vunpack.c.h.b16 %v3171
    %v3261 = vunpack.c.l.b16 %v3172
    %v3262 = vunpack.c.h.b16 %v3172
    %v3263 = vunpack.c.l.b16 %v3173
    %v3264 = vunpack.c.h.b16 %v3173
    %v3265 = vunpack.c.l.b16 %v3174
    %v3266 = vunpack.c.h.b16 %v3174
    %v3267 = vunpack.c.l.b16 %v3175
    %v3268 = vunpack.c.h.b16 %v3175
    %v3269 = vunpack.c.l.b16 %v3176
    %v3270 = vunpack.c.h.b16 %v3176
    %v3271 = vunpack.c.l.b16 %v3177
    %v3272 = vunpack.c.h.b16 %v3177
    %v3273 = vunpack.c.l.b16 %v3178
    %v3274 = vunpack.c.h.b16 %v3178
    %v3275 = vunpack.c.l.b16 %v3179
    %v3276 = vunpack.c.h.b16 %v3179
    %v3277 = vpack.c.b16 %v3217, %v3213
    %v3278 = vpack.c.b16 %v3218, %v3214
    %v3279 = vpack.c.b16 %v3219, %v3215
    %v3280 = vpack.c.b16 %v3220, %v3216
    %v3281 = vpack.c.b16 %v3225, %v3221
    %v3282 = vpack.c.b16 %v3226, %v3222
    %v3283 = vpack.c.b16 %v3227, %v3223
    %v3284 = vpack.c.b16 %v3228, %v3224
    %v3285 = vpack.c.b16 %v3233, %v3229
    %v3286 = vpack.c.b16 %v3234, %v3230
    %v3287 = vpack.c.b16 %v3235, %v3231
    %v3288 = vpack.c.b16 %v3236, %v3232
    %v3289 = vpack.c.b16 %v3241, %v3237
    %v3290 = vpack.c.b16 %v3242, %v3238
    %v3291 = vpack.c.b16 %v3243, %v3239
    %v3292 = vpack.c.b16 %v3244, %v3240
    %v3293 = vpack.c.b16 %v3249, %v3245
    %v3294 = vpack.c.b16 %v3250, %v3246
    %v3295 = vpack.c.b16 %v3251, %v3247
    %v3296 = vpack.c.b16 %v3252, %v3248
    %v3297 = vpack.c.b16 %v3257, %v3253
    %v3298 = vpack.c.b16 %v3258, %v3254
    %v3299 = vpack.c.b16 %v3259, %v3255
    %v3300 = vpack.c.b16 %v3260, %v3256
    %v3301 = vpack.c.b16 %v3265, %v3261
    %v3302 = vpack.c.b16 %v3266, %v3262
    %v3303 = vpack.c.b16 %v3267, %v3263
    %v3304 = vpack.c.b16 %v3268, %v3264
    %v3305 = vpack.c.b16 %v3273, %v3269
    %v3306 = vpack.c.b16 %v3274, %v3270
    %v3307 = vpack.c.b16 %v3275, %v3271
    %v3308 = vpack.c.b16 %v3276, %v3272
    %3341 = vmatprep.subr.bf16.mxu0 %v3278
    %3342 = vmatpush1.bf16.msra.mxu0 %v3277
    %3343 = vmatprep.subr.bf16.mxu0 %v3282
    %3344 = vmatpush1.bf16.msra.mxu0 %v3281
    %3345 = vmatprep.subr.bf16.mxu0 %v3286
    %3346 = vmatpush1.bf16.msra.mxu0 %v3285
    %3347 = vmatprep.subr.bf16.mxu0 %v3290
    %3348 = vmatpush1.bf16.msra.mxu0 %v3289
    %3349 = vmatprep.subr.bf16.mxu0 %v3294
    %3350 = vmatpush1.bf16.msra.mxu0 %v3293
    %3351 = vmatprep.subr.bf16.mxu0 %v3298
    %3352 = vmatpush1.bf16.msra.mxu0 %v3297
    %3353 = vmatprep.subr.bf16.mxu0 %v3302
    %3354 = vmatpush1.bf16.msra.mxu0 %v3301
    %3355 = vmatprep.subr.bf16.mxu0 %v3306
    %3356 = vmatpush1.bf16.msra.mxu0 %v3305
    %3357 = vmatprep.subr.bf16.mxu0 0
    %3358 = vmatpush1.bf16.msra.mxu0 0
    %3359 = vmatprep.subr.bf16.mxu0 0
    %3360 = vmatpush1.bf16.msra.mxu0 0
    %3361 = vmatprep.subr.bf16.mxu0 0
    %3362 = vmatpush1.bf16.msra.mxu0 0
    %3363 = vmatprep.subr.bf16.mxu0 0
    %3364 = vmatpush1.bf16.msra.mxu0 0
    %3365 = vmatprep.subr.bf16.mxu0 0
    %3366 = vmatpush1.bf16.msra.mxu0 0
    %3367 = vmatprep.subr.bf16.mxu0 0
    %3368 = vmatpush1.bf16.msra.mxu0 0
    %3369 = vmatprep.subr.bf16.mxu0 0
    %3370 = vmatpush1.bf16.msra.mxu0 0
    %3371 = vmatprep.subr.bf16.mxu0 0
    %3372 = vmatpush1.bf16.msra.mxu0 0
    %3373 = vmatprep.mubr.bf16.mxu0 0
    %3374 = vmatmul.mubr.bf16.gmra.mrb[0].mxu0 %v3180
    %v3375 = vpop.f32.mrb[0].mxu0
    %v3376 = vadd.f32 0.0, %v3375
    %v3377 = vpop.f32.mrb[0].mxu0
    %v3378 = vadd.f32 0.0, %v3377
    %v3379 = vpop.f32.mrb[0].mxu0
    %v3380 = vpop.f32.mrb[0].mxu0
    %3381 = vdwg.mxu0
    %3382 = vmatprep.subr.bf16.mxu0 %v3280
    %3383 = vmatpush1.bf16.msra.mxu0 %v3279
    %3384 = vmatprep.subr.bf16.mxu0 %v3284
    %3385 = vmatpush1.bf16.msra.mxu0 %v3283
    %3386 = vmatprep.subr.bf16.mxu0 %v3288
    %3387 = vmatpush1.bf16.msra.mxu0 %v3287
    %3388 = vmatprep.subr.bf16.mxu0 %v3292
    %3389 = vmatpush1.bf16.msra.mxu0 %v3291
    %3390 = vmatprep.subr.bf16.mxu0 %v3296
    %3391 = vmatpush1.bf16.msra.mxu0 %v3295
    %3392 = vmatprep.subr.bf16.mxu0 %v3300
    %3393 = vmatpush1.bf16.msra.mxu0 %v3299
    %3394 = vmatprep.subr.bf16.mxu0 %v3304
    %3395 = vmatpush1.bf16.msra.mxu0 %v3303
    %3396 = vmatprep.subr.bf16.mxu0 %v3308
    %3397 = vmatpush1.bf16.msra.mxu0 %v3307
    %3398 = vmatprep.subr.bf16.mxu0 0
    %3399 = vmatpush1.bf16.msra.mxu0 0
    %3400 = vmatprep.subr.bf16.mxu0 0
    %3401 = vmatpush1.bf16.msra.mxu0 0
    %3402 = vmatprep.subr.bf16.mxu0 0
    %3403 = vmatpush1.bf16.msra.mxu0 0
    %3404 = vmatprep.subr.bf16.mxu0 0
    %3405 = vmatpush1.bf16.msra.mxu0 0
    %3406 = vmatprep.subr.bf16.mxu0 0
    %3407 = vmatpush1.bf16.msra.mxu0 0
    %3408 = vmatprep.subr.bf16.mxu0 0
    %3409 = vmatpush1.bf16.msra.mxu0 0
    %3410 = vmatprep.subr.bf16.mxu0 0
    %3411 = vmatpush1.bf16.msra.mxu0 0
    %3412 = vmatprep.subr.bf16.mxu0 0
    %3413 = vmatpush1.bf16.msra.mxu0 0
    %3414 = vmatprep.mubr.bf16.mxu0 0
    %3415 = vmatmul.mubr.bf16.gmra.mrb[0].mxu0 %v3180
    %v3416 = vpop.f32.mrb[0].mxu0
    %v3417 = vadd.f32 0.0, %v3416
    %v3418 = vpop.f32.mrb[0].mxu0
    %v3419 = vadd.f32 0.0, %v3418
    %v3420 = vpop.f32.mrb[0].mxu0
    %v3421 = vpop.f32.mrb[0].mxu0
    %3422 = vdwg.mxu0
    %v3423 = vadd.f32 %v3144, %v3376
    %v3424 = vadd.f32 %v3145, %v3378
    %v3425 = vadd.f32 %v3146, %v3417
    %v3426 = vadd.f32 %v3147, %v3419
    %v3427 = vxor.u32 %v3423, 2147483648
    %v3428 = vmul.f32 %v3427, 1.442695
    %v3429 = vpow.pop %v3428
    %v3430 = vadd.f32 %v3429, 1.0
    %v3431 = vrcp.pop %v3430
    %v3432 = vmul.f32 1.0, %v3431
    %v3433 = vxor.u32 %v3424, 2147483648
    %v3434 = vmul.f32 %v3433, 1.442695
    %v3435 = vpow.pop %v3434
    %v3436 = vadd.f32 %v3435, 1.0
    %v3437 = vrcp.pop %v3436
    %v3438 = vmul.f32 1.0, %v3437
    %v3439 = vtanh.pop %v3425
    %v3440 = vxor.u32 %v3426, 2147483648
    %v3441 = vmul.f32 %v3440, 1.442695
    %v3442 = vpow.pop %v3441
    %v3443 = vadd.f32 %v3442, 1.0
    %v3444 = vrcp.pop %v3443
    %v3445 = vmul.f32 1.0, %v3444
    %v3446 = vmul.f32 %v3438, %v2820
    %v3447 = vmul.f32 %v3432, %v3439
    %v3448 = vadd.f32 %v3446, %v3447
    %v3449 = vtanh.pop %v3448
    %v3450 = vmul.f32 %v3445, %v3449
    %s3451 = smul.u32 4, 2
    %s3452 = smul.addr %s3451, 8
    %s3453 = scalar_lea.vmem [#allocation15], %s3452
    %3454 = vst [vmem:[%s3453 + $0x8] sm:$0xff] %v3450
    %v3455 = vld [vmem:[%s3143] sm:$0xff]
    %v3456 = vld [vmem:[%s3143 + $0x8] sm:$0xff]
    %v3457 = vld [vmem:[%s3143 + $0x10] sm:$0xff]
    %v3458 = vld [vmem:[%s3143 + $0x18] sm:$0xff]
    %v3459 = vld [vmem:[#allocation9] sm:$0xff]
    %v3460 = vld [vmem:[#allocation9 + $0x8] sm:$0xff]
    %v3461 = vld [vmem:[#allocation9 + $0x10] sm:$0xff]
    %v3462 = vld [vmem:[#allocation9 + $0x18] sm:$0xff]
    %v3463 = vld [vmem:[#allocation9 + $0x20] sm:$0xff]
    %v3464 = vld [vmem:[#allocation9 + $0x28] sm:$0xff]
    %v3465 = vld [vmem:[#allocation9 + $0x30] sm:$0xff]
    %v3466 = vld [vmem:[#allocation9 + $0x38] sm:$0xff]
    %v3467 = vld [vmem:[#allocation9 + $0x40] sm:$0xff]
    %v3468 = vld [vmem:[#allocation9 + $0x48] sm:$0xff]
    %v3469 = vld [vmem:[#allocation9 + $0x50] sm:$0xff]
    %v3470 = vld [vmem:[#allocation9 + $0x58] sm:$0xff]
    %v3471 = vld [vmem:[#allocation9 + $0x60] sm:$0xff]
    %v3472 = vld [vmem:[#allocation9 + $0x68] sm:$0xff]
    %v3473 = vld [vmem:[#allocation9 + $0x70] sm:$0xff]
    %v3474 = vld [vmem:[#allocation9 + $0x78] sm:$0xff]
    %v3475 = vld [vmem:[#allocation9 + $0x80] sm:$0xff]
    %v3476 = vld [vmem:[#allocation9 + $0x88] sm:$0xff]
    %v3477 = vld [vmem:[#allocation9 + $0x90] sm:$0xff]
    %v3478 = vld [vmem:[#allocation9 + $0x98] sm:$0xff]
    %v3479 = vld [vmem:[#allocation9 + $0xa0] sm:$0xff]
    %v3480 = vld [vmem:[#allocation9 + $0xa8] sm:$0xff]
    %v3481 = vld [vmem:[#allocation9 + $0xb0] sm:$0xff]
    %v3482 = vld [vmem:[#allocation9 + $0xb8] sm:$0xff]
    %v3483 = vld [vmem:[#allocation9 + $0xc0] sm:$0xff]
    %v3484 = vld [vmem:[#allocation9 + $0xc8] sm:$0xff]
    %v3485 = vld [vmem:[#allocation9 + $0xd0] sm:$0xff]
    %v3486 = vld [vmem:[#allocation9 + $0xd8] sm:$0xff]
    %v3487 = vld [vmem:[#allocation9 + $0xe0] sm:$0xff]
    %v3488 = vld [vmem:[#allocation9 + $0xe8] sm:$0xff]
    %v3489 = vld [vmem:[#allocation9 + $0xf0] sm:$0xff]
    %v3490 = vld [vmem:[#allocation9 + $0xf8] sm:$0xff]
    %v3491 = vpack.c.bf16 %v3136, %v3136
    %v3524 = vunpack.c.l.b16 %v3459
    %v3525 = vunpack.c.h.b16 %v3459
    %v3526 = vunpack.c.l.b16 %v3460
    %v3527 = vunpack.c.h.b16 %v3460
    %v3528 = vunpack.c.l.b16 %v3461
    %v3529 = vunpack.c.h.b16 %v3461
    %v3530 = vunpack.c.l.b16 %v3462
    %v3531 = vunpack.c.h.b16 %v3462
    %v3532 = vunpack.c.l.b16 %v3463
    %v3533 = vunpack.c.h.b16 %v3463
    %v3534 = vunpack.c.l.b16 %v3464
    %v3535 = vunpack.c.h.b16 %v3464
    %v3536 = vunpack.c.l.b16 %v3465
    %v3537 = vunpack.c.h.b16 %v3465
    %v3538 = vunpack.c.l.b16 %v3466
    %v3539 = vunpack.c.h.b16 %v3466
    %v3540 = vunpack.c.l.b16 %v3467
    %v3541 = vunpack.c.h.b16 %v3467
    %v3542 = vunpack.c.l.b16 %v3468
    %v3543 = vunpack.c.h.b16 %v3468
    %v3544 = vunpack.c.l.b16 %v3469
    %v3545 = vunpack.c.h.b16 %v3469
    %v3546 = vunpack.c.l.b16 %v3470
    %v3547 = vunpack.c.h.b16 %v3470
    %v3548 = vunpack.c.l.b16 %v3471
    %v3549 = vunpack.c.h.b16 %v3471
    %v3550 = vunpack.c.l.b16 %v3472
    %v3551 = vunpack.c.h.b16 %v3472
    %v3552 = vunpack.c.l.b16 %v3473
    %v3553 = vunpack.c.h.b16 %v3473
    %v3554 = vunpack.c.l.b16 %v3474
    %v3555 = vunpack.c.h.b16 %v3474
    %v3556 = vunpack.c.l.b16 %v3475
    %v3557 = vunpack.c.h.b16 %v3475
    %v3558 = vunpack.c.l.b16 %v3476
    %v3559 = vunpack.c.h.b16 %v3476
    %v3560 = vunpack.c.l.b16 %v3477
    %v3561 = vunpack.c.h.b16 %v3477
    %v3562 = vunpack.c.l.b16 %v3478
    %v3563 = vunpack.c.h.b16 %v3478
    %v3564 = vunpack.c.l.b16 %v3479
    %v3565 = vunpack.c.h.b16 %v3479
    %v3566 = vunpack.c.l.b16 %v3480
    %v3567 = vunpack.c.h.b16 %v3480
    %v3568 = vunpack.c.l.b16 %v3481
    %v3569 = vunpack.c.h.b16 %v3481
    %v3570 = vunpack.c.l.b16 %v3482
    %v3571 = vunpack.c.h.b16 %v3482
    %v3572 = vunpack.c.l.b16 %v3483
    %v3573 = vunpack.c.h.b16 %v3483
    %v3574 = vunpack.c.l.b16 %v3484
    %v3575 = vunpack.c.h.b16 %v3484
    %v3576 = vunpack.c.l.b16 %v3485
    %v3577 = vunpack.c.h.b16 %v3485
    %v3578 = vunpack.c.l.b16 %v3486
    %v3579 = vunpack.c.h.b16 %v3486
    %v3580 = vunpack.c.l.b16 %v3487
    %v3581 = vunpack.c.h.b16 %v3487
    %v3582 = vunpack.c.l.b16 %v3488
    %v3583 = vunpack.c.h.b16 %v3488
    %v3584 = vunpack.c.l.b16 %v3489
    %v3585 = vunpack.c.h.b16 %v3489
    %v3586 = vunpack.c.l.b16 %v3490
    %v3587 = vunpack.c.h.b16 %v3490
    %v3588 = vpack.c.b16 %v3528, %v3524
    %v3589 = vpack.c.b16 %v3529, %v3525
    %v3590 = vpack.c.b16 %v3530, %v3526
    %v3591 = vpack.c.b16 %v3531, %v3527
    %v3592 = vpack.c.b16 %v3536, %v3532
    %v3593 = vpack.c.b16 %v3537, %v3533
    %v3594 = vpack.c.b16 %v3538, %v3534
    %v3595 = vpack.c.b16 %v3539, %v3535
    %v3596 = vpack.c.b16 %v3544, %v3540
    %v3597 = vpack.c.b16 %v3545, %v3541
    %v3598 = vpack.c.b16 %v3546, %v3542
    %v3599 = vpack.c.b16 %v3547, %v3543
    %v3600 = vpack.c.b16 %v3552, %v3548
    %v3601 = vpack.c.b16 %v3553, %v3549
    %v3602 = vpack.c.b16 %v3554, %v3550
    %v3603 = vpack.c.b16 %v3555, %v3551
    %v3604 = vpack.c.b16 %v3560, %v3556
    %v3605 = vpack.c.b16 %v3561, %v3557
    %v3606 = vpack.c.b16 %v3562, %v3558
    %v3607 = vpack.c.b16 %v3563, %v3559
    %v3608 = vpack.c.b16 %v3568, %v3564
    %v3609 = vpack.c.b16 %v3569, %v3565
    %v3610 = vpack.c.b16 %v3570, %v3566
    %v3611 = vpack.c.b16 %v3571, %v3567
    %v3612 = vpack.c.b16 %v3576, %v3572
    %v3613 = vpack.c.b16 %v3577, %v3573
    %v3614 = vpack.c.b16 %v3578, %v3574
    %v3615 = vpack.c.b16 %v3579, %v3575
    %v3616 = vpack.c.b16 %v3584, %v3580
    %v3617 = vpack.c.b16 %v3585, %v3581
    %v3618 = vpack.c.b16 %v3586, %v3582
    %v3619 = vpack.c.b16 %v3587, %v3583
    %3652 = vmatprep.subr.bf16.mxu0 %v3589
    %3653 = vmatpush1.bf16.msra.mxu0 %v3588
    %3654 = vmatprep.subr.bf16.mxu0 %v3593
    %3655 = vmatpush1.bf16.msra.mxu0 %v3592
    %3656 = vmatprep.subr.bf16.mxu0 %v3597
    %3657 = vmatpush1.bf16.msra.mxu0 %v3596
    %3658 = vmatprep.subr.bf16.mxu0 %v3601
    %3659 = vmatpush1.bf16.msra.mxu0 %v3600
    %3660 = vmatprep.subr.bf16.mxu0 %v3605
    %3661 = vmatpush1.bf16.msra.mxu0 %v3604
    %3662 = vmatprep.subr.bf16.mxu0 %v3609
    %3663 = vmatpush1.bf16.msra.mxu0 %v3608
    %3664 = vmatprep.subr.bf16.mxu0 %v3613
    %3665 = vmatpush1.bf16.msra.mxu0 %v3612
    %3666 = vmatprep.subr.bf16.mxu0 %v3617
    %3667 = vmatpush1.bf16.msra.mxu0 %v3616
    %3668 = vmatprep.subr.bf16.mxu0 0
    %3669 = vmatpush1.bf16.msra.mxu0 0
    %3670 = vmatprep.subr.bf16.mxu0 0
    %3671 = vmatpush1.bf16.msra.mxu0 0
    %3672 = vmatprep.subr.bf16.mxu0 0
    %3673 = vmatpush1.bf16.msra.mxu0 0
    %3674 = vmatprep.subr.bf16.mxu0 0
    %3675 = vmatpush1.bf16.msra.mxu0 0
    %3676 = vmatprep.subr.bf16.mxu0 0
    %3677 = vmatpush1.bf16.msra.mxu0 0
    %3678 = vmatprep.subr.bf16.mxu0 0
    %3679 = vmatpush1.bf16.msra.mxu0 0
    %3680 = vmatprep.subr.bf16.mxu0 0
    %3681 = vmatpush1.bf16.msra.mxu0 0
    %3682 = vmatprep.subr.bf16.mxu0 0
    %3683 = vmatpush1.bf16.msra.mxu0 0
    %3684 = vmatprep.mubr.bf16.mxu0 0
    %3685 = vmatmul.mubr.bf16.gmra.mrb[0].mxu0 %v3491
    %v3686 = vpop.f32.mrb[0].mxu0
    %v3687 = vadd.f32 0.0, %v3686
    %v3688 = vpop.f32.mrb[0].mxu0
    %v3689 = vadd.f32 0.0, %v3688
    %v3690 = vpop.f32.mrb[0].mxu0
    %v3691 = vpop.f32.mrb[0].mxu0
    %3692 = vdwg.mxu0
    %3693 = vmatprep.subr.bf16.mxu0 %v3591
    %3694 = vmatpush1.bf16.msra.mxu0 %v3590
    %3695 = vmatprep.subr.bf16.mxu0 %v3595
    %3696 = vmatpush1.bf16.msra.mxu0 %v3594
    %3697 = vmatprep.subr.bf16.mxu0 %v3599
    %3698 = vmatpush1.bf16.msra.mxu0 %v3598
    %3699 = vmatprep.subr.bf16.mxu0 %v3603
    %3700 = vmatpush1.bf16.msra.mxu0 %v3602
    %3701 = vmatprep.subr.bf16.mxu0 %v3607
    %3702 = vmatpush1.bf16.msra.mxu0 %v3606
    %3703 = vmatprep.subr.bf16.mxu0 %v3611
    %3704 = vmatpush1.bf16.msra.mxu0 %v3610
    %3705 = vmatprep.subr.bf16.mxu0 %v3615
    %3706 = vmatpush1.bf16.msra.mxu0 %v3614
    %3707 = vmatprep.subr.bf16.mxu0 %v3619
    %3708 = vmatpush1.bf16.msra.mxu0 %v3618
    %3709 = vmatprep.subr.bf16.mxu0 0
    %3710 = vmatpush1.bf16.msra.mxu0 0
    %3711 = vmatprep.subr.bf16.mxu0 0
    %3712 = vmatpush1.bf16.msra.mxu0 0
    %3713 = vmatprep.subr.bf16.mxu0 0
    %3714 = vmatpush1.bf16.msra.mxu0 0
    %3715 = vmatprep.subr.bf16.mxu0 0
    %3716 = vmatpush1.bf16.msra.mxu0 0
    %3717 = vmatprep.subr.bf16.mxu0 0
    %3718 = vmatpush1.bf16.msra.mxu0 0
    %3719 = vmatprep.subr.bf16.mxu0 0
    %3720 = vmatpush1.bf16.msra.mxu0 0
    %3721 = vmatprep.subr.bf16.mxu0 0
    %3722 = vmatpush1.bf16.msra.mxu0 0
    %3723 = vmatprep.subr.bf16.mxu0 0
    %3724 = vmatpush1.bf16.msra.mxu0 0
    %3725 = vmatprep.mubr.bf16.mxu0 0
    %3726 = vmatmul.mubr.bf16.gmra.mrb[0].mxu0 %v3491
    %v3727 = vpop.f32.mrb[0].mxu0
    %v3728 = vadd.f32 0.0, %v3727
    %v3729 = vpop.f32.mrb[0].mxu0
    %v3730 = vadd.f32 0.0, %v3729
    %v3731 = vpop.f32.mrb[0].mxu0
    %v3732 = vpop.f32.mrb[0].mxu0
    %3733 = vdwg.mxu0
    %v3734 = vadd.f32 %v3455, %v3687
    %v3735 = vadd.f32 %v3456, %v3689
    %v3736 = vadd.f32 %v3457, %v3728
    %v3737 = vadd.f32 %v3458, %v3730
    %v3738 = vxor.u32 %v3734, 2147483648
    %v3739 = vmul.f32 %v3738, 1.442695
    %v3740 = vpow.pop %v3739
    %v3741 = vadd.f32 %v3740, 1.0
    %v3742 = vrcp.pop %v3741
    %v3743 = vmul.f32 1.0, %v3742
    %v3744 = vxor.u32 %v3735, 2147483648
    %v3745 = vmul.f32 %v3744, 1.442695
    %v3746 = vpow.pop %v3745
    %v3747 = vadd.f32 %v3746, 1.0
    %v3748 = vrcp.pop %v3747
    %v3749 = vmul.f32 1.0, %v3748
    %v3750 = vtanh.pop %v3736
    %v3751 = vxor.u32 %v3737, 2147483648
    %v3752 = vmul.f32 %v3751, 1.442695
    %v3753 = vpow.pop %v3752
    %v3754 = vadd.f32 %v3753, 1.0
    %v3755 = vrcp.pop %v3754
    %v3756 = vmul.f32 1.0, %v3755
    %v3757 = vmul.f32 %v3749, %v3134
    %v3758 = vmul.f32 %v3743, %v3750
    %v3759 = vadd.f32 %v3757, %v3758
    %v3760 = vtanh.pop %v3759
    %v3761 = vmul.f32 %v3756, %v3760
    %3762 = vst [vmem:[%s3453] sm:$0xff] %v3761
    %v3763 = vld [vmem:[%s2829 + $0x20] sm:$0xff]
    %v3764 = vld [vmem:[%s2829 + $0x28] sm:$0xff]
    %v3765 = vld [vmem:[%s2829 + $0x30] sm:$0xff]
    %v3766 = vld [vmem:[%s2829 + $0x38] sm:$0xff]
    %v3767 = vld [vmem:[#allocation11] sm:$0xff]
    %v3768 = vld [vmem:[#allocation11 + $0x8] sm:$0xff]
    %v3769 = vld [vmem:[#allocation11 + $0x10] sm:$0xff]
    %v3770 = vld [vmem:[#allocation11 + $0x18] sm:$0xff]
    %v3771 = vld [vmem:[#allocation11 + $0x20] sm:$0xff]
    %v3772 = vld [vmem:[#allocation11 + $0x28] sm:$0xff]
    %v3773 = vld [vmem:[#allocation11 + $0x30] sm:$0xff]
    %v3774 = vld [vmem:[#allocation11 + $0x38] sm:$0xff]
    %v3775 = vld [vmem:[#allocation11 + $0x40] sm:$0xff]
    %v3776 = vld [vmem:[#allocation11 + $0x48] sm:$0xff]
    %v3777 = vld [vmem:[#allocation11 + $0x50] sm:$0xff]
    %v3778 = vld [vmem:[#allocation11 + $0x58] sm:$0xff]
    %v3779 = vld [vmem:[#allocation11 + $0x60] sm:$0xff]
    %v3780 = vld [vmem:[#allocation11 + $0x68] sm:$0xff]
    %v3781 = vld [vmem:[#allocation11 + $0x70] sm:$0xff]
    %v3782 = vld [vmem:[#allocation11 + $0x78] sm:$0xff]
    %v3783 = vld [vmem:[#allocation11 + $0x80] sm:$0xff]
    %v3784 = vld [vmem:[#allocation11 + $0x88] sm:$0xff]
    %v3785 = vld [vmem:[#allocation11 + $0x90] sm:$0xff]
    %v3786 = vld [vmem:[#allocation11 + $0x98] sm:$0xff]
    %v3787 = vld [vmem:[#allocation11 + $0xa0] sm:$0xff]
    %v3788 = vld [vmem:[#allocation11 + $0xa8] sm:$0xff]
    %v3789 = vld [vmem:[#allocation11 + $0xb0] sm:$0xff]
    %v3790 = vld [vmem:[#allocation11 + $0xb8] sm:$0xff]
    %v3791 = vld [vmem:[#allocation11 + $0xc0] sm:$0xff]
    %v3792 = vld [vmem:[#allocation11 + $0xc8] sm:$0xff]
    %v3793 = vld [vmem:[#allocation11 + $0xd0] sm:$0xff]
    %v3794 = vld [vmem:[#allocation11 + $0xd8] sm:$0xff]
    %v3795 = vld [vmem:[#allocation11 + $0xe0] sm:$0xff]
    %v3796 = vld [vmem:[#allocation11 + $0xe8] sm:$0xff]
    %v3797 = vld [vmem:[#allocation11 + $0xf0] sm:$0xff]
    %v3798 = vld [vmem:[#allocation11 + $0xf8] sm:$0xff]
    %v3799 = vpack.c.bf16 %v3450, %v3450
    %v3832 = vunpack.c.l.b16 %v3767
    %v3833 = vunpack.c.h.b16 %v3767
    %v3834 = vunpack.c.l.b16 %v3768
    %v3835 = vunpack.c.h.b16 %v3768
    %v3836 = vunpack.c.l.b16 %v3769
    %v3837 = vunpack.c.h.b16 %v3769
    %v3838 = vunpack.c.l.b16 %v3770
    %v3839 = vunpack.c.h.b16 %v3770
    %v3840 = vunpack.c.l.b16 %v3771
    %v3841 = vunpack.c.h.b16 %v3771
    %v3842 = vunpack.c.l.b16 %v3772
    %v3843 = vunpack.c.h.b16 %v3772
    %v3844 = vunpack.c.l.b16 %v3773
    %v3845 = vunpack.c.h.b16 %v3773
    %v3846 = vunpack.c.l.b16 %v3774
    %v3847 = vunpack.c.h.b16 %v3774
    %v3848 = vunpack.c.l.b16 %v3775
    %v3849 = vunpack.c.h.b16 %v3775
    %v3850 = vunpack.c.l.b16 %v3776
    %v3851 = vunpack.c.h.b16 %v3776
    %v3852 = vunpack.c.l.b16 %v3777
    %v3853 = vunpack.c.h.b16 %v3777
    %v3854 = vunpack.c.l.b16 %v3778
    %v3855 = vunpack.c.h.b16 %v3778
    %v3856 = vunpack.c.l.b16 %v3779
    %v3857 = vunpack.c.h.b16 %v3779
    %v3858 = vunpack.c.l.b16 %v3780
    %v3859 = vunpack.c.h.b16 %v3780
    %v3860 = vunpack.c.l.b16 %v3781
    %v3861 = vunpack.c.h.b16 %v3781
    %v3862 = vunpack.c.l.b16 %v3782
    %v3863 = vunpack.c.h.b16 %v3782
    %v3864 = vunpack.c.l.b16 %v3783
    %v3865 = vunpack.c.h.b16 %v3783
    %v3866 = vunpack.c.l.b16 %v3784
    %v3867 = vunpack.c.h.b16 %v3784
    %v3868 = vunpack.c.l.b16 %v3785
    %v3869 = vunpack.c.h.b16 %v3785
    %v3870 = vunpack.c.l.b16 %v3786
    %v3871 = vunpack.c.h.b16 %v3786
    %v3872 = vunpack.c.l.b16 %v3787
    %v3873 = vunpack.c.h.b16 %v3787
    %v3874 = vunpack.c.l.b16 %v3788
    %v3875 = vunpack.c.h.b16 %v3788
    %v3876 = vunpack.c.l.b16 %v3789
    %v3877 = vunpack.c.h.b16 %v3789
    %v3878 = vunpack.c.l.b16 %v3790
    %v3879 = vunpack.c.h.b16 %v3790
    %v3880 = vunpack.c.l.b16 %v3791
    %v3881 = vunpack.c.h.b16 %v3791
    %v3882 = vunpack.c.l.b16 %v3792
    %v3883 = vunpack.c.h.b16 %v3792
    %v3884 = vunpack.c.l.b16 %v3793
    %v3885 = vunpack.c.h.b16 %v3793
    %v3886 = vunpack.c.l.b16 %v3794
    %v3887 = vunpack.c.h.b16 %v3794
    %v3888 = vunpack.c.l.b16 %v3795
    %v3889 = vunpack.c.h.b16 %v3795
    %v3890 = vunpack.c.l.b16 %v3796
    %v3891 = vunpack.c.h.b16 %v3796
    %v3892 = vunpack.c.l.b16 %v3797
    %v3893 = vunpack.c.h.b16 %v3797
    %v3894 = vunpack.c.l.b16 %v3798
    %v3895 = vunpack.c.h.b16 %v3798
    %v3896 = vpack.c.b16 %v3836, %v3832
    %v3897 = vpack.c.b16 %v3837, %v3833
    %v3898 = vpack.c.b16 %v3838, %v3834
    %v3899 = vpack.c.b16 %v3839, %v3835
    %v3900 = vpack.c.b16 %v3844, %v3840
    %v3901 = vpack.c.b16 %v3845, %v3841
    %v3902 = vpack.c.b16 %v3846, %v3842
    %v3903 = vpack.c.b16 %v3847, %v3843
    %v3904 = vpack.c.b16 %v3852, %v3848
    %v3905 = vpack.c.b16 %v3853, %v3849
    %v3906 = vpack.c.b16 %v3854, %v3850
    %v3907 = vpack.c.b16 %v3855, %v3851
    %v3908 = vpack.c.b16 %v3860, %v3856
    %v3909 = vpack.c.b16 %v3861, %v3857
    %v3910 = vpack.c.b16 %v3862, %v3858
    %v3911 = vpack.c.b16 %v3863, %v3859
    %v3912 = vpack.c.b16 %v3868, %v3864
    %v3913 = vpack.c.b16 %v3869, %v3865
    %v3914 = vpack.c.b16 %v3870, %v3866
    %v3915 = vpack.c.b16 %v3871, %v3867
    %v3916 = vpack.c.b16 %v3876, %v3872
    %v3917 = vpack.c.b16 %v3877, %v3873
    %v3918 = vpack.c.b16 %v3878, %v3874
    %v3919 = vpack.c.b16 %v3879, %v3875
    %v3920 = vpack.c.b16 %v3884, %v3880
    %v3921 = vpack.c.b16 %v3885, %v3881
    %v3922 = vpack.c.b16 %v3886, %v3882
    %v3923 = vpack.c.b16 %v3887, %v3883
    %v3924 = vpack.c.b16 %v3892, %v3888
    %v3925 = vpack.c.b16 %v3893, %v3889
    %v3926 = vpack.c.b16 %v3894, %v3890
    %v3927 = vpack.c.b16 %v3895, %v3891
    %3960 = vmatprep.subr.bf16.mxu0 %v3897
    %3961 = vmatpush1.bf16.msra.mxu0 %v3896
    %3962 = vmatprep.subr.bf16.mxu0 %v3901
    %3963 = vmatpush1.bf16.msra.mxu0 %v3900
    %3964 = vmatprep.subr.bf16.mxu0 %v3905
    %3965 = vmatpush1.bf16.msra.mxu0 %v3904
    %3966 = vmatprep.subr.bf16.mxu0 %v3909
    %3967 = vmatpush1.bf16.msra.mxu0 %v3908
    %3968 = vmatprep.subr.bf16.mxu0 %v3913
    %3969 = vmatpush1.bf16.msra.mxu0 %v3912
    %3970 = vmatprep.subr.bf16.mxu0 %v3917
    %3971 = vmatpush1.bf16.msra.mxu0 %v3916
    %3972 = vmatprep.subr.bf16.mxu0 %v3921
    %3973 = vmatpush1.bf16.msra.mxu0 %v3920
    %3974 = vmatprep.subr.bf16.mxu0 %v3925
    %3975 = vmatpush1.bf16.msra.mxu0 %v3924
    %3976 = vmatprep.subr.bf16.mxu0 0
    %3977 = vmatpush1.bf16.msra.mxu0 0
    %3978 = vmatprep.subr.bf16.mxu0 0
    %3979 = vmatpush1.bf16.msra.mxu0 0
    %3980 = vmatprep.subr.bf16.mxu0 0
    %3981 = vmatpush1.bf16.msra.mxu0 0
    %3982 = vmatprep.subr.bf16.mxu0 0
    %3983 = vmatpush1.bf16.msra.mxu0 0
    %3984 = vmatprep.subr.bf16.mxu0 0
    %3985 = vmatpush1.bf16.msra.mxu0 0
    %3986 = vmatprep.subr.bf16.mxu0 0
    %3987 = vmatpush1.bf16.msra.mxu0 0
    %3988 = vmatprep.subr.bf16.mxu0 0
    %3989 = vmatpush1.bf16.msra.mxu0 0
    %3990 = vmatprep.subr.bf16.mxu0 0
    %3991 = vmatpush1.bf16.msra.mxu0 0
    %3992 = vmatprep.mubr.bf16.mxu0 0
    %3993 = vmatmul.mubr.bf16.gmra.mrb[0].mxu0 %v3799
    %v3994 = vpop.f32.mrb[0].mxu0
    %v3995 = vadd.f32 0.0, %v3994
    %v3996 = vpop.f32.mrb[0].mxu0
    %v3997 = vadd.f32 0.0, %v3996
    %v3998 = vpop.f32.mrb[0].mxu0
    %v3999 = vpop.f32.mrb[0].mxu0
    %4000 = vdwg.mxu0
    %4001 = vmatprep.subr.bf16.mxu0 %v3899
    %4002 = vmatpush1.bf16.msra.mxu0 %v3898
    %4003 = vmatprep.subr.bf16.mxu0 %v3903
    %4004 = vmatpush1.bf16.msra.mxu0 %v3902
    %4005 = vmatprep.subr.bf16.mxu0 %v3907
    %4006 = vmatpush1.bf16.msra.mxu0 %v3906
    %4007 = vmatprep.subr.bf16.mxu0 %v3911
    %4008 = vmatpush1.bf16.msra.mxu0 %v3910
    %4009 = vmatprep.subr.bf16.mxu0 %v3915
    %4010 = vmatpush1.bf16.msra.mxu0 %v3914
    %4011 = vmatprep.subr.bf16.mxu0 %v3919
    %4012 = vmatpush1.bf16.msra.mxu0 %v3918
    %4013 = vmatprep.subr.bf16.mxu0 %v3923
    %4014 = vmatpush1.bf16.msra.mxu0 %v3922
    %4015 = vmatprep.subr.bf16.mxu0 %v3927
    %4016 = vmatpush1.bf16.msra.mxu0 %v3926
    %4017 = vmatprep.subr.bf16.mxu0 0
    %4018 = vmatpush1.bf16.msra.mxu0 0
    %4019 = vmatprep.subr.bf16.mxu0 0
    %4020 = vmatpush1.bf16.msra.mxu0 0
    %4021 = vmatprep.subr.bf16.mxu0 0
    %4022 = vmatpush1.bf16.msra.mxu0 0
    %4023 = vmatprep.subr.bf16.mxu0 0
    %4024 = vmatpush1.bf16.msra.mxu0 0
    %4025 = vmatprep.subr.bf16.mxu0 0
    %4026 = vmatpush1.bf16.msra.mxu0 0
    %4027 = vmatprep.subr.bf16.mxu0 0
    %4028 = vmatpush1.bf16.msra.mxu0 0
    %4029 = vmatprep.subr.bf16.mxu0 0
    %4030 = vmatpush1.bf16.msra.mxu0 0
    %4031 = vmatprep.subr.bf16.mxu0 0
    %4032 = vmatpush1.bf16.msra.mxu0 0
    %4033 = vmatprep.mubr.bf16.mxu0 0
    %4034 = vmatmul.mubr.bf16.gmra.mrb[0].mxu0 %v3799
    %v4035 = vpop.f32.mrb[0].mxu0
    %v4036 = vadd.f32 0.0, %v4035
    %v4037 = vpop.f32.mrb[0].mxu0
    %v4038 = vadd.f32 0.0, %v4037
    %v4039 = vpop.f32.mrb[0].mxu0
    %v4040 = vpop.f32.mrb[0].mxu0
    %4041 = vdwg.mxu0
    %v4042 = vadd.f32 %v3763, %v3995
    %v4043 = vadd.f32 %v3764, %v3997
    %v4044 = vadd.f32 %v3765, %v4036
    %v4045 = vadd.f32 %v3766, %v4038
    %v4046 = vxor.u32 %v4042, 2147483648
    %v4047 = vmul.f32 %v4046, 1.442695
    %v4048 = vpow.pop %v4047
    %v4049 = vadd.f32 %v4048, 1.0
    %v4050 = vrcp.pop %v4049
    %v4051 = vmul.f32 1.0, %v4050
    %v4052 = vxor.u32 %v4043, 2147483648
    %v4053 = vmul.f32 %v4052, 1.442695
    %v4054 = vpow.pop %v4053
    %v4055 = vadd.f32 %v4054, 1.0
    %v4056 = vrcp.pop %v4055
    %v4057 = vmul.f32 1.0, %v4056
    %v4058 = vtanh.pop %v4044
    %v4059 = vxor.u32 %v4045, 2147483648
    %v4060 = vmul.f32 %v4059, 1.442695
    %v4061 = vpow.pop %v4060
    %v4062 = vadd.f32 %v4061, 1.0
    %v4063 = vrcp.pop %v4062
    %v4064 = vmul.f32 1.0, %v4063
    %v4065 = vmul.f32 %v4057, %v3448
    %v4066 = vmul.f32 %v4051, %v4058
    %v4067 = vadd.f32 %v4065, %v4066
    %v4068 = vtanh.pop %v4067
    %v4069 = vmul.f32 %v4064, %v4068
    %4070 = vst [vmem:[%s3139 + $0x8] sm:$0xff] %v4069
    %v4071 = vld [vmem:[%s2515] sm:$0xff]
    %v4072 = vld [vmem:[%s2515 + $0x8] sm:$0xff]
    %v4073 = vld [vmem:[%s2515 + $0x10] sm:$0xff]
    %v4074 = vld [vmem:[%s2515 + $0x18] sm:$0xff]
    %v4075 = vld [vmem:[#allocation9] sm:$0xff]
    %v4076 = vld [vmem:[#allocation9 + $0x8] sm:$0xff]
    %v4077 = vld [vmem:[#allocation9 + $0x10] sm:$0xff]
    %v4078 = vld [vmem:[#allocation9 + $0x18] sm:$0xff]
    %v4079 = vld [vmem:[#allocation9 + $0x20] sm:$0xff]
    %v4080 = vld [vmem:[#allocation9 + $0x28] sm:$0xff]
    %v4081 = vld [vmem:[#allocation9 + $0x30] sm:$0xff]
    %v4082 = vld [vmem:[#allocation9 + $0x38] sm:$0xff]
    %v4083 = vld [vmem:[#allocation9 + $0x40] sm:$0xff]
    %v4084 = vld [vmem:[#allocation9 + $0x48] sm:$0xff]
    %v4085 = vld [vmem:[#allocation9 + $0x50] sm:$0xff]
    %v4086 = vld [vmem:[#allocation9 + $0x58] sm:$0xff]
    %v4087 = vld [vmem:[#allocation9 + $0x60] sm:$0xff]
    %v4088 = vld [vmem:[#allocation9 + $0x68] sm:$0xff]
    %v4089 = vld [vmem:[#allocation9 + $0x70] sm:$0xff]
    %v4090 = vld [vmem:[#allocation9 + $0x78] sm:$0xff]
    %v4091 = vld [vmem:[#allocation9 + $0x80] sm:$0xff]
    %v4092 = vld [vmem:[#allocation9 + $0x88] sm:$0xff]
    %v4093 = vld [vmem:[#allocation9 + $0x90] sm:$0xff]
    %v4094 = vld [vmem:[#allocation9 + $0x98] sm:$0xff]
    %v4095 = vld [vmem:[#allocation9 + $0xa0] sm:$0xff]
    %v4096 = vld [vmem:[#allocation9 + $0xa8] sm:$0xff]
    %v4097 = vld [vmem:[#allocation9 + $0xb0] sm:$0xff]
    %v4098 = vld [vmem:[#allocation9 + $0xb8] sm:$0xff]
    %v4099 = vld [vmem:[#allocation9 + $0xc0] sm:$0xff]
    %v4100 = vld [vmem:[#allocation9 + $0xc8] sm:$0xff]
    %v4101 = vld [vmem:[#allocation9 + $0xd0] sm:$0xff]
    %v4102 = vld [vmem:[#allocation9 + $0xd8] sm:$0xff]
    %v4103 = vld [vmem:[#allocation9 + $0xe0] sm:$0xff]
    %v4104 = vld [vmem:[#allocation9 + $0xe8] sm:$0xff]
    %v4105 = vld [vmem:[#allocation9 + $0xf0] sm:$0xff]
    %v4106 = vld [vmem:[#allocation9 + $0xf8] sm:$0xff]
    %v4107 = vpack.c.bf16 %v3761, %v3761
    %v4140 = vunpack.c.l.b16 %v4075
    %v4141 = vunpack.c.h.b16 %v4075
    %v4142 = vunpack.c.l.b16 %v4076
    %v4143 = vunpack.c.h.b16 %v4076
    %v4144 = vunpack.c.l.b16 %v4077
    %v4145 = vunpack.c.h.b16 %v4077
    %v4146 = vunpack.c.l.b16 %v4078
    %v4147 = vunpack.c.h.b16 %v4078
    %v4148 = vunpack.c.l.b16 %v4079
    %v4149 = vunpack.c.h.b16 %v4079
    %v4150 = vunpack.c.l.b16 %v4080
    %v4151 = vunpack.c.h.b16 %v4080
    %v4152 = vunpack.c.l.b16 %v4081
    %v4153 = vunpack.c.h.b16 %v4081
    %v4154 = vunpack.c.l.b16 %v4082
    %v4155 = vunpack.c.h.b16 %v4082
    %v4156 = vunpack.c.l.b16 %v4083
    %v4157 = vunpack.c.h.b16 %v4083
    %v4158 = vunpack.c.l.b16 %v4084
    %v4159 = vunpack.c.h.b16 %v4084
    %v4160 = vunpack.c.l.b16 %v4085
    %v4161 = vunpack.c.h.b16 %v4085
    %v4162 = vunpack.c.l.b16 %v4086
    %v4163 = vunpack.c.h.b16 %v4086
    %v4164 = vunpack.c.l.b16 %v4087
    %v4165 = vunpack.c.h.b16 %v4087
    %v4166 = vunpack.c.l.b16 %v4088
    %v4167 = vunpack.c.h.b16 %v4088
    %v4168 = vunpack.c.l.b16 %v4089
    %v4169 = vunpack.c.h.b16 %v4089
    %v4170 = vunpack.c.l.b16 %v4090
    %v4171 = vunpack.c.h.b16 %v4090
    %v4172 = vunpack.c.l.b16 %v4091
    %v4173 = vunpack.c.h.b16 %v4091
    %v4174 = vunpack.c.l.b16 %v4092
    %v4175 = vunpack.c.h.b16 %v4092
    %v4176 = vunpack.c.l.b16 %v4093
    %v4177 = vunpack.c.h.b16 %v4093
    %v4178 = vunpack.c.l.b16 %v4094
    %v4179 = vunpack.c.h.b16 %v4094
    %v4180 = vunpack.c.l.b16 %v4095
    %v4181 = vunpack.c.h.b16 %v4095
    %v4182 = vunpack.c.l.b16 %v4096
    %v4183 = vunpack.c.h.b16 %v4096
    %v4184 = vunpack.c.l.b16 %v4097
    %v4185 = vunpack.c.h.b16 %v4097
    %v4186 = vunpack.c.l.b16 %v4098
    %v4187 = vunpack.c.h.b16 %v4098
    %v4188 = vunpack.c.l.b16 %v4099
    %v4189 = vunpack.c.h.b16 %v4099
    %v4190 = vunpack.c.l.b16 %v4100
    %v4191 = vunpack.c.h.b16 %v4100
    %v4192 = vunpack.c.l.b16 %v4101
    %v4193 = vunpack.c.h.b16 %v4101
    %v4194 = vunpack.c.l.b16 %v4102
    %v4195 = vunpack.c.h.b16 %v4102
    %v4196 = vunpack.c.l.b16 %v4103
    %v4197 = vunpack.c.h.b16 %v4103
    %v4198 = vunpack.c.l.b16 %v4104
    %v4199 = vunpack.c.h.b16 %v4104
    %v4200 = vunpack.c.l.b16 %v4105
    %v4201 = vunpack.c.h.b16 %v4105
    %v4202 = vunpack.c.l.b16 %v4106
    %v4203 = vunpack.c.h.b16 %v4106
    %v4204 = vpack.c.b16 %v4144, %v4140
    %v4205 = vpack.c.b16 %v4145, %v4141
    %v4206 = vpack.c.b16 %v4146, %v4142
    %v4207 = vpack.c.b16 %v4147, %v4143
    %v4208 = vpack.c.b16 %v4152, %v4148
    %v4209 = vpack.c.b16 %v4153, %v4149
    %v4210 = vpack.c.b16 %v4154, %v4150
    %v4211 = vpack.c.b16 %v4155, %v4151
    %v4212 = vpack.c.b16 %v4160, %v4156
    %v4213 = vpack.c.b16 %v4161, %v4157
    %v4214 = vpack.c.b16 %v4162, %v4158
    %v4215 = vpack.c.b16 %v4163, %v4159
    %v4216 = vpack.c.b16 %v4168, %v4164
    %v4217 = vpack.c.b16 %v4169, %v4165
    %v4218 = vpack.c.b16 %v4170, %v4166
    %v4219 = vpack.c.b16 %v4171, %v4167
    %v4220 = vpack.c.b16 %v4176, %v4172
    %v4221 = vpack.c.b16 %v4177, %v4173
    %v4222 = vpack.c.b16 %v4178, %v4174
    %v4223 = vpack.c.b16 %v4179, %v4175
    %v4224 = vpack.c.b16 %v4184, %v4180
    %v4225 = vpack.c.b16 %v4185, %v4181
    %v4226 = vpack.c.b16 %v4186, %v4182
    %v4227 = vpack.c.b16 %v4187, %v4183
    %v4228 = vpack.c.b16 %v4192, %v4188
    %v4229 = vpack.c.b16 %v4193, %v4189
    %v4230 = vpack.c.b16 %v4194, %v4190
    %v4231 = vpack.c.b16 %v4195, %v4191
    %v4232 = vpack.c.b16 %v4200, %v4196
    %v4233 = vpack.c.b16 %v4201, %v4197
    %v4234 = vpack.c.b16 %v4202, %v4198
    %v4235 = vpack.c.b16 %v4203, %v4199
    %4268 = vmatprep.subr.bf16.mxu0 %v4205
    %4269 = vmatpush1.bf16.msra.mxu0 %v4204
    %4270 = vmatprep.subr.bf16.mxu0 %v4209
    %4271 = vmatpush1.bf16.msra.mxu0 %v4208
    %4272 = vmatprep.subr.bf16.mxu0 %v4213
    %4273 = vmatpush1.bf16.msra.mxu0 %v4212
    %4274 = vmatprep.subr.bf16.mxu0 %v4217
    %4275 = vmatpush1.bf16.msra.mxu0 %v4216
    %4276 = vmatprep.subr.bf16.mxu0 %v4221
    %4277 = vmatpush1.bf16.msra.mxu0 %v4220
    %4278 = vmatprep.subr.bf16.mxu0 %v4225
    %4279 = vmatpush1.bf16.msra.mxu0 %v4224
    %4280 = vmatprep.subr.bf16.mxu0 %v4229
    %4281 = vmatpush1.bf16.msra.mxu0 %v4228
    %4282 = vmatprep.subr.bf16.mxu0 %v4233
    %4283 = vmatpush1.bf16.msra.mxu0 %v4232
    %4284 = vmatprep.subr.bf16.mxu0 0
    %4285 = vmatpush1.bf16.msra.mxu0 0
    %4286 = vmatprep.subr.bf16.mxu0 0
    %4287 = vmatpush1.bf16.msra.mxu0 0
    %4288 = vmatprep.subr.bf16.mxu0 0
    %4289 = vmatpush1.bf16.msra.mxu0 0
    %4290 = vmatprep.subr.bf16.mxu0 0
    %4291 = vmatpush1.bf16.msra.mxu0 0
    %4292 = vmatprep.subr.bf16.mxu0 0
    %4293 = vmatpush1.bf16.msra.mxu0 0
    %4294 = vmatprep.subr.bf16.mxu0 0
    %4295 = vmatpush1.bf16.msra.mxu0 0
    %4296 = vmatprep.subr.bf16.mxu0 0
    %4297 = vmatpush1.bf16.msra.mxu0 0
    %4298 = vmatprep.subr.bf16.mxu0 0
    %4299 = vmatpush1.bf16.msra.mxu0 0
    %4300 = vmatprep.mubr.bf16.mxu0 0
    %4301 = vmatmul.mubr.bf16.gmra.mrb[0].mxu0 %v4107
    %v4302 = vpop.f32.mrb[0].mxu0
    %v4303 = vadd.f32 0.0, %v4302
    %v4304 = vpop.f32.mrb[0].mxu0
    %v4305 = vadd.f32 0.0, %v4304
    %v4306 = vpop.f32.mrb[0].mxu0
    %v4307 = vpop.f32.mrb[0].mxu0
    %4308 = vdwg.mxu0
    %4309 = vmatprep.subr.bf16.mxu0 %v4207
    %4310 = vmatpush1.bf16.msra.mxu0 %v4206
    %4311 = vmatprep.subr.bf16.mxu0 %v4211
    %4312 = vmatpush1.bf16.msra.mxu0 %v4210
    %4313 = vmatprep.subr.bf16.mxu0 %v4215
    %4314 = vmatpush1.bf16.msra.mxu0 %v4214
    %4315 = vmatprep.subr.bf16.mxu0 %v4219
    %4316 = vmatpush1.bf16.msra.mxu0 %v4218
    %4317 = vmatprep.subr.bf16.mxu0 %v4223
    %4318 = vmatpush1.bf16.msra.mxu0 %v4222
    %4319 = vmatprep.subr.bf16.mxu0 %v4227
    %4320 = vmatpush1.bf16.msra.mxu0 %v4226
    %4321 = vmatprep.subr.bf16.mxu0 %v4231
    %4322 = vmatpush1.bf16.msra.mxu0 %v4230
    %4323 = vmatprep.subr.bf16.mxu0 %v4235
    %4324 = vmatpush1.bf16.msra.mxu0 %v4234
    %4325 = vmatprep.subr.bf16.mxu0 0
    %4326 = vmatpush1.bf16.msra.mxu0 0
    %4327 = vmatprep.subr.bf16.mxu0 0
    %4328 = vmatpush1.bf16.msra.mxu0 0
    %4329 = vmatprep.subr.bf16.mxu0 0
    %4330 = vmatpush1.bf16.msra.mxu0 0
    %4331 = vmatprep.subr.bf16.mxu0 0
    %4332 = vmatpush1.bf16.msra.mxu0 0
    %4333 = vmatprep.subr.bf16.mxu0 0
    %4334 = vmatpush1.bf16.msra.mxu0 0
    %4335 = vmatprep.subr.bf16.mxu0 0
    %4336 = vmatpush1.bf16.msra.mxu0 0
    %4337 = vmatprep.subr.bf16.mxu0 0
    %4338 = vmatpush1.bf16.msra.mxu0 0
    %4339 = vmatprep.subr.bf16.mxu0 0
    %4340 = vmatpush1.bf16.msra.mxu0 0
    %4341 = vmatprep.mubr.bf16.mxu0 0
    %4342 = vmatmul.mubr.bf16.gmra.mrb[0].mxu0 %v4107
    %v4343 = vpop.f32.mrb[0].mxu0
    %v4344 = vadd.f32 0.0, %v4343
    %v4345 = vpop.f32.mrb[0].mxu0
    %v4346 = vadd.f32 0.0, %v4345
    %v4347 = vpop.f32.mrb[0].mxu0
    %v4348 = vpop.f32.mrb[0].mxu0
    %4349 = vdwg.mxu0
    %v4350 = vadd.f32 %v4071, %v4303
    %v4351 = vadd.f32 %v4072, %v4305
    %v4352 = vadd.f32 %v4073, %v4344
    %v4353 = vadd.f32 %v4074, %v4346
    %v4354 = vxor.u32 %v4350, 2147483648
    %v4355 = vmul.f32 %v4354, 1.442695
    %v4356 = vpow.pop %v4355
    %v4357 = vadd.f32 %v4356, 1.0
    %v4358 = vrcp.pop %v4357
    %v4359 = vmul.f32 1.0, %v4358
    %v4360 = vxor.u32 %v4351, 2147483648
    %v4361 = vmul.f32 %v4360, 1.442695
    %v4362 = vpow.pop %v4361
    %v4363 = vadd.f32 %v4362, 1.0
    %v4364 = vrcp.pop %v4363
    %v4365 = vmul.f32 1.0, %v4364
    %v4366 = vtanh.pop %v4352
    %v4367 = vxor.u32 %v4353, 2147483648
    %v4368 = vmul.f32 %v4367, 1.442695
    %v4369 = vpow.pop %v4368
    %v4370 = vadd.f32 %v4369, 1.0
    %v4371 = vrcp.pop %v4370
    %v4372 = vmul.f32 1.0, %v4371
    %v4373 = vmul.f32 %v4365, %v3759
    %v4374 = vmul.f32 %v4359, %v4366
    %v4375 = vadd.f32 %v4373, %v4374
    %v4376 = vtanh.pop %v4375
    %v4377 = vmul.f32 %v4372, %v4376
    %4378 = vst [vmem:[%s2825] sm:$0xff] %v4377
    %v4379 = vld [vmem:[%s2201 + $0x20] sm:$0xff]
    %v4380 = vld [vmem:[%s2201 + $0x28] sm:$0xff]
    %v4381 = vld [vmem:[%s2201 + $0x30] sm:$0xff]
    %v4382 = vld [vmem:[%s2201 + $0x38] sm:$0xff]
    %v4383 = vld [vmem:[#allocation11] sm:$0xff]
    %v4384 = vld [vmem:[#allocation11 + $0x8] sm:$0xff]
    %v4385 = vld [vmem:[#allocation11 + $0x10] sm:$0xff]
    %v4386 = vld [vmem:[#allocation11 + $0x18] sm:$0xff]
    %v4387 = vld [vmem:[#allocation11 + $0x20] sm:$0xff]
    %v4388 = vld [vmem:[#allocation11 + $0x28] sm:$0xff]
    %v4389 = vld [vmem:[#allocation11 + $0x30] sm:$0xff]
    %v4390 = vld [vmem:[#allocation11 + $0x38] sm:$0xff]
    %v4391 = vld [vmem:[#allocation11 + $0x40] sm:$0xff]
    %v4392 = vld [vmem:[#allocation11 + $0x48] sm:$0xff]
    %v4393 = vld [vmem:[#allocation11 + $0x50] sm:$0xff]
    %v4394 = vld [vmem:[#allocation11 + $0x58] sm:$0xff]
    %v4395 = vld [vmem:[#allocation11 + $0x60] sm:$0xff]
    %v4396 = vld [vmem:[#allocation11 + $0x68] sm:$0xff]
    %v4397 = vld [vmem:[#allocation11 + $0x70] sm:$0xff]
    %v4398 = vld [vmem:[#allocation11 + $0x78] sm:$0xff]
    %v4399 = vld [vmem:[#allocation11 + $0x80] sm:$0xff]
    %v4400 = vld [vmem:[#allocation11 + $0x88] sm:$0xff]
    %v4401 = vld [vmem:[#allocation11 + $0x90] sm:$0xff]
    %v4402 = vld [vmem:[#allocation11 + $0x98] sm:$0xff]
    %v4403 = vld [vmem:[#allocation11 + $0xa0] sm:$0xff]
    %v4404 = vld [vmem:[#allocation11 + $0xa8] sm:$0xff]
    %v4405 = vld [vmem:[#allocation11 + $0xb0] sm:$0xff]
    %v4406 = vld [vmem:[#allocation11 + $0xb8] sm:$0xff]
    %v4407 = vld [vmem:[#allocation11 + $0xc0] sm:$0xff]
    %v4408 = vld [vmem:[#allocation11 + $0xc8] sm:$0xff]
    %v4409 = vld [vmem:[#allocation11 + $0xd0] sm:$0xff]
    %v4410 = vld [vmem:[#allocation11 + $0xd8] sm:$0xff]
    %v4411 = vld [vmem:[#allocation11 + $0xe0] sm:$0xff]
    %v4412 = vld [vmem:[#allocation11 + $0xe8] sm:$0xff]
    %v4413 = vld [vmem:[#allocation11 + $0xf0] sm:$0xff]
    %v4414 = vld [vmem:[#allocation11 + $0xf8] sm:$0xff]
    %v4415 = vpack.c.bf16 %v4069, %v4069
    %v4448 = vunpack.c.l.b16 %v4383
    %v4449 = vunpack.c.h.b16 %v4383
    %v4450 = vunpack.c.l.b16 %v4384
    %v4451 = vunpack.c.h.b16 %v4384
    %v4452 = vunpack.c.l.b16 %v4385
    %v4453 = vunpack.c.h.b16 %v4385
    %v4454 = vunpack.c.l.b16 %v4386
    %v4455 = vunpack.c.h.b16 %v4386
    %v4456 = vunpack.c.l.b16 %v4387
    %v4457 = vunpack.c.h.b16 %v4387
    %v4458 = vunpack.c.l.b16 %v4388
    %v4459 = vunpack.c.h.b16 %v4388
    %v4460 = vunpack.c.l.b16 %v4389
    %v4461 = vunpack.c.h.b16 %v4389
    %v4462 = vunpack.c.l.b16 %v4390
    %v4463 = vunpack.c.h.b16 %v4390
    %v4464 = vunpack.c.l.b16 %v4391
    %v4465 = vunpack.c.h.b16 %v4391
    %v4466 = vunpack.c.l.b16 %v4392
    %v4467 = vunpack.c.h.b16 %v4392
    %v4468 = vunpack.c.l.b16 %v4393
    %v4469 = vunpack.c.h.b16 %v4393
    %v4470 = vunpack.c.l.b16 %v4394
    %v4471 = vunpack.c.h.b16 %v4394
    %v4472 = vunpack.c.l.b16 %v4395
    %v4473 = vunpack.c.h.b16 %v4395
    %v4474 = vunpack.c.l.b16 %v4396
    %v4475 = vunpack.c.h.b16 %v4396
    %v4476 = vunpack.c.l.b16 %v4397
    %v4477 = vunpack.c.h.b16 %v4397
    %v4478 = vunpack.c.l.b16 %v4398
    %v4479 = vunpack.c.h.b16 %v4398
    %v4480 = vunpack.c.l.b16 %v4399
    %v4481 = vunpack.c.h.b16 %v4399
    %v4482 = vunpack.c.l.b16 %v4400
    %v4483 = vunpack.c.h.b16 %v4400
    %v4484 = vunpack.c.l.b16 %v4401
    %v4485 = vunpack.c.h.b16 %v4401
    %v4486 = vunpack.c.l.b16 %v4402
    %v4487 = vunpack.c.h.b16 %v4402
    %v4488 = vunpack.c.l.b16 %v4403
    %v4489 = vunpack.c.h.b16 %v4403
    %v4490 = vunpack.c.l.b16 %v4404
    %v4491 = vunpack.c.h.b16 %v4404
    %v4492 = vunpack.c.l.b16 %v4405
    %v4493 = vunpack.c.h.b16 %v4405
    %v4494 = vunpack.c.l.b16 %v4406
    %v4495 = vunpack.c.h.b16 %v4406
    %v4496 = vunpack.c.l.b16 %v4407
    %v4497 = vunpack.c.h.b16 %v4407
    %v4498 = vunpack.c.l.b16 %v4408
    %v4499 = vunpack.c.h.b16 %v4408
    %v4500 = vunpack.c.l.b16 %v4409
    %v4501 = vunpack.c.h.b16 %v4409
    %v4502 = vunpack.c.l.b16 %v4410
    %v4503 = vunpack.c.h.b16 %v4410
    %v4504 = vunpack.c.l.b16 %v4411
    %v4505 = vunpack.c.h.b16 %v4411
    %v4506 = vunpack.c.l.b16 %v4412
    %v4507 = vunpack.c.h.b16 %v4412
    %v4508 = vunpack.c.l.b16 %v4413
    %v4509 = vunpack.c.h.b16 %v4413
    %v4510 = vunpack.c.l.b16 %v4414
    %v4511 = vunpack.c.h.b16 %v4414
    %v4512 = vpack.c.b16 %v4452, %v4448
    %v4513 = vpack.c.b16 %v4453, %v4449
    %v4514 = vpack.c.b16 %v4454, %v4450
    %v4515 = vpack.c.b16 %v4455, %v4451
    %v4516 = vpack.c.b16 %v4460, %v4456
    %v4517 = vpack.c.b16 %v4461, %v4457
    %v4518 = vpack.c.b16 %v4462, %v4458
    %v4519 = vpack.c.b16 %v4463, %v4459
    %v4520 = vpack.c.b16 %v4468, %v4464
    %v4521 = vpack.c.b16 %v4469, %v4465
    %v4522 = vpack.c.b16 %v4470, %v4466
    %v4523 = vpack.c.b16 %v4471, %v4467
    %v4524 = vpack.c.b16 %v4476, %v4472
    %v4525 = vpack.c.b16 %v4477, %v4473
    %v4526 = vpack.c.b16 %v4478, %v4474
    %v4527 = vpack.c.b16 %v4479, %v4475
    %v4528 = vpack.c.b16 %v4484, %v4480
    %v4529 = vpack.c.b16 %v4485, %v4481
    %v4530 = vpack.c.b16 %v4486, %v4482
    %v4531 = vpack.c.b16 %v4487, %v4483
    %v4532 = vpack.c.b16 %v4492, %v4488
    %v4533 = vpack.c.b16 %v4493, %v4489
    %v4534 = vpack.c.b16 %v4494, %v4490
    %v4535 = vpack.c.b16 %v4495, %v4491
    %v4536 = vpack.c.b16 %v4500, %v4496
    %v4537 = vpack.c.b16 %v4501, %v4497
    %v4538 = vpack.c.b16 %v4502, %v4498
    %v4539 = vpack.c.b16 %v4503, %v4499
    %v4540 = vpack.c.b16 %v4508, %v4504
    %v4541 = vpack.c.b16 %v4509, %v4505
    %v4542 = vpack.c.b16 %v4510, %v4506
    %v4543 = vpack.c.b16 %v4511, %v4507
    %4576 = vmatprep.subr.bf16.mxu0 %v4513
    %4577 = vmatpush1.bf16.msra.mxu0 %v4512
    %4578 = vmatprep.subr.bf16.mxu0 %v4517
    %4579 = vmatpush1.bf16.msra.mxu0 %v4516
    %4580 = vmatprep.subr.bf16.mxu0 %v4521
    %4581 = vmatpush1.bf16.msra.mxu0 %v4520
    %4582 = vmatprep.subr.bf16.mxu0 %v4525
    %4583 = vmatpush1.bf16.msra.mxu0 %v4524
    %4584 = vmatprep.subr.bf16.mxu0 %v4529
    %4585 = vmatpush1.bf16.msra.mxu0 %v4528
    %4586 = vmatprep.subr.bf16.mxu0 %v4533
    %4587 = vmatpush1.bf16.msra.mxu0 %v4532
    %4588 = vmatprep.subr.bf16.mxu0 %v4537
    %4589 = vmatpush1.bf16.msra.mxu0 %v4536
    %4590 = vmatprep.subr.bf16.mxu0 %v4541
    %4591 = vmatpush1.bf16.msra.mxu0 %v4540
    %4592 = vmatprep.subr.bf16.mxu0 0
    %4593 = vmatpush1.bf16.msra.mxu0 0
    %4594 = vmatprep.subr.bf16.mxu0 0
    %4595 = vmatpush1.bf16.msra.mxu0 0
    %4596 = vmatprep.subr.bf16.mxu0 0
    %4597 = vmatpush1.bf16.msra.mxu0 0
    %4598 = vmatprep.subr.bf16.mxu0 0
    %4599 = vmatpush1.bf16.msra.mxu0 0
    %4600 = vmatprep.subr.bf16.mxu0 0
    %4601 = vmatpush1.bf16.msra.mxu0 0
    %4602 = vmatprep.subr.bf16.mxu0 0
    %4603 = vmatpush1.bf16.msra.mxu0 0
    %4604 = vmatprep.subr.bf16.mxu0 0
    %4605 = vmatpush1.bf16.msra.mxu0 0
    %4606 = vmatprep.subr.bf16.mxu0 0
    %4607 = vmatpush1.bf16.msra.mxu0 0
    %4608 = vmatprep.mubr.bf16.mxu0 0
    %4609 = vmatmul.mubr.bf16.gmra.mrb[0].mxu0 %v4415
    %v4610 = vpop.f32.mrb[0].mxu0
    %v4611 = vadd.f32 0.0, %v4610
    %v4612 = vpop.f32.mrb[0].mxu0
    %v4613 = vadd.f32 0.0, %v4612
    %v4614 = vpop.f32.mrb[0].mxu0
    %v4615 = vpop.f32.mrb[0].mxu0
    %4616 = vdwg.mxu0
    %4617 = vmatprep.subr.bf16.mxu0 %v4515
    %4618 = vmatpush1.bf16.msra.mxu0 %v4514
    %4619 = vmatprep.subr.bf16.mxu0 %v4519
    %4620 = vmatpush1.bf16.msra.mxu0 %v4518
    %4621 = vmatprep.subr.bf16.mxu0 %v4523
    %4622 = vmatpush1.bf16.msra.mxu0 %v4522
    %4623 = vmatprep.subr.bf16.mxu0 %v4527
    %4624 = vmatpush1.bf16.msra.mxu0 %v4526
    %4625 = vmatprep.subr.bf16.mxu0 %v4531
    %4626 = vmatpush1.bf16.msra.mxu0 %v4530
    %4627 = vmatprep.subr.bf16.mxu0 %v4535
    %4628 = vmatpush1.bf16.msra.mxu0 %v4534
    %4629 = vmatprep.subr.bf16.mxu0 %v4539
    %4630 = vmatpush1.bf16.msra.mxu0 %v4538
    %4631 = vmatprep.subr.bf16.mxu0 %v4543
    %4632 = vmatpush1.bf16.msra.mxu0 %v4542
    %4633 = vmatprep.subr.bf16.mxu0 0
    %4634 = vmatpush1.bf16.msra.mxu0 0
    %4635 = vmatprep.subr.bf16.mxu0 0
    %4636 = vmatpush1.bf16.msra.mxu0 0
    %4637 = vmatprep.subr.bf16.mxu0 0
    %4638 = vmatpush1.bf16.msra.mxu0 0
    %4639 = vmatprep.subr.bf16.mxu0 0
    %4640 = vmatpush1.bf16.msra.mxu0 0
    %4641 = vmatprep.subr.bf16.mxu0 0
    %4642 = vmatpush1.bf16.msra.mxu0 0
    %4643 = vmatprep.subr.bf16.mxu0 0
    %4644 = vmatpush1.bf16.msra.mxu0 0
    %4645 = vmatprep.subr.bf16.mxu0 0
    %4646 = vmatpush1.bf16.msra.mxu0 0
    %4647 = vmatprep.subr.bf16.mxu0 0
    %4648 = vmatpush1.bf16.msra.mxu0 0
    %4649 = vmatprep.mubr.bf16.mxu0 0
    %4650 = vmatmul.mubr.bf16.gmra.mrb[0].mxu0 %v4415
    %v4651 = vpop.f32.mrb[0].mxu0
    %v4652 = vadd.f32 0.0, %v4651
    %v4653 = vpop.f32.mrb[0].mxu0
    %v4654 = vadd.f32 0.0, %v4653
    %v4655 = vpop.f32.mrb[0].mxu0
    %v4656 = vpop.f32.mrb[0].mxu0
    %4657 = vdwg.mxu0
    %v4658 = vadd.f32 %v4379, %v4611
    %v4659 = vadd.f32 %v4380, %v4613
    %v4660 = vadd.f32 %v4381, %v4652
    %v4661 = vadd.f32 %v4382, %v4654
    %v4662 = vxor.u32 %v4658, 2147483648
    %v4663 = vmul.f32 %v4662, 1.442695
    %v4664 = vpow.pop %v4663
    %v4665 = vadd.f32 %v4664, 1.0
    %v4666 = vrcp.pop %v4665
    %v4667 = vmul.f32 1.0, %v4666
    %v4668 = vxor.u32 %v4659, 2147483648
    %v4669 = vmul.f32 %v4668, 1.442695
    %v4670 = vpow.pop %v4669
    %v4671 = vadd.f32 %v4670, 1.0
    %v4672 = vrcp.pop %v4671
    %v4673 = vmul.f32 1.0, %v4672
    %v4674 = vtanh.pop %v4660
    %v4675 = vxor.u32 %v4661, 2147483648
    %v4676 = vmul.f32 %v4675, 1.442695
    %v4677 = vpow.pop %v4676
    %v4678 = vadd.f32 %v4677, 1.0
    %v4679 = vrcp.pop %v4678
    %v4680 = vmul.f32 1.0, %v4679
    %v4681 = vmul.f32 %v4673, %v4067
    %v4682 = vmul.f32 %v4667, %v4674
    %v4683 = vadd.f32 %v4681, %v4682
    %v4684 = vtanh.pop %v4683
    %v4685 = vmul.f32 %v4680, %v4684
    %4686 = vst [vmem:[%s2511 + $0x8] sm:$0xff] %v4685
    %v4687 = vld [vmem:[%s1887] sm:$0xff]
    %v4688 = vld [vmem:[%s1887 + $0x8] sm:$0xff]
    %v4689 = vld [vmem:[%s1887 + $0x10] sm:$0xff]
    %v4690 = vld [vmem:[%s1887 + $0x18] sm:$0xff]
    %v4691 = vld [vmem:[#allocation9] sm:$0xff]
    %v4692 = vld [vmem:[#allocation9 + $0x8] sm:$0xff]
    %v4693 = vld [vmem:[#allocation9 + $0x10] sm:$0xff]
    %v4694 = vld [vmem:[#allocation9 + $0x18] sm:$0xff]
    %v4695 = vld [vmem:[#allocation9 + $0x20] sm:$0xff]
    %v4696 = vld [vmem:[#allocation9 + $0x28] sm:$0xff]
    %v4697 = vld [vmem:[#allocation9 + $0x30] sm:$0xff]
    %v4698 = vld [vmem:[#allocation9 + $0x38] sm:$0xff]
    %v4699 = vld [vmem:[#allocation9 + $0x40] sm:$0xff]
    %v4700 = vld [vmem:[#allocation9 + $0x48] sm:$0xff]
    %v4701 = vld [vmem:[#allocation9 + $0x50] sm:$0xff]
    %v4702 = vld [vmem:[#allocation9 + $0x58] sm:$0xff]
    %v4703 = vld [vmem:[#allocation9 + $0x60] sm:$0xff]
    %v4704 = vld [vmem:[#allocation9 + $0x68] sm:$0xff]
    %v4705 = vld [vmem:[#allocation9 + $0x70] sm:$0xff]
    %v4706 = vld [vmem:[#allocation9 + $0x78] sm:$0xff]
    %v4707 = vld [vmem:[#allocation9 + $0x80] sm:$0xff]
    %v4708 = vld [vmem:[#allocation9 + $0x88] sm:$0xff]
    %v4709 = vld [vmem:[#allocation9 + $0x90] sm:$0xff]
    %v4710 = vld [vmem:[#allocation9 + $0x98] sm:$0xff]
    %v4711 = vld [vmem:[#allocation9 + $0xa0] sm:$0xff]
    %v4712 = vld [vmem:[#allocation9 + $0xa8] sm:$0xff]
    %v4713 = vld [vmem:[#allocation9 + $0xb0] sm:$0xff]
    %v4714 = vld [vmem:[#allocation9 + $0xb8] sm:$0xff]
    %v4715 = vld [vmem:[#allocation9 + $0xc0] sm:$0xff]
    %v4716 = vld [vmem:[#allocation9 + $0xc8] sm:$0xff]
    %v4717 = vld [vmem:[#allocation9 + $0xd0] sm:$0xff]
    %v4718 = vld [vmem:[#allocation9 + $0xd8] sm:$0xff]
    %v4719 = vld [vmem:[#allocation9 + $0xe0] sm:$0xff]
    %v4720 = vld [vmem:[#allocation9 + $0xe8] sm:$0xff]
    %v4721 = vld [vmem:[#allocation9 + $0xf0] sm:$0xff]
    %v4722 = vld [vmem:[#allocation9 + $0xf8] sm:$0xff]
    %v4723 = vpack.c.bf16 %v4377, %v4377
    %v4756 = vunpack.c.l.b16 %v4691
    %v4757 = vunpack.c.h.b16 %v4691
    %v4758 = vunpack.c.l.b16 %v4692
    %v4759 = vunpack.c.h.b16 %v4692
    %v4760 = vunpack.c.l.b16 %v4693
    %v4761 = vunpack.c.h.b16 %v4693
    %v4762 = vunpack.c.l.b16 %v4694
    %v4763 = vunpack.c.h.b16 %v4694
    %v4764 = vunpack.c.l.b16 %v4695
    %v4765 = vunpack.c.h.b16 %v4695
    %v4766 = vunpack.c.l.b16 %v4696
    %v4767 = vunpack.c.h.b16 %v4696
    %v4768 = vunpack.c.l.b16 %v4697
    %v4769 = vunpack.c.h.b16 %v4697
    %v4770 = vunpack.c.l.b16 %v4698
    %v4771 = vunpack.c.h.b16 %v4698
    %v4772 = vunpack.c.l.b16 %v4699
    %v4773 = vunpack.c.h.b16 %v4699
    %v4774 = vunpack.c.l.b16 %v4700
    %v4775 = vunpack.c.h.b16 %v4700
    %v4776 = vunpack.c.l.b16 %v4701
    %v4777 = vunpack.c.h.b16 %v4701
    %v4778 = vunpack.c.l.b16 %v4702
    %v4779 = vunpack.c.h.b16 %v4702
    %v4780 = vunpack.c.l.b16 %v4703
    %v4781 = vunpack.c.h.b16 %v4703
    %v4782 = vunpack.c.l.b16 %v4704
    %v4783 = vunpack.c.h.b16 %v4704
    %v4784 = vunpack.c.l.b16 %v4705
    %v4785 = vunpack.c.h.b16 %v4705
    %v4786 = vunpack.c.l.b16 %v4706
    %v4787 = vunpack.c.h.b16 %v4706
    %v4788 = vunpack.c.l.b16 %v4707
    %v4789 = vunpack.c.h.b16 %v4707
    %v4790 = vunpack.c.l.b16 %v4708
    %v4791 = vunpack.c.h.b16 %v4708
    %v4792 = vunpack.c.l.b16 %v4709
    %v4793 = vunpack.c.h.b16 %v4709
    %v4794 = vunpack.c.l.b16 %v4710
    %v4795 = vunpack.c.h.b16 %v4710
    %v4796 = vunpack.c.l.b16 %v4711
    %v4797 = vunpack.c.h.b16 %v4711
    %v4798 = vunpack.c.l.b16 %v4712
    %v4799 = vunpack.c.h.b16 %v4712
    %v4800 = vunpack.c.l.b16 %v4713
    %v4801 = vunpack.c.h.b16 %v4713
    %v4802 = vunpack.c.l.b16 %v4714
    %v4803 = vunpack.c.h.b16 %v4714
    %v4804 = vunpack.c.l.b16 %v4715
    %v4805 = vunpack.c.h.b16 %v4715
    %v4806 = vunpack.c.l.b16 %v4716
    %v4807 = vunpack.c.h.b16 %v4716
    %v4808 = vunpack.c.l.b16 %v4717
    %v4809 = vunpack.c.h.b16 %v4717
    %v4810 = vunpack.c.l.b16 %v4718
    %v4811 = vunpack.c.h.b16 %v4718
    %v4812 = vunpack.c.l.b16 %v4719
    %v4813 = vunpack.c.h.b16 %v4719
    %v4814 = vunpack.c.l.b16 %v4720
    %v4815 = vunpack.c.h.b16 %v4720
    %v4816 = vunpack.c.l.b16 %v4721
    %v4817 = vunpack.c.h.b16 %v4721
    %v4818 = vunpack.c.l.b16 %v4722
    %v4819 = vunpack.c.h.b16 %v4722
    %v4820 = vpack.c.b16 %v4760, %v4756
    %v4821 = vpack.c.b16 %v4761, %v4757
    %v4822 = vpack.c.b16 %v4762, %v4758
    %v4823 = vpack.c.b16 %v4763, %v4759
    %v4824 = vpack.c.b16 %v4768, %v4764
    %v4825 = vpack.c.b16 %v4769, %v4765
    %v4826 = vpack.c.b16 %v4770, %v4766
    %v4827 = vpack.c.b16 %v4771, %v4767
    %v4828 = vpack.c.b16 %v4776, %v4772
    %v4829 = vpack.c.b16 %v4777, %v4773
    %v4830 = vpack.c.b16 %v4778, %v4774
    %v4831 = vpack.c.b16 %v4779, %v4775
    %v4832 = vpack.c.b16 %v4784, %v4780
    %v4833 = vpack.c.b16 %v4785, %v4781
    %v4834 = vpack.c.b16 %v4786, %v4782
    %v4835 = vpack.c.b16 %v4787, %v4783
    %v4836 = vpack.c.b16 %v4792, %v4788
    %v4837 = vpack.c.b16 %v4793, %v4789
    %v4838 = vpack.c.b16 %v4794, %v4790
    %v4839 = vpack.c.b16 %v4795, %v4791
    %v4840 = vpack.c.b16 %v4800, %v4796
    %v4841 = vpack.c.b16 %v4801, %v4797
    %v4842 = vpack.c.b16 %v4802, %v4798
    %v4843 = vpack.c.b16 %v4803, %v4799
    %v4844 = vpack.c.b16 %v4808, %v4804
    %v4845 = vpack.c.b16 %v4809, %v4805
    %v4846 = vpack.c.b16 %v4810, %v4806
    %v4847 = vpack.c.b16 %v4811, %v4807
    %v4848 = vpack.c.b16 %v4816, %v4812
    %v4849 = vpack.c.b16 %v4817, %v4813
    %v4850 = vpack.c.b16 %v4818, %v4814
    %v4851 = vpack.c.b16 %v4819, %v4815
    %4884 = vmatprep.subr.bf16.mxu0 %v4821
    %4885 = vmatpush1.bf16.msra.mxu0 %v4820
    %4886 = vmatprep.subr.bf16.mxu0 %v4825
    %4887 = vmatpush1.bf16.msra.mxu0 %v4824
    %4888 = vmatprep.subr.bf16.mxu0 %v4829
    %4889 = vmatpush1.bf16.msra.mxu0 %v4828
    %4890 = vmatprep.subr.bf16.mxu0 %v4833
    %4891 = vmatpush1.bf16.msra.mxu0 %v4832
    %4892 = vmatprep.subr.bf16.mxu0 %v4837
    %4893 = vmatpush1.bf16.msra.mxu0 %v4836
    %4894 = vmatprep.subr.bf16.mxu0 %v4841
    %4895 = vmatpush1.bf16.msra.mxu0 %v4840
    %4896 = vmatprep.subr.bf16.mxu0 %v4845
    %4897 = vmatpush1.bf16.msra.mxu0 %v4844
    %4898 = vmatprep.subr.bf16.mxu0 %v4849
    %4899 = vmatpush1.bf16.msra.mxu0 %v4848
    %4900 = vmatprep.subr.bf16.mxu0 0
    %4901 = vmatpush1.bf16.msra.mxu0 0
    %4902 = vmatprep.subr.bf16.mxu0 0
    %4903 = vmatpush1.bf16.msra.mxu0 0
    %4904 = vmatprep.subr.bf16.mxu0 0
    %4905 = vmatpush1.bf16.msra.mxu0 0
    %4906 = vmatprep.subr.bf16.mxu0 0
    %4907 = vmatpush1.bf16.msra.mxu0 0
    %4908 = vmatprep.subr.bf16.mxu0 0
    %4909 = vmatpush1.bf16.msra.mxu0 0
    %4910 = vmatprep.subr.bf16.mxu0 0
    %4911 = vmatpush1.bf16.msra.mxu0 0
    %4912 = vmatprep.subr.bf16.mxu0 0
    %4913 = vmatpush1.bf16.msra.mxu0 0
    %4914 = vmatprep.subr.bf16.mxu0 0
    %4915 = vmatpush1.bf16.msra.mxu0 0
    %4916 = vmatprep.mubr.bf16.mxu0 0
    %4917 = vmatmul.mubr.bf16.gmra.mrb[0].mxu0 %v4723
    %v4918 = vpop.f32.mrb[0].mxu0
    %v4919 = vadd.f32 0.0, %v4918
    %v4920 = vpop.f32.mrb[0].mxu0
    %v4921 = vadd.f32 0.0, %v4920
    %v4922 = vpop.f32.mrb[0].mxu0
    %v4923 = vpop.f32.mrb[0].mxu0
    %4924 = vdwg.mxu0
    %4925 = vmatprep.subr.bf16.mxu0 %v4823
    %4926 = vmatpush1.bf16.msra.mxu0 %v4822
    %4927 = vmatprep.subr.bf16.mxu0 %v4827
    %4928 = vmatpush1.bf16.msra.mxu0 %v4826
    %4929 = vmatprep.subr.bf16.mxu0 %v4831
    %4930 = vmatpush1.bf16.msra.mxu0 %v4830
    %4931 = vmatprep.subr.bf16.mxu0 %v4835
    %4932 = vmatpush1.bf16.msra.mxu0 %v4834
    %4933 = vmatprep.subr.bf16.mxu0 %v4839
    %4934 = vmatpush1.bf16.msra.mxu0 %v4838
    %4935 = vmatprep.subr.bf16.mxu0 %v4843
    %4936 = vmatpush1.bf16.msra.mxu0 %v4842
    %4937 = vmatprep.subr.bf16.mxu0 %v4847
    %4938 = vmatpush1.bf16.msra.mxu0 %v4846
    %4939 = vmatprep.subr.bf16.mxu0 %v4851
    %4940 = vmatpush1.bf16.msra.mxu0 %v4850
    %4941 = vmatprep.subr.bf16.mxu0 0
    %4942 = vmatpush1.bf16.msra.mxu0 0
    %4943 = vmatprep.subr.bf16.mxu0 0
    %4944 = vmatpush1.bf16.msra.mxu0 0
    %4945 = vmatprep.subr.bf16.mxu0 0
    %4946 = vmatpush1.bf16.msra.mxu0 0
    %4947 = vmatprep.subr.bf16.mxu0 0
    %4948 = vmatpush1.bf16.msra.mxu0 0
    %4949 = vmatprep.subr.bf16.mxu0 0
    %4950 = vmatpush1.bf16.msra.mxu0 0
    %4951 = vmatprep.subr.bf16.mxu0 0
    %4952 = vmatpush1.bf16.msra.mxu0 0
    %4953 = vmatprep.subr.bf16.mxu0 0
    %4954 = vmatpush1.bf16.msra.mxu0 0
    %4955 = vmatprep.subr.bf16.mxu0 0
    %4956 = vmatpush1.bf16.msra.mxu0 0
    %4957 = vmatprep.mubr.bf16.mxu0 0
    %4958 = vmatmul.mubr.bf16.gmra.mrb[0].mxu0 %v4723
    %v4959 = vpop.f32.mrb[0].mxu0
    %v4960 = vadd.f32 0.0, %v4959
    %v4961 = vpop.f32.mrb[0].mxu0
    %v4962 = vadd.f32 0.0, %v4961
    %v4963 = vpop.f32.mrb[0].mxu0
    %v4964 = vpop.f32.mrb[0].mxu0
    %4965 = vdwg.mxu0
    %v4966 = vadd.f32 %v4687, %v4919
    %v4967 = vadd.f32 %v4688, %v4921
    %v4968 = vadd.f32 %v4689, %v4960
    %v4969 = vadd.f32 %v4690, %v4962
    %v4970 = vxor.u32 %v4966, 2147483648
    %v4971 = vmul.f32 %v4970, 1.442695
    %v4972 = vpow.pop %v4971
    %v4973 = vadd.f32 %v4972, 1.0
    %v4974 = vrcp.pop %v4973
    %v4975 = vmul.f32 1.0, %v4974
    %v4976 = vxor.u32 %v4967, 2147483648
    %v4977 = vmul.f32 %v4976, 1.442695
    %v4978 = vpow.pop %v4977
    %v4979 = vadd.f32 %v4978, 1.0
    %v4980 = vrcp.pop %v4979
    %v4981 = vmul.f32 1.0, %v4980
    %v4982 = vtanh.pop %v4968
    %v4983 = vxor.u32 %v4969, 2147483648
    %v4984 = vmul.f32 %v4983, 1.442695
    %v4985 = vpow.pop %v4984
    %v4986 = vadd.f32 %v4985, 1.0
    %v4987 = vrcp.pop %v4986
    %v4988 = vmul.f32 1.0, %v4987
    %v4989 = vmul.f32 %v4981, %v4375
    %v4990 = vmul.f32 %v4975, %v4982
    %v4991 = vadd.f32 %v4989, %v4990
    %v4992 = vtanh.pop %v4991
    %v4993 = vmul.f32 %v4988, %v4992
    %4994 = vst [vmem:[%s2197] sm:$0xff] %v4993
    %v4995 = vld [vmem:[%s1573 + $0x20] sm:$0xff]
    %v4996 = vld [vmem:[%s1573 + $0x28] sm:$0xff]
    %v4997 = vld [vmem:[%s1573 + $0x30] sm:$0xff]
    %v4998 = vld [vmem:[%s1573 + $0x38] sm:$0xff]
    %v4999 = vld [vmem:[#allocation11] sm:$0xff]
    %v5000 = vld [vmem:[#allocation11 + $0x8] sm:$0xff]
    %v5001 = vld [vmem:[#allocation11 + $0x10] sm:$0xff]
    %v5002 = vld [vmem:[#allocation11 + $0x18] sm:$0xff]
    %v5003 = vld [vmem:[#allocation11 + $0x20] sm:$0xff]
    %v5004 = vld [vmem:[#allocation11 + $0x28] sm:$0xff]
    %v5005 = vld [vmem:[#allocation11 + $0x30] sm:$0xff]
    %v5006 = vld [vmem:[#allocation11 + $0x38] sm:$0xff]
    %v5007 = vld [vmem:[#allocation11 + $0x40] sm:$0xff]
    %v5008 = vld [vmem:[#allocation11 + $0x48] sm:$0xff]
    %v5009 = vld [vmem:[#allocation11 + $0x50] sm:$0xff]
    %v5010 = vld [vmem:[#allocation11 + $0x58] sm:$0xff]
    %v5011 = vld [vmem:[#allocation11 + $0x60] sm:$0xff]
    %v5012 = vld [vmem:[#allocation11 + $0x68] sm:$0xff]
    %v5013 = vld [vmem:[#allocation11 + $0x70] sm:$0xff]
    %v5014 = vld [vmem:[#allocation11 + $0x78] sm:$0xff]
    %v5015 = vld [vmem:[#allocation11 + $0x80] sm:$0xff]
    %v5016 = vld [vmem:[#allocation11 + $0x88] sm:$0xff]
    %v5017 = vld [vmem:[#allocation11 + $0x90] sm:$0xff]
    %v5018 = vld [vmem:[#allocation11 + $0x98] sm:$0xff]
    %v5019 = vld [vmem:[#allocation11 + $0xa0] sm:$0xff]
    %v5020 = vld [vmem:[#allocation11 + $0xa8] sm:$0xff]
    %v5021 = vld [vmem:[#allocation11 + $0xb0] sm:$0xff]
    %v5022 = vld [vmem:[#allocation11 + $0xb8] sm:$0xff]
    %v5023 = vld [vmem:[#allocation11 + $0xc0] sm:$0xff]
    %v5024 = vld [vmem:[#allocation11 + $0xc8] sm:$0xff]
    %v5025 = vld [vmem:[#allocation11 + $0xd0] sm:$0xff]
    %v5026 = vld [vmem:[#allocation11 + $0xd8] sm:$0xff]
    %v5027 = vld [vmem:[#allocation11 + $0xe0] sm:$0xff]
    %v5028 = vld [vmem:[#allocation11 + $0xe8] sm:$0xff]
    %v5029 = vld [vmem:[#allocation11 + $0xf0] sm:$0xff]
    %v5030 = vld [vmem:[#allocation11 + $0xf8] sm:$0xff]
    %v5031 = vpack.c.bf16 %v4685, %v4685
    %v5064 = vunpack.c.l.b16 %v4999
    %v5065 = vunpack.c.h.b16 %v4999
    %v5066 = vunpack.c.l.b16 %v5000
    %v5067 = vunpack.c.h.b16 %v5000
    %v5068 = vunpack.c.l.b16 %v5001
    %v5069 = vunpack.c.h.b16 %v5001
    %v5070 = vunpack.c.l.b16 %v5002
    %v5071 = vunpack.c.h.b16 %v5002
    %v5072 = vunpack.c.l.b16 %v5003
    %v5073 = vunpack.c.h.b16 %v5003
    %v5074 = vunpack.c.l.b16 %v5004
    %v5075 = vunpack.c.h.b16 %v5004
    %v5076 = vunpack.c.l.b16 %v5005
    %v5077 = vunpack.c.h.b16 %v5005
    %v5078 = vunpack.c.l.b16 %v5006
    %v5079 = vunpack.c.h.b16 %v5006
    %v5080 = vunpack.c.l.b16 %v5007
    %v5081 = vunpack.c.h.b16 %v5007
    %v5082 = vunpack.c.l.b16 %v5008
    %v5083 = vunpack.c.h.b16 %v5008
    %v5084 = vunpack.c.l.b16 %v5009
    %v5085 = vunpack.c.h.b16 %v5009
    %v5086 = vunpack.c.l.b16 %v5010
    %v5087 = vunpack.c.h.b16 %v5010
    %v5088 = vunpack.c.l.b16 %v5011
    %v5089 = vunpack.c.h.b16 %v5011
    %v5090 = vunpack.c.l.b16 %v5012
    %v5091 = vunpack.c.h.b16 %v5012
    %v5092 = vunpack.c.l.b16 %v5013
    %v5093 = vunpack.c.h.b16 %v5013
    %v5094 = vunpack.c.l.b16 %v5014
    %v5095 = vunpack.c.h.b16 %v5014
    %v5096 = vunpack.c.l.b16 %v5015
    %v5097 = vunpack.c.h.b16 %v5015
    %v5098 = vunpack.c.l.b16 %v5016
    %v5099 = vunpack.c.h.b16 %v5016
    %v5100 = vunpack.c.l.b16 %v5017
    %v5101 = vunpack.c.h.b16 %v5017
    %v5102 = vunpack.c.l.b16 %v5018
    %v5103 = vunpack.c.h.b16 %v5018
    %v5104 = vunpack.c.l.b16 %v5019
    %v5105 = vunpack.c.h.b16 %v5019
    %v5106 = vunpack.c.l.b16 %v5020
    %v5107 = vunpack.c.h.b16 %v5020
    %v5108 = vunpack.c.l.b16 %v5021
    %v5109 = vunpack.c.h.b16 %v5021
    %v5110 = vunpack.c.l.b16 %v5022
    %v5111 = vunpack.c.h.b16 %v5022
    %v5112 = vunpack.c.l.b16 %v5023
    %v5113 = vunpack.c.h.b16 %v5023
    %v5114 = vunpack.c.l.b16 %v5024
    %v5115 = vunpack.c.h.b16 %v5024
    %v5116 = vunpack.c.l.b16 %v5025
    %v5117 = vunpack.c.h.b16 %v5025
    %v5118 = vunpack.c.l.b16 %v5026
    %v5119 = vunpack.c.h.b16 %v5026
    %v5120 = vunpack.c.l.b16 %v5027
    %v5121 = vunpack.c.h.b16 %v5027
    %v5122 = vunpack.c.l.b16 %v5028
    %v5123 = vunpack.c.h.b16 %v5028
    %v5124 = vunpack.c.l.b16 %v5029
    %v5125 = vunpack.c.h.b16 %v5029
    %v5126 = vunpack.c.l.b16 %v5030
    %v5127 = vunpack.c.h.b16 %v5030
    %v5128 = vpack.c.b16 %v5068, %v5064
    %v5129 = vpack.c.b16 %v5069, %v5065
    %v5130 = vpack.c.b16 %v5070, %v5066
    %v5131 = vpack.c.b16 %v5071, %v5067
    %v5132 = vpack.c.b16 %v5076, %v5072
    %v5133 = vpack.c.b16 %v5077, %v5073
    %v5134 = vpack.c.b16 %v5078, %v5074
    %v5135 = vpack.c.b16 %v5079, %v5075
    %v5136 = vpack.c.b16 %v5084, %v5080
    %v5137 = vpack.c.b16 %v5085, %v5081
    %v5138 = vpack.c.b16 %v5086, %v5082
    %v5139 = vpack.c.b16 %v5087, %v5083
    %v5140 = vpack.c.b16 %v5092, %v5088
    %v5141 = vpack.c.b16 %v5093, %v5089
    %v5142 = vpack.c.b16 %v5094, %v5090
    %v5143 = vpack.c.b16 %v5095, %v5091
    %v5144 = vpack.c.b16 %v5100, %v5096
    %v5145 = vpack.c.b16 %v5101, %v5097
    %v5146 = vpack.c.b16 %v5102, %v5098
    %v5147 = vpack.c.b16 %v5103, %v5099
    %v5148 = vpack.c.b16 %v5108, %v5104
    %v5149 = vpack.c.b16 %v5109, %v5105
    %v5150 = vpack.c.b16 %v5110, %v5106
    %v5151 = vpack.c.b16 %v5111, %v5107
    %v5152 = vpack.c.b16 %v5116, %v5112
    %v5153 = vpack.c.b16 %v5117, %v5113
    %v5154 = vpack.c.b16 %v5118, %v5114
    %v5155 = vpack.c.b16 %v5119, %v5115
    %v5156 = vpack.c.b16 %v5124, %v5120
    %v5157 = vpack.c.b16 %v5125, %v5121
    %v5158 = vpack.c.b16 %v5126, %v5122
    %v5159 = vpack.c.b16 %v5127, %v5123
    %5192 = vmatprep.subr.bf16.mxu0 %v5129
    %5193 = vmatpush1.bf16.msra.mxu0 %v5128
    %5194 = vmatprep.subr.bf16.mxu0 %v5133
    %5195 = vmatpush1.bf16.msra.mxu0 %v5132
    %5196 = vmatprep.subr.bf16.mxu0 %v5137
    %5197 = vmatpush1.bf16.msra.mxu0 %v5136
    %5198 = vmatprep.subr.bf16.mxu0 %v5141
    %5199 = vmatpush1.bf16.msra.mxu0 %v5140
    %5200 = vmatprep.subr.bf16.mxu0 %v5145
    %5201 = vmatpush1.bf16.msra.mxu0 %v5144
    %5202 = vmatprep.subr.bf16.mxu0 %v5149
    %5203 = vmatpush1.bf16.msra.mxu0 %v5148
    %5204 = vmatprep.subr.bf16.mxu0 %v5153
    %5205 = vmatpush1.bf16.msra.mxu0 %v5152
    %5206 = vmatprep.subr.bf16.mxu0 %v5157
    %5207 = vmatpush1.bf16.msra.mxu0 %v5156
    %5208 = vmatprep.subr.bf16.mxu0 0
    %5209 = vmatpush1.bf16.msra.mxu0 0
    %5210 = vmatprep.subr.bf16.mxu0 0
    %5211 = vmatpush1.bf16.msra.mxu0 0
    %5212 = vmatprep.subr.bf16.mxu0 0
    %5213 = vmatpush1.bf16.msra.mxu0 0
    %5214 = vmatprep.subr.bf16.mxu0 0
    %5215 = vmatpush1.bf16.msra.mxu0 0
    %5216 = vmatprep.subr.bf16.mxu0 0
    %5217 = vmatpush1.bf16.msra.mxu0 0
    %5218 = vmatprep.subr.bf16.mxu0 0
    %5219 = vmatpush1.bf16.msra.mxu0 0
    %5220 = vmatprep.subr.bf16.mxu0 0
    %5221 = vmatpush1.bf16.msra.mxu0 0
    %5222 = vmatprep.subr.bf16.mxu0 0
    %5223 = vmatpush1.bf16.msra.mxu0 0
    %5224 = vmatprep.mubr.bf16.mxu0 0
    %5225 = vmatmul.mubr.bf16.gmra.mrb[0].mxu0 %v5031
    %v5226 = vpop.f32.mrb[0].mxu0
    %v5227 = vadd.f32 0.0, %v5226
    %v5228 = vpop.f32.mrb[0].mxu0
    %v5229 = vadd.f32 0.0, %v5228
    %v5230 = vpop.f32.mrb[0].mxu0
    %v5231 = vpop.f32.mrb[0].mxu0
    %5232 = vdwg.mxu0
    %5233 = vmatprep.subr.bf16.mxu0 %v5131
    %5234 = vmatpush1.bf16.msra.mxu0 %v5130
    %5235 = vmatprep.subr.bf16.mxu0 %v5135
    %5236 = vmatpush1.bf16.msra.mxu0 %v5134
    %5237 = vmatprep.subr.bf16.mxu0 %v5139
    %5238 = vmatpush1.bf16.msra.mxu0 %v5138
    %5239 = vmatprep.subr.bf16.mxu0 %v5143
    %5240 = vmatpush1.bf16.msra.mxu0 %v5142
    %5241 = vmatprep.subr.bf16.mxu0 %v5147
    %5242 = vmatpush1.bf16.msra.mxu0 %v5146
    %5243 = vmatprep.subr.bf16.mxu0 %v5151
    %5244 = vmatpush1.bf16.msra.mxu0 %v5150
    %5245 = vmatprep.subr.bf16.mxu0 %v5155
    %5246 = vmatpush1.bf16.msra.mxu0 %v5154
    %5247 = vmatprep.subr.bf16.mxu0 %v5159
    %5248 = vmatpush1.bf16.msra.mxu0 %v5158
    %5249 = vmatprep.subr.bf16.mxu0 0
    %5250 = vmatpush1.bf16.msra.mxu0 0
    %5251 = vmatprep.subr.bf16.mxu0 0
    %5252 = vmatpush1.bf16.msra.mxu0 0
    %5253 = vmatprep.subr.bf16.mxu0 0
    %5254 = vmatpush1.bf16.msra.mxu0 0
    %5255 = vmatprep.subr.bf16.mxu0 0
    %5256 = vmatpush1.bf16.msra.mxu0 0
    %5257 = vmatprep.subr.bf16.mxu0 0
    %5258 = vmatpush1.bf16.msra.mxu0 0
    %5259 = vmatprep.subr.bf16.mxu0 0
    %5260 = vmatpush1.bf16.msra.mxu0 0
    %5261 = vmatprep.subr.bf16.mxu0 0
    %5262 = vmatpush1.bf16.msra.mxu0 0
    %5263 = vmatprep.subr.bf16.mxu0 0
    %5264 = vmatpush1.bf16.msra.mxu0 0
    %5265 = vmatprep.mubr.bf16.mxu0 0
    %5266 = vmatmul.mubr.bf16.gmra.mrb[0].mxu0 %v5031
    %v5267 = vpop.f32.mrb[0].mxu0
    %v5268 = vadd.f32 0.0, %v5267
    %v5269 = vpop.f32.mrb[0].mxu0
    %v5270 = vadd.f32 0.0, %v5269
    %v5271 = vpop.f32.mrb[0].mxu0
    %v5272 = vpop.f32.mrb[0].mxu0
    %5273 = vdwg.mxu0
    %v5274 = vadd.f32 %v4995, %v5227
    %v5275 = vadd.f32 %v4996, %v5229
    %v5276 = vadd.f32 %v4997, %v5268
    %v5277 = vadd.f32 %v4998, %v5270
    %v5278 = vxor.u32 %v5274, 2147483648
    %v5279 = vmul.f32 %v5278, 1.442695
    %v5280 = vpow.pop %v5279
    %v5281 = vadd.f32 %v5280, 1.0
    %v5282 = vrcp.pop %v5281
    %v5283 = vmul.f32 1.0, %v5282
    %v5284 = vxor.u32 %v5275, 2147483648
    %v5285 = vmul.f32 %v5284, 1.442695
    %v5286 = vpow.pop %v5285
    %v5287 = vadd.f32 %v5286, 1.0
    %v5288 = vrcp.pop %v5287
    %v5289 = vmul.f32 1.0, %v5288
    %v5290 = vtanh.pop %v5276
    %v5291 = vxor.u32 %v5277, 2147483648
    %v5292 = vmul.f32 %v5291, 1.442695
    %v5293 = vpow.pop %v5292
    %v5294 = vadd.f32 %v5293, 1.0
    %v5295 = vrcp.pop %v5294
    %v5296 = vmul.f32 1.0, %v5295
    %v5297 = vmul.f32 %v5289, %v4683
    %v5298 = vmul.f32 %v5283, %v5290
    %v5299 = vadd.f32 %v5297, %v5298
    %v5300 = vtanh.pop %v5299
    %v5301 = vmul.f32 %v5296, %v5300
    %5302 = vst [vmem:[%s1883 + $0x8] sm:$0xff] %v5301
    %v5303 = vld [vmem:[%s1260] sm:$0xff]
    %v5304 = vld [vmem:[%s1260 + $0x8] sm:$0xff]
    %v5305 = vld [vmem:[%s1260 + $0x10] sm:$0xff]
    %v5306 = vld [vmem:[%s1260 + $0x18] sm:$0xff]
    %v5307 = vld [vmem:[#allocation9] sm:$0xff]
    %v5308 = vld [vmem:[#allocation9 + $0x8] sm:$0xff]
    %v5309 = vld [vmem:[#allocation9 + $0x10] sm:$0xff]
    %v5310 = vld [vmem:[#allocation9 + $0x18] sm:$0xff]
    %v5311 = vld [vmem:[#allocation9 + $0x20] sm:$0xff]
    %v5312 = vld [vmem:[#allocation9 + $0x28] sm:$0xff]
    %v5313 = vld [vmem:[#allocation9 + $0x30] sm:$0xff]
    %v5314 = vld [vmem:[#allocation9 + $0x38] sm:$0xff]
    %v5315 = vld [vmem:[#allocation9 + $0x40] sm:$0xff]
    %v5316 = vld [vmem:[#allocation9 + $0x48] sm:$0xff]
    %v5317 = vld [vmem:[#allocation9 + $0x50] sm:$0xff]
    %v5318 = vld [vmem:[#allocation9 + $0x58] sm:$0xff]
    %v5319 = vld [vmem:[#allocation9 + $0x60] sm:$0xff]
    %v5320 = vld [vmem:[#allocation9 + $0x68] sm:$0xff]
    %v5321 = vld [vmem:[#allocation9 + $0x70] sm:$0xff]
    %v5322 = vld [vmem:[#allocation9 + $0x78] sm:$0xff]
    %v5323 = vld [vmem:[#allocation9 + $0x80] sm:$0xff]
    %v5324 = vld [vmem:[#allocation9 + $0x88] sm:$0xff]
    %v5325 = vld [vmem:[#allocation9 + $0x90] sm:$0xff]
    %v5326 = vld [vmem:[#allocation9 + $0x98] sm:$0xff]
    %v5327 = vld [vmem:[#allocation9 + $0xa0] sm:$0xff]
    %v5328 = vld [vmem:[#allocation9 + $0xa8] sm:$0xff]
    %v5329 = vld [vmem:[#allocation9 + $0xb0] sm:$0xff]
    %v5330 = vld [vmem:[#allocation9 + $0xb8] sm:$0xff]
    %v5331 = vld [vmem:[#allocation9 + $0xc0] sm:$0xff]
    %v5332 = vld [vmem:[#allocation9 + $0xc8] sm:$0xff]
    %v5333 = vld [vmem:[#allocation9 + $0xd0] sm:$0xff]
    %v5334 = vld [vmem:[#allocation9 + $0xd8] sm:$0xff]
    %v5335 = vld [vmem:[#allocation9 + $0xe0] sm:$0xff]
    %v5336 = vld [vmem:[#allocation9 + $0xe8] sm:$0xff]
    %v5337 = vld [vmem:[#allocation9 + $0xf0] sm:$0xff]
    %v5338 = vld [vmem:[#allocation9 + $0xf8] sm:$0xff]
    %v5339 = vpack.c.bf16 %v4993, %v4993
    %v5372 = vunpack.c.l.b16 %v5307
    %v5373 = vunpack.c.h.b16 %v5307
    %v5374 = vunpack.c.l.b16 %v5308
    %v5375 = vunpack.c.h.b16 %v5308
    %v5376 = vunpack.c.l.b16 %v5309
    %v5377 = vunpack.c.h.b16 %v5309
    %v5378 = vunpack.c.l.b16 %v5310
    %v5379 = vunpack.c.h.b16 %v5310
    %v5380 = vunpack.c.l.b16 %v5311
    %v5381 = vunpack.c.h.b16 %v5311
    %v5382 = vunpack.c.l.b16 %v5312
    %v5383 = vunpack.c.h.b16 %v5312
    %v5384 = vunpack.c.l.b16 %v5313
    %v5385 = vunpack.c.h.b16 %v5313
    %v5386 = vunpack.c.l.b16 %v5314
    %v5387 = vunpack.c.h.b16 %v5314
    %v5388 = vunpack.c.l.b16 %v5315
    %v5389 = vunpack.c.h.b16 %v5315
    %v5390 = vunpack.c.l.b16 %v5316
    %v5391 = vunpack.c.h.b16 %v5316
    %v5392 = vunpack.c.l.b16 %v5317
    %v5393 = vunpack.c.h.b16 %v5317
    %v5394 = vunpack.c.l.b16 %v5318
    %v5395 = vunpack.c.h.b16 %v5318
    %v5396 = vunpack.c.l.b16 %v5319
    %v5397 = vunpack.c.h.b16 %v5319
    %v5398 = vunpack.c.l.b16 %v5320
    %v5399 = vunpack.c.h.b16 %v5320
    %v5400 = vunpack.c.l.b16 %v5321
    %v5401 = vunpack.c.h.b16 %v5321
    %v5402 = vunpack.c.l.b16 %v5322
    %v5403 = vunpack.c.h.b16 %v5322
    %v5404 = vunpack.c.l.b16 %v5323
    %v5405 = vunpack.c.h.b16 %v5323
    %v5406 = vunpack.c.l.b16 %v5324
    %v5407 = vunpack.c.h.b16 %v5324
    %v5408 = vunpack.c.l.b16 %v5325
    %v5409 = vunpack.c.h.b16 %v5325
    %v5410 = vunpack.c.l.b16 %v5326
    %v5411 = vunpack.c.h.b16 %v5326
    %v5412 = vunpack.c.l.b16 %v5327
    %v5413 = vunpack.c.h.b16 %v5327
    %v5414 = vunpack.c.l.b16 %v5328
    %v5415 = vunpack.c.h.b16 %v5328
    %v5416 = vunpack.c.l.b16 %v5329
    %v5417 = vunpack.c.h.b16 %v5329
    %v5418 = vunpack.c.l.b16 %v5330
    %v5419 = vunpack.c.h.b16 %v5330
    %v5420 = vunpack.c.l.b16 %v5331
    %v5421 = vunpack.c.h.b16 %v5331
    %v5422 = vunpack.c.l.b16 %v5332
    %v5423 = vunpack.c.h.b16 %v5332
    %v5424 = vunpack.c.l.b16 %v5333
    %v5425 = vunpack.c.h.b16 %v5333
    %v5426 = vunpack.c.l.b16 %v5334
    %v5427 = vunpack.c.h.b16 %v5334
    %v5428 = vunpack.c.l.b16 %v5335
    %v5429 = vunpack.c.h.b16 %v5335
    %v5430 = vunpack.c.l.b16 %v5336
    %v5431 = vunpack.c.h.b16 %v5336
    %v5432 = vunpack.c.l.b16 %v5337
    %v5433 = vunpack.c.h.b16 %v5337
    %v5434 = vunpack.c.l.b16 %v5338
    %v5435 = vunpack.c.h.b16 %v5338
    %v5436 = vpack.c.b16 %v5376, %v5372
    %v5437 = vpack.c.b16 %v5377, %v5373
    %v5438 = vpack.c.b16 %v5378, %v5374
    %v5439 = vpack.c.b16 %v5379, %v5375
    %v5440 = vpack.c.b16 %v5384, %v5380
    %v5441 = vpack.c.b16 %v5385, %v5381
    %v5442 = vpack.c.b16 %v5386, %v5382
    %v5443 = vpack.c.b16 %v5387, %v5383
    %v5444 = vpack.c.b16 %v5392, %v5388
    %v5445 = vpack.c.b16 %v5393, %v5389
    %v5446 = vpack.c.b16 %v5394, %v5390
    %v5447 = vpack.c.b16 %v5395, %v5391
    %v5448 = vpack.c.b16 %v5400, %v5396
    %v5449 = vpack.c.b16 %v5401, %v5397
    %v5450 = vpack.c.b16 %v5402, %v5398
    %v5451 = vpack.c.b16 %v5403, %v5399
    %v5452 = vpack.c.b16 %v5408, %v5404
    %v5453 = vpack.c.b16 %v5409, %v5405
    %v5454 = vpack.c.b16 %v5410, %v5406
    %v5455 = vpack.c.b16 %v5411, %v5407
    %v5456 = vpack.c.b16 %v5416, %v5412
    %v5457 = vpack.c.b16 %v5417, %v5413
    %v5458 = vpack.c.b16 %v5418, %v5414
    %v5459 = vpack.c.b16 %v5419, %v5415
    %v5460 = vpack.c.b16 %v5424, %v5420
    %v5461 = vpack.c.b16 %v5425, %v5421
    %v5462 = vpack.c.b16 %v5426, %v5422
    %v5463 = vpack.c.b16 %v5427, %v5423
    %v5464 = vpack.c.b16 %v5432, %v5428
    %v5465 = vpack.c.b16 %v5433, %v5429
    %v5466 = vpack.c.b16 %v5434, %v5430
    %v5467 = vpack.c.b16 %v5435, %v5431
    %5500 = vmatprep.subr.bf16.mxu0 %v5437
    %5501 = vmatpush1.bf16.msra.mxu0 %v5436
    %5502 = vmatprep.subr.bf16.mxu0 %v5441
    %5503 = vmatpush1.bf16.msra.mxu0 %v5440
    %5504 = vmatprep.subr.bf16.mxu0 %v5445
    %5505 = vmatpush1.bf16.msra.mxu0 %v5444
    %5506 = vmatprep.subr.bf16.mxu0 %v5449
    %5507 = vmatpush1.bf16.msra.mxu0 %v5448
    %5508 = vmatprep.subr.bf16.mxu0 %v5453
    %5509 = vmatpush1.bf16.msra.mxu0 %v5452
    %5510 = vmatprep.subr.bf16.mxu0 %v5457
    %5511 = vmatpush1.bf16.msra.mxu0 %v5456
    %5512 = vmatprep.subr.bf16.mxu0 %v5461
    %5513 = vmatpush1.bf16.msra.mxu0 %v5460
    %5514 = vmatprep.subr.bf16.mxu0 %v5465
    %5515 = vmatpush1.bf16.msra.mxu0 %v5464
    %5516 = vmatprep.subr.bf16.mxu0 0
    %5517 = vmatpush1.bf16.msra.mxu0 0
    %5518 = vmatprep.subr.bf16.mxu0 0
    %5519 = vmatpush1.bf16.msra.mxu0 0
    %5520 = vmatprep.subr.bf16.mxu0 0
    %5521 = vmatpush1.bf16.msra.mxu0 0
    %5522 = vmatprep.subr.bf16.mxu0 0
    %5523 = vmatpush1.bf16.msra.mxu0 0
    %5524 = vmatprep.subr.bf16.mxu0 0
    %5525 = vmatpush1.bf16.msra.mxu0 0
    %5526 = vmatprep.subr.bf16.mxu0 0
    %5527 = vmatpush1.bf16.msra.mxu0 0
    %5528 = vmatprep.subr.bf16.mxu0 0
    %5529 = vmatpush1.bf16.msra.mxu0 0
    %5530 = vmatprep.subr.bf16.mxu0 0
    %5531 = vmatpush1.bf16.msra.mxu0 0
    %5532 = vmatprep.mubr.bf16.mxu0 0
    %5533 = vmatmul.mubr.bf16.gmra.mrb[0].mxu0 %v5339
    %v5534 = vpop.f32.mrb[0].mxu0
    %v5535 = vadd.f32 0.0, %v5534
    %v5536 = vpop.f32.mrb[0].mxu0
    %v5537 = vadd.f32 0.0, %v5536
    %v5538 = vpop.f32.mrb[0].mxu0
    %v5539 = vpop.f32.mrb[0].mxu0
    %5540 = vdwg.mxu0
    %5541 = vmatprep.subr.bf16.mxu0 %v5439
    %5542 = vmatpush1.bf16.msra.mxu0 %v5438
    %5543 = vmatprep.subr.bf16.mxu0 %v5443
    %5544 = vmatpush1.bf16.msra.mxu0 %v5442
    %5545 = vmatprep.subr.bf16.mxu0 %v5447
    %5546 = vmatpush1.bf16.msra.mxu0 %v5446
    %5547 = vmatprep.subr.bf16.mxu0 %v5451
    %5548 = vmatpush1.bf16.msra.mxu0 %v5450
    %5549 = vmatprep.subr.bf16.mxu0 %v5455
    %5550 = vmatpush1.bf16.msra.mxu0 %v5454
    %5551 = vmatprep.subr.bf16.mxu0 %v5459
    %5552 = vmatpush1.bf16.msra.mxu0 %v5458
    %5553 = vmatprep.subr.bf16.mxu0 %v5463
    %5554 = vmatpush1.bf16.msra.mxu0 %v5462
    %5555 = vmatprep.subr.bf16.mxu0 %v5467
    %5556 = vmatpush1.bf16.msra.mxu0 %v5466
    %5557 = vmatprep.subr.bf16.mxu0 0
    %5558 = vmatpush1.bf16.msra.mxu0 0
    %5559 = vmatprep.subr.bf16.mxu0 0
    %5560 = vmatpush1.bf16.msra.mxu0 0
    %5561 = vmatprep.subr.bf16.mxu0 0
    %5562 = vmatpush1.bf16.msra.mxu0 0
    %5563 = vmatprep.subr.bf16.mxu0 0
    %5564 = vmatpush1.bf16.msra.mxu0 0
    %5565 = vmatprep.subr.bf16.mxu0 0
    %5566 = vmatpush1.bf16.msra.mxu0 0
    %5567 = vmatprep.subr.bf16.mxu0 0
    %5568 = vmatpush1.bf16.msra.mxu0 0
    %5569 = vmatprep.subr.bf16.mxu0 0
    %5570 = vmatpush1.bf16.msra.mxu0 0
    %5571 = vmatprep.subr.bf16.mxu0 0
    %5572 = vmatpush1.bf16.msra.mxu0 0
    %5573 = vmatprep.mubr.bf16.mxu0 0
    %5574 = vmatmul.mubr.bf16.gmra.mrb[0].mxu0 %v5339
    %v5575 = vpop.f32.mrb[0].mxu0
    %v5576 = vadd.f32 0.0, %v5575
    %v5577 = vpop.f32.mrb[0].mxu0
    %v5578 = vadd.f32 0.0, %v5577
    %v5579 = vpop.f32.mrb[0].mxu0
    %v5580 = vpop.f32.mrb[0].mxu0
    %5581 = vdwg.mxu0
    %v5582 = vadd.f32 %v5303, %v5535
    %v5583 = vadd.f32 %v5304, %v5537
    %v5584 = vadd.f32 %v5305, %v5576
    %v5585 = vadd.f32 %v5306, %v5578
    %v5586 = vxor.u32 %v5582, 2147483648
    %v5587 = vmul.f32 %v5586, 1.442695
    %v5588 = vpow.pop %v5587
    %v5589 = vadd.f32 %v5588, 1.0
    %v5590 = vrcp.pop %v5589
    %v5591 = vmul.f32 1.0, %v5590
    %v5592 = vxor.u32 %v5583, 2147483648
    %v5593 = vmul.f32 %v5592, 1.442695
    %v5594 = vpow.pop %v5593
    %v5595 = vadd.f32 %v5594, 1.0
    %v5596 = vrcp.pop %v5595
    %v5597 = vmul.f32 1.0, %v5596
    %v5598 = vtanh.pop %v5584
    %v5599 = vxor.u32 %v5585, 2147483648
    %v5600 = vmul.f32 %v5599, 1.442695
    %v5601 = vpow.pop %v5600
    %v5602 = vadd.f32 %v5601, 1.0
    %v5603 = vrcp.pop %v5602
    %v5604 = vmul.f32 1.0, %v5603
    %v5605 = vmul.f32 %v5597, %v4991
    %v5606 = vmul.f32 %v5591, %v5598
    %v5607 = vadd.f32 %v5605, %v5606
    %v5608 = vtanh.pop %v5607
    %v5609 = vmul.f32 %v5604, %v5608
    %5610 = vst [vmem:[%s1569] sm:$0xff] %v5609
    %v5611 = vld [vmem:[%s947 + $0x20] sm:$0xff]
    %v5612 = vld [vmem:[%s947 + $0x28] sm:$0xff]
    %v5613 = vld [vmem:[%s947 + $0x30] sm:$0xff]
    %v5614 = vld [vmem:[%s947 + $0x38] sm:$0xff]
    %v5615 = vld [vmem:[#allocation11] sm:$0xff]
    %v5616 = vld [vmem:[#allocation11 + $0x8] sm:$0xff]
    %v5617 = vld [vmem:[#allocation11 + $0x10] sm:$0xff]
    %v5618 = vld [vmem:[#allocation11 + $0x18] sm:$0xff]
    %v5619 = vld [vmem:[#allocation11 + $0x20] sm:$0xff]
    %v5620 = vld [vmem:[#allocation11 + $0x28] sm:$0xff]
    %v5621 = vld [vmem:[#allocation11 + $0x30] sm:$0xff]
    %v5622 = vld [vmem:[#allocation11 + $0x38] sm:$0xff]
    %v5623 = vld [vmem:[#allocation11 + $0x40] sm:$0xff]
    %v5624 = vld [vmem:[#allocation11 + $0x48] sm:$0xff]
    %v5625 = vld [vmem:[#allocation11 + $0x50] sm:$0xff]
    %v5626 = vld [vmem:[#allocation11 + $0x58] sm:$0xff]
    %v5627 = vld [vmem:[#allocation11 + $0x60] sm:$0xff]
    %v5628 = vld [vmem:[#allocation11 + $0x68] sm:$0xff]
    %v5629 = vld [vmem:[#allocation11 + $0x70] sm:$0xff]
    %v5630 = vld [vmem:[#allocation11 + $0x78] sm:$0xff]
    %v5631 = vld [vmem:[#allocation11 + $0x80] sm:$0xff]
    %v5632 = vld [vmem:[#allocation11 + $0x88] sm:$0xff]
    %v5633 = vld [vmem:[#allocation11 + $0x90] sm:$0xff]
    %v5634 = vld [vmem:[#allocation11 + $0x98] sm:$0xff]
    %v5635 = vld [vmem:[#allocation11 + $0xa0] sm:$0xff]
    %v5636 = vld [vmem:[#allocation11 + $0xa8] sm:$0xff]
    %v5637 = vld [vmem:[#allocation11 + $0xb0] sm:$0xff]
    %v5638 = vld [vmem:[#allocation11 + $0xb8] sm:$0xff]
    %v5639 = vld [vmem:[#allocation11 + $0xc0] sm:$0xff]
    %v5640 = vld [vmem:[#allocation11 + $0xc8] sm:$0xff]
    %v5641 = vld [vmem:[#allocation11 + $0xd0] sm:$0xff]
    %v5642 = vld [vmem:[#allocation11 + $0xd8] sm:$0xff]
    %v5643 = vld [vmem:[#allocation11 + $0xe0] sm:$0xff]
    %v5644 = vld [vmem:[#allocation11 + $0xe8] sm:$0xff]
    %v5645 = vld [vmem:[#allocation11 + $0xf0] sm:$0xff]
    %v5646 = vld [vmem:[#allocation11 + $0xf8] sm:$0xff]
    %v5647 = vpack.c.bf16 %v5301, %v5301
    %v5680 = vunpack.c.l.b16 %v5615
    %v5681 = vunpack.c.h.b16 %v5615
    %v5682 = vunpack.c.l.b16 %v5616
    %v5683 = vunpack.c.h.b16 %v5616
    %v5684 = vunpack.c.l.b16 %v5617
    %v5685 = vunpack.c.h.b16 %v5617
    %v5686 = vunpack.c.l.b16 %v5618
    %v5687 = vunpack.c.h.b16 %v5618
    %v5688 = vunpack.c.l.b16 %v5619
    %v5689 = vunpack.c.h.b16 %v5619
    %v5690 = vunpack.c.l.b16 %v5620
    %v5691 = vunpack.c.h.b16 %v5620
    %v5692 = vunpack.c.l.b16 %v5621
    %v5693 = vunpack.c.h.b16 %v5621
    %v5694 = vunpack.c.l.b16 %v5622
    %v5695 = vunpack.c.h.b16 %v5622
    %v5696 = vunpack.c.l.b16 %v5623
    %v5697 = vunpack.c.h.b16 %v5623
    %v5698 = vunpack.c.l.b16 %v5624
    %v5699 = vunpack.c.h.b16 %v5624
    %v5700 = vunpack.c.l.b16 %v5625
    %v5701 = vunpack.c.h.b16 %v5625
    %v5702 = vunpack.c.l.b16 %v5626
    %v5703 = vunpack.c.h.b16 %v5626
    %v5704 = vunpack.c.l.b16 %v5627
    %v5705 = vunpack.c.h.b16 %v5627
    %v5706 = vunpack.c.l.b16 %v5628
    %v5707 = vunpack.c.h.b16 %v5628
    %v5708 = vunpack.c.l.b16 %v5629
    %v5709 = vunpack.c.h.b16 %v5629
    %v5710 = vunpack.c.l.b16 %v5630
    %v5711 = vunpack.c.h.b16 %v5630
    %v5712 = vunpack.c.l.b16 %v5631
    %v5713 = vunpack.c.h.b16 %v5631
    %v5714 = vunpack.c.l.b16 %v5632
    %v5715 = vunpack.c.h.b16 %v5632
    %v5716 = vunpack.c.l.b16 %v5633
    %v5717 = vunpack.c.h.b16 %v5633
    %v5718 = vunpack.c.l.b16 %v5634
    %v5719 = vunpack.c.h.b16 %v5634
    %v5720 = vunpack.c.l.b16 %v5635
    %v5721 = vunpack.c.h.b16 %v5635
    %v5722 = vunpack.c.l.b16 %v5636
    %v5723 = vunpack.c.h.b16 %v5636
    %v5724 = vunpack.c.l.b16 %v5637
    %v5725 = vunpack.c.h.b16 %v5637
    %v5726 = vunpack.c.l.b16 %v5638
    %v5727 = vunpack.c.h.b16 %v5638
    %v5728 = vunpack.c.l.b16 %v5639
    %v5729 = vunpack.c.h.b16 %v5639
    %v5730 = vunpack.c.l.b16 %v5640
    %v5731 = vunpack.c.h.b16 %v5640
    %v5732 = vunpack.c.l.b16 %v5641
    %v5733 = vunpack.c.h.b16 %v5641
    %v5734 = vunpack.c.l.b16 %v5642
    %v5735 = vunpack.c.h.b16 %v5642
    %v5736 = vunpack.c.l.b16 %v5643
    %v5737 = vunpack.c.h.b16 %v5643
    %v5738 = vunpack.c.l.b16 %v5644
    %v5739 = vunpack.c.h.b16 %v5644
    %v5740 = vunpack.c.l.b16 %v5645
    %v5741 = vunpack.c.h.b16 %v5645
    %v5742 = vunpack.c.l.b16 %v5646
    %v5743 = vunpack.c.h.b16 %v5646
    %v5744 = vpack.c.b16 %v5684, %v5680
    %v5745 = vpack.c.b16 %v5685, %v5681
    %v5746 = vpack.c.b16 %v5686, %v5682
    %v5747 = vpack.c.b16 %v5687, %v5683
    %v5748 = vpack.c.b16 %v5692, %v5688
    %v5749 = vpack.c.b16 %v5693, %v5689
    %v5750 = vpack.c.b16 %v5694, %v5690
    %v5751 = vpack.c.b16 %v5695, %v5691
    %v5752 = vpack.c.b16 %v5700, %v5696
    %v5753 = vpack.c.b16 %v5701, %v5697
    %v5754 = vpack.c.b16 %v5702, %v5698
    %v5755 = vpack.c.b16 %v5703, %v5699
    %v5756 = vpack.c.b16 %v5708, %v5704
    %v5757 = vpack.c.b16 %v5709, %v5705
    %v5758 = vpack.c.b16 %v5710, %v5706
    %v5759 = vpack.c.b16 %v5711, %v5707
    %v5760 = vpack.c.b16 %v5716, %v5712
    %v5761 = vpack.c.b16 %v5717, %v5713
    %v5762 = vpack.c.b16 %v5718, %v5714
    %v5763 = vpack.c.b16 %v5719, %v5715
    %v5764 = vpack.c.b16 %v5724, %v5720
    %v5765 = vpack.c.b16 %v5725, %v5721
    %v5766 = vpack.c.b16 %v5726, %v5722
    %v5767 = vpack.c.b16 %v5727, %v5723
    %v5768 = vpack.c.b16 %v5732, %v5728
    %v5769 = vpack.c.b16 %v5733, %v5729
    %v5770 = vpack.c.b16 %v5734, %v5730
    %v5771 = vpack.c.b16 %v5735, %v5731
    %v5772 = vpack.c.b16 %v5740, %v5736
    %v5773 = vpack.c.b16 %v5741, %v5737
    %v5774 = vpack.c.b16 %v5742, %v5738
    %v5775 = vpack.c.b16 %v5743, %v5739
    %5808 = vmatprep.subr.bf16.mxu0 %v5745
    %5809 = vmatpush1.bf16.msra.mxu0 %v5744
    %5810 = vmatprep.subr.bf16.mxu0 %v5749
    %5811 = vmatpush1.bf16.msra.mxu0 %v5748
    %5812 = vmatprep.subr.bf16.mxu0 %v5753
    %5813 = vmatpush1.bf16.msra.mxu0 %v5752
    %5814 = vmatprep.subr.bf16.mxu0 %v5757
    %5815 = vmatpush1.bf16.msra.mxu0 %v5756
    %5816 = vmatprep.subr.bf16.mxu0 %v5761
    %5817 = vmatpush1.bf16.msra.mxu0 %v5760
    %5818 = vmatprep.subr.bf16.mxu0 %v5765
    %5819 = vmatpush1.bf16.msra.mxu0 %v5764
    %5820 = vmatprep.subr.bf16.mxu0 %v5769
    %5821 = vmatpush1.bf16.msra.mxu0 %v5768
    %5822 = vmatprep.subr.bf16.mxu0 %v5773
    %5823 = vmatpush1.bf16.msra.mxu0 %v5772
    %5824 = vmatprep.subr.bf16.mxu0 0
    %5825 = vmatpush1.bf16.msra.mxu0 0
    %5826 = vmatprep.subr.bf16.mxu0 0
    %5827 = vmatpush1.bf16.msra.mxu0 0
    %5828 = vmatprep.subr.bf16.mxu0 0
    %5829 = vmatpush1.bf16.msra.mxu0 0
    %5830 = vmatprep.subr.bf16.mxu0 0
    %5831 = vmatpush1.bf16.msra.mxu0 0
    %5832 = vmatprep.subr.bf16.mxu0 0
    %5833 = vmatpush1.bf16.msra.mxu0 0
    %5834 = vmatprep.subr.bf16.mxu0 0
    %5835 = vmatpush1.bf16.msra.mxu0 0
    %5836 = vmatprep.subr.bf16.mxu0 0
    %5837 = vmatpush1.bf16.msra.mxu0 0
    %5838 = vmatprep.subr.bf16.mxu0 0
    %5839 = vmatpush1.bf16.msra.mxu0 0
    %5840 = vmatprep.mubr.bf16.mxu0 0
    %5841 = vmatmul.mubr.bf16.gmra.mrb[0].mxu0 %v5647
    %v5842 = vpop.f32.mrb[0].mxu0
    %v5843 = vadd.f32 0.0, %v5842
    %v5844 = vpop.f32.mrb[0].mxu0
    %v5845 = vadd.f32 0.0, %v5844
    %v5846 = vpop.f32.mrb[0].mxu0
    %v5847 = vpop.f32.mrb[0].mxu0
    %5848 = vdwg.mxu0
    %5849 = vmatprep.subr.bf16.mxu0 %v5747
    %5850 = vmatpush1.bf16.msra.mxu0 %v5746
    %5851 = vmatprep.subr.bf16.mxu0 %v5751
    %5852 = vmatpush1.bf16.msra.mxu0 %v5750
    %5853 = vmatprep.subr.bf16.mxu0 %v5755
    %5854 = vmatpush1.bf16.msra.mxu0 %v5754
    %5855 = vmatprep.subr.bf16.mxu0 %v5759
    %5856 = vmatpush1.bf16.msra.mxu0 %v5758
    %5857 = vmatprep.subr.bf16.mxu0 %v5763
    %5858 = vmatpush1.bf16.msra.mxu0 %v5762
    %5859 = vmatprep.subr.bf16.mxu0 %v5767
    %5860 = vmatpush1.bf16.msra.mxu0 %v5766
    %5861 = vmatprep.subr.bf16.mxu0 %v5771
    %5862 = vmatpush1.bf16.msra.mxu0 %v5770
    %5863 = vmatprep.subr.bf16.mxu0 %v5775
    %5864 = vmatpush1.bf16.msra.mxu0 %v5774
    %5865 = vmatprep.subr.bf16.mxu0 0
    %5866 = vmatpush1.bf16.msra.mxu0 0
    %5867 = vmatprep.subr.bf16.mxu0 0
    %5868 = vmatpush1.bf16.msra.mxu0 0
    %5869 = vmatprep.subr.bf16.mxu0 0
    %5870 = vmatpush1.bf16.msra.mxu0 0
    %5871 = vmatprep.subr.bf16.mxu0 0
    %5872 = vmatpush1.bf16.msra.mxu0 0
    %5873 = vmatprep.subr.bf16.mxu0 0
    %5874 = vmatpush1.bf16.msra.mxu0 0
    %5875 = vmatprep.subr.bf16.mxu0 0
    %5876 = vmatpush1.bf16.msra.mxu0 0
    %5877 = vmatprep.subr.bf16.mxu0 0
    %5878 = vmatpush1.bf16.msra.mxu0 0
    %5879 = vmatprep.subr.bf16.mxu0 0
    %5880 = vmatpush1.bf16.msra.mxu0 0
    %5881 = vmatprep.mubr.bf16.mxu0 0
    %5882 = vmatmul.mubr.bf16.gmra.mrb[0].mxu0 %v5647
    %v5883 = vpop.f32.mrb[0].mxu0
    %v5884 = vadd.f32 0.0, %v5883
    %v5885 = vpop.f32.mrb[0].mxu0
    %v5886 = vadd.f32 0.0, %v5885
    %v5887 = vpop.f32.mrb[0].mxu0
    %v5888 = vpop.f32.mrb[0].mxu0
    %5889 = vdwg.mxu0
    %v5890 = vadd.f32 %v5611, %v5843
    %v5891 = vadd.f32 %v5612, %v5845
    %v5892 = vadd.f32 %v5613, %v5884
    %v5893 = vadd.f32 %v5614, %v5886
    %v5894 = vxor.u32 %v5890, 2147483648
    %v5895 = vmul.f32 %v5894, 1.442695
    %v5896 = vpow.pop %v5895
    %v5897 = vadd.f32 %v5896, 1.0
    %v5898 = vrcp.pop %v5897
    %v5899 = vmul.f32 1.0, %v5898
    %v5900 = vxor.u32 %v5891, 2147483648
    %v5901 = vmul.f32 %v5900, 1.442695
    %v5902 = vpow.pop %v5901
    %v5903 = vadd.f32 %v5902, 1.0
    %v5904 = vrcp.pop %v5903
    %v5905 = vmul.f32 1.0, %v5904
    %v5906 = vtanh.pop %v5892
    %v5907 = vxor.u32 %v5893, 2147483648
    %v5908 = vmul.f32 %v5907, 1.442695
    %v5909 = vpow.pop %v5908
    %v5910 = vadd.f32 %v5909, 1.0
    %v5911 = vrcp.pop %v5910
    %v5912 = vmul.f32 1.0, %v5911
    %v5913 = vmul.f32 %v5905, %v5299
    %v5914 = vmul.f32 %v5899, %v5906
    %v5915 = vadd.f32 %v5913, %v5914
    %v5916 = vtanh.pop %v5915
    %v5917 = vmul.f32 %v5912, %v5916
    %5918 = vst [vmem:[%s1256 + $0x8] sm:$0xff] %v5917
    %v5919 = vpack.c.bf16 %v5609, %v5609
    %v5920 = vpack.c.bf16 %v5917, %v5917
    %v5921 = vpack.c.bf16 %v5607, %v5607
    %v5922 = vpack.c.bf16 %v5915, %v5915
    %v5923 = vld [vmem:[#allocation12] sm:$0xf]
    %v5924 = vld [vmem:[#allocation12 + $0x4] sm:$0xf]
    %v5925 = vld [vmem:[#allocation12 + $0x8] sm:$0xf]
    %v5926 = vld [vmem:[#allocation12 + $0xc] sm:$0xf]
    %v5927 = vld [vmem:[#allocation12 + $0x10] sm:$0xf]
    %v5928 = vld [vmem:[#allocation12 + $0x14] sm:$0xf]
    %v5929 = vld [vmem:[#allocation12 + $0x18] sm:$0xf]
    %v5930 = vld [vmem:[#allocation12 + $0x1c] sm:$0xf]
    %v5931 = vld [vmem:[#allocation12 + $0x20] sm:$0xf]
    %v5932 = vld [vmem:[#allocation12 + $0x24] sm:$0xf]
    %v5933 = vld [vmem:[#allocation12 + $0x28] sm:$0xf]
    %v5934 = vld [vmem:[#allocation12 + $0x2c] sm:$0xf]
    %v5935 = vld [vmem:[#allocation12 + $0x30] sm:$0xf]
    %v5936 = vld [vmem:[#allocation12 + $0x34] sm:$0xf]
    %v5937 = vld [vmem:[#allocation12 + $0x38] sm:$0xf]
    %v5938 = vld [vmem:[#allocation12 + $0x3c] sm:$0xf]
    %v5939 = vld [vmem:[#allocation12 + $0x40] sm:$0xf]
    %v5940 = vld [vmem:[#allocation12 + $0x44] sm:$0xf]
    %v5941 = vld [vmem:[#allocation12 + $0x48] sm:$0xf]
    %v5942 = vld [vmem:[#allocation12 + $0x4c] sm:$0xf]
    %v5943 = vld [vmem:[#allocation12 + $0x50] sm:$0xf]
    %v5944 = vld [vmem:[#allocation12 + $0x54] sm:$0xf]
    %v5945 = vld [vmem:[#allocation12 + $0x58] sm:$0xf]
    %v5946 = vld [vmem:[#allocation12 + $0x5c] sm:$0xf]
    %v5947 = vld [vmem:[#allocation12 + $0x60] sm:$0xf]
    %v5948 = vld [vmem:[#allocation12 + $0x64] sm:$0xf]
    %v5949 = vld [vmem:[#allocation12 + $0x68] sm:$0xf]
    %v5950 = vld [vmem:[#allocation12 + $0x6c] sm:$0xf]
    %v5951 = vld [vmem:[#allocation12 + $0x70] sm:$0xf]
    %v5952 = vld [vmem:[#allocation12 + $0x74] sm:$0xf]
    %v5953 = vld [vmem:[#allocation12 + $0x78] sm:$0xf]
    %v5954 = vld [vmem:[#allocation12 + $0x7c] sm:$0xf]
    %v5955 = vld [vmem:[%s6] sm:$0x1]
    %v5957 = vlaneseq
    %v5958 = vshrl.u32 %v5957, 7
    %v5959 = vsub.s32 0, %v5958
    %v5960 = vrot.slane %v5955, %v5959
    %v5994 = vunpack.c.l.b16 %v5923
    %v5995 = vunpack.c.l.b16 %v5924
    %v5996 = vunpack.c.l.b16 %v5925
    %v5997 = vunpack.c.l.b16 %v5926
    %v5998 = vunpack.c.l.b16 %v5927
    %v5999 = vunpack.c.l.b16 %v5928
    %v6000 = vunpack.c.l.b16 %v5929
    %v6001 = vunpack.c.l.b16 %v5930
    %v6002 = vunpack.c.l.b16 %v5931
    %v6003 = vunpack.c.l.b16 %v5932
    %v6004 = vunpack.c.l.b16 %v5933
    %v6005 = vunpack.c.l.b16 %v5934
    %v6006 = vunpack.c.l.b16 %v5935
    %v6007 = vunpack.c.l.b16 %v5936
    %v6008 = vunpack.c.l.b16 %v5937
    %v6009 = vunpack.c.l.b16 %v5938
    %v6010 = vunpack.c.l.b16 %v5939
    %v6011 = vunpack.c.l.b16 %v5940
    %v6012 = vunpack.c.l.b16 %v5941
    %v6013 = vunpack.c.l.b16 %v5942
    %v6014 = vunpack.c.l.b16 %v5943
    %v6015 = vunpack.c.l.b16 %v5944
    %v6016 = vunpack.c.l.b16 %v5945
    %v6017 = vunpack.c.l.b16 %v5946
    %v6018 = vunpack.c.l.b16 %v5947
    %v6019 = vunpack.c.l.b16 %v5948
    %v6020 = vunpack.c.l.b16 %v5949
    %v6021 = vunpack.c.l.b16 %v5950
    %v6022 = vunpack.c.l.b16 %v5951
    %v6023 = vunpack.c.l.b16 %v5952
    %v6024 = vunpack.c.l.b16 %v5953
    %v6025 = vunpack.c.l.b16 %v5954
    %v6026 = vpack.c.b16 %v5995, %v5994
    %v6027 = vpack.c.b16 %v5997, %v5996
    %v6028 = vpack.c.b16 %v5999, %v5998
    %v6029 = vpack.c.b16 %v6001, %v6000
    %v6030 = vpack.c.b16 %v6003, %v6002
    %v6031 = vpack.c.b16 %v6005, %v6004
    %v6032 = vpack.c.b16 %v6007, %v6006
    %v6033 = vpack.c.b16 %v6009, %v6008
    %v6034 = vpack.c.b16 %v6011, %v6010
    %v6035 = vpack.c.b16 %v6013, %v6012
    %v6036 = vpack.c.b16 %v6015, %v6014
    %v6037 = vpack.c.b16 %v6017, %v6016
    %v6038 = vpack.c.b16 %v6019, %v6018
    %v6039 = vpack.c.b16 %v6021, %v6020
    %v6040 = vpack.c.b16 %v6023, %v6022
    %v6041 = vpack.c.b16 %v6025, %v6024
    %6058 = vmatprep.subr.bf16.mxu0 0
    %6059 = vmatpush1.bf16.msra.mxu0 %v6026
    %6060 = vmatprep.subr.bf16.mxu0 0
    %6061 = vmatpush1.bf16.msra.mxu0 %v6027
    %6062 = vmatprep.subr.bf16.mxu0 0
    %6063 = vmatpush1.bf16.msra.mxu0 %v6028
    %6064 = vmatprep.subr.bf16.mxu0 0
    %6065 = vmatpush1.bf16.msra.mxu0 %v6029
    %6066 = vmatprep.subr.bf16.mxu0 0
    %6067 = vmatpush1.bf16.msra.mxu0 %v6030
    %6068 = vmatprep.subr.bf16.mxu0 0
    %6069 = vmatpush1.bf16.msra.mxu0 %v6031
    %6070 = vmatprep.subr.bf16.mxu0 0
    %6071 = vmatpush1.bf16.msra.mxu0 %v6032
    %6072 = vmatprep.subr.bf16.mxu0 0
    %6073 = vmatpush1.bf16.msra.mxu0 %v6033
    %6074 = vmatprep.subr.bf16.mxu0 0
    %6075 = vmatpush1.bf16.msra.mxu0 %v6034
    %6076 = vmatprep.subr.bf16.mxu0 0
    %6077 = vmatpush1.bf16.msra.mxu0 %v6035
    %6078 = vmatprep.subr.bf16.mxu0 0
    %6079 = vmatpush1.bf16.msra.mxu0 %v6036
    %6080 = vmatprep.subr.bf16.mxu0 0
    %6081 = vmatpush1.bf16.msra.mxu0 %v6037
    %6082 = vmatprep.subr.bf16.mxu0 0
    %6083 = vmatpush1.bf16.msra.mxu0 %v6038
    %6084 = vmatprep.subr.bf16.mxu0 0
    %6085 = vmatpush1.bf16.msra.mxu0 %v6039
    %6086 = vmatprep.subr.bf16.mxu0 0
    %6087 = vmatpush1.bf16.msra.mxu0 %v6040
    %6088 = vmatprep.subr.bf16.mxu0 0
    %6089 = vmatpush1.bf16.msra.mxu0 %v6041
    %6090 = vmatprep.mubr.bf16.mxu0 %v5920
    %6091 = vmatmul.mubr.bf16.gmra.mrb[0].mxu0 %v5919
    %v6092 = vpop.f32.mrb[0].mxu0
    %v6093 = vadd.f32 %v5960, %v6092
    %v6094 = vpop.f32.mrb[0].mxu0
    %v6095 = vpop.f32.mrb[0].mxu0
    %v6096 = vpop.f32.mrb[0].mxu0
    %6097 = vdwg.mxu0
    %6098 = vst [vmem:[#allocation16] sm:$0xff] %v6093
    %v6099 = vld [vmem:[#allocation14] sm:$0xf]
    %v6100 = vld [vmem:[#allocation14 + $0x4] sm:$0xf]
    %v6101 = vld [vmem:[#allocation14 + $0x8] sm:$0xf]
    %v6102 = vld [vmem:[#allocation14 + $0xc] sm:$0xf]
    %v6103 = vld [vmem:[#allocation14 + $0x10] sm:$0xf]
    %v6104 = vld [vmem:[#allocation14 + $0x14] sm:$0xf]
    %v6105 = vld [vmem:[#allocation14 + $0x18] sm:$0xf]
    %v6106 = vld [vmem:[#allocation14 + $0x1c] sm:$0xf]
    %v6107 = vld [vmem:[#allocation14 + $0x20] sm:$0xf]
    %v6108 = vld [vmem:[#allocation14 + $0x24] sm:$0xf]
    %v6109 = vld [vmem:[#allocation14 + $0x28] sm:$0xf]
    %v6110 = vld [vmem:[#allocation14 + $0x2c] sm:$0xf]
    %v6111 = vld [vmem:[#allocation14 + $0x30] sm:$0xf]
    %v6112 = vld [vmem:[#allocation14 + $0x34] sm:$0xf]
    %v6113 = vld [vmem:[#allocation14 + $0x38] sm:$0xf]
    %v6114 = vld [vmem:[#allocation14 + $0x3c] sm:$0xf]
    %v6115 = vld [vmem:[#allocation14 + $0x40] sm:$0xf]
    %v6116 = vld [vmem:[#allocation14 + $0x44] sm:$0xf]
    %v6117 = vld [vmem:[#allocation14 + $0x48] sm:$0xf]
    %v6118 = vld [vmem:[#allocation14 + $0x4c] sm:$0xf]
    %v6119 = vld [vmem:[#allocation14 + $0x50] sm:$0xf]
    %v6120 = vld [vmem:[#allocation14 + $0x54] sm:$0xf]
    %v6121 = vld [vmem:[#allocation14 + $0x58] sm:$0xf]
    %v6122 = vld [vmem:[#allocation14 + $0x5c] sm:$0xf]
    %v6123 = vld [vmem:[#allocation14 + $0x60] sm:$0xf]
    %v6124 = vld [vmem:[#allocation14 + $0x64] sm:$0xf]
    %v6125 = vld [vmem:[#allocation14 + $0x68] sm:$0xf]
    %v6126 = vld [vmem:[#allocation14 + $0x6c] sm:$0xf]
    %v6127 = vld [vmem:[#allocation14 + $0x70] sm:$0xf]
    %v6128 = vld [vmem:[#allocation14 + $0x74] sm:$0xf]
    %v6129 = vld [vmem:[#allocation14 + $0x78] sm:$0xf]
    %v6130 = vld [vmem:[#allocation14 + $0x7c] sm:$0xf]
    %v6131 = vld [vmem:[%s8] sm:$0x1]
    %v6133 = vlaneseq
    %v6134 = vshrl.u32 %v6133, 7
    %v6135 = vsub.s32 0, %v6134
    %v6136 = vrot.slane %v6131, %v6135
    %v6170 = vunpack.c.l.b16 %v6099
    %v6171 = vunpack.c.l.b16 %v6100
    %v6172 = vunpack.c.l.b16 %v6101
    %v6173 = vunpack.c.l.b16 %v6102
    %v6174 = vunpack.c.l.b16 %v6103
    %v6175 = vunpack.c.l.b16 %v6104
    %v6176 = vunpack.c.l.b16 %v6105
    %v6177 = vunpack.c.l.b16 %v6106
    %v6178 = vunpack.c.l.b16 %v6107
    %v6179 = vunpack.c.l.b16 %v6108
    %v6180 = vunpack.c.l.b16 %v6109
    %v6181 = vunpack.c.l.b16 %v6110
    %v6182 = vunpack.c.l.b16 %v6111
    %v6183 = vunpack.c.l.b16 %v6112
    %v6184 = vunpack.c.l.b16 %v6113
    %v6185 = vunpack.c.l.b16 %v6114
    %v6186 = vunpack.c.l.b16 %v6115
    %v6187 = vunpack.c.l.b16 %v6116
    %v6188 = vunpack.c.l.b16 %v6117
    %v6189 = vunpack.c.l.b16 %v6118
    %v6190 = vunpack.c.l.b16 %v6119
    %v6191 = vunpack.c.l.b16 %v6120
    %v6192 = vunpack.c.l.b16 %v6121
    %v6193 = vunpack.c.l.b16 %v6122
    %v6194 = vunpack.c.l.b16 %v6123
    %v6195 = vunpack.c.l.b16 %v6124
    %v6196 = vunpack.c.l.b16 %v6125
    %v6197 = vunpack.c.l.b16 %v6126
    %v6198 = vunpack.c.l.b16 %v6127
    %v6199 = vunpack.c.l.b16 %v6128
    %v6200 = vunpack.c.l.b16 %v6129
    %v6201 = vunpack.c.l.b16 %v6130
    %v6202 = vpack.c.b16 %v6171, %v6170
    %v6203 = vpack.c.b16 %v6173, %v6172
    %v6204 = vpack.c.b16 %v6175, %v6174
    %v6205 = vpack.c.b16 %v6177, %v6176
    %v6206 = vpack.c.b16 %v6179, %v6178
    %v6207 = vpack.c.b16 %v6181, %v6180
    %v6208 = vpack.c.b16 %v6183, %v6182
    %v6209 = vpack.c.b16 %v6185, %v6184
    %v6210 = vpack.c.b16 %v6187, %v6186
    %v6211 = vpack.c.b16 %v6189, %v6188
    %v6212 = vpack.c.b16 %v6191, %v6190
    %v6213 = vpack.c.b16 %v6193, %v6192
    %v6214 = vpack.c.b16 %v6195, %v6194
    %v6215 = vpack.c.b16 %v6197, %v6196
    %v6216 = vpack.c.b16 %v6199, %v6198
    %v6217 = vpack.c.b16 %v6201, %v6200
    %6234 = vmatprep.subr.bf16.mxu0 0
    %6235 = vmatpush1.bf16.msra.mxu0 %v6202
    %6236 = vmatprep.subr.bf16.mxu0 0
    %6237 = vmatpush1.bf16.msra.mxu0 %v6203
    %6238 = vmatprep.subr.bf16.mxu0 0
    %6239 = vmatpush1.bf16.msra.mxu0 %v6204
    %6240 = vmatprep.subr.bf16.mxu0 0
    %6241 = vmatpush1.bf16.msra.mxu0 %v6205
    %6242 = vmatprep.subr.bf16.mxu0 0
    %6243 = vmatpush1.bf16.msra.mxu0 %v6206
    %6244 = vmatprep.subr.bf16.mxu0 0
    %6245 = vmatpush1.bf16.msra.mxu0 %v6207
    %6246 = vmatprep.subr.bf16.mxu0 0
    %6247 = vmatpush1.bf16.msra.mxu0 %v6208
    %6248 = vmatprep.subr.bf16.mxu0 0
    %6249 = vmatpush1.bf16.msra.mxu0 %v6209
    %6250 = vmatprep.subr.bf16.mxu0 0
    %6251 = vmatpush1.bf16.msra.mxu0 %v6210
    %6252 = vmatprep.subr.bf16.mxu0 0
    %6253 = vmatpush1.bf16.msra.mxu0 %v6211
    %6254 = vmatprep.subr.bf16.mxu0 0
    %6255 = vmatpush1.bf16.msra.mxu0 %v6212
    %6256 = vmatprep.subr.bf16.mxu0 0
    %6257 = vmatpush1.bf16.msra.mxu0 %v6213
    %6258 = vmatprep.subr.bf16.mxu0 0
    %6259 = vmatpush1.bf16.msra.mxu0 %v6214
    %6260 = vmatprep.subr.bf16.mxu0 0
    %6261 = vmatpush1.bf16.msra.mxu0 %v6215
    %6262 = vmatprep.subr.bf16.mxu0 0
    %6263 = vmatpush1.bf16.msra.mxu0 %v6216
    %6264 = vmatprep.subr.bf16.mxu0 0
    %6265 = vmatpush1.bf16.msra.mxu0 %v6217
    %6266 = vmatprep.mubr.bf16.mxu0 %v5922
    %6267 = vmatmul.mubr.bf16.gmra.mrb[0].mxu0 %v5921
    %v6268 = vpop.f32.mrb[0].mxu0
    %v6269 = vadd.f32 %v6136, %v6268
    %v6270 = vpop.f32.mrb[0].mxu0
    %v6271 = vpop.f32.mrb[0].mxu0
    %v6272 = vpop.f32.mrb[0].mxu0
    %6273 = vdwg.mxu0
    %6274 = vst [vmem:[#allocation18] sm:$0xff] %v6269
    // Predicated region
    $region66: #{tpu_custom_call.1} parent=1 // pred_check
      _
    $region67: #{tpu_custom_call.1} parent=1 // pred_check_branch
      %6276 = sbr.rel (0) target = $region69
    $region68: #{tpu_custom_call.1} parent=1 // pred_region
      %s6278 = ssub.s32 2048, 2048
      %6279 = vsyncadd [#allocation5], %s6278
      %s6280 = sshll.u32 [#allocation15], 4
      %s6281 = int_to_ptr.vmem [resolvable:$true] %s6280
      %6286 = dma.vmem_to_hbm [thread:$0]  %s6281, 2048, %s9, [#allocation5], 256, 256, 16
    $region69: #{tpu_custom_call.1} parent=1 // pred_fallthru
      _
    // Predicated region
    $region70: #{tpu_custom_call.1} parent=1 // pred_check
      _
    $region71: #{tpu_custom_call.1} parent=1 // pred_check_branch
      %6288 = sbr.rel (0) target = $region73
    $region72: #{tpu_custom_call.1} parent=1 // pred_region
      %s6290 = ssub.s32 128, 128
      %6291 = vsyncadd [#allocation17], %s6290
      %s6293 = sshll.u32 [#allocation16], 4
      %s6294 = int_to_ptr.vmem [resolvable:$true] %s6293
      %6296 = dma.vmem_to_hbm [thread:$0]  %s6294, 128, %s10, [#allocation17]
    $region73: #{tpu_custom_call.1} parent=1 // pred_fallthru
      _
    // Predicated region
    $region74: #{tpu_custom_call.1} parent=1 // pred_check
      _
    $region75: #{tpu_custom_call.1} parent=1 // pred_check_branch
      %6298 = sbr.rel (0) target = $region77
    $region76: #{tpu_custom_call.1} parent=1 // pred_region
      %s6300 = ssub.s32 128, 128
      %6301 = vsyncadd [#allocation17], %s6300
      %s6303 = sshll.u32 [#allocation18], 4
      %s6304 = int_to_ptr.vmem [resolvable:$true] %s6303
      %6306 = dma.vmem_to_hbm [thread:$0]  %s6304, 128, %s11, [#allocation17]
    $region77: #{tpu_custom_call.1} parent=1 // pred_fallthru
      _
    // Predicated region
    $region78: #{tpu_custom_call.1} parent=1 // pred_check
      _
    $region79: #{tpu_custom_call.1} parent=1 // pred_check_branch
      %6308 = sbr.rel (0) target = $region81
    $region80: #{tpu_custom_call.1} parent=1 // pred_region
      %6309 = dma.done [#allocation5], 2048
    $region81: #{tpu_custom_call.1} parent=1 // pred_fallthru
      _
    // Predicated region
    $region82: #{tpu_custom_call.1} parent=1 // pred_check
      _
    $region83: #{tpu_custom_call.1} parent=1 // pred_check_branch
      %6311 = sbr.rel (0) target = $region85
    $region84: #{tpu_custom_call.1} parent=1 // pred_region
      %6312 = dma.done [#allocation17], 128
    $region85: #{tpu_custom_call.1} parent=1 // pred_fallthru
      _
    // Predicated region
    $region86: #{tpu_custom_call.1} parent=1 // pred_check
      _
    $region87: #{tpu_custom_call.1} parent=1 // pred_check_branch
      %6314 = sbr.rel (0) target = $region89
    $region88: #{tpu_custom_call.1} parent=1 // pred_region
      %6315 = dma.done [#allocation17], 128
    $region89: #{tpu_custom_call.1} parent=1 // pred_fallthru
      _
    %6316 = vsyncpa [#allocation4], 1
    %6317 = vsyncpa [#allocation7], 1
    %6318 = vsyncpa [#allocation10], 1
    %6319 = vsyncpa [#allocation13], 1
    %6320 = vsyncpa [#allocation5], 1
    %6321 = vsyncpa [#allocation17], 1

</llo_original>
